<compile_context>
chip_gen: v5e
topology: v5e:2x2
jax: 0.10.0
libtpu: 0.0.40
codegen_flags: <defaults>
</compile_context>

<pallas_src>
import math
import numpy as np
import jax
import jax.numpy as jnp
from jax.experimental import pallas as pl
from jax.experimental.pallas import tpu as pltpu

# --------------------------------------------------------------------------
# "cfg" constants (small synthetic versions of the OSX config)
# --------------------------------------------------------------------------
INPUT_BODY_SHAPE = (16, 16)          # cfg.input_body_shape  (h, w)
INPUT_HAND_SHAPE = (16, 16)          # cfg.input_hand_shape
OUTPUT_HM_SHAPE = (8, 8, 8)          # cfg.output_hm_shape   (d, h, w)
FOCAL = (5000.0, 5000.0)             # cfg.focal
CAMERA_3D_SIZE = 2.5                 # cfg.camera_3d_size
K_VALUE = math.sqrt(FOCAL[0] * FOCAL[1] * CAMERA_3D_SIZE * CAMERA_3D_SIZE /
                    (INPUT_BODY_SHAPE[0] * INPUT_BODY_SHAPE[1]))
ASPECT = INPUT_HAND_SHAPE[1] / INPUT_HAND_SHAPE[0]
EXT = 2.0
SX = INPUT_BODY_SHAPE[1] / OUTPUT_HM_SHAPE[2]   # heatmap-x -> body-img-x
SY = INPUT_BODY_SHAPE[0] / OUTPUT_HM_SHAPE[1]   # heatmap-y -> body-img-y
HALF_PI = 0.5 * math.pi

# model sizes (small synthetic)
D = 32                 # token / feature dim
PATCH = 4              # backbone patch size
NUM_TASK_TOKEN = 10    # 6 fixed tokens + 4 body-pose tokens
J_BODY = 4             # body rotation joints
J_HAND = 3             # hand rotation joints (per hand)
CH = 32                # hand feature dim
N_VERT = 32            # synthetic SMPL-X vertex count
GH = INPUT_BODY_SHAPE[0] // PATCH    # 4
GW = INPUT_BODY_SHAPE[1] // PATCH    # 4
HW = GH * GW                         # 16 patches
ROT_OUT = 6 + J_BODY * 6 + 10 + 3    # 43: root6 | body6*J | shape10 | cam3
SMPLX_IN = 3 + J_BODY * 3 + 2 * J_HAND * 3 + 3 + 10 + 10   # 56


# --------------------------------------------------------------------------
# in-kernel math helpers (traced inside the fused kernel)
# --------------------------------------------------------------------------
def _sigmoid(x):
    # sigmoid via tanh: numerically robust, lowers to the EUP tanh path.
    return 0.5 * (jnp.tanh(0.5 * x) + 1.0)


def _acos(x):
    # Cephes-style single-precision arccos built from sqrt + polynomial only,
    # so the rot6d "finish" stays fully inside the kernel without relying on
    # an inverse-trig lowering.  |error| ~ 1e-7 over [-1, 1].
    ax = jnp.abs(x)
    big = ax > 0.5
    z = jnp.where(big, 0.5 * (1.0 - ax), ax * ax)
    t = jnp.where(big, jnp.sqrt(jnp.maximum(0.5 * (1.0 - ax), 0.0)), ax)
    poly = ((((4.2163199048e-2 * z + 2.4181311049e-2) * z + 4.5470025998e-2) * z
             + 7.4953002686e-2) * z + 1.6666752422e-1)
    asin_small = t + t * z * poly
    asin_abs = jnp.where(big, HALF_PI - 2.0 * asin_small, asin_small)
    asin_x = jnp.where(x < 0.0, -asin_abs, asin_abs)
    return HALF_PI - asin_x


def _rot6d_to_axis_angle(x6):
    # 6d rep -> rotation matrix (Gram-Schmidt + cross) -> axis-angle. [N,6]->[N,3]
    a1 = x6[:, 0:3]
    a2 = x6[:, 3:6]
    b1 = a1 * jax.lax.rsqrt(jnp.sum(a1 * a1, axis=1, keepdims=True) + 1e-8)
    d = jnp.sum(b1 * a2, axis=1, keepdims=True)
    u2 = a2 - d * b1
    b2 = u2 * jax.lax.rsqrt(jnp.sum(u2 * u2, axis=1, keepdims=True) + 1e-8)
    b1x, b1y, b1z = b1[:, 0:1], b1[:, 1:2], b1[:, 2:3]
    b2x, b2y, b2z = b2[:, 0:1], b2[:, 1:2], b2[:, 2:3]
    b3x = b1y * b2z - b1z * b2y
    b3y = b1z * b2x - b1x * b2z
    b3z = b1x * b2y - b1y * b2x
    cos_t = jnp.clip((b1x + b2y + b3z - 1.0) * 0.5, -1.0 + 1e-6, 1.0 - 1e-6)
    theta = _acos(cos_t)
    sin_t = jnp.sqrt(jnp.maximum(1.0 - cos_t * cos_t, 1e-12))
    scale = theta / (2.0 * jnp.maximum(sin_t, 1e-6))   # clamped denom (review fix)
    wx = b2z - b3y
    wy = b3x - b1z
    wz = b1y - b2x
    return jnp.concatenate([wx, wy, wz], axis=1) * scale


def _restore_bbox_cols(cx, cy, sw, sh):
    # heatmap-space (center, size) -> input-body-space bbox corners, aspect
    # corrected + extended by 2.0 (matches OSX restore_bbox); x/y use their
    # own heatmap scales (review fix for non-square heatmaps).
    xmin = (cx - sw * 0.5) * SX
    xmax = (cx + sw * 0.5) * SX
    ymin = (cy - sh * 0.5) * SY
    ymax = (cy + sh * 0.5) * SY
    w = xmax - xmin
    h = ymax - ymin
    cxc = xmin + 0.5 * w
    cyc = ymin + 0.5 * h
    new_h = jnp.where(w > ASPECT * h, w / ASPECT, h)
    new_w = jnp.where(w < ASPECT * h, h * ASPECT, w)
    w2 = new_w * EXT
    h2 = new_h * EXT
    x0 = cxc - 0.5 * w2
    y0 = cyc - 0.5 * h2
    return x0, y0, x0 + w2, y0 + h2


# --------------------------------------------------------------------------
# the single fused forward kernel (one grid step = one batch element)
# --------------------------------------------------------------------------
def _osx_fused_kernel(
        patches_ref,            # [1, HW, 3*PATCH*PATCH]  (this batch element)
        coords_ref,             # [HW, 2]  heatmap (x, y) coordinate table
        spread_ref,             # [3, 3*N_VERT]  cam-trans spread matrix
        w_patch_ref, b_patch_ref,
        w_task_ref, b_task_ref,
        w_hm_ref, b_hm_ref,
        w_rot_bpt_ref, w_rot_shape_ref, w_rot_cam_ref, w_rot_bji_ref, b_rot_ref,
        w_box_pool_ref, w_box_bji_ref, b_box_ref,
        w_roi_pool_ref, w_roi_box_ref, b_roi_ref,
        w_hpos_ref, b_hpos_ref,
        w_hrot_feat_ref, w_hrot_joint_ref, b_hrot_ref,
        w_face_expr_ref, w_face_jaw_ref, b_face_ref,
        w_smplx_ref, b_smplx_ref,
        mesh_ref,               # [1, 1, 3*N_VERT]
):
    def dot(a, b):
        return jnp.dot(a, b, preferred_element_type=jnp.float32)

    # ---- backbone (synthetic patch encoder + task tokens) ----
    # TODO(synk): real ViT backbone is opaque in the reference; linear stand-in.
    patches = patches_ref[0]                                       # [HW, 3*P*P]
    tokens = jnp.tanh(dot(patches, w_patch_ref[...]) + b_patch_ref[...])   # [HW, D]
    pooled = jnp.mean(tokens, axis=0, keepdims=True)               # [1, D]
    task = dot(pooled, w_task_ref[...]) + b_task_ref[...]          # [1, NT*D]

    shape_tok = task[:, 0:D]
    cam_tok = task[:, D:2 * D]
    expr_tok = task[:, 2 * D:3 * D]
    jaw_tok = task[:, 3 * D:4 * D]
    # task[:, 4*D:6*D] = hand tokens (produced but unused in forward, as in ref)
    body_pose_tok = task[:, 6 * D:]                                # [1, 4*D]

    # ---- body position net: joint heatmap + soft-argmax ----
    hm = dot(tokens, w_hm_ref[...]) + b_hm_ref[...]                # [HW, J_BODY]
    m = jnp.max(hm, axis=0, keepdims=True)
    e = jnp.exp(hm - m)
    p = e * pl.reciprocal(jnp.sum(e, axis=0, keepdims=True), approx=True)
    jx = jnp.sum(p * coords_ref[:, 0:1], axis=0, keepdims=True)    # [1, J]
    jy = jnp.sum(p * coords_ref[:, 1:2], axis=0, keepdims=True)
    jz = jnp.mean(hm, axis=0, keepdims=True)
    # body_joint_img features laid out as [x-block | y-block | z-block]
    bji = jnp.concatenate([jx * (OUTPUT_HM_SHAPE[2] / GW),
                           jy * (OUTPUT_HM_SHAPE[1] / GH), jz], axis=1)   # [1, 3*J]

    # ---- body rotation net (split-weight matmuls instead of feature concat) ----
    rot = (dot(body_pose_tok, w_rot_bpt_ref[...])
           + dot(shape_tok, w_rot_shape_ref[...])
           + dot(cam_tok, w_rot_cam_ref[...])
           + dot(bji, w_rot_bji_ref[...])
           + b_rot_ref[...])                                       # [1, ROT_OUT]
    root_aa = _rot6d_to_axis_angle(rot[:, 0:6])
    body_aa = [_rot6d_to_axis_angle(rot[:, 6 + 6 * j:12 + 6 * j])
               for j in range(J_BODY)]
    shape = rot[:, 6 + 6 * J_BODY:16 + 6 * J_BODY]                 # [1, 10]
    cam_param = rot[:, 16 + 6 * J_BODY:19 + 6 * J_BODY]            # [1, 3]

    # camera translation: (tx, ty, K * sigmoid(tz))
    t_z = K_VALUE * _sigmoid(cam_param[:, 2:3])
    cam_trans = jnp.concatenate([cam_param[:, 0:2], t_z], axis=1)  # [1, 3]

    # ---- box net: hand / face bbox centers & sizes ----
    # TODO(synk): full flattened-heatmap pathway of the real box net is reduced
    # to the per-joint soft-argmax statistics (same heatmap-derived info, keeps
    # the fused kernel free of awkward in-register reshapes).
    box = _sigmoid(dot(pooled, w_box_pool_ref[...])
                   + dot(bji, w_box_bji_ref[...]) + b_box_ref[...])   # [1, 12]
    hm_w = float(OUTPUT_HM_SHAPE[2])
    hm_h = float(OUTPUT_HM_SHAPE[1])
    # box[:, 8:12] = face bbox center/size (unused in test-mode forward, as in ref)

    # ---- hand ROI + hand position / rotation nets ----
    # TODO(synk): real ROI-Align crop+resize of img_feat not implemented; the
    # synthetic hand descriptor is pooled feature + restored bbox coordinates.
    def hand_branch(c0):
        x0, y0, x1, y1 = _restore_bbox_cols(
            box[:, c0 + 0:c0 + 1] * hm_w, box[:, c0 + 1:c0 + 2] * hm_h,
            box[:, c0 + 2:c0 + 3] * hm_w, box[:, c0 + 3:c0 + 4] * hm_h)
        bbox = jnp.concatenate([x0, y0, x1, y1], axis=1)            # [1, 4]
        feat = jnp.tanh(dot(pooled, w_roi_pool_ref[...])
                        + dot(bbox, w_roi_box_ref[...]) + b_roi_ref[...])   # [1, CH]
        hj = dot(feat, w_hpos_ref[...]) + b_hpos_ref[...]           # [1, 3*JH]
        pose6 = (dot(feat, w_hrot_feat_ref[...])
                 + dot(hj, w_hrot_joint_ref[...]) + b_hrot_ref[...])   # [1, 6*JH]
        return [_rot6d_to_axis_angle(pose6[:, 6 * j:6 * j + 6])
                for j in range(J_HAND)]

    lhand_aa = hand_branch(0)
    rhand_aa = hand_branch(4)
    # left hand: mirror -> negate the (y, z) axis-angle components per joint
    lhand_aa = [jnp.concatenate([a[:, 0:1], -a[:, 1:3]], axis=1) for a in lhand_aa]

    # ---- face regressor ----
    face = (dot(expr_tok, w_face_expr_ref[...])
            + dot(jaw_tok, w_face_jaw_ref[...]) + b_face_ref[...])  # [1, 16]
    expr = face[:, 0:10]
    jaw_aa = _rot6d_to_axis_angle(face[:, 10:16])

    # ---- SMPL-X vertex decoder + camera translation (folded into the matmul) ----
    # TODO(synk): real SMPL-X layer (blendshapes + LBS) replaced by a linear
    # vertex decoder; cam-trans add is folded via a constant spread matrix so
    # the output store stays lane-dense ([1, 3*N_VERT]).
    smplx_feat = jnp.concatenate(
        [root_aa] + body_aa + lhand_aa + rhand_aa + [jaw_aa, shape, expr], axis=1)
    mesh = (dot(smplx_feat, w_smplx_ref[...]) + b_smplx_ref[...]
            + dot(cam_trans, spread_ref[...]))                      # [1, 3*N_VERT]
    mesh_ref[0] = mesh


# --------------------------------------------------------------------------
# deterministic parameter init (synthetic stand-ins for the sub-networks)
# --------------------------------------------------------------------------
_PARAM_SPECS = {
    "w_patch": (3 * PATCH * PATCH, D), "b_patch": (D,),
    "w_task": (D, NUM_TASK_TOKEN * D), "b_task": (NUM_TASK_TOKEN * D,),
    "w_hm": (D, J_BODY), "b_hm": (J_BODY,),
    "w_rot_bpt": (4 * D, ROT_OUT), "w_rot_shape": (D, ROT_OUT),
    "w_rot_cam": (D, ROT_OUT), "w_rot_bji": (3 * J_BODY, ROT_OUT),
    "b_rot": (ROT_OUT,),
    "w_box_pool": (D, 12), "w_box_bji": (3 * J_BODY, 12), "b_box": (12,),
    "w_roi_pool": (D, CH), "w_roi_box": (4, CH), "b_roi": (CH,),
    "w_hpos": (CH, J_HAND * 3), "b_hpos": (J_HAND * 3,),
    "w_hrot_feat": (CH, J_HAND * 6), "w_hrot_joint": (J_HAND * 3, J_HAND * 6),
    "b_hrot": (J_HAND * 6,),
    "w_face_expr": (D, 16), "w_face_jaw": (D, 16), "b_face": (16,),
    "w_smplx": (SMPLX_IN, N_VERT * 3), "b_smplx": (N_VERT * 3,),
}

_PARAM_ORDER = (
    "w_patch", "b_patch", "w_task", "b_task", "w_hm", "b_hm",
    "w_rot_bpt", "w_rot_shape", "w_rot_cam", "w_rot_bji", "b_rot",
    "w_box_pool", "w_box_bji", "b_box",
    "w_roi_pool", "w_roi_box", "b_roi",
    "w_hpos", "b_hpos", "w_hrot_feat", "w_hrot_joint", "b_hrot",
    "w_face_expr", "w_face_jaw", "b_face",
    "w_smplx", "b_smplx",
)


def init_params(key):
    names = sorted(_PARAM_SPECS)
    keys = jax.random.split(key, len(names))
    return {n: jax.random.normal(k, _PARAM_SPECS[n], jnp.float32) * 0.05
            for n, k in zip(names, keys)}


def _rep_spec(shape):
    # full-array block, replicated across the batch grid
    zeros = (0,) * len(shape)
    return pl.BlockSpec(shape, lambda i: zeros)


# --------------------------------------------------------------------------
# forward pass (mirrors Model.forward structure; one fused pallas_call)
# --------------------------------------------------------------------------
def forward(inputs, params, mode="test"):
    img = inputs["img"]                                   # [B, 3, H, W]  NCHW
    bsz = img.shape[0]

    # F.interpolate(img, cfg.input_body_shape)  (default nearest)
    body_img = jax.image.resize(img, (bsz, 3) + INPUT_BODY_SHAPE, method="nearest")

    # non-overlapping patch extraction (layout plumbing; stays in JAX)
    patches = (body_img.reshape(bsz, 3, GH, PATCH, GW, PATCH)
               .transpose(0, 2, 4, 1, 3, 5)
               .reshape(bsz, HW, 3 * PATCH * PATCH))

    # constant lookup tables consumed by the fused kernel
    idx = np.arange(HW)
    coords = jnp.asarray(np.stack([idx % GW, idx // GW], axis=1), jnp.float32)
    spread = jnp.asarray(np.tile(np.eye(3), (1, N_VERT)), jnp.float32)  # [3, 3*NV]

    param_args = []
    for name in _PARAM_ORDER:
        v = params[name]
        param_args.append(v.reshape(1, -1) if v.ndim == 1 else v)
    args = (patches, coords, spread, *param_args)

    in_specs = [pl.BlockSpec((1, HW, 3 * PATCH * PATCH), lambda i: (i, 0, 0))]
    in_specs += [_rep_spec(a.shape) for a in args[1:]]

    mesh_flat = pl.pallas_call(
        _osx_fused_kernel,
        out_shape=jax.ShapeDtypeStruct((bsz, 1, 3 * N_VERT), jnp.float32),
        grid=(bsz,),
        in_specs=in_specs,
        out_specs=pl.BlockSpec((1, 1, 3 * N_VERT), lambda i: (i, 0, 0)),
        compiler_params=pltpu.CompilerParams(
            dimension_semantics=("parallel",)),   # v7x: both TCs split the batch
    )(*args)

    return {"smplx_mesh_cam": mesh_flat.reshape(bsz, N_VERT, 3)}


# --------------------------------------------------------------------------
if __name__ == "__main__":
    key = jax.random.PRNGKey(0)
    k_img, _ = jax.random.split(key)
    img = jax.random.normal(k_img, (2, 3, 32, 32), jnp.float32)   # NCHW
    params = init_params(jax.random.PRNGKey(42))

    out = forward({"img": img}, params, mode="test")
    mesh = jax.block_until_ready(out["smplx_mesh_cam"])
    assert mesh.shape == (2, N_VERT, 3)
    assert bool(jnp.all(jnp.isfinite(mesh)))
    print("KERNEL_OK")
</pallas_src>

<mosaic_0001>
module attributes {stable_mosaic.version = 11 : i64} {
  func.func @_osx_fused_kernel(%arg0: i32, %arg1: memref<1x16x48xf32, #tpu.memory_space<vmem>>, %arg2: memref<16x2xf32, #tpu.memory_space<vmem>>, %arg3: memref<3x96xf32, #tpu.memory_space<vmem>>, %arg4: memref<48x32xf32, #tpu.memory_space<vmem>>, %arg5: memref<1x32xf32, #tpu.memory_space<vmem>>, %arg6: memref<32x320xf32, #tpu.memory_space<vmem>>, %arg7: memref<1x320xf32, #tpu.memory_space<vmem>>, %arg8: memref<32x4xf32, #tpu.memory_space<vmem>>, %arg9: memref<1x4xf32, #tpu.memory_space<vmem>>, %arg10: memref<128x43xf32, #tpu.memory_space<vmem>>, %arg11: memref<32x43xf32, #tpu.memory_space<vmem>>, %arg12: memref<32x43xf32, #tpu.memory_space<vmem>>, %arg13: memref<12x43xf32, #tpu.memory_space<vmem>>, %arg14: memref<1x43xf32, #tpu.memory_space<vmem>>, %arg15: memref<32x12xf32, #tpu.memory_space<vmem>>, %arg16: memref<12x12xf32, #tpu.memory_space<vmem>>, %arg17: memref<1x12xf32, #tpu.memory_space<vmem>>, %arg18: memref<32x32xf32, #tpu.memory_space<vmem>>, %arg19: memref<4x32xf32, #tpu.memory_space<vmem>>, %arg20: memref<1x32xf32, #tpu.memory_space<vmem>>, %arg21: memref<32x9xf32, #tpu.memory_space<vmem>>, %arg22: memref<1x9xf32, #tpu.memory_space<vmem>>, %arg23: memref<32x18xf32, #tpu.memory_space<vmem>>, %arg24: memref<9x18xf32, #tpu.memory_space<vmem>>, %arg25: memref<1x18xf32, #tpu.memory_space<vmem>>, %arg26: memref<32x16xf32, #tpu.memory_space<vmem>>, %arg27: memref<32x16xf32, #tpu.memory_space<vmem>>, %arg28: memref<1x16xf32, #tpu.memory_space<vmem>>, %arg29: memref<56x96xf32, #tpu.memory_space<vmem>>, %arg30: memref<1x96xf32, #tpu.memory_space<vmem>>, %arg31: memref<1x1x96xf32, #tpu.memory_space<vmem>>) attributes {dimension_semantics = [#tpu.dimension_semantics<parallel>], iteration_bounds = array<i64: 2>, scalar_prefetch = 0 : i64, scratch_operands = 0 : i64, tpu.core_type = #tpu.core_type<tc>, window_params = [{transform_indices = @transform_0, window_bounds = array<i64: 1, 16, 48>}, {pipeline_mode = #tpu.pipeline_mode<synchronous>, transform_indices = @transform_1, window_bounds = array<i64: 16, 2>}, {pipeline_mode = #tpu.pipeline_mode<synchronous>, transform_indices = @transform_2, window_bounds = array<i64: 3, 96>}, {pipeline_mode = #tpu.pipeline_mode<synchronous>, transform_indices = @transform_3, window_bounds = array<i64: 48, 32>}, {pipeline_mode = #tpu.pipeline_mode<synchronous>, transform_indices = @transform_4, window_bounds = array<i64: 1, 32>}, {pipeline_mode = #tpu.pipeline_mode<synchronous>, transform_indices = @transform_5, window_bounds = array<i64: 32, 320>}, {pipeline_mode = #tpu.pipeline_mode<synchronous>, transform_indices = @transform_6, window_bounds = array<i64: 1, 320>}, {pipeline_mode = #tpu.pipeline_mode<synchronous>, transform_indices = @transform_7, window_bounds = array<i64: 32, 4>}, {pipeline_mode = #tpu.pipeline_mode<synchronous>, transform_indices = @transform_8, window_bounds = array<i64: 1, 4>}, {pipeline_mode = #tpu.pipeline_mode<synchronous>, transform_indices = @transform_9, window_bounds = array<i64: 128, 43>}, {pipeline_mode = #tpu.pipeline_mode<synchronous>, transform_indices = @transform_10, window_bounds = array<i64: 32, 43>}, {pipeline_mode = #tpu.pipeline_mode<synchronous>, transform_indices = @transform_11, window_bounds = array<i64: 32, 43>}, {pipeline_mode = #tpu.pipeline_mode<synchronous>, transform_indices = @transform_12, window_bounds = array<i64: 12, 43>}, {pipeline_mode = #tpu.pipeline_mode<synchronous>, transform_indices = @transform_13, window_bounds = array<i64: 1, 43>}, {pipeline_mode = #tpu.pipeline_mode<synchronous>, transform_indices = @transform_14, window_bounds = array<i64: 32, 12>}, {pipeline_mode = #tpu.pipeline_mode<synchronous>, transform_indices = @transform_15, window_bounds = array<i64: 12, 12>}, {pipeline_mode = #tpu.pipeline_mode<synchronous>, transform_indices = @transform_16, window_bounds = array<i64: 1, 12>}, {pipeline_mode = #tpu.pipeline_mode<synchronous>, transform_indices = @transform_17, window_bounds = array<i64: 32, 32>}, {pipeline_mode = #tpu.pipeline_mode<synchronous>, transform_indices = @transform_18, window_bounds = array<i64: 4, 32>}, {pipeline_mode = #tpu.pipeline_mode<synchronous>, transform_indices = @transform_19, window_bounds = array<i64: 1, 32>}, {pipeline_mode = #tpu.pipeline_mode<synchronous>, transform_indices = @transform_20, window_bounds = array<i64: 32, 9>}, {pipeline_mode = #tpu.pipeline_mode<synchronous>, transform_indices = @transform_21, window_bounds = array<i64: 1, 9>}, {pipeline_mode = #tpu.pipeline_mode<synchronous>, transform_indices = @transform_22, window_bounds = array<i64: 32, 18>}, {pipeline_mode = #tpu.pipeline_mode<synchronous>, transform_indices = @transform_23, window_bounds = array<i64: 9, 18>}, {pipeline_mode = #tpu.pipeline_mode<synchronous>, transform_indices = @transform_24, window_bounds = array<i64: 1, 18>}, {pipeline_mode = #tpu.pipeline_mode<synchronous>, transform_indices = @transform_25, window_bounds = array<i64: 32, 16>}, {pipeline_mode = #tpu.pipeline_mode<synchronous>, transform_indices = @transform_26, window_bounds = array<i64: 32, 16>}, {pipeline_mode = #tpu.pipeline_mode<synchronous>, transform_indices = @transform_27, window_bounds = array<i64: 1, 16>}, {pipeline_mode = #tpu.pipeline_mode<synchronous>, transform_indices = @transform_28, window_bounds = array<i64: 56, 96>}, {pipeline_mode = #tpu.pipeline_mode<synchronous>, transform_indices = @transform_29, window_bounds = array<i64: 1, 96>}, {transform_indices = @transform_30, window_bounds = array<i64: 1, 1, 96>}]} {
    %c0 = arith.constant 0 : index
    %c0_0 = arith.constant 0 : index
    %c0_1 = arith.constant 0 : index
    %0 = vector.load %arg1[%c0, %c0_0, %c0_1] : memref<1x16x48xf32, #tpu.memory_space<vmem>>, vector<1x16x48xf32>
    %1 = vector.shape_cast %0 : vector<1x16x48xf32> to vector<16x48xf32>
    %c0_2 = arith.constant 0 : index
    %c0_3 = arith.constant 0 : index
    %2 = vector.load %arg4[%c0_2, %c0_3] : memref<48x32xf32, #tpu.memory_space<vmem>>, vector<48x32xf32>
    %cst = arith.constant dense<0.000000e+00> : vector<16x32xf32>
    %3 = tpu.matmul %1, %2, %cst {dimension_numbers = #tpu.dot_dimension_numbers<[1], [0], [0], [1], [0, 0, 1, 1], [], []>} : vector<16x48xf32>, vector<48x32xf32>, vector<16x32xf32> -> vector<16x32xf32>
    %c0_4 = arith.constant 0 : index
    %c0_5 = arith.constant 0 : index
    %4 = vector.load %arg5[%c0_4, %c0_5] : memref<1x32xf32, #tpu.memory_space<vmem>>, vector<1x32xf32>
    %5 = vector.broadcast %4 : vector<1x32xf32> to vector<16x32xf32>
    %6 = arith.addf %3, %5 : vector<16x32xf32>
    %7 = math.tanh %6 : vector<16x32xf32>
    %cst_6 = arith.constant dense<0.000000e+00> : vector<32xf32>
    %8 = vector.multi_reduction <add>, %7, %cst_6 [0] : vector<16x32xf32> to vector<32xf32>
    %9 = vector.shape_cast %8 : vector<32xf32> to vector<1x32xf32>
    %cst_7 = arith.constant 1.600000e+01 : f32
    %10 = vector.broadcast %cst_7 : f32 to vector<1x32xf32>
    %11 = arith.divf %9, %10 : vector<1x32xf32>
    %c0_8 = arith.constant 0 : index
    %c0_9 = arith.constant 0 : index
    %12 = vector.load %arg6[%c0_8, %c0_9] : memref<32x320xf32, #tpu.memory_space<vmem>>, vector<32x320xf32>
    %cst_10 = arith.constant dense<0.000000e+00> : vector<1x320xf32>
    %13 = tpu.matmul %11, %12, %cst_10 {dimension_numbers = #tpu.dot_dimension_numbers<[1], [0], [0], [1], [0, 0, 1, 1], [], []>} : vector<1x32xf32>, vector<32x320xf32>, vector<1x320xf32> -> vector<1x320xf32>
    %c0_11 = arith.constant 0 : index
    %c0_12 = arith.constant 0 : index
    %14 = vector.load %arg7[%c0_11, %c0_12] : memref<1x320xf32, #tpu.memory_space<vmem>>, vector<1x320xf32>
    %15 = arith.addf %13, %14 : vector<1x320xf32>
    %16 = vector.extract_strided_slice %15 {offsets = [0, 0], sizes = [1, 32], strides = [1, 1]} : vector<1x320xf32> to vector<1x32xf32>
    %17 = vector.extract_strided_slice %15 {offsets = [0, 32], sizes = [1, 32], strides = [1, 1]} : vector<1x320xf32> to vector<1x32xf32>
    %18 = vector.extract_strided_slice %15 {offsets = [0, 64], sizes = [1, 32], strides = [1, 1]} : vector<1x320xf32> to vector<1x32xf32>
    %19 = vector.extract_strided_slice %15 {offsets = [0, 96], sizes = [1, 32], strides = [1, 1]} : vector<1x320xf32> to vector<1x32xf32>
    %20 = vector.extract_strided_slice %15 {offsets = [0, 192], sizes = [1, 128], strides = [1, 1]} : vector<1x320xf32> to vector<1x128xf32>
    %c0_13 = arith.constant 0 : index
    %c0_14 = arith.constant 0 : index
    %21 = vector.load %arg8[%c0_13, %c0_14] : memref<32x4xf32, #tpu.memory_space<vmem>>, vector<32x4xf32>
    %cst_15 = arith.constant dense<0.000000e+00> : vector<16x4xf32>
    %22 = tpu.matmul %7, %21, %cst_15 {dimension_numbers = #tpu.dot_dimension_numbers<[1], [0], [0], [1], [0, 0, 1, 1], [], []>} : vector<16x32xf32>, vector<32x4xf32>, vector<16x4xf32> -> vector<16x4xf32>
    %c0_16 = arith.constant 0 : index
    %c0_17 = arith.constant 0 : index
    %23 = vector.load %arg9[%c0_16, %c0_17] : memref<1x4xf32, #tpu.memory_space<vmem>>, vector<1x4xf32>
    %24 = vector.broadcast %23 : vector<1x4xf32> to vector<16x4xf32>
    %25 = arith.addf %22, %24 : vector<16x4xf32>
    %cst_18 = arith.constant dense<0xFF800000> : vector<4xf32>
    %26 = vector.multi_reduction <maximumf>, %25, %cst_18 [0] : vector<16x4xf32> to vector<4xf32>
    %27 = vector.shape_cast %26 : vector<4xf32> to vector<1x4xf32>
    %28 = vector.broadcast %27 : vector<1x4xf32> to vector<16x4xf32>
    %29 = arith.subf %25, %28 : vector<16x4xf32>
    %30 = math.exp %29 : vector<16x4xf32>
    %cst_19 = arith.constant dense<0.000000e+00> : vector<4xf32>
    %31 = vector.multi_reduction <add>, %30, %cst_19 [0] : vector<16x4xf32> to vector<4xf32>
    %32 = vector.shape_cast %31 : vector<4xf32> to vector<1x4xf32>
    %33 = tpu.reciprocal %32 {approx = true} : vector<1x4xf32> -> vector<1x4xf32>
    %34 = vector.broadcast %33 : vector<1x4xf32> to vector<16x4xf32>
    %35 = arith.mulf %30, %34 : vector<16x4xf32>
    %c0_20 = arith.constant 0 : index
    %c0_21 = arith.constant 0 : index
    %36 = vector.load %arg2[%c0_20, %c0_21] : memref<16x2xf32, #tpu.memory_space<vmem>>, vector<16x1xf32>
    %37 = vector.broadcast %36 : vector<16x1xf32> to vector<16x4xf32>
    %38 = arith.mulf %35, %37 : vector<16x4xf32>
    %cst_22 = arith.constant dense<0.000000e+00> : vector<4xf32>
    %39 = vector.multi_reduction <add>, %38, %cst_22 [0] : vector<16x4xf32> to vector<4xf32>
    %40 = vector.shape_cast %39 : vector<4xf32> to vector<1x4xf32>
    %c0_23 = arith.constant 0 : index
    %c1 = arith.constant 1 : index
    %41 = vector.load %arg2[%c0_23, %c1] : memref<16x2xf32, #tpu.memory_space<vmem>>, vector<16x1xf32>
    %42 = vector.broadcast %41 : vector<16x1xf32> to vector<16x4xf32>
    %43 = arith.mulf %35, %42 : vector<16x4xf32>
    %cst_24 = arith.constant dense<0.000000e+00> : vector<4xf32>
    %44 = vector.multi_reduction <add>, %43, %cst_24 [0] : vector<16x4xf32> to vector<4xf32>
    %45 = vector.shape_cast %44 : vector<4xf32> to vector<1x4xf32>
    %cst_25 = arith.constant dense<0.000000e+00> : vector<4xf32>
    %46 = vector.multi_reduction <add>, %25, %cst_25 [0] : vector<16x4xf32> to vector<4xf32>
    %47 = vector.shape_cast %46 : vector<4xf32> to vector<1x4xf32>
    %cst_26 = arith.constant 1.600000e+01 : f32
    %48 = vector.broadcast %cst_26 : f32 to vector<1x4xf32>
    %49 = arith.divf %47, %48 : vector<1x4xf32>
    %cst_27 = arith.constant 2.000000e+00 : f32
    %50 = vector.broadcast %cst_27 : f32 to vector<1x4xf32>
    %51 = arith.mulf %40, %50 : vector<1x4xf32>
    %cst_28 = arith.constant 2.000000e+00 : f32
    %52 = vector.broadcast %cst_28 : f32 to vector<1x4xf32>
    %53 = arith.mulf %45, %52 : vector<1x4xf32>
    %54 = tpu.concatenate %51, %53, %49 in 1 : vector<1x4xf32>, vector<1x4xf32>, vector<1x4xf32> -> vector<1x12xf32>
    %c0_29 = arith.constant 0 : index
    %c0_30 = arith.constant 0 : index
    %55 = vector.load %arg10[%c0_29, %c0_30] : memref<128x43xf32, #tpu.memory_space<vmem>>, vector<128x43xf32>
    %cst_31 = arith.constant dense<0.000000e+00> : vector<1x43xf32>
    %56 = tpu.matmul %20, %55, %cst_31 {dimension_numbers = #tpu.dot_dimension_numbers<[1], [0], [0], [1], [0, 0, 1, 1], [], []>} : vector<1x128xf32>, vector<128x43xf32>, vector<1x43xf32> -> vector<1x43xf32>
    %c0_32 = arith.constant 0 : index
    %c0_33 = arith.constant 0 : index
    %57 = vector.load %arg11[%c0_32, %c0_33] : memref<32x43xf32, #tpu.memory_space<vmem>>, vector<32x43xf32>
    %cst_34 = arith.constant dense<0.000000e+00> : vector<1x43xf32>
    %58 = tpu.matmul %16, %57, %cst_34 {dimension_numbers = #tpu.dot_dimension_numbers<[1], [0], [0], [1], [0, 0, 1, 1], [], []>} : vector<1x32xf32>, vector<32x43xf32>, vector<1x43xf32> -> vector<1x43xf32>
    %59 = arith.addf %56, %58 : vector<1x43xf32>
    %c0_35 = arith.constant 0 : index
    %c0_36 = arith.constant 0 : index
    %60 = vector.load %arg12[%c0_35, %c0_36] : memref<32x43xf32, #tpu.memory_space<vmem>>, vector<32x43xf32>
    %cst_37 = arith.constant dense<0.000000e+00> : vector<1x43xf32>
    %61 = tpu.matmul %17, %60, %cst_37 {dimension_numbers = #tpu.dot_dimension_numbers<[1], [0], [0], [1], [0, 0, 1, 1], [], []>} : vector<1x32xf32>, vector<32x43xf32>, vector<1x43xf32> -> vector<1x43xf32>
    %62 = arith.addf %59, %61 : vector<1x43xf32>
    %c0_38 = arith.constant 0 : index
    %c0_39 = arith.constant 0 : index
    %63 = vector.load %arg13[%c0_38, %c0_39] : memref<12x43xf32, #tpu.memory_space<vmem>>, vector<12x43xf32>
    %cst_40 = arith.constant dense<0.000000e+00> : vector<1x43xf32>
    %64 = tpu.matmul %54, %63, %cst_40 {dimension_numbers = #tpu.dot_dimension_numbers<[1], [0], [0], [1], [0, 0, 1, 1], [], []>} : vector<1x12xf32>, vector<12x43xf32>, vector<1x43xf32> -> vector<1x43xf32>
    %65 = arith.addf %62, %64 : vector<1x43xf32>
    %c0_41 = arith.constant 0 : index
    %c0_42 = arith.constant 0 : index
    %66 = vector.load %arg14[%c0_41, %c0_42] : memref<1x43xf32, #tpu.memory_space<vmem>>, vector<1x43xf32>
    %67 = arith.addf %65, %66 : vector<1x43xf32>
    %68 = vector.extract_strided_slice %67 {offsets = [0, 0], sizes = [1, 6], strides = [1, 1]} : vector<1x43xf32> to vector<1x6xf32>
    %69 = vector.extract_strided_slice %68 {offsets = [0, 0], sizes = [1, 3], strides = [1, 1]} : vector<1x6xf32> to vector<1x3xf32>
    %70 = vector.extract_strided_slice %68 {offsets = [0, 3], sizes = [1, 3], strides = [1, 1]} : vector<1x6xf32> to vector<1x3xf32>
    %71 = arith.mulf %69, %69 : vector<1x3xf32>
    %cst_43 = arith.constant dense<0.000000e+00> : vector<1xf32>
    %72 = vector.multi_reduction <add>, %71, %cst_43 [1] : vector<1x3xf32> to vector<1xf32>
    %73 = vector.shape_cast %72 : vector<1xf32> to vector<1x1xf32>
    %cst_44 = arith.constant 9.99999993E-9 : f32
    %74 = vector.broadcast %cst_44 : f32 to vector<1x1xf32>
    %75 = arith.addf %73, %74 : vector<1x1xf32>
    %76 = math.rsqrt %75 : vector<1x1xf32>
    %77 = vector.broadcast %76 : vector<1x1xf32> to vector<1x3xf32>
    %78 = arith.mulf %69, %77 : vector<1x3xf32>
    %79 = arith.mulf %78, %70 : vector<1x3xf32>
    %cst_45 = arith.constant dense<0.000000e+00> : vector<1xf32>
    %80 = vector.multi_reduction <add>, %79, %cst_45 [1] : vector<1x3xf32> to vector<1xf32>
    %81 = vector.shape_cast %80 : vector<1xf32> to vector<1x1xf32>
    %82 = vector.broadcast %81 : vector<1x1xf32> to vector<1x3xf32>
    %83 = arith.mulf %82, %78 : vector<1x3xf32>
    %84 = arith.subf %70, %83 : vector<1x3xf32>
    %85 = arith.mulf %84, %84 : vector<1x3xf32>
    %cst_46 = arith.constant dense<0.000000e+00> : vector<1xf32>
    %86 = vector.multi_reduction <add>, %85, %cst_46 [1] : vector<1x3xf32> to vector<1xf32>
    %87 = vector.shape_cast %86 : vector<1xf32> to vector<1x1xf32>
    %cst_47 = arith.constant 9.99999993E-9 : f32
    %88 = vector.broadcast %cst_47 : f32 to vector<1x1xf32>
    %89 = arith.addf %87, %88 : vector<1x1xf32>
    %90 = math.rsqrt %89 : vector<1x1xf32>
    %91 = vector.broadcast %90 : vector<1x1xf32> to vector<1x3xf32>
    %92 = arith.mulf %84, %91 : vector<1x3xf32>
    %93 = vector.extract_strided_slice %78 {offsets = [0, 0], sizes = [1, 1], strides = [1, 1]} : vector<1x3xf32> to vector<1x1xf32>
    %94 = vector.extract_strided_slice %78 {offsets = [0, 1], sizes = [1, 1], strides = [1, 1]} : vector<1x3xf32> to vector<1x1xf32>
    %95 = vector.extract_strided_slice %78 {offsets = [0, 2], sizes = [1, 1], strides = [1, 1]} : vector<1x3xf32> to vector<1x1xf32>
    %96 = vector.extract_strided_slice %92 {offsets = [0, 0], sizes = [1, 1], strides = [1, 1]} : vector<1x3xf32> to vector<1x1xf32>
    %97 = vector.extract_strided_slice %92 {offsets = [0, 1], sizes = [1, 1], strides = [1, 1]} : vector<1x3xf32> to vector<1x1xf32>
    %98 = vector.extract_strided_slice %92 {offsets = [0, 2], sizes = [1, 1], strides = [1, 1]} : vector<1x3xf32> to vector<1x1xf32>
    %99 = arith.mulf %94, %98 : vector<1x1xf32>
    %100 = arith.mulf %95, %97 : vector<1x1xf32>
    %101 = arith.subf %99, %100 : vector<1x1xf32>
    %102 = arith.mulf %95, %96 : vector<1x1xf32>
    %103 = arith.mulf %93, %98 : vector<1x1xf32>
    %104 = arith.subf %102, %103 : vector<1x1xf32>
    %105 = arith.mulf %93, %97 : vector<1x1xf32>
    %106 = arith.mulf %94, %96 : vector<1x1xf32>
    %107 = arith.subf %105, %106 : vector<1x1xf32>
    %108 = arith.addf %93, %97 : vector<1x1xf32>
    %109 = arith.addf %108, %107 : vector<1x1xf32>
    %cst_48 = arith.constant 1.000000e+00 : f32
    %110 = vector.broadcast %cst_48 : f32 to vector<1x1xf32>
    %111 = arith.subf %109, %110 : vector<1x1xf32>
    %cst_49 = arith.constant 5.000000e-01 : f32
    %112 = vector.broadcast %cst_49 : f32 to vector<1x1xf32>
    %113 = arith.mulf %111, %112 : vector<1x1xf32>
    %cst_50 = arith.constant -0.999998986 : f32
    %cst_51 = arith.constant 0.999998986 : f32
    %114 = vector.broadcast %cst_50 : f32 to vector<1x1xf32>
    %115 = arith.maximumf %114, %113 : vector<1x1xf32>
    %116 = vector.broadcast %cst_51 : f32 to vector<1x1xf32>
    %117 = arith.minimumf %116, %115 : vector<1x1xf32>
    %118 = math.absf %117 : vector<1x1xf32>
    %cst_52 = arith.constant 5.000000e-01 : f32
    %119 = vector.broadcast %cst_52 : f32 to vector<1x1xf32>
    %120 = arith.cmpf ogt, %118, %119 : vector<1x1xf32>
    %cst_53 = arith.constant 1.000000e+00 : f32
    %121 = vector.broadcast %cst_53 : f32 to vector<1x1xf32>
    %122 = arith.subf %121, %118 : vector<1x1xf32>
    %cst_54 = arith.constant 5.000000e-01 : f32
    %123 = vector.broadcast %cst_54 : f32 to vector<1x1xf32>
    %124 = arith.mulf %123, %122 : vector<1x1xf32>
    %125 = arith.mulf %118, %118 : vector<1x1xf32>
    %126 = arith.select %120, %124, %125 : vector<1x1xi1>, vector<1x1xf32>
    %cst_55 = arith.constant 1.000000e+00 : f32
    %127 = vector.broadcast %cst_55 : f32 to vector<1x1xf32>
    %128 = arith.subf %127, %118 : vector<1x1xf32>
    %cst_56 = arith.constant 5.000000e-01 : f32
    %129 = vector.broadcast %cst_56 : f32 to vector<1x1xf32>
    %130 = arith.mulf %129, %128 : vector<1x1xf32>
    %cst_57 = arith.constant 0.000000e+00 : f32
    %131 = vector.broadcast %cst_57 : f32 to vector<1x1xf32>
    %132 = arith.maximumf %130, %131 : vector<1x1xf32>
    %133 = math.sqrt %132 : vector<1x1xf32>
    %134 = arith.select %120, %133, %118 : vector<1x1xi1>, vector<1x1xf32>
    %cst_58 = arith.constant 4.216320e-02 : f32
    %135 = vector.broadcast %cst_58 : f32 to vector<1x1xf32>
    %136 = arith.mulf %135, %126 : vector<1x1xf32>
    %cst_59 = arith.constant 0.024181312 : f32
    %137 = vector.broadcast %cst_59 : f32 to vector<1x1xf32>
    %138 = arith.addf %136, %137 : vector<1x1xf32>
    %139 = arith.mulf %138, %126 : vector<1x1xf32>
    %cst_60 = arith.constant 0.0454700254 : f32
    %140 = vector.broadcast %cst_60 : f32 to vector<1x1xf32>
    %141 = arith.addf %139, %140 : vector<1x1xf32>
    %142 = arith.mulf %141, %126 : vector<1x1xf32>
    %cst_61 = arith.constant 0.0749530047 : f32
    %143 = vector.broadcast %cst_61 : f32 to vector<1x1xf32>
    %144 = arith.addf %142, %143 : vector<1x1xf32>
    %145 = arith.mulf %144, %126 : vector<1x1xf32>
    %cst_62 = arith.constant 0.166667521 : f32
    %146 = vector.broadcast %cst_62 : f32 to vector<1x1xf32>
    %147 = arith.addf %145, %146 : vector<1x1xf32>
    %148 = arith.mulf %134, %126 : vector<1x1xf32>
    %149 = arith.mulf %148, %147 : vector<1x1xf32>
    %150 = arith.addf %134, %149 : vector<1x1xf32>
    %cst_63 = arith.constant 2.000000e+00 : f32
    %151 = vector.broadcast %cst_63 : f32 to vector<1x1xf32>
    %152 = arith.mulf %151, %150 : vector<1x1xf32>
    %cst_64 = arith.constant 1.57079637 : f32
    %153 = vector.broadcast %cst_64 : f32 to vector<1x1xf32>
    %154 = arith.subf %153, %152 : vector<1x1xf32>
    %155 = arith.select %120, %154, %150 : vector<1x1xi1>, vector<1x1xf32>
    %cst_65 = arith.constant 0.000000e+00 : f32
    %156 = vector.broadcast %cst_65 : f32 to vector<1x1xf32>
    %157 = arith.cmpf olt, %117, %156 : vector<1x1xf32>
    %cst_66 = arith.constant 0.000000e+00 : f32
    %158 = vector.broadcast %cst_66 : f32 to vector<1x1xf32>
    %159 = arith.subf %158, %155 : vector<1x1xf32>
    %160 = arith.select %157, %159, %155 : vector<1x1xi1>, vector<1x1xf32>
    %cst_67 = arith.constant 1.57079637 : f32
    %161 = vector.broadcast %cst_67 : f32 to vector<1x1xf32>
    %162 = arith.subf %161, %160 : vector<1x1xf32>
    %163 = arith.mulf %117, %117 : vector<1x1xf32>
    %cst_68 = arith.constant 1.000000e+00 : f32
    %164 = vector.broadcast %cst_68 : f32 to vector<1x1xf32>
    %165 = arith.subf %164, %163 : vector<1x1xf32>
    %cst_69 = arith.constant 9.99999996E-13 : f32
    %166 = vector.broadcast %cst_69 : f32 to vector<1x1xf32>
    %167 = arith.maximumf %165, %166 : vector<1x1xf32>
    %168 = math.sqrt %167 : vector<1x1xf32>
    %cst_70 = arith.constant 9.99999997E-7 : f32
    %169 = vector.broadcast %cst_70 : f32 to vector<1x1xf32>
    %170 = arith.maximumf %168, %169 : vector<1x1xf32>
    %cst_71 = arith.constant 2.000000e+00 : f32
    %171 = vector.broadcast %cst_71 : f32 to vector<1x1xf32>
    %172 = arith.mulf %171, %170 : vector<1x1xf32>
    %173 = arith.divf %162, %172 : vector<1x1xf32>
    %174 = arith.subf %98, %104 : vector<1x1xf32>
    %175 = arith.subf %101, %95 : vector<1x1xf32>
    %176 = arith.subf %94, %96 : vector<1x1xf32>
    %177 = tpu.concatenate %174, %175, %176 in 1 : vector<1x1xf32>, vector<1x1xf32>, vector<1x1xf32> -> vector<1x3xf32>
    %178 = vector.broadcast %173 : vector<1x1xf32> to vector<1x3xf32>
    %179 = arith.mulf %177, %178 : vector<1x3xf32>
    %180 = vector.extract_strided_slice %67 {offsets = [0, 6], sizes = [1, 6], strides = [1, 1]} : vector<1x43xf32> to vector<1x6xf32>
    %181 = vector.extract_strided_slice %180 {offsets = [0, 0], sizes = [1, 3], strides = [1, 1]} : vector<1x6xf32> to vector<1x3xf32>
    %182 = vector.extract_strided_slice %180 {offsets = [0, 3], sizes = [1, 3], strides = [1, 1]} : vector<1x6xf32> to vector<1x3xf32>
    %183 = arith.mulf %181, %181 : vector<1x3xf32>
    %cst_72 = arith.constant dense<0.000000e+00> : vector<1xf32>
    %184 = vector.multi_reduction <add>, %183, %cst_72 [1] : vector<1x3xf32> to vector<1xf32>
    %185 = vector.shape_cast %184 : vector<1xf32> to vector<1x1xf32>
    %cst_73 = arith.constant 9.99999993E-9 : f32
    %186 = vector.broadcast %cst_73 : f32 to vector<1x1xf32>
    %187 = arith.addf %185, %186 : vector<1x1xf32>
    %188 = math.rsqrt %187 : vector<1x1xf32>
    %189 = vector.broadcast %188 : vector<1x1xf32> to vector<1x3xf32>
    %190 = arith.mulf %181, %189 : vector<1x3xf32>
    %191 = arith.mulf %190, %182 : vector<1x3xf32>
    %cst_74 = arith.constant dense<0.000000e+00> : vector<1xf32>
    %192 = vector.multi_reduction <add>, %191, %cst_74 [1] : vector<1x3xf32> to vector<1xf32>
    %193 = vector.shape_cast %192 : vector<1xf32> to vector<1x1xf32>
    %194 = vector.broadcast %193 : vector<1x1xf32> to vector<1x3xf32>
    %195 = arith.mulf %194, %190 : vector<1x3xf32>
    %196 = arith.subf %182, %195 : vector<1x3xf32>
    %197 = arith.mulf %196, %196 : vector<1x3xf32>
    %cst_75 = arith.constant dense<0.000000e+00> : vector<1xf32>
    %198 = vector.multi_reduction <add>, %197, %cst_75 [1] : vector<1x3xf32> to vector<1xf32>
    %199 = vector.shape_cast %198 : vector<1xf32> to vector<1x1xf32>
    %cst_76 = arith.constant 9.99999993E-9 : f32
    %200 = vector.broadcast %cst_76 : f32 to vector<1x1xf32>
    %201 = arith.addf %199, %200 : vector<1x1xf32>
    %202 = math.rsqrt %201 : vector<1x1xf32>
    %203 = vector.broadcast %202 : vector<1x1xf32> to vector<1x3xf32>
    %204 = arith.mulf %196, %203 : vector<1x3xf32>
    %205 = vector.extract_strided_slice %190 {offsets = [0, 0], sizes = [1, 1], strides = [1, 1]} : vector<1x3xf32> to vector<1x1xf32>
    %206 = vector.extract_strided_slice %190 {offsets = [0, 1], sizes = [1, 1], strides = [1, 1]} : vector<1x3xf32> to vector<1x1xf32>
    %207 = vector.extract_strided_slice %190 {offsets = [0, 2], sizes = [1, 1], strides = [1, 1]} : vector<1x3xf32> to vector<1x1xf32>
    %208 = vector.extract_strided_slice %204 {offsets = [0, 0], sizes = [1, 1], strides = [1, 1]} : vector<1x3xf32> to vector<1x1xf32>
    %209 = vector.extract_strided_slice %204 {offsets = [0, 1], sizes = [1, 1], strides = [1, 1]} : vector<1x3xf32> to vector<1x1xf32>
    %210 = vector.extract_strided_slice %204 {offsets = [0, 2], sizes = [1, 1], strides = [1, 1]} : vector<1x3xf32> to vector<1x1xf32>
    %211 = arith.mulf %206, %210 : vector<1x1xf32>
    %212 = arith.mulf %207, %209 : vector<1x1xf32>
    %213 = arith.subf %211, %212 : vector<1x1xf32>
    %214 = arith.mulf %207, %208 : vector<1x1xf32>
    %215 = arith.mulf %205, %210 : vector<1x1xf32>
    %216 = arith.subf %214, %215 : vector<1x1xf32>
    %217 = arith.mulf %205, %209 : vector<1x1xf32>
    %218 = arith.mulf %206, %208 : vector<1x1xf32>
    %219 = arith.subf %217, %218 : vector<1x1xf32>
    %220 = arith.addf %205, %209 : vector<1x1xf32>
    %221 = arith.addf %220, %219 : vector<1x1xf32>
    %cst_77 = arith.constant 1.000000e+00 : f32
    %222 = vector.broadcast %cst_77 : f32 to vector<1x1xf32>
    %223 = arith.subf %221, %222 : vector<1x1xf32>
    %cst_78 = arith.constant 5.000000e-01 : f32
    %224 = vector.broadcast %cst_78 : f32 to vector<1x1xf32>
    %225 = arith.mulf %223, %224 : vector<1x1xf32>
    %cst_79 = arith.constant -0.999998986 : f32
    %cst_80 = arith.constant 0.999998986 : f32
    %226 = vector.broadcast %cst_79 : f32 to vector<1x1xf32>
    %227 = arith.maximumf %226, %225 : vector<1x1xf32>
    %228 = vector.broadcast %cst_80 : f32 to vector<1x1xf32>
    %229 = arith.minimumf %228, %227 : vector<1x1xf32>
    %230 = math.absf %229 : vector<1x1xf32>
    %cst_81 = arith.constant 5.000000e-01 : f32
    %231 = vector.broadcast %cst_81 : f32 to vector<1x1xf32>
    %232 = arith.cmpf ogt, %230, %231 : vector<1x1xf32>
    %cst_82 = arith.constant 1.000000e+00 : f32
    %233 = vector.broadcast %cst_82 : f32 to vector<1x1xf32>
    %234 = arith.subf %233, %230 : vector<1x1xf32>
    %cst_83 = arith.constant 5.000000e-01 : f32
    %235 = vector.broadcast %cst_83 : f32 to vector<1x1xf32>
    %236 = arith.mulf %235, %234 : vector<1x1xf32>
    %237 = arith.mulf %230, %230 : vector<1x1xf32>
    %238 = arith.select %232, %236, %237 : vector<1x1xi1>, vector<1x1xf32>
    %cst_84 = arith.constant 1.000000e+00 : f32
    %239 = vector.broadcast %cst_84 : f32 to vector<1x1xf32>
    %240 = arith.subf %239, %230 : vector<1x1xf32>
    %cst_85 = arith.constant 5.000000e-01 : f32
    %241 = vector.broadcast %cst_85 : f32 to vector<1x1xf32>
    %242 = arith.mulf %241, %240 : vector<1x1xf32>
    %cst_86 = arith.constant 0.000000e+00 : f32
    %243 = vector.broadcast %cst_86 : f32 to vector<1x1xf32>
    %244 = arith.maximumf %242, %243 : vector<1x1xf32>
    %245 = math.sqrt %244 : vector<1x1xf32>
    %246 = arith.select %232, %245, %230 : vector<1x1xi1>, vector<1x1xf32>
    %cst_87 = arith.constant 4.216320e-02 : f32
    %247 = vector.broadcast %cst_87 : f32 to vector<1x1xf32>
    %248 = arith.mulf %247, %238 : vector<1x1xf32>
    %cst_88 = arith.constant 0.024181312 : f32
    %249 = vector.broadcast %cst_88 : f32 to vector<1x1xf32>
    %250 = arith.addf %248, %249 : vector<1x1xf32>
    %251 = arith.mulf %250, %238 : vector<1x1xf32>
    %cst_89 = arith.constant 0.0454700254 : f32
    %252 = vector.broadcast %cst_89 : f32 to vector<1x1xf32>
    %253 = arith.addf %251, %252 : vector<1x1xf32>
    %254 = arith.mulf %253, %238 : vector<1x1xf32>
    %cst_90 = arith.constant 0.0749530047 : f32
    %255 = vector.broadcast %cst_90 : f32 to vector<1x1xf32>
    %256 = arith.addf %254, %255 : vector<1x1xf32>
    %257 = arith.mulf %256, %238 : vector<1x1xf32>
    %cst_91 = arith.constant 0.166667521 : f32
    %258 = vector.broadcast %cst_91 : f32 to vector<1x1xf32>
    %259 = arith.addf %257, %258 : vector<1x1xf32>
    %260 = arith.mulf %246, %238 : vector<1x1xf32>
    %261 = arith.mulf %260, %259 : vector<1x1xf32>
    %262 = arith.addf %246, %261 : vector<1x1xf32>
    %cst_92 = arith.constant 2.000000e+00 : f32
    %263 = vector.broadcast %cst_92 : f32 to vector<1x1xf32>
    %264 = arith.mulf %263, %262 : vector<1x1xf32>
    %cst_93 = arith.constant 1.57079637 : f32
    %265 = vector.broadcast %cst_93 : f32 to vector<1x1xf32>
    %266 = arith.subf %265, %264 : vector<1x1xf32>
    %267 = arith.select %232, %266, %262 : vector<1x1xi1>, vector<1x1xf32>
    %cst_94 = arith.constant 0.000000e+00 : f32
    %268 = vector.broadcast %cst_94 : f32 to vector<1x1xf32>
    %269 = arith.cmpf olt, %229, %268 : vector<1x1xf32>
    %cst_95 = arith.constant 0.000000e+00 : f32
    %270 = vector.broadcast %cst_95 : f32 to vector<1x1xf32>
    %271 = arith.subf %270, %267 : vector<1x1xf32>
    %272 = arith.select %269, %271, %267 : vector<1x1xi1>, vector<1x1xf32>
    %cst_96 = arith.constant 1.57079637 : f32
    %273 = vector.broadcast %cst_96 : f32 to vector<1x1xf32>
    %274 = arith.subf %273, %272 : vector<1x1xf32>
    %275 = arith.mulf %229, %229 : vector<1x1xf32>
    %cst_97 = arith.constant 1.000000e+00 : f32
    %276 = vector.broadcast %cst_97 : f32 to vector<1x1xf32>
    %277 = arith.subf %276, %275 : vector<1x1xf32>
    %cst_98 = arith.constant 9.99999996E-13 : f32
    %278 = vector.broadcast %cst_98 : f32 to vector<1x1xf32>
    %279 = arith.maximumf %277, %278 : vector<1x1xf32>
    %280 = math.sqrt %279 : vector<1x1xf32>
    %cst_99 = arith.constant 9.99999997E-7 : f32
    %281 = vector.broadcast %cst_99 : f32 to vector<1x1xf32>
    %282 = arith.maximumf %280, %281 : vector<1x1xf32>
    %cst_100 = arith.constant 2.000000e+00 : f32
    %283 = vector.broadcast %cst_100 : f32 to vector<1x1xf32>
    %284 = arith.mulf %283, %282 : vector<1x1xf32>
    %285 = arith.divf %274, %284 : vector<1x1xf32>
    %286 = arith.subf %210, %216 : vector<1x1xf32>
    %287 = arith.subf %213, %207 : vector<1x1xf32>
    %288 = arith.subf %206, %208 : vector<1x1xf32>
    %289 = tpu.concatenate %286, %287, %288 in 1 : vector<1x1xf32>, vector<1x1xf32>, vector<1x1xf32> -> vector<1x3xf32>
    %290 = vector.broadcast %285 : vector<1x1xf32> to vector<1x3xf32>
    %291 = arith.mulf %289, %290 : vector<1x3xf32>
    %292 = vector.extract_strided_slice %67 {offsets = [0, 12], sizes = [1, 6], strides = [1, 1]} : vector<1x43xf32> to vector<1x6xf32>
    %293 = vector.extract_strided_slice %292 {offsets = [0, 0], sizes = [1, 3], strides = [1, 1]} : vector<1x6xf32> to vector<1x3xf32>
    %294 = vector.extract_strided_slice %292 {offsets = [0, 3], sizes = [1, 3], strides = [1, 1]} : vector<1x6xf32> to vector<1x3xf32>
    %295 = arith.mulf %293, %293 : vector<1x3xf32>
    %cst_101 = arith.constant dense<0.000000e+00> : vector<1xf32>
    %296 = vector.multi_reduction <add>, %295, %cst_101 [1] : vector<1x3xf32> to vector<1xf32>
    %297 = vector.shape_cast %296 : vector<1xf32> to vector<1x1xf32>
    %cst_102 = arith.constant 9.99999993E-9 : f32
    %298 = vector.broadcast %cst_102 : f32 to vector<1x1xf32>
    %299 = arith.addf %297, %298 : vector<1x1xf32>
    %300 = math.rsqrt %299 : vector<1x1xf32>
    %301 = vector.broadcast %300 : vector<1x1xf32> to vector<1x3xf32>
    %302 = arith.mulf %293, %301 : vector<1x3xf32>
    %303 = arith.mulf %302, %294 : vector<1x3xf32>
    %cst_103 = arith.constant dense<0.000000e+00> : vector<1xf32>
    %304 = vector.multi_reduction <add>, %303, %cst_103 [1] : vector<1x3xf32> to vector<1xf32>
    %305 = vector.shape_cast %304 : vector<1xf32> to vector<1x1xf32>
    %306 = vector.broadcast %305 : vector<1x1xf32> to vector<1x3xf32>
    %307 = arith.mulf %306, %302 : vector<1x3xf32>
    %308 = arith.subf %294, %307 : vector<1x3xf32>
    %309 = arith.mulf %308, %308 : vector<1x3xf32>
    %cst_104 = arith.constant dense<0.000000e+00> : vector<1xf32>
    %310 = vector.multi_reduction <add>, %309, %cst_104 [1] : vector<1x3xf32> to vector<1xf32>
    %311 = vector.shape_cast %310 : vector<1xf32> to vector<1x1xf32>
    %cst_105 = arith.constant 9.99999993E-9 : f32
    %312 = vector.broadcast %cst_105 : f32 to vector<1x1xf32>
    %313 = arith.addf %311, %312 : vector<1x1xf32>
    %314 = math.rsqrt %313 : vector<1x1xf32>
    %315 = vector.broadcast %314 : vector<1x1xf32> to vector<1x3xf32>
    %316 = arith.mulf %308, %315 : vector<1x3xf32>
    %317 = vector.extract_strided_slice %302 {offsets = [0, 0], sizes = [1, 1], strides = [1, 1]} : vector<1x3xf32> to vector<1x1xf32>
    %318 = vector.extract_strided_slice %302 {offsets = [0, 1], sizes = [1, 1], strides = [1, 1]} : vector<1x3xf32> to vector<1x1xf32>
    %319 = vector.extract_strided_slice %302 {offsets = [0, 2], sizes = [1, 1], strides = [1, 1]} : vector<1x3xf32> to vector<1x1xf32>
    %320 = vector.extract_strided_slice %316 {offsets = [0, 0], sizes = [1, 1], strides = [1, 1]} : vector<1x3xf32> to vector<1x1xf32>
    %321 = vector.extract_strided_slice %316 {offsets = [0, 1], sizes = [1, 1], strides = [1, 1]} : vector<1x3xf32> to vector<1x1xf32>
    %322 = vector.extract_strided_slice %316 {offsets = [0, 2], sizes = [1, 1], strides = [1, 1]} : vector<1x3xf32> to vector<1x1xf32>
    %323 = arith.mulf %318, %322 : vector<1x1xf32>
    %324 = arith.mulf %319, %321 : vector<1x1xf32>
    %325 = arith.subf %323, %324 : vector<1x1xf32>
    %326 = arith.mulf %319, %320 : vector<1x1xf32>
    %327 = arith.mulf %317, %322 : vector<1x1xf32>
    %328 = arith.subf %326, %327 : vector<1x1xf32>
    %329 = arith.mulf %317, %321 : vector<1x1xf32>
    %330 = arith.mulf %318, %320 : vector<1x1xf32>
    %331 = arith.subf %329, %330 : vector<1x1xf32>
    %332 = arith.addf %317, %321 : vector<1x1xf32>
    %333 = arith.addf %332, %331 : vector<1x1xf32>
    %cst_106 = arith.constant 1.000000e+00 : f32
    %334 = vector.broadcast %cst_106 : f32 to vector<1x1xf32>
    %335 = arith.subf %333, %334 : vector<1x1xf32>
    %cst_107 = arith.constant 5.000000e-01 : f32
    %336 = vector.broadcast %cst_107 : f32 to vector<1x1xf32>
    %337 = arith.mulf %335, %336 : vector<1x1xf32>
    %cst_108 = arith.constant -0.999998986 : f32
    %cst_109 = arith.constant 0.999998986 : f32
    %338 = vector.broadcast %cst_108 : f32 to vector<1x1xf32>
    %339 = arith.maximumf %338, %337 : vector<1x1xf32>
    %340 = vector.broadcast %cst_109 : f32 to vector<1x1xf32>
    %341 = arith.minimumf %340, %339 : vector<1x1xf32>
    %342 = math.absf %341 : vector<1x1xf32>
    %cst_110 = arith.constant 5.000000e-01 : f32
    %343 = vector.broadcast %cst_110 : f32 to vector<1x1xf32>
    %344 = arith.cmpf ogt, %342, %343 : vector<1x1xf32>
    %cst_111 = arith.constant 1.000000e+00 : f32
    %345 = vector.broadcast %cst_111 : f32 to vector<1x1xf32>
    %346 = arith.subf %345, %342 : vector<1x1xf32>
    %cst_112 = arith.constant 5.000000e-01 : f32
    %347 = vector.broadcast %cst_112 : f32 to vector<1x1xf32>
    %348 = arith.mulf %347, %346 : vector<1x1xf32>
    %349 = arith.mulf %342, %342 : vector<1x1xf32>
    %350 = arith.select %344, %348, %349 : vector<1x1xi1>, vector<1x1xf32>
    %cst_113 = arith.constant 1.000000e+00 : f32
    %351 = vector.broadcast %cst_113 : f32 to vector<1x1xf32>
    %352 = arith.subf %351, %342 : vector<1x1xf32>
    %cst_114 = arith.constant 5.000000e-01 : f32
    %353 = vector.broadcast %cst_114 : f32 to vector<1x1xf32>
    %354 = arith.mulf %353, %352 : vector<1x1xf32>
    %cst_115 = arith.constant 0.000000e+00 : f32
    %355 = vector.broadcast %cst_115 : f32 to vector<1x1xf32>
    %356 = arith.maximumf %354, %355 : vector<1x1xf32>
    %357 = math.sqrt %356 : vector<1x1xf32>
    %358 = arith.select %344, %357, %342 : vector<1x1xi1>, vector<1x1xf32>
    %cst_116 = arith.constant 4.216320e-02 : f32
    %359 = vector.broadcast %cst_116 : f32 to vector<1x1xf32>
    %360 = arith.mulf %359, %350 : vector<1x1xf32>
    %cst_117 = arith.constant 0.024181312 : f32
    %361 = vector.broadcast %cst_117 : f32 to vector<1x1xf32>
    %362 = arith.addf %360, %361 : vector<1x1xf32>
    %363 = arith.mulf %362, %350 : vector<1x1xf32>
    %cst_118 = arith.constant 0.0454700254 : f32
    %364 = vector.broadcast %cst_118 : f32 to vector<1x1xf32>
    %365 = arith.addf %363, %364 : vector<1x1xf32>
    %366 = arith.mulf %365, %350 : vector<1x1xf32>
    %cst_119 = arith.constant 0.0749530047 : f32
    %367 = vector.broadcast %cst_119 : f32 to vector<1x1xf32>
    %368 = arith.addf %366, %367 : vector<1x1xf32>
    %369 = arith.mulf %368, %350 : vector<1x1xf32>
    %cst_120 = arith.constant 0.166667521 : f32
    %370 = vector.broadcast %cst_120 : f32 to vector<1x1xf32>
    %371 = arith.addf %369, %370 : vector<1x1xf32>
    %372 = arith.mulf %358, %350 : vector<1x1xf32>
    %373 = arith.mulf %372, %371 : vector<1x1xf32>
    %374 = arith.addf %358, %373 : vector<1x1xf32>
    %cst_121 = arith.constant 2.000000e+00 : f32
    %375 = vector.broadcast %cst_121 : f32 to vector<1x1xf32>
    %376 = arith.mulf %375, %374 : vector<1x1xf32>
    %cst_122 = arith.constant 1.57079637 : f32
    %377 = vector.broadcast %cst_122 : f32 to vector<1x1xf32>
    %378 = arith.subf %377, %376 : vector<1x1xf32>
    %379 = arith.select %344, %378, %374 : vector<1x1xi1>, vector<1x1xf32>
    %cst_123 = arith.constant 0.000000e+00 : f32
    %380 = vector.broadcast %cst_123 : f32 to vector<1x1xf32>
    %381 = arith.cmpf olt, %341, %380 : vector<1x1xf32>
    %cst_124 = arith.constant 0.000000e+00 : f32
    %382 = vector.broadcast %cst_124 : f32 to vector<1x1xf32>
    %383 = arith.subf %382, %379 : vector<1x1xf32>
    %384 = arith.select %381, %383, %379 : vector<1x1xi1>, vector<1x1xf32>
    %cst_125 = arith.constant 1.57079637 : f32
    %385 = vector.broadcast %cst_125 : f32 to vector<1x1xf32>
    %386 = arith.subf %385, %384 : vector<1x1xf32>
    %387 = arith.mulf %341, %341 : vector<1x1xf32>
    %cst_126 = arith.constant 1.000000e+00 : f32
    %388 = vector.broadcast %cst_126 : f32 to vector<1x1xf32>
    %389 = arith.subf %388, %387 : vector<1x1xf32>
    %cst_127 = arith.constant 9.99999996E-13 : f32
    %390 = vector.broadcast %cst_127 : f32 to vector<1x1xf32>
    %391 = arith.maximumf %389, %390 : vector<1x1xf32>
    %392 = math.sqrt %391 : vector<1x1xf32>
    %cst_128 = arith.constant 9.99999997E-7 : f32
    %393 = vector.broadcast %cst_128 : f32 to vector<1x1xf32>
    %394 = arith.maximumf %392, %393 : vector<1x1xf32>
    %cst_129 = arith.constant 2.000000e+00 : f32
    %395 = vector.broadcast %cst_129 : f32 to vector<1x1xf32>
    %396 = arith.mulf %395, %394 : vector<1x1xf32>
    %397 = arith.divf %386, %396 : vector<1x1xf32>
    %398 = arith.subf %322, %328 : vector<1x1xf32>
    %399 = arith.subf %325, %319 : vector<1x1xf32>
    %400 = arith.subf %318, %320 : vector<1x1xf32>
    %401 = tpu.concatenate %398, %399, %400 in 1 : vector<1x1xf32>, vector<1x1xf32>, vector<1x1xf32> -> vector<1x3xf32>
    %402 = vector.broadcast %397 : vector<1x1xf32> to vector<1x3xf32>
    %403 = arith.mulf %401, %402 : vector<1x3xf32>
    %404 = vector.extract_strided_slice %67 {offsets = [0, 18], sizes = [1, 6], strides = [1, 1]} : vector<1x43xf32> to vector<1x6xf32>
    %405 = vector.extract_strided_slice %404 {offsets = [0, 0], sizes = [1, 3], strides = [1, 1]} : vector<1x6xf32> to vector<1x3xf32>
    %406 = vector.extract_strided_slice %404 {offsets = [0, 3], sizes = [1, 3], strides = [1, 1]} : vector<1x6xf32> to vector<1x3xf32>
    %407 = arith.mulf %405, %405 : vector<1x3xf32>
    %cst_130 = arith.constant dense<0.000000e+00> : vector<1xf32>
    %408 = vector.multi_reduction <add>, %407, %cst_130 [1] : vector<1x3xf32> to vector<1xf32>
    %409 = vector.shape_cast %408 : vector<1xf32> to vector<1x1xf32>
    %cst_131 = arith.constant 9.99999993E-9 : f32
    %410 = vector.broadcast %cst_131 : f32 to vector<1x1xf32>
    %411 = arith.addf %409, %410 : vector<1x1xf32>
    %412 = math.rsqrt %411 : vector<1x1xf32>
    %413 = vector.broadcast %412 : vector<1x1xf32> to vector<1x3xf32>
    %414 = arith.mulf %405, %413 : vector<1x3xf32>
    %415 = arith.mulf %414, %406 : vector<1x3xf32>
    %cst_132 = arith.constant dense<0.000000e+00> : vector<1xf32>
    %416 = vector.multi_reduction <add>, %415, %cst_132 [1] : vector<1x3xf32> to vector<1xf32>
    %417 = vector.shape_cast %416 : vector<1xf32> to vector<1x1xf32>
    %418 = vector.broadcast %417 : vector<1x1xf32> to vector<1x3xf32>
    %419 = arith.mulf %418, %414 : vector<1x3xf32>
    %420 = arith.subf %406, %419 : vector<1x3xf32>
    %421 = arith.mulf %420, %420 : vector<1x3xf32>
    %cst_133 = arith.constant dense<0.000000e+00> : vector<1xf32>
    %422 = vector.multi_reduction <add>, %421, %cst_133 [1] : vector<1x3xf32> to vector<1xf32>
    %423 = vector.shape_cast %422 : vector<1xf32> to vector<1x1xf32>
    %cst_134 = arith.constant 9.99999993E-9 : f32
    %424 = vector.broadcast %cst_134 : f32 to vector<1x1xf32>
    %425 = arith.addf %423, %424 : vector<1x1xf32>
    %426 = math.rsqrt %425 : vector<1x1xf32>
    %427 = vector.broadcast %426 : vector<1x1xf32> to vector<1x3xf32>
    %428 = arith.mulf %420, %427 : vector<1x3xf32>
    %429 = vector.extract_strided_slice %414 {offsets = [0, 0], sizes = [1, 1], strides = [1, 1]} : vector<1x3xf32> to vector<1x1xf32>
    %430 = vector.extract_strided_slice %414 {offsets = [0, 1], sizes = [1, 1], strides = [1, 1]} : vector<1x3xf32> to vector<1x1xf32>
    %431 = vector.extract_strided_slice %414 {offsets = [0, 2], sizes = [1, 1], strides = [1, 1]} : vector<1x3xf32> to vector<1x1xf32>
    %432 = vector.extract_strided_slice %428 {offsets = [0, 0], sizes = [1, 1], strides = [1, 1]} : vector<1x3xf32> to vector<1x1xf32>
    %433 = vector.extract_strided_slice %428 {offsets = [0, 1], sizes = [1, 1], strides = [1, 1]} : vector<1x3xf32> to vector<1x1xf32>
    %434 = vector.extract_strided_slice %428 {offsets = [0, 2], sizes = [1, 1], strides = [1, 1]} : vector<1x3xf32> to vector<1x1xf32>
    %435 = arith.mulf %430, %434 : vector<1x1xf32>
    %436 = arith.mulf %431, %433 : vector<1x1xf32>
    %437 = arith.subf %435, %436 : vector<1x1xf32>
    %438 = arith.mulf %431, %432 : vector<1x1xf32>
    %439 = arith.mulf %429, %434 : vector<1x1xf32>
    %440 = arith.subf %438, %439 : vector<1x1xf32>
    %441 = arith.mulf %429, %433 : vector<1x1xf32>
    %442 = arith.mulf %430, %432 : vector<1x1xf32>
    %443 = arith.subf %441, %442 : vector<1x1xf32>
    %444 = arith.addf %429, %433 : vector<1x1xf32>
    %445 = arith.addf %444, %443 : vector<1x1xf32>
    %cst_135 = arith.constant 1.000000e+00 : f32
    %446 = vector.broadcast %cst_135 : f32 to vector<1x1xf32>
    %447 = arith.subf %445, %446 : vector<1x1xf32>
    %cst_136 = arith.constant 5.000000e-01 : f32
    %448 = vector.broadcast %cst_136 : f32 to vector<1x1xf32>
    %449 = arith.mulf %447, %448 : vector<1x1xf32>
    %cst_137 = arith.constant -0.999998986 : f32
    %cst_138 = arith.constant 0.999998986 : f32
    %450 = vector.broadcast %cst_137 : f32 to vector<1x1xf32>
    %451 = arith.maximumf %450, %449 : vector<1x1xf32>
    %452 = vector.broadcast %cst_138 : f32 to vector<1x1xf32>
    %453 = arith.minimumf %452, %451 : vector<1x1xf32>
    %454 = math.absf %453 : vector<1x1xf32>
    %cst_139 = arith.constant 5.000000e-01 : f32
    %455 = vector.broadcast %cst_139 : f32 to vector<1x1xf32>
    %456 = arith.cmpf ogt, %454, %455 : vector<1x1xf32>
    %cst_140 = arith.constant 1.000000e+00 : f32
    %457 = vector.broadcast %cst_140 : f32 to vector<1x1xf32>
    %458 = arith.subf %457, %454 : vector<1x1xf32>
    %cst_141 = arith.constant 5.000000e-01 : f32
    %459 = vector.broadcast %cst_141 : f32 to vector<1x1xf32>
    %460 = arith.mulf %459, %458 : vector<1x1xf32>
    %461 = arith.mulf %454, %454 : vector<1x1xf32>
    %462 = arith.select %456, %460, %461 : vector<1x1xi1>, vector<1x1xf32>
    %cst_142 = arith.constant 1.000000e+00 : f32
    %463 = vector.broadcast %cst_142 : f32 to vector<1x1xf32>
    %464 = arith.subf %463, %454 : vector<1x1xf32>
    %cst_143 = arith.constant 5.000000e-01 : f32
    %465 = vector.broadcast %cst_143 : f32 to vector<1x1xf32>
    %466 = arith.mulf %465, %464 : vector<1x1xf32>
    %cst_144 = arith.constant 0.000000e+00 : f32
    %467 = vector.broadcast %cst_144 : f32 to vector<1x1xf32>
    %468 = arith.maximumf %466, %467 : vector<1x1xf32>
    %469 = math.sqrt %468 : vector<1x1xf32>
    %470 = arith.select %456, %469, %454 : vector<1x1xi1>, vector<1x1xf32>
    %cst_145 = arith.constant 4.216320e-02 : f32
    %471 = vector.broadcast %cst_145 : f32 to vector<1x1xf32>
    %472 = arith.mulf %471, %462 : vector<1x1xf32>
    %cst_146 = arith.constant 0.024181312 : f32
    %473 = vector.broadcast %cst_146 : f32 to vector<1x1xf32>
    %474 = arith.addf %472, %473 : vector<1x1xf32>
    %475 = arith.mulf %474, %462 : vector<1x1xf32>
    %cst_147 = arith.constant 0.0454700254 : f32
    %476 = vector.broadcast %cst_147 : f32 to vector<1x1xf32>
    %477 = arith.addf %475, %476 : vector<1x1xf32>
    %478 = arith.mulf %477, %462 : vector<1x1xf32>
    %cst_148 = arith.constant 0.0749530047 : f32
    %479 = vector.broadcast %cst_148 : f32 to vector<1x1xf32>
    %480 = arith.addf %478, %479 : vector<1x1xf32>
    %481 = arith.mulf %480, %462 : vector<1x1xf32>
    %cst_149 = arith.constant 0.166667521 : f32
    %482 = vector.broadcast %cst_149 : f32 to vector<1x1xf32>
    %483 = arith.addf %481, %482 : vector<1x1xf32>
    %484 = arith.mulf %470, %462 : vector<1x1xf32>
    %485 = arith.mulf %484, %483 : vector<1x1xf32>
    %486 = arith.addf %470, %485 : vector<1x1xf32>
    %cst_150 = arith.constant 2.000000e+00 : f32
    %487 = vector.broadcast %cst_150 : f32 to vector<1x1xf32>
    %488 = arith.mulf %487, %486 : vector<1x1xf32>
    %cst_151 = arith.constant 1.57079637 : f32
    %489 = vector.broadcast %cst_151 : f32 to vector<1x1xf32>
    %490 = arith.subf %489, %488 : vector<1x1xf32>
    %491 = arith.select %456, %490, %486 : vector<1x1xi1>, vector<1x1xf32>
    %cst_152 = arith.constant 0.000000e+00 : f32
    %492 = vector.broadcast %cst_152 : f32 to vector<1x1xf32>
    %493 = arith.cmpf olt, %453, %492 : vector<1x1xf32>
    %cst_153 = arith.constant 0.000000e+00 : f32
    %494 = vector.broadcast %cst_153 : f32 to vector<1x1xf32>
    %495 = arith.subf %494, %491 : vector<1x1xf32>
    %496 = arith.select %493, %495, %491 : vector<1x1xi1>, vector<1x1xf32>
    %cst_154 = arith.constant 1.57079637 : f32
    %497 = vector.broadcast %cst_154 : f32 to vector<1x1xf32>
    %498 = arith.subf %497, %496 : vector<1x1xf32>
    %499 = arith.mulf %453, %453 : vector<1x1xf32>
    %cst_155 = arith.constant 1.000000e+00 : f32
    %500 = vector.broadcast %cst_155 : f32 to vector<1x1xf32>
    %501 = arith.subf %500, %499 : vector<1x1xf32>
    %cst_156 = arith.constant 9.99999996E-13 : f32
    %502 = vector.broadcast %cst_156 : f32 to vector<1x1xf32>
    %503 = arith.maximumf %501, %502 : vector<1x1xf32>
    %504 = math.sqrt %503 : vector<1x1xf32>
    %cst_157 = arith.constant 9.99999997E-7 : f32
    %505 = vector.broadcast %cst_157 : f32 to vector<1x1xf32>
    %506 = arith.maximumf %504, %505 : vector<1x1xf32>
    %cst_158 = arith.constant 2.000000e+00 : f32
    %507 = vector.broadcast %cst_158 : f32 to vector<1x1xf32>
    %508 = arith.mulf %507, %506 : vector<1x1xf32>
    %509 = arith.divf %498, %508 : vector<1x1xf32>
    %510 = arith.subf %434, %440 : vector<1x1xf32>
    %511 = arith.subf %437, %431 : vector<1x1xf32>
    %512 = arith.subf %430, %432 : vector<1x1xf32>
    %513 = tpu.concatenate %510, %511, %512 in 1 : vector<1x1xf32>, vector<1x1xf32>, vector<1x1xf32> -> vector<1x3xf32>
    %514 = vector.broadcast %509 : vector<1x1xf32> to vector<1x3xf32>
    %515 = arith.mulf %513, %514 : vector<1x3xf32>
    %516 = vector.extract_strided_slice %67 {offsets = [0, 24], sizes = [1, 6], strides = [1, 1]} : vector<1x43xf32> to vector<1x6xf32>
    %517 = vector.extract_strided_slice %516 {offsets = [0, 0], sizes = [1, 3], strides = [1, 1]} : vector<1x6xf32> to vector<1x3xf32>
    %518 = vector.extract_strided_slice %516 {offsets = [0, 3], sizes = [1, 3], strides = [1, 1]} : vector<1x6xf32> to vector<1x3xf32>
    %519 = arith.mulf %517, %517 : vector<1x3xf32>
    %cst_159 = arith.constant dense<0.000000e+00> : vector<1xf32>
    %520 = vector.multi_reduction <add>, %519, %cst_159 [1] : vector<1x3xf32> to vector<1xf32>
    %521 = vector.shape_cast %520 : vector<1xf32> to vector<1x1xf32>
    %cst_160 = arith.constant 9.99999993E-9 : f32
    %522 = vector.broadcast %cst_160 : f32 to vector<1x1xf32>
    %523 = arith.addf %521, %522 : vector<1x1xf32>
    %524 = math.rsqrt %523 : vector<1x1xf32>
    %525 = vector.broadcast %524 : vector<1x1xf32> to vector<1x3xf32>
    %526 = arith.mulf %517, %525 : vector<1x3xf32>
    %527 = arith.mulf %526, %518 : vector<1x3xf32>
    %cst_161 = arith.constant dense<0.000000e+00> : vector<1xf32>
    %528 = vector.multi_reduction <add>, %527, %cst_161 [1] : vector<1x3xf32> to vector<1xf32>
    %529 = vector.shape_cast %528 : vector<1xf32> to vector<1x1xf32>
    %530 = vector.broadcast %529 : vector<1x1xf32> to vector<1x3xf32>
    %531 = arith.mulf %530, %526 : vector<1x3xf32>
    %532 = arith.subf %518, %531 : vector<1x3xf32>
    %533 = arith.mulf %532, %532 : vector<1x3xf32>
    %cst_162 = arith.constant dense<0.000000e+00> : vector<1xf32>
    %534 = vector.multi_reduction <add>, %533, %cst_162 [1] : vector<1x3xf32> to vector<1xf32>
    %535 = vector.shape_cast %534 : vector<1xf32> to vector<1x1xf32>
    %cst_163 = arith.constant 9.99999993E-9 : f32
    %536 = vector.broadcast %cst_163 : f32 to vector<1x1xf32>
    %537 = arith.addf %535, %536 : vector<1x1xf32>
    %538 = math.rsqrt %537 : vector<1x1xf32>
    %539 = vector.broadcast %538 : vector<1x1xf32> to vector<1x3xf32>
    %540 = arith.mulf %532, %539 : vector<1x3xf32>
    %541 = vector.extract_strided_slice %526 {offsets = [0, 0], sizes = [1, 1], strides = [1, 1]} : vector<1x3xf32> to vector<1x1xf32>
    %542 = vector.extract_strided_slice %526 {offsets = [0, 1], sizes = [1, 1], strides = [1, 1]} : vector<1x3xf32> to vector<1x1xf32>
    %543 = vector.extract_strided_slice %526 {offsets = [0, 2], sizes = [1, 1], strides = [1, 1]} : vector<1x3xf32> to vector<1x1xf32>
    %544 = vector.extract_strided_slice %540 {offsets = [0, 0], sizes = [1, 1], strides = [1, 1]} : vector<1x3xf32> to vector<1x1xf32>
    %545 = vector.extract_strided_slice %540 {offsets = [0, 1], sizes = [1, 1], strides = [1, 1]} : vector<1x3xf32> to vector<1x1xf32>
    %546 = vector.extract_strided_slice %540 {offsets = [0, 2], sizes = [1, 1], strides = [1, 1]} : vector<1x3xf32> to vector<1x1xf32>
    %547 = arith.mulf %542, %546 : vector<1x1xf32>
    %548 = arith.mulf %543, %545 : vector<1x1xf32>
    %549 = arith.subf %547, %548 : vector<1x1xf32>
    %550 = arith.mulf %543, %544 : vector<1x1xf32>
    %551 = arith.mulf %541, %546 : vector<1x1xf32>
    %552 = arith.subf %550, %551 : vector<1x1xf32>
    %553 = arith.mulf %541, %545 : vector<1x1xf32>
    %554 = arith.mulf %542, %544 : vector<1x1xf32>
    %555 = arith.subf %553, %554 : vector<1x1xf32>
    %556 = arith.addf %541, %545 : vector<1x1xf32>
    %557 = arith.addf %556, %555 : vector<1x1xf32>
    %cst_164 = arith.constant 1.000000e+00 : f32
    %558 = vector.broadcast %cst_164 : f32 to vector<1x1xf32>
    %559 = arith.subf %557, %558 : vector<1x1xf32>
    %cst_165 = arith.constant 5.000000e-01 : f32
    %560 = vector.broadcast %cst_165 : f32 to vector<1x1xf32>
    %561 = arith.mulf %559, %560 : vector<1x1xf32>
    %cst_166 = arith.constant -0.999998986 : f32
    %cst_167 = arith.constant 0.999998986 : f32
    %562 = vector.broadcast %cst_166 : f32 to vector<1x1xf32>
    %563 = arith.maximumf %562, %561 : vector<1x1xf32>
    %564 = vector.broadcast %cst_167 : f32 to vector<1x1xf32>
    %565 = arith.minimumf %564, %563 : vector<1x1xf32>
    %566 = math.absf %565 : vector<1x1xf32>
    %cst_168 = arith.constant 5.000000e-01 : f32
    %567 = vector.broadcast %cst_168 : f32 to vector<1x1xf32>
    %568 = arith.cmpf ogt, %566, %567 : vector<1x1xf32>
    %cst_169 = arith.constant 1.000000e+00 : f32
    %569 = vector.broadcast %cst_169 : f32 to vector<1x1xf32>
    %570 = arith.subf %569, %566 : vector<1x1xf32>
    %cst_170 = arith.constant 5.000000e-01 : f32
    %571 = vector.broadcast %cst_170 : f32 to vector<1x1xf32>
    %572 = arith.mulf %571, %570 : vector<1x1xf32>
    %573 = arith.mulf %566, %566 : vector<1x1xf32>
    %574 = arith.select %568, %572, %573 : vector<1x1xi1>, vector<1x1xf32>
    %cst_171 = arith.constant 1.000000e+00 : f32
    %575 = vector.broadcast %cst_171 : f32 to vector<1x1xf32>
    %576 = arith.subf %575, %566 : vector<1x1xf32>
    %cst_172 = arith.constant 5.000000e-01 : f32
    %577 = vector.broadcast %cst_172 : f32 to vector<1x1xf32>
    %578 = arith.mulf %577, %576 : vector<1x1xf32>
    %cst_173 = arith.constant 0.000000e+00 : f32
    %579 = vector.broadcast %cst_173 : f32 to vector<1x1xf32>
    %580 = arith.maximumf %578, %579 : vector<1x1xf32>
    %581 = math.sqrt %580 : vector<1x1xf32>
    %582 = arith.select %568, %581, %566 : vector<1x1xi1>, vector<1x1xf32>
    %cst_174 = arith.constant 4.216320e-02 : f32
    %583 = vector.broadcast %cst_174 : f32 to vector<1x1xf32>
    %584 = arith.mulf %583, %574 : vector<1x1xf32>
    %cst_175 = arith.constant 0.024181312 : f32
    %585 = vector.broadcast %cst_175 : f32 to vector<1x1xf32>
    %586 = arith.addf %584, %585 : vector<1x1xf32>
    %587 = arith.mulf %586, %574 : vector<1x1xf32>
    %cst_176 = arith.constant 0.0454700254 : f32
    %588 = vector.broadcast %cst_176 : f32 to vector<1x1xf32>
    %589 = arith.addf %587, %588 : vector<1x1xf32>
    %590 = arith.mulf %589, %574 : vector<1x1xf32>
    %cst_177 = arith.constant 0.0749530047 : f32
    %591 = vector.broadcast %cst_177 : f32 to vector<1x1xf32>
    %592 = arith.addf %590, %591 : vector<1x1xf32>
    %593 = arith.mulf %592, %574 : vector<1x1xf32>
    %cst_178 = arith.constant 0.166667521 : f32
    %594 = vector.broadcast %cst_178 : f32 to vector<1x1xf32>
    %595 = arith.addf %593, %594 : vector<1x1xf32>
    %596 = arith.mulf %582, %574 : vector<1x1xf32>
    %597 = arith.mulf %596, %595 : vector<1x1xf32>
    %598 = arith.addf %582, %597 : vector<1x1xf32>
    %cst_179 = arith.constant 2.000000e+00 : f32
    %599 = vector.broadcast %cst_179 : f32 to vector<1x1xf32>
    %600 = arith.mulf %599, %598 : vector<1x1xf32>
    %cst_180 = arith.constant 1.57079637 : f32
    %601 = vector.broadcast %cst_180 : f32 to vector<1x1xf32>
    %602 = arith.subf %601, %600 : vector<1x1xf32>
    %603 = arith.select %568, %602, %598 : vector<1x1xi1>, vector<1x1xf32>
    %cst_181 = arith.constant 0.000000e+00 : f32
    %604 = vector.broadcast %cst_181 : f32 to vector<1x1xf32>
    %605 = arith.cmpf olt, %565, %604 : vector<1x1xf32>
    %cst_182 = arith.constant 0.000000e+00 : f32
    %606 = vector.broadcast %cst_182 : f32 to vector<1x1xf32>
    %607 = arith.subf %606, %603 : vector<1x1xf32>
    %608 = arith.select %605, %607, %603 : vector<1x1xi1>, vector<1x1xf32>
    %cst_183 = arith.constant 1.57079637 : f32
    %609 = vector.broadcast %cst_183 : f32 to vector<1x1xf32>
    %610 = arith.subf %609, %608 : vector<1x1xf32>
    %611 = arith.mulf %565, %565 : vector<1x1xf32>
    %cst_184 = arith.constant 1.000000e+00 : f32
    %612 = vector.broadcast %cst_184 : f32 to vector<1x1xf32>
    %613 = arith.subf %612, %611 : vector<1x1xf32>
    %cst_185 = arith.constant 9.99999996E-13 : f32
    %614 = vector.broadcast %cst_185 : f32 to vector<1x1xf32>
    %615 = arith.maximumf %613, %614 : vector<1x1xf32>
    %616 = math.sqrt %615 : vector<1x1xf32>
    %cst_186 = arith.constant 9.99999997E-7 : f32
    %617 = vector.broadcast %cst_186 : f32 to vector<1x1xf32>
    %618 = arith.maximumf %616, %617 : vector<1x1xf32>
    %cst_187 = arith.constant 2.000000e+00 : f32
    %619 = vector.broadcast %cst_187 : f32 to vector<1x1xf32>
    %620 = arith.mulf %619, %618 : vector<1x1xf32>
    %621 = arith.divf %610, %620 : vector<1x1xf32>
    %622 = arith.subf %546, %552 : vector<1x1xf32>
    %623 = arith.subf %549, %543 : vector<1x1xf32>
    %624 = arith.subf %542, %544 : vector<1x1xf32>
    %625 = tpu.concatenate %622, %623, %624 in 1 : vector<1x1xf32>, vector<1x1xf32>, vector<1x1xf32> -> vector<1x3xf32>
    %626 = vector.broadcast %621 : vector<1x1xf32> to vector<1x3xf32>
    %627 = arith.mulf %625, %626 : vector<1x3xf32>
    %628 = vector.extract_strided_slice %67 {offsets = [0, 30], sizes = [1, 10], strides = [1, 1]} : vector<1x43xf32> to vector<1x10xf32>
    %629 = vector.extract_strided_slice %67 {offsets = [0, 40], sizes = [1, 3], strides = [1, 1]} : vector<1x43xf32> to vector<1x3xf32>
    %630 = vector.extract_strided_slice %629 {offsets = [0, 2], sizes = [1, 1], strides = [1, 1]} : vector<1x3xf32> to vector<1x1xf32>
    %cst_188 = arith.constant 5.000000e-01 : f32
    %631 = vector.broadcast %cst_188 : f32 to vector<1x1xf32>
    %632 = arith.mulf %631, %630 : vector<1x1xf32>
    %633 = math.tanh %632 : vector<1x1xf32>
    %cst_189 = arith.constant 1.000000e+00 : f32
    %634 = vector.broadcast %cst_189 : f32 to vector<1x1xf32>
    %635 = arith.addf %633, %634 : vector<1x1xf32>
    %cst_190 = arith.constant 5.000000e-01 : f32
    %636 = vector.broadcast %cst_190 : f32 to vector<1x1xf32>
    %637 = arith.mulf %636, %635 : vector<1x1xf32>
    %cst_191 = arith.constant 7.812500e+02 : f32
    %638 = vector.broadcast %cst_191 : f32 to vector<1x1xf32>
    %639 = arith.mulf %638, %637 : vector<1x1xf32>
    %640 = vector.extract_strided_slice %629 {offsets = [0, 0], sizes = [1, 2], strides = [1, 1]} : vector<1x3xf32> to vector<1x2xf32>
    %641 = tpu.concatenate %640, %639 in 1 : vector<1x2xf32>, vector<1x1xf32> -> vector<1x3xf32>
    %c0_192 = arith.constant 0 : index
    %c0_193 = arith.constant 0 : index
    %642 = vector.load %arg15[%c0_192, %c0_193] : memref<32x12xf32, #tpu.memory_space<vmem>>, vector<32x12xf32>
    %cst_194 = arith.constant dense<0.000000e+00> : vector<1x12xf32>
    %643 = tpu.matmul %11, %642, %cst_194 {dimension_numbers = #tpu.dot_dimension_numbers<[1], [0], [0], [1], [0, 0, 1, 1], [], []>} : vector<1x32xf32>, vector<32x12xf32>, vector<1x12xf32> -> vector<1x12xf32>
    %c0_195 = arith.constant 0 : index
    %c0_196 = arith.constant 0 : index
    %644 = vector.load %arg16[%c0_195, %c0_196] : memref<12x12xf32, #tpu.memory_space<vmem>>, vector<12x12xf32>
    %cst_197 = arith.constant dense<0.000000e+00> : vector<1x12xf32>
    %645 = tpu.matmul %54, %644, %cst_197 {dimension_numbers = #tpu.dot_dimension_numbers<[1], [0], [0], [1], [0, 0, 1, 1], [], []>} : vector<1x12xf32>, vector<12x12xf32>, vector<1x12xf32> -> vector<1x12xf32>
    %646 = arith.addf %643, %645 : vector<1x12xf32>
    %c0_198 = arith.constant 0 : index
    %c0_199 = arith.constant 0 : index
    %647 = vector.load %arg17[%c0_198, %c0_199] : memref<1x12xf32, #tpu.memory_space<vmem>>, vector<1x12xf32>
    %648 = arith.addf %646, %647 : vector<1x12xf32>
    %cst_200 = arith.constant 5.000000e-01 : f32
    %649 = vector.broadcast %cst_200 : f32 to vector<1x12xf32>
    %650 = arith.mulf %649, %648 : vector<1x12xf32>
    %651 = math.tanh %650 : vector<1x12xf32>
    %cst_201 = arith.constant 1.000000e+00 : f32
    %652 = vector.broadcast %cst_201 : f32 to vector<1x12xf32>
    %653 = arith.addf %651, %652 : vector<1x12xf32>
    %cst_202 = arith.constant 5.000000e-01 : f32
    %654 = vector.broadcast %cst_202 : f32 to vector<1x12xf32>
    %655 = arith.mulf %654, %653 : vector<1x12xf32>
    %656 = vector.extract_strided_slice %655 {offsets = [0, 0], sizes = [1, 1], strides = [1, 1]} : vector<1x12xf32> to vector<1x1xf32>
    %cst_203 = arith.constant 8.000000e+00 : f32
    %657 = vector.broadcast %cst_203 : f32 to vector<1x1xf32>
    %658 = arith.mulf %656, %657 : vector<1x1xf32>
    %659 = vector.extract_strided_slice %655 {offsets = [0, 1], sizes = [1, 1], strides = [1, 1]} : vector<1x12xf32> to vector<1x1xf32>
    %cst_204 = arith.constant 8.000000e+00 : f32
    %660 = vector.broadcast %cst_204 : f32 to vector<1x1xf32>
    %661 = arith.mulf %659, %660 : vector<1x1xf32>
    %662 = vector.extract_strided_slice %655 {offsets = [0, 2], sizes = [1, 1], strides = [1, 1]} : vector<1x12xf32> to vector<1x1xf32>
    %cst_205 = arith.constant 8.000000e+00 : f32
    %663 = vector.broadcast %cst_205 : f32 to vector<1x1xf32>
    %664 = arith.mulf %662, %663 : vector<1x1xf32>
    %665 = vector.extract_strided_slice %655 {offsets = [0, 3], sizes = [1, 1], strides = [1, 1]} : vector<1x12xf32> to vector<1x1xf32>
    %cst_206 = arith.constant 8.000000e+00 : f32
    %666 = vector.broadcast %cst_206 : f32 to vector<1x1xf32>
    %667 = arith.mulf %665, %666 : vector<1x1xf32>
    %cst_207 = arith.constant 5.000000e-01 : f32
    %668 = vector.broadcast %cst_207 : f32 to vector<1x1xf32>
    %669 = arith.mulf %664, %668 : vector<1x1xf32>
    %670 = arith.subf %658, %669 : vector<1x1xf32>
    %cst_208 = arith.constant 2.000000e+00 : f32
    %671 = vector.broadcast %cst_208 : f32 to vector<1x1xf32>
    %672 = arith.mulf %670, %671 : vector<1x1xf32>
    %cst_209 = arith.constant 5.000000e-01 : f32
    %673 = vector.broadcast %cst_209 : f32 to vector<1x1xf32>
    %674 = arith.mulf %664, %673 : vector<1x1xf32>
    %675 = arith.addf %658, %674 : vector<1x1xf32>
    %cst_210 = arith.constant 2.000000e+00 : f32
    %676 = vector.broadcast %cst_210 : f32 to vector<1x1xf32>
    %677 = arith.mulf %675, %676 : vector<1x1xf32>
    %cst_211 = arith.constant 5.000000e-01 : f32
    %678 = vector.broadcast %cst_211 : f32 to vector<1x1xf32>
    %679 = arith.mulf %667, %678 : vector<1x1xf32>
    %680 = arith.subf %661, %679 : vector<1x1xf32>
    %cst_212 = arith.constant 2.000000e+00 : f32
    %681 = vector.broadcast %cst_212 : f32 to vector<1x1xf32>
    %682 = arith.mulf %680, %681 : vector<1x1xf32>
    %cst_213 = arith.constant 5.000000e-01 : f32
    %683 = vector.broadcast %cst_213 : f32 to vector<1x1xf32>
    %684 = arith.mulf %667, %683 : vector<1x1xf32>
    %685 = arith.addf %661, %684 : vector<1x1xf32>
    %cst_214 = arith.constant 2.000000e+00 : f32
    %686 = vector.broadcast %cst_214 : f32 to vector<1x1xf32>
    %687 = arith.mulf %685, %686 : vector<1x1xf32>
    %688 = arith.subf %677, %672 : vector<1x1xf32>
    %689 = arith.subf %687, %682 : vector<1x1xf32>
    %cst_215 = arith.constant 5.000000e-01 : f32
    %690 = vector.broadcast %cst_215 : f32 to vector<1x1xf32>
    %691 = arith.mulf %690, %688 : vector<1x1xf32>
    %692 = arith.addf %672, %691 : vector<1x1xf32>
    %cst_216 = arith.constant 5.000000e-01 : f32
    %693 = vector.broadcast %cst_216 : f32 to vector<1x1xf32>
    %694 = arith.mulf %693, %689 : vector<1x1xf32>
    %695 = arith.addf %682, %694 : vector<1x1xf32>
    %cst_217 = arith.constant 1.000000e+00 : f32
    %696 = vector.broadcast %cst_217 : f32 to vector<1x1xf32>
    %697 = arith.mulf %696, %689 : vector<1x1xf32>
    %698 = arith.cmpf ogt, %688, %697 : vector<1x1xf32>
    %cst_218 = arith.constant 1.000000e+00 : f32
    %699 = vector.broadcast %cst_218 : f32 to vector<1x1xf32>
    %700 = arith.divf %688, %699 : vector<1x1xf32>
    %701 = arith.select %698, %700, %689 : vector<1x1xi1>, vector<1x1xf32>
    %cst_219 = arith.constant 1.000000e+00 : f32
    %702 = vector.broadcast %cst_219 : f32 to vector<1x1xf32>
    %703 = arith.mulf %702, %689 : vector<1x1xf32>
    %704 = arith.cmpf olt, %688, %703 : vector<1x1xf32>
    %cst_220 = arith.constant 1.000000e+00 : f32
    %705 = vector.broadcast %cst_220 : f32 to vector<1x1xf32>
    %706 = arith.mulf %689, %705 : vector<1x1xf32>
    %707 = arith.select %704, %706, %688 : vector<1x1xi1>, vector<1x1xf32>
    %cst_221 = arith.constant 2.000000e+00 : f32
    %708 = vector.broadcast %cst_221 : f32 to vector<1x1xf32>
    %709 = arith.mulf %707, %708 : vector<1x1xf32>
    %cst_222 = arith.constant 2.000000e+00 : f32
    %710 = vector.broadcast %cst_222 : f32 to vector<1x1xf32>
    %711 = arith.mulf %701, %710 : vector<1x1xf32>
    %cst_223 = arith.constant 5.000000e-01 : f32
    %712 = vector.broadcast %cst_223 : f32 to vector<1x1xf32>
    %713 = arith.mulf %712, %709 : vector<1x1xf32>
    %714 = arith.subf %692, %713 : vector<1x1xf32>
    %cst_224 = arith.constant 5.000000e-01 : f32
    %715 = vector.broadcast %cst_224 : f32 to vector<1x1xf32>
    %716 = arith.mulf %715, %711 : vector<1x1xf32>
    %717 = arith.subf %695, %716 : vector<1x1xf32>
    %718 = arith.addf %714, %709 : vector<1x1xf32>
    %719 = arith.addf %717, %711 : vector<1x1xf32>
    %720 = tpu.concatenate %714, %717, %718, %719 in 1 : vector<1x1xf32>, vector<1x1xf32>, vector<1x1xf32>, vector<1x1xf32> -> vector<1x4xf32>
    %c0_225 = arith.constant 0 : index
    %c0_226 = arith.constant 0 : index
    %721 = vector.load %arg18[%c0_225, %c0_226] : memref<32x32xf32, #tpu.memory_space<vmem>>, vector<32x32xf32>
    %cst_227 = arith.constant dense<0.000000e+00> : vector<1x32xf32>
    %722 = tpu.matmul %11, %721, %cst_227 {dimension_numbers = #tpu.dot_dimension_numbers<[1], [0], [0], [1], [0, 0, 1, 1], [], []>} : vector<1x32xf32>, vector<32x32xf32>, vector<1x32xf32> -> vector<1x32xf32>
    %c0_228 = arith.constant 0 : index
    %c0_229 = arith.constant 0 : index
    %723 = vector.load %arg19[%c0_228, %c0_229] : memref<4x32xf32, #tpu.memory_space<vmem>>, vector<4x32xf32>
    %cst_230 = arith.constant dense<0.000000e+00> : vector<1x32xf32>
    %724 = tpu.matmul %720, %723, %cst_230 {dimension_numbers = #tpu.dot_dimension_numbers<[1], [0], [0], [1], [0, 0, 1, 1], [], []>} : vector<1x4xf32>, vector<4x32xf32>, vector<1x32xf32> -> vector<1x32xf32>
    %725 = arith.addf %722, %724 : vector<1x32xf32>
    %c0_231 = arith.constant 0 : index
    %c0_232 = arith.constant 0 : index
    %726 = vector.load %arg20[%c0_231, %c0_232] : memref<1x32xf32, #tpu.memory_space<vmem>>, vector<1x32xf32>
    %727 = arith.addf %725, %726 : vector<1x32xf32>
    %728 = math.tanh %727 : vector<1x32xf32>
    %c0_233 = arith.constant 0 : index
    %c0_234 = arith.constant 0 : index
    %729 = vector.load %arg21[%c0_233, %c0_234] : memref<32x9xf32, #tpu.memory_space<vmem>>, vector<32x9xf32>
    %cst_235 = arith.constant dense<0.000000e+00> : vector<1x9xf32>
    %730 = tpu.matmul %728, %729, %cst_235 {dimension_numbers = #tpu.dot_dimension_numbers<[1], [0], [0], [1], [0, 0, 1, 1], [], []>} : vector<1x32xf32>, vector<32x9xf32>, vector<1x9xf32> -> vector<1x9xf32>
    %c0_236 = arith.constant 0 : index
    %c0_237 = arith.constant 0 : index
    %731 = vector.load %arg22[%c0_236, %c0_237] : memref<1x9xf32, #tpu.memory_space<vmem>>, vector<1x9xf32>
    %732 = arith.addf %730, %731 : vector<1x9xf32>
    %c0_238 = arith.constant 0 : index
    %c0_239 = arith.constant 0 : index
    %733 = vector.load %arg23[%c0_238, %c0_239] : memref<32x18xf32, #tpu.memory_space<vmem>>, vector<32x18xf32>
    %cst_240 = arith.constant dense<0.000000e+00> : vector<1x18xf32>
    %734 = tpu.matmul %728, %733, %cst_240 {dimension_numbers = #tpu.dot_dimension_numbers<[1], [0], [0], [1], [0, 0, 1, 1], [], []>} : vector<1x32xf32>, vector<32x18xf32>, vector<1x18xf32> -> vector<1x18xf32>
    %c0_241 = arith.constant 0 : index
    %c0_242 = arith.constant 0 : index
    %735 = vector.load %arg24[%c0_241, %c0_242] : memref<9x18xf32, #tpu.memory_space<vmem>>, vector<9x18xf32>
    %cst_243 = arith.constant dense<0.000000e+00> : vector<1x18xf32>
    %736 = tpu.matmul %732, %735, %cst_243 {dimension_numbers = #tpu.dot_dimension_numbers<[1], [0], [0], [1], [0, 0, 1, 1], [], []>} : vector<1x9xf32>, vector<9x18xf32>, vector<1x18xf32> -> vector<1x18xf32>
    %737 = arith.addf %734, %736 : vector<1x18xf32>
    %c0_244 = arith.constant 0 : index
    %c0_245 = arith.constant 0 : index
    %738 = vector.load %arg25[%c0_244, %c0_245] : memref<1x18xf32, #tpu.memory_space<vmem>>, vector<1x18xf32>
    %739 = arith.addf %737, %738 : vector<1x18xf32>
    %740 = vector.extract_strided_slice %739 {offsets = [0, 0], sizes = [1, 6], strides = [1, 1]} : vector<1x18xf32> to vector<1x6xf32>
    %741 = vector.extract_strided_slice %740 {offsets = [0, 0], sizes = [1, 3], strides = [1, 1]} : vector<1x6xf32> to vector<1x3xf32>
    %742 = vector.extract_strided_slice %740 {offsets = [0, 3], sizes = [1, 3], strides = [1, 1]} : vector<1x6xf32> to vector<1x3xf32>
    %743 = arith.mulf %741, %741 : vector<1x3xf32>
    %cst_246 = arith.constant dense<0.000000e+00> : vector<1xf32>
    %744 = vector.multi_reduction <add>, %743, %cst_246 [1] : vector<1x3xf32> to vector<1xf32>
    %745 = vector.shape_cast %744 : vector<1xf32> to vector<1x1xf32>
    %cst_247 = arith.constant 9.99999993E-9 : f32
    %746 = vector.broadcast %cst_247 : f32 to vector<1x1xf32>
    %747 = arith.addf %745, %746 : vector<1x1xf32>
    %748 = math.rsqrt %747 : vector<1x1xf32>
    %749 = vector.broadcast %748 : vector<1x1xf32> to vector<1x3xf32>
    %750 = arith.mulf %741, %749 : vector<1x3xf32>
    %751 = arith.mulf %750, %742 : vector<1x3xf32>
    %cst_248 = arith.constant dense<0.000000e+00> : vector<1xf32>
    %752 = vector.multi_reduction <add>, %751, %cst_248 [1] : vector<1x3xf32> to vector<1xf32>
    %753 = vector.shape_cast %752 : vector<1xf32> to vector<1x1xf32>
    %754 = vector.broadcast %753 : vector<1x1xf32> to vector<1x3xf32>
    %755 = arith.mulf %754, %750 : vector<1x3xf32>
    %756 = arith.subf %742, %755 : vector<1x3xf32>
    %757 = arith.mulf %756, %756 : vector<1x3xf32>
    %cst_249 = arith.constant dense<0.000000e+00> : vector<1xf32>
    %758 = vector.multi_reduction <add>, %757, %cst_249 [1] : vector<1x3xf32> to vector<1xf32>
    %759 = vector.shape_cast %758 : vector<1xf32> to vector<1x1xf32>
    %cst_250 = arith.constant 9.99999993E-9 : f32
    %760 = vector.broadcast %cst_250 : f32 to vector<1x1xf32>
    %761 = arith.addf %759, %760 : vector<1x1xf32>
    %762 = math.rsqrt %761 : vector<1x1xf32>
    %763 = vector.broadcast %762 : vector<1x1xf32> to vector<1x3xf32>
    %764 = arith.mulf %756, %763 : vector<1x3xf32>
    %765 = vector.extract_strided_slice %750 {offsets = [0, 0], sizes = [1, 1], strides = [1, 1]} : vector<1x3xf32> to vector<1x1xf32>
    %766 = vector.extract_strided_slice %750 {offsets = [0, 1], sizes = [1, 1], strides = [1, 1]} : vector<1x3xf32> to vector<1x1xf32>
    %767 = vector.extract_strided_slice %750 {offsets = [0, 2], sizes = [1, 1], strides = [1, 1]} : vector<1x3xf32> to vector<1x1xf32>
    %768 = vector.extract_strided_slice %764 {offsets = [0, 0], sizes = [1, 1], strides = [1, 1]} : vector<1x3xf32> to vector<1x1xf32>
    %769 = vector.extract_strided_slice %764 {offsets = [0, 1], sizes = [1, 1], strides = [1, 1]} : vector<1x3xf32> to vector<1x1xf32>
    %770 = vector.extract_strided_slice %764 {offsets = [0, 2], sizes = [1, 1], strides = [1, 1]} : vector<1x3xf32> to vector<1x1xf32>
    %771 = arith.mulf %766, %770 : vector<1x1xf32>
    %772 = arith.mulf %767, %769 : vector<1x1xf32>
    %773 = arith.subf %771, %772 : vector<1x1xf32>
    %774 = arith.mulf %767, %768 : vector<1x1xf32>
    %775 = arith.mulf %765, %770 : vector<1x1xf32>
    %776 = arith.subf %774, %775 : vector<1x1xf32>
    %777 = arith.mulf %765, %769 : vector<1x1xf32>
    %778 = arith.mulf %766, %768 : vector<1x1xf32>
    %779 = arith.subf %777, %778 : vector<1x1xf32>
    %780 = arith.addf %765, %769 : vector<1x1xf32>
    %781 = arith.addf %780, %779 : vector<1x1xf32>
    %cst_251 = arith.constant 1.000000e+00 : f32
    %782 = vector.broadcast %cst_251 : f32 to vector<1x1xf32>
    %783 = arith.subf %781, %782 : vector<1x1xf32>
    %cst_252 = arith.constant 5.000000e-01 : f32
    %784 = vector.broadcast %cst_252 : f32 to vector<1x1xf32>
    %785 = arith.mulf %783, %784 : vector<1x1xf32>
    %cst_253 = arith.constant -0.999998986 : f32
    %cst_254 = arith.constant 0.999998986 : f32
    %786 = vector.broadcast %cst_253 : f32 to vector<1x1xf32>
    %787 = arith.maximumf %786, %785 : vector<1x1xf32>
    %788 = vector.broadcast %cst_254 : f32 to vector<1x1xf32>
    %789 = arith.minimumf %788, %787 : vector<1x1xf32>
    %790 = math.absf %789 : vector<1x1xf32>
    %cst_255 = arith.constant 5.000000e-01 : f32
    %791 = vector.broadcast %cst_255 : f32 to vector<1x1xf32>
    %792 = arith.cmpf ogt, %790, %791 : vector<1x1xf32>
    %cst_256 = arith.constant 1.000000e+00 : f32
    %793 = vector.broadcast %cst_256 : f32 to vector<1x1xf32>
    %794 = arith.subf %793, %790 : vector<1x1xf32>
    %cst_257 = arith.constant 5.000000e-01 : f32
    %795 = vector.broadcast %cst_257 : f32 to vector<1x1xf32>
    %796 = arith.mulf %795, %794 : vector<1x1xf32>
    %797 = arith.mulf %790, %790 : vector<1x1xf32>
    %798 = arith.select %792, %796, %797 : vector<1x1xi1>, vector<1x1xf32>
    %cst_258 = arith.constant 1.000000e+00 : f32
    %799 = vector.broadcast %cst_258 : f32 to vector<1x1xf32>
    %800 = arith.subf %799, %790 : vector<1x1xf32>
    %cst_259 = arith.constant 5.000000e-01 : f32
    %801 = vector.broadcast %cst_259 : f32 to vector<1x1xf32>
    %802 = arith.mulf %801, %800 : vector<1x1xf32>
    %cst_260 = arith.constant 0.000000e+00 : f32
    %803 = vector.broadcast %cst_260 : f32 to vector<1x1xf32>
    %804 = arith.maximumf %802, %803 : vector<1x1xf32>
    %805 = math.sqrt %804 : vector<1x1xf32>
    %806 = arith.select %792, %805, %790 : vector<1x1xi1>, vector<1x1xf32>
    %cst_261 = arith.constant 4.216320e-02 : f32
    %807 = vector.broadcast %cst_261 : f32 to vector<1x1xf32>
    %808 = arith.mulf %807, %798 : vector<1x1xf32>
    %cst_262 = arith.constant 0.024181312 : f32
    %809 = vector.broadcast %cst_262 : f32 to vector<1x1xf32>
    %810 = arith.addf %808, %809 : vector<1x1xf32>
    %811 = arith.mulf %810, %798 : vector<1x1xf32>
    %cst_263 = arith.constant 0.0454700254 : f32
    %812 = vector.broadcast %cst_263 : f32 to vector<1x1xf32>
    %813 = arith.addf %811, %812 : vector<1x1xf32>
    %814 = arith.mulf %813, %798 : vector<1x1xf32>
    %cst_264 = arith.constant 0.0749530047 : f32
    %815 = vector.broadcast %cst_264 : f32 to vector<1x1xf32>
    %816 = arith.addf %814, %815 : vector<1x1xf32>
    %817 = arith.mulf %816, %798 : vector<1x1xf32>
    %cst_265 = arith.constant 0.166667521 : f32
    %818 = vector.broadcast %cst_265 : f32 to vector<1x1xf32>
    %819 = arith.addf %817, %818 : vector<1x1xf32>
    %820 = arith.mulf %806, %798 : vector<1x1xf32>
    %821 = arith.mulf %820, %819 : vector<1x1xf32>
    %822 = arith.addf %806, %821 : vector<1x1xf32>
    %cst_266 = arith.constant 2.000000e+00 : f32
    %823 = vector.broadcast %cst_266 : f32 to vector<1x1xf32>
    %824 = arith.mulf %823, %822 : vector<1x1xf32>
    %cst_267 = arith.constant 1.57079637 : f32
    %825 = vector.broadcast %cst_267 : f32 to vector<1x1xf32>
    %826 = arith.subf %825, %824 : vector<1x1xf32>
    %827 = arith.select %792, %826, %822 : vector<1x1xi1>, vector<1x1xf32>
    %cst_268 = arith.constant 0.000000e+00 : f32
    %828 = vector.broadcast %cst_268 : f32 to vector<1x1xf32>
    %829 = arith.cmpf olt, %789, %828 : vector<1x1xf32>
    %cst_269 = arith.constant 0.000000e+00 : f32
    %830 = vector.broadcast %cst_269 : f32 to vector<1x1xf32>
    %831 = arith.subf %830, %827 : vector<1x1xf32>
    %832 = arith.select %829, %831, %827 : vector<1x1xi1>, vector<1x1xf32>
    %cst_270 = arith.constant 1.57079637 : f32
    %833 = vector.broadcast %cst_270 : f32 to vector<1x1xf32>
    %834 = arith.subf %833, %832 : vector<1x1xf32>
    %835 = arith.mulf %789, %789 : vector<1x1xf32>
    %cst_271 = arith.constant 1.000000e+00 : f32
    %836 = vector.broadcast %cst_271 : f32 to vector<1x1xf32>
    %837 = arith.subf %836, %835 : vector<1x1xf32>
    %cst_272 = arith.constant 9.99999996E-13 : f32
    %838 = vector.broadcast %cst_272 : f32 to vector<1x1xf32>
    %839 = arith.maximumf %837, %838 : vector<1x1xf32>
    %840 = math.sqrt %839 : vector<1x1xf32>
    %cst_273 = arith.constant 9.99999997E-7 : f32
    %841 = vector.broadcast %cst_273 : f32 to vector<1x1xf32>
    %842 = arith.maximumf %840, %841 : vector<1x1xf32>
    %cst_274 = arith.constant 2.000000e+00 : f32
    %843 = vector.broadcast %cst_274 : f32 to vector<1x1xf32>
    %844 = arith.mulf %843, %842 : vector<1x1xf32>
    %845 = arith.divf %834, %844 : vector<1x1xf32>
    %846 = arith.subf %770, %776 : vector<1x1xf32>
    %847 = arith.subf %773, %767 : vector<1x1xf32>
    %848 = arith.subf %766, %768 : vector<1x1xf32>
    %849 = tpu.concatenate %846, %847, %848 in 1 : vector<1x1xf32>, vector<1x1xf32>, vector<1x1xf32> -> vector<1x3xf32>
    %850 = vector.broadcast %845 : vector<1x1xf32> to vector<1x3xf32>
    %851 = arith.mulf %849, %850 : vector<1x3xf32>
    %852 = vector.extract_strided_slice %739 {offsets = [0, 6], sizes = [1, 6], strides = [1, 1]} : vector<1x18xf32> to vector<1x6xf32>
    %853 = vector.extract_strided_slice %852 {offsets = [0, 0], sizes = [1, 3], strides = [1, 1]} : vector<1x6xf32> to vector<1x3xf32>
    %854 = vector.extract_strided_slice %852 {offsets = [0, 3], sizes = [1, 3], strides = [1, 1]} : vector<1x6xf32> to vector<1x3xf32>
    %855 = arith.mulf %853, %853 : vector<1x3xf32>
    %cst_275 = arith.constant dense<0.000000e+00> : vector<1xf32>
    %856 = vector.multi_reduction <add>, %855, %cst_275 [1] : vector<1x3xf32> to vector<1xf32>
    %857 = vector.shape_cast %856 : vector<1xf32> to vector<1x1xf32>
    %cst_276 = arith.constant 9.99999993E-9 : f32
    %858 = vector.broadcast %cst_276 : f32 to vector<1x1xf32>
    %859 = arith.addf %857, %858 : vector<1x1xf32>
    %860 = math.rsqrt %859 : vector<1x1xf32>
    %861 = vector.broadcast %860 : vector<1x1xf32> to vector<1x3xf32>
    %862 = arith.mulf %853, %861 : vector<1x3xf32>
    %863 = arith.mulf %862, %854 : vector<1x3xf32>
    %cst_277 = arith.constant dense<0.000000e+00> : vector<1xf32>
    %864 = vector.multi_reduction <add>, %863, %cst_277 [1] : vector<1x3xf32> to vector<1xf32>
    %865 = vector.shape_cast %864 : vector<1xf32> to vector<1x1xf32>
    %866 = vector.broadcast %865 : vector<1x1xf32> to vector<1x3xf32>
    %867 = arith.mulf %866, %862 : vector<1x3xf32>
    %868 = arith.subf %854, %867 : vector<1x3xf32>
    %869 = arith.mulf %868, %868 : vector<1x3xf32>
    %cst_278 = arith.constant dense<0.000000e+00> : vector<1xf32>
    %870 = vector.multi_reduction <add>, %869, %cst_278 [1] : vector<1x3xf32> to vector<1xf32>
    %871 = vector.shape_cast %870 : vector<1xf32> to vector<1x1xf32>
    %cst_279 = arith.constant 9.99999993E-9 : f32
    %872 = vector.broadcast %cst_279 : f32 to vector<1x1xf32>
    %873 = arith.addf %871, %872 : vector<1x1xf32>
    %874 = math.rsqrt %873 : vector<1x1xf32>
    %875 = vector.broadcast %874 : vector<1x1xf32> to vector<1x3xf32>
    %876 = arith.mulf %868, %875 : vector<1x3xf32>
    %877 = vector.extract_strided_slice %862 {offsets = [0, 0], sizes = [1, 1], strides = [1, 1]} : vector<1x3xf32> to vector<1x1xf32>
    %878 = vector.extract_strided_slice %862 {offsets = [0, 1], sizes = [1, 1], strides = [1, 1]} : vector<1x3xf32> to vector<1x1xf32>
    %879 = vector.extract_strided_slice %862 {offsets = [0, 2], sizes = [1, 1], strides = [1, 1]} : vector<1x3xf32> to vector<1x1xf32>
    %880 = vector.extract_strided_slice %876 {offsets = [0, 0], sizes = [1, 1], strides = [1, 1]} : vector<1x3xf32> to vector<1x1xf32>
    %881 = vector.extract_strided_slice %876 {offsets = [0, 1], sizes = [1, 1], strides = [1, 1]} : vector<1x3xf32> to vector<1x1xf32>
    %882 = vector.extract_strided_slice %876 {offsets = [0, 2], sizes = [1, 1], strides = [1, 1]} : vector<1x3xf32> to vector<1x1xf32>
    %883 = arith.mulf %878, %882 : vector<1x1xf32>
    %884 = arith.mulf %879, %881 : vector<1x1xf32>
    %885 = arith.subf %883, %884 : vector<1x1xf32>
    %886 = arith.mulf %879, %880 : vector<1x1xf32>
    %887 = arith.mulf %877, %882 : vector<1x1xf32>
    %888 = arith.subf %886, %887 : vector<1x1xf32>
    %889 = arith.mulf %877, %881 : vector<1x1xf32>
    %890 = arith.mulf %878, %880 : vector<1x1xf32>
    %891 = arith.subf %889, %890 : vector<1x1xf32>
    %892 = arith.addf %877, %881 : vector<1x1xf32>
    %893 = arith.addf %892, %891 : vector<1x1xf32>
    %cst_280 = arith.constant 1.000000e+00 : f32
    %894 = vector.broadcast %cst_280 : f32 to vector<1x1xf32>
    %895 = arith.subf %893, %894 : vector<1x1xf32>
    %cst_281 = arith.constant 5.000000e-01 : f32
    %896 = vector.broadcast %cst_281 : f32 to vector<1x1xf32>
    %897 = arith.mulf %895, %896 : vector<1x1xf32>
    %cst_282 = arith.constant -0.999998986 : f32
    %cst_283 = arith.constant 0.999998986 : f32
    %898 = vector.broadcast %cst_282 : f32 to vector<1x1xf32>
    %899 = arith.maximumf %898, %897 : vector<1x1xf32>
    %900 = vector.broadcast %cst_283 : f32 to vector<1x1xf32>
    %901 = arith.minimumf %900, %899 : vector<1x1xf32>
    %902 = math.absf %901 : vector<1x1xf32>
    %cst_284 = arith.constant 5.000000e-01 : f32
    %903 = vector.broadcast %cst_284 : f32 to vector<1x1xf32>
    %904 = arith.cmpf ogt, %902, %903 : vector<1x1xf32>
    %cst_285 = arith.constant 1.000000e+00 : f32
    %905 = vector.broadcast %cst_285 : f32 to vector<1x1xf32>
    %906 = arith.subf %905, %902 : vector<1x1xf32>
    %cst_286 = arith.constant 5.000000e-01 : f32
    %907 = vector.broadcast %cst_286 : f32 to vector<1x1xf32>
    %908 = arith.mulf %907, %906 : vector<1x1xf32>
    %909 = arith.mulf %902, %902 : vector<1x1xf32>
    %910 = arith.select %904, %908, %909 : vector<1x1xi1>, vector<1x1xf32>
    %cst_287 = arith.constant 1.000000e+00 : f32
    %911 = vector.broadcast %cst_287 : f32 to vector<1x1xf32>
    %912 = arith.subf %911, %902 : vector<1x1xf32>
    %cst_288 = arith.constant 5.000000e-01 : f32
    %913 = vector.broadcast %cst_288 : f32 to vector<1x1xf32>
    %914 = arith.mulf %913, %912 : vector<1x1xf32>
    %cst_289 = arith.constant 0.000000e+00 : f32
    %915 = vector.broadcast %cst_289 : f32 to vector<1x1xf32>
    %916 = arith.maximumf %914, %915 : vector<1x1xf32>
    %917 = math.sqrt %916 : vector<1x1xf32>
    %918 = arith.select %904, %917, %902 : vector<1x1xi1>, vector<1x1xf32>
    %cst_290 = arith.constant 4.216320e-02 : f32
    %919 = vector.broadcast %cst_290 : f32 to vector<1x1xf32>
    %920 = arith.mulf %919, %910 : vector<1x1xf32>
    %cst_291 = arith.constant 0.024181312 : f32
    %921 = vector.broadcast %cst_291 : f32 to vector<1x1xf32>
    %922 = arith.addf %920, %921 : vector<1x1xf32>
    %923 = arith.mulf %922, %910 : vector<1x1xf32>
    %cst_292 = arith.constant 0.0454700254 : f32
    %924 = vector.broadcast %cst_292 : f32 to vector<1x1xf32>
    %925 = arith.addf %923, %924 : vector<1x1xf32>
    %926 = arith.mulf %925, %910 : vector<1x1xf32>
    %cst_293 = arith.constant 0.0749530047 : f32
    %927 = vector.broadcast %cst_293 : f32 to vector<1x1xf32>
    %928 = arith.addf %926, %927 : vector<1x1xf32>
    %929 = arith.mulf %928, %910 : vector<1x1xf32>
    %cst_294 = arith.constant 0.166667521 : f32
    %930 = vector.broadcast %cst_294 : f32 to vector<1x1xf32>
    %931 = arith.addf %929, %930 : vector<1x1xf32>
    %932 = arith.mulf %918, %910 : vector<1x1xf32>
    %933 = arith.mulf %932, %931 : vector<1x1xf32>
    %934 = arith.addf %918, %933 : vector<1x1xf32>
    %cst_295 = arith.constant 2.000000e+00 : f32
    %935 = vector.broadcast %cst_295 : f32 to vector<1x1xf32>
    %936 = arith.mulf %935, %934 : vector<1x1xf32>
    %cst_296 = arith.constant 1.57079637 : f32
    %937 = vector.broadcast %cst_296 : f32 to vector<1x1xf32>
    %938 = arith.subf %937, %936 : vector<1x1xf32>
    %939 = arith.select %904, %938, %934 : vector<1x1xi1>, vector<1x1xf32>
    %cst_297 = arith.constant 0.000000e+00 : f32
    %940 = vector.broadcast %cst_297 : f32 to vector<1x1xf32>
    %941 = arith.cmpf olt, %901, %940 : vector<1x1xf32>
    %cst_298 = arith.constant 0.000000e+00 : f32
    %942 = vector.broadcast %cst_298 : f32 to vector<1x1xf32>
    %943 = arith.subf %942, %939 : vector<1x1xf32>
    %944 = arith.select %941, %943, %939 : vector<1x1xi1>, vector<1x1xf32>
    %cst_299 = arith.constant 1.57079637 : f32
    %945 = vector.broadcast %cst_299 : f32 to vector<1x1xf32>
    %946 = arith.subf %945, %944 : vector<1x1xf32>
    %947 = arith.mulf %901, %901 : vector<1x1xf32>
    %cst_300 = arith.constant 1.000000e+00 : f32
    %948 = vector.broadcast %cst_300 : f32 to vector<1x1xf32>
    %949 = arith.subf %948, %947 : vector<1x1xf32>
    %cst_301 = arith.constant 9.99999996E-13 : f32
    %950 = vector.broadcast %cst_301 : f32 to vector<1x1xf32>
    %951 = arith.maximumf %949, %950 : vector<1x1xf32>
    %952 = math.sqrt %951 : vector<1x1xf32>
    %cst_302 = arith.constant 9.99999997E-7 : f32
    %953 = vector.broadcast %cst_302 : f32 to vector<1x1xf32>
    %954 = arith.maximumf %952, %953 : vector<1x1xf32>
    %cst_303 = arith.constant 2.000000e+00 : f32
    %955 = vector.broadcast %cst_303 : f32 to vector<1x1xf32>
    %956 = arith.mulf %955, %954 : vector<1x1xf32>
    %957 = arith.divf %946, %956 : vector<1x1xf32>
    %958 = arith.subf %882, %888 : vector<1x1xf32>
    %959 = arith.subf %885, %879 : vector<1x1xf32>
    %960 = arith.subf %878, %880 : vector<1x1xf32>
    %961 = tpu.concatenate %958, %959, %960 in 1 : vector<1x1xf32>, vector<1x1xf32>, vector<1x1xf32> -> vector<1x3xf32>
    %962 = vector.broadcast %957 : vector<1x1xf32> to vector<1x3xf32>
    %963 = arith.mulf %961, %962 : vector<1x3xf32>
    %964 = vector.extract_strided_slice %739 {offsets = [0, 12], sizes = [1, 6], strides = [1, 1]} : vector<1x18xf32> to vector<1x6xf32>
    %965 = vector.extract_strided_slice %964 {offsets = [0, 0], sizes = [1, 3], strides = [1, 1]} : vector<1x6xf32> to vector<1x3xf32>
    %966 = vector.extract_strided_slice %964 {offsets = [0, 3], sizes = [1, 3], strides = [1, 1]} : vector<1x6xf32> to vector<1x3xf32>
    %967 = arith.mulf %965, %965 : vector<1x3xf32>
    %cst_304 = arith.constant dense<0.000000e+00> : vector<1xf32>
    %968 = vector.multi_reduction <add>, %967, %cst_304 [1] : vector<1x3xf32> to vector<1xf32>
    %969 = vector.shape_cast %968 : vector<1xf32> to vector<1x1xf32>
    %cst_305 = arith.constant 9.99999993E-9 : f32
    %970 = vector.broadcast %cst_305 : f32 to vector<1x1xf32>
    %971 = arith.addf %969, %970 : vector<1x1xf32>
    %972 = math.rsqrt %971 : vector<1x1xf32>
    %973 = vector.broadcast %972 : vector<1x1xf32> to vector<1x3xf32>
    %974 = arith.mulf %965, %973 : vector<1x3xf32>
    %975 = arith.mulf %974, %966 : vector<1x3xf32>
    %cst_306 = arith.constant dense<0.000000e+00> : vector<1xf32>
    %976 = vector.multi_reduction <add>, %975, %cst_306 [1] : vector<1x3xf32> to vector<1xf32>
    %977 = vector.shape_cast %976 : vector<1xf32> to vector<1x1xf32>
    %978 = vector.broadcast %977 : vector<1x1xf32> to vector<1x3xf32>
    %979 = arith.mulf %978, %974 : vector<1x3xf32>
    %980 = arith.subf %966, %979 : vector<1x3xf32>
    %981 = arith.mulf %980, %980 : vector<1x3xf32>
    %cst_307 = arith.constant dense<0.000000e+00> : vector<1xf32>
    %982 = vector.multi_reduction <add>, %981, %cst_307 [1] : vector<1x3xf32> to vector<1xf32>
    %983 = vector.shape_cast %982 : vector<1xf32> to vector<1x1xf32>
    %cst_308 = arith.constant 9.99999993E-9 : f32
    %984 = vector.broadcast %cst_308 : f32 to vector<1x1xf32>
    %985 = arith.addf %983, %984 : vector<1x1xf32>
    %986 = math.rsqrt %985 : vector<1x1xf32>
    %987 = vector.broadcast %986 : vector<1x1xf32> to vector<1x3xf32>
    %988 = arith.mulf %980, %987 : vector<1x3xf32>
    %989 = vector.extract_strided_slice %974 {offsets = [0, 0], sizes = [1, 1], strides = [1, 1]} : vector<1x3xf32> to vector<1x1xf32>
    %990 = vector.extract_strided_slice %974 {offsets = [0, 1], sizes = [1, 1], strides = [1, 1]} : vector<1x3xf32> to vector<1x1xf32>
    %991 = vector.extract_strided_slice %974 {offsets = [0, 2], sizes = [1, 1], strides = [1, 1]} : vector<1x3xf32> to vector<1x1xf32>
    %992 = vector.extract_strided_slice %988 {offsets = [0, 0], sizes = [1, 1], strides = [1, 1]} : vector<1x3xf32> to vector<1x1xf32>
    %993 = vector.extract_strided_slice %988 {offsets = [0, 1], sizes = [1, 1], strides = [1, 1]} : vector<1x3xf32> to vector<1x1xf32>
    %994 = vector.extract_strided_slice %988 {offsets = [0, 2], sizes = [1, 1], strides = [1, 1]} : vector<1x3xf32> to vector<1x1xf32>
    %995 = arith.mulf %990, %994 : vector<1x1xf32>
    %996 = arith.mulf %991, %993 : vector<1x1xf32>
    %997 = arith.subf %995, %996 : vector<1x1xf32>
    %998 = arith.mulf %991, %992 : vector<1x1xf32>
    %999 = arith.mulf %989, %994 : vector<1x1xf32>
    %1000 = arith.subf %998, %999 : vector<1x1xf32>
    %1001 = arith.mulf %989, %993 : vector<1x1xf32>
    %1002 = arith.mulf %990, %992 : vector<1x1xf32>
    %1003 = arith.subf %1001, %1002 : vector<1x1xf32>
    %1004 = arith.addf %989, %993 : vector<1x1xf32>
    %1005 = arith.addf %1004, %1003 : vector<1x1xf32>
    %cst_309 = arith.constant 1.000000e+00 : f32
    %1006 = vector.broadcast %cst_309 : f32 to vector<1x1xf32>
    %1007 = arith.subf %1005, %1006 : vector<1x1xf32>
    %cst_310 = arith.constant 5.000000e-01 : f32
    %1008 = vector.broadcast %cst_310 : f32 to vector<1x1xf32>
    %1009 = arith.mulf %1007, %1008 : vector<1x1xf32>
    %cst_311 = arith.constant -0.999998986 : f32
    %cst_312 = arith.constant 0.999998986 : f32
    %1010 = vector.broadcast %cst_311 : f32 to vector<1x1xf32>
    %1011 = arith.maximumf %1010, %1009 : vector<1x1xf32>
    %1012 = vector.broadcast %cst_312 : f32 to vector<1x1xf32>
    %1013 = arith.minimumf %1012, %1011 : vector<1x1xf32>
    %1014 = math.absf %1013 : vector<1x1xf32>
    %cst_313 = arith.constant 5.000000e-01 : f32
    %1015 = vector.broadcast %cst_313 : f32 to vector<1x1xf32>
    %1016 = arith.cmpf ogt, %1014, %1015 : vector<1x1xf32>
    %cst_314 = arith.constant 1.000000e+00 : f32
    %1017 = vector.broadcast %cst_314 : f32 to vector<1x1xf32>
    %1018 = arith.subf %1017, %1014 : vector<1x1xf32>
    %cst_315 = arith.constant 5.000000e-01 : f32
    %1019 = vector.broadcast %cst_315 : f32 to vector<1x1xf32>
    %1020 = arith.mulf %1019, %1018 : vector<1x1xf32>
    %1021 = arith.mulf %1014, %1014 : vector<1x1xf32>
    %1022 = arith.select %1016, %1020, %1021 : vector<1x1xi1>, vector<1x1xf32>
    %cst_316 = arith.constant 1.000000e+00 : f32
    %1023 = vector.broadcast %cst_316 : f32 to vector<1x1xf32>
    %1024 = arith.subf %1023, %1014 : vector<1x1xf32>
    %cst_317 = arith.constant 5.000000e-01 : f32
    %1025 = vector.broadcast %cst_317 : f32 to vector<1x1xf32>
    %1026 = arith.mulf %1025, %1024 : vector<1x1xf32>
    %cst_318 = arith.constant 0.000000e+00 : f32
    %1027 = vector.broadcast %cst_318 : f32 to vector<1x1xf32>
    %1028 = arith.maximumf %1026, %1027 : vector<1x1xf32>
    %1029 = math.sqrt %1028 : vector<1x1xf32>
    %1030 = arith.select %1016, %1029, %1014 : vector<1x1xi1>, vector<1x1xf32>
    %cst_319 = arith.constant 4.216320e-02 : f32
    %1031 = vector.broadcast %cst_319 : f32 to vector<1x1xf32>
    %1032 = arith.mulf %1031, %1022 : vector<1x1xf32>
    %cst_320 = arith.constant 0.024181312 : f32
    %1033 = vector.broadcast %cst_320 : f32 to vector<1x1xf32>
    %1034 = arith.addf %1032, %1033 : vector<1x1xf32>
    %1035 = arith.mulf %1034, %1022 : vector<1x1xf32>
    %cst_321 = arith.constant 0.0454700254 : f32
    %1036 = vector.broadcast %cst_321 : f32 to vector<1x1xf32>
    %1037 = arith.addf %1035, %1036 : vector<1x1xf32>
    %1038 = arith.mulf %1037, %1022 : vector<1x1xf32>
    %cst_322 = arith.constant 0.0749530047 : f32
    %1039 = vector.broadcast %cst_322 : f32 to vector<1x1xf32>
    %1040 = arith.addf %1038, %1039 : vector<1x1xf32>
    %1041 = arith.mulf %1040, %1022 : vector<1x1xf32>
    %cst_323 = arith.constant 0.166667521 : f32
    %1042 = vector.broadcast %cst_323 : f32 to vector<1x1xf32>
    %1043 = arith.addf %1041, %1042 : vector<1x1xf32>
    %1044 = arith.mulf %1030, %1022 : vector<1x1xf32>
    %1045 = arith.mulf %1044, %1043 : vector<1x1xf32>
    %1046 = arith.addf %1030, %1045 : vector<1x1xf32>
    %cst_324 = arith.constant 2.000000e+00 : f32
    %1047 = vector.broadcast %cst_324 : f32 to vector<1x1xf32>
    %1048 = arith.mulf %1047, %1046 : vector<1x1xf32>
    %cst_325 = arith.constant 1.57079637 : f32
    %1049 = vector.broadcast %cst_325 : f32 to vector<1x1xf32>
    %1050 = arith.subf %1049, %1048 : vector<1x1xf32>
    %1051 = arith.select %1016, %1050, %1046 : vector<1x1xi1>, vector<1x1xf32>
    %cst_326 = arith.constant 0.000000e+00 : f32
    %1052 = vector.broadcast %cst_326 : f32 to vector<1x1xf32>
    %1053 = arith.cmpf olt, %1013, %1052 : vector<1x1xf32>
    %cst_327 = arith.constant 0.000000e+00 : f32
    %1054 = vector.broadcast %cst_327 : f32 to vector<1x1xf32>
    %1055 = arith.subf %1054, %1051 : vector<1x1xf32>
    %1056 = arith.select %1053, %1055, %1051 : vector<1x1xi1>, vector<1x1xf32>
    %cst_328 = arith.constant 1.57079637 : f32
    %1057 = vector.broadcast %cst_328 : f32 to vector<1x1xf32>
    %1058 = arith.subf %1057, %1056 : vector<1x1xf32>
    %1059 = arith.mulf %1013, %1013 : vector<1x1xf32>
    %cst_329 = arith.constant 1.000000e+00 : f32
    %1060 = vector.broadcast %cst_329 : f32 to vector<1x1xf32>
    %1061 = arith.subf %1060, %1059 : vector<1x1xf32>
    %cst_330 = arith.constant 9.99999996E-13 : f32
    %1062 = vector.broadcast %cst_330 : f32 to vector<1x1xf32>
    %1063 = arith.maximumf %1061, %1062 : vector<1x1xf32>
    %1064 = math.sqrt %1063 : vector<1x1xf32>
    %cst_331 = arith.constant 9.99999997E-7 : f32
    %1065 = vector.broadcast %cst_331 : f32 to vector<1x1xf32>
    %1066 = arith.maximumf %1064, %1065 : vector<1x1xf32>
    %cst_332 = arith.constant 2.000000e+00 : f32
    %1067 = vector.broadcast %cst_332 : f32 to vector<1x1xf32>
    %1068 = arith.mulf %1067, %1066 : vector<1x1xf32>
    %1069 = arith.divf %1058, %1068 : vector<1x1xf32>
    %1070 = arith.subf %994, %1000 : vector<1x1xf32>
    %1071 = arith.subf %997, %991 : vector<1x1xf32>
    %1072 = arith.subf %990, %992 : vector<1x1xf32>
    %1073 = tpu.concatenate %1070, %1071, %1072 in 1 : vector<1x1xf32>, vector<1x1xf32>, vector<1x1xf32> -> vector<1x3xf32>
    %1074 = vector.broadcast %1069 : vector<1x1xf32> to vector<1x3xf32>
    %1075 = arith.mulf %1073, %1074 : vector<1x3xf32>
    %1076 = vector.extract_strided_slice %655 {offsets = [0, 4], sizes = [1, 1], strides = [1, 1]} : vector<1x12xf32> to vector<1x1xf32>
    %cst_333 = arith.constant 8.000000e+00 : f32
    %1077 = vector.broadcast %cst_333 : f32 to vector<1x1xf32>
    %1078 = arith.mulf %1076, %1077 : vector<1x1xf32>
    %1079 = vector.extract_strided_slice %655 {offsets = [0, 5], sizes = [1, 1], strides = [1, 1]} : vector<1x12xf32> to vector<1x1xf32>
    %cst_334 = arith.constant 8.000000e+00 : f32
    %1080 = vector.broadcast %cst_334 : f32 to vector<1x1xf32>
    %1081 = arith.mulf %1079, %1080 : vector<1x1xf32>
    %1082 = vector.extract_strided_slice %655 {offsets = [0, 6], sizes = [1, 1], strides = [1, 1]} : vector<1x12xf32> to vector<1x1xf32>
    %cst_335 = arith.constant 8.000000e+00 : f32
    %1083 = vector.broadcast %cst_335 : f32 to vector<1x1xf32>
    %1084 = arith.mulf %1082, %1083 : vector<1x1xf32>
    %1085 = vector.extract_strided_slice %655 {offsets = [0, 7], sizes = [1, 1], strides = [1, 1]} : vector<1x12xf32> to vector<1x1xf32>
    %cst_336 = arith.constant 8.000000e+00 : f32
    %1086 = vector.broadcast %cst_336 : f32 to vector<1x1xf32>
    %1087 = arith.mulf %1085, %1086 : vector<1x1xf32>
    %cst_337 = arith.constant 5.000000e-01 : f32
    %1088 = vector.broadcast %cst_337 : f32 to vector<1x1xf32>
    %1089 = arith.mulf %1084, %1088 : vector<1x1xf32>
    %1090 = arith.subf %1078, %1089 : vector<1x1xf32>
    %cst_338 = arith.constant 2.000000e+00 : f32
    %1091 = vector.broadcast %cst_338 : f32 to vector<1x1xf32>
    %1092 = arith.mulf %1090, %1091 : vector<1x1xf32>
    %cst_339 = arith.constant 5.000000e-01 : f32
    %1093 = vector.broadcast %cst_339 : f32 to vector<1x1xf32>
    %1094 = arith.mulf %1084, %1093 : vector<1x1xf32>
    %1095 = arith.addf %1078, %1094 : vector<1x1xf32>
    %cst_340 = arith.constant 2.000000e+00 : f32
    %1096 = vector.broadcast %cst_340 : f32 to vector<1x1xf32>
    %1097 = arith.mulf %1095, %1096 : vector<1x1xf32>
    %cst_341 = arith.constant 5.000000e-01 : f32
    %1098 = vector.broadcast %cst_341 : f32 to vector<1x1xf32>
    %1099 = arith.mulf %1087, %1098 : vector<1x1xf32>
    %1100 = arith.subf %1081, %1099 : vector<1x1xf32>
    %cst_342 = arith.constant 2.000000e+00 : f32
    %1101 = vector.broadcast %cst_342 : f32 to vector<1x1xf32>
    %1102 = arith.mulf %1100, %1101 : vector<1x1xf32>
    %cst_343 = arith.constant 5.000000e-01 : f32
    %1103 = vector.broadcast %cst_343 : f32 to vector<1x1xf32>
    %1104 = arith.mulf %1087, %1103 : vector<1x1xf32>
    %1105 = arith.addf %1081, %1104 : vector<1x1xf32>
    %cst_344 = arith.constant 2.000000e+00 : f32
    %1106 = vector.broadcast %cst_344 : f32 to vector<1x1xf32>
    %1107 = arith.mulf %1105, %1106 : vector<1x1xf32>
    %1108 = arith.subf %1097, %1092 : vector<1x1xf32>
    %1109 = arith.subf %1107, %1102 : vector<1x1xf32>
    %cst_345 = arith.constant 5.000000e-01 : f32
    %1110 = vector.broadcast %cst_345 : f32 to vector<1x1xf32>
    %1111 = arith.mulf %1110, %1108 : vector<1x1xf32>
    %1112 = arith.addf %1092, %1111 : vector<1x1xf32>
    %cst_346 = arith.constant 5.000000e-01 : f32
    %1113 = vector.broadcast %cst_346 : f32 to vector<1x1xf32>
    %1114 = arith.mulf %1113, %1109 : vector<1x1xf32>
    %1115 = arith.addf %1102, %1114 : vector<1x1xf32>
    %cst_347 = arith.constant 1.000000e+00 : f32
    %1116 = vector.broadcast %cst_347 : f32 to vector<1x1xf32>
    %1117 = arith.mulf %1116, %1109 : vector<1x1xf32>
    %1118 = arith.cmpf ogt, %1108, %1117 : vector<1x1xf32>
    %cst_348 = arith.constant 1.000000e+00 : f32
    %1119 = vector.broadcast %cst_348 : f32 to vector<1x1xf32>
    %1120 = arith.divf %1108, %1119 : vector<1x1xf32>
    %1121 = arith.select %1118, %1120, %1109 : vector<1x1xi1>, vector<1x1xf32>
    %cst_349 = arith.constant 1.000000e+00 : f32
    %1122 = vector.broadcast %cst_349 : f32 to vector<1x1xf32>
    %1123 = arith.mulf %1122, %1109 : vector<1x1xf32>
    %1124 = arith.cmpf olt, %1108, %1123 : vector<1x1xf32>
    %cst_350 = arith.constant 1.000000e+00 : f32
    %1125 = vector.broadcast %cst_350 : f32 to vector<1x1xf32>
    %1126 = arith.mulf %1109, %1125 : vector<1x1xf32>
    %1127 = arith.select %1124, %1126, %1108 : vector<1x1xi1>, vector<1x1xf32>
    %cst_351 = arith.constant 2.000000e+00 : f32
    %1128 = vector.broadcast %cst_351 : f32 to vector<1x1xf32>
    %1129 = arith.mulf %1127, %1128 : vector<1x1xf32>
    %cst_352 = arith.constant 2.000000e+00 : f32
    %1130 = vector.broadcast %cst_352 : f32 to vector<1x1xf32>
    %1131 = arith.mulf %1121, %1130 : vector<1x1xf32>
    %cst_353 = arith.constant 5.000000e-01 : f32
    %1132 = vector.broadcast %cst_353 : f32 to vector<1x1xf32>
    %1133 = arith.mulf %1132, %1129 : vector<1x1xf32>
    %1134 = arith.subf %1112, %1133 : vector<1x1xf32>
    %cst_354 = arith.constant 5.000000e-01 : f32
    %1135 = vector.broadcast %cst_354 : f32 to vector<1x1xf32>
    %1136 = arith.mulf %1135, %1131 : vector<1x1xf32>
    %1137 = arith.subf %1115, %1136 : vector<1x1xf32>
    %1138 = arith.addf %1134, %1129 : vector<1x1xf32>
    %1139 = arith.addf %1137, %1131 : vector<1x1xf32>
    %1140 = tpu.concatenate %1134, %1137, %1138, %1139 in 1 : vector<1x1xf32>, vector<1x1xf32>, vector<1x1xf32>, vector<1x1xf32> -> vector<1x4xf32>
    %c0_355 = arith.constant 0 : index
    %c0_356 = arith.constant 0 : index
    %1141 = vector.load %arg18[%c0_355, %c0_356] : memref<32x32xf32, #tpu.memory_space<vmem>>, vector<32x32xf32>
    %cst_357 = arith.constant dense<0.000000e+00> : vector<1x32xf32>
    %1142 = tpu.matmul %11, %1141, %cst_357 {dimension_numbers = #tpu.dot_dimension_numbers<[1], [0], [0], [1], [0, 0, 1, 1], [], []>} : vector<1x32xf32>, vector<32x32xf32>, vector<1x32xf32> -> vector<1x32xf32>
    %c0_358 = arith.constant 0 : index
    %c0_359 = arith.constant 0 : index
    %1143 = vector.load %arg19[%c0_358, %c0_359] : memref<4x32xf32, #tpu.memory_space<vmem>>, vector<4x32xf32>
    %cst_360 = arith.constant dense<0.000000e+00> : vector<1x32xf32>
    %1144 = tpu.matmul %1140, %1143, %cst_360 {dimension_numbers = #tpu.dot_dimension_numbers<[1], [0], [0], [1], [0, 0, 1, 1], [], []>} : vector<1x4xf32>, vector<4x32xf32>, vector<1x32xf32> -> vector<1x32xf32>
    %1145 = arith.addf %1142, %1144 : vector<1x32xf32>
    %c0_361 = arith.constant 0 : index
    %c0_362 = arith.constant 0 : index
    %1146 = vector.load %arg20[%c0_361, %c0_362] : memref<1x32xf32, #tpu.memory_space<vmem>>, vector<1x32xf32>
    %1147 = arith.addf %1145, %1146 : vector<1x32xf32>
    %1148 = math.tanh %1147 : vector<1x32xf32>
    %c0_363 = arith.constant 0 : index
    %c0_364 = arith.constant 0 : index
    %1149 = vector.load %arg21[%c0_363, %c0_364] : memref<32x9xf32, #tpu.memory_space<vmem>>, vector<32x9xf32>
    %cst_365 = arith.constant dense<0.000000e+00> : vector<1x9xf32>
    %1150 = tpu.matmul %1148, %1149, %cst_365 {dimension_numbers = #tpu.dot_dimension_numbers<[1], [0], [0], [1], [0, 0, 1, 1], [], []>} : vector<1x32xf32>, vector<32x9xf32>, vector<1x9xf32> -> vector<1x9xf32>
    %c0_366 = arith.constant 0 : index
    %c0_367 = arith.constant 0 : index
    %1151 = vector.load %arg22[%c0_366, %c0_367] : memref<1x9xf32, #tpu.memory_space<vmem>>, vector<1x9xf32>
    %1152 = arith.addf %1150, %1151 : vector<1x9xf32>
    %c0_368 = arith.constant 0 : index
    %c0_369 = arith.constant 0 : index
    %1153 = vector.load %arg23[%c0_368, %c0_369] : memref<32x18xf32, #tpu.memory_space<vmem>>, vector<32x18xf32>
    %cst_370 = arith.constant dense<0.000000e+00> : vector<1x18xf32>
    %1154 = tpu.matmul %1148, %1153, %cst_370 {dimension_numbers = #tpu.dot_dimension_numbers<[1], [0], [0], [1], [0, 0, 1, 1], [], []>} : vector<1x32xf32>, vector<32x18xf32>, vector<1x18xf32> -> vector<1x18xf32>
    %c0_371 = arith.constant 0 : index
    %c0_372 = arith.constant 0 : index
    %1155 = vector.load %arg24[%c0_371, %c0_372] : memref<9x18xf32, #tpu.memory_space<vmem>>, vector<9x18xf32>
    %cst_373 = arith.constant dense<0.000000e+00> : vector<1x18xf32>
    %1156 = tpu.matmul %1152, %1155, %cst_373 {dimension_numbers = #tpu.dot_dimension_numbers<[1], [0], [0], [1], [0, 0, 1, 1], [], []>} : vector<1x9xf32>, vector<9x18xf32>, vector<1x18xf32> -> vector<1x18xf32>
    %1157 = arith.addf %1154, %1156 : vector<1x18xf32>
    %c0_374 = arith.constant 0 : index
    %c0_375 = arith.constant 0 : index
    %1158 = vector.load %arg25[%c0_374, %c0_375] : memref<1x18xf32, #tpu.memory_space<vmem>>, vector<1x18xf32>
    %1159 = arith.addf %1157, %1158 : vector<1x18xf32>
    %1160 = vector.extract_strided_slice %1159 {offsets = [0, 0], sizes = [1, 6], strides = [1, 1]} : vector<1x18xf32> to vector<1x6xf32>
    %1161 = vector.extract_strided_slice %1160 {offsets = [0, 0], sizes = [1, 3], strides = [1, 1]} : vector<1x6xf32> to vector<1x3xf32>
    %1162 = vector.extract_strided_slice %1160 {offsets = [0, 3], sizes = [1, 3], strides = [1, 1]} : vector<1x6xf32> to vector<1x3xf32>
    %1163 = arith.mulf %1161, %1161 : vector<1x3xf32>
    %cst_376 = arith.constant dense<0.000000e+00> : vector<1xf32>
    %1164 = vector.multi_reduction <add>, %1163, %cst_376 [1] : vector<1x3xf32> to vector<1xf32>
    %1165 = vector.shape_cast %1164 : vector<1xf32> to vector<1x1xf32>
    %cst_377 = arith.constant 9.99999993E-9 : f32
    %1166 = vector.broadcast %cst_377 : f32 to vector<1x1xf32>
    %1167 = arith.addf %1165, %1166 : vector<1x1xf32>
    %1168 = math.rsqrt %1167 : vector<1x1xf32>
    %1169 = vector.broadcast %1168 : vector<1x1xf32> to vector<1x3xf32>
    %1170 = arith.mulf %1161, %1169 : vector<1x3xf32>
    %1171 = arith.mulf %1170, %1162 : vector<1x3xf32>
    %cst_378 = arith.constant dense<0.000000e+00> : vector<1xf32>
    %1172 = vector.multi_reduction <add>, %1171, %cst_378 [1] : vector<1x3xf32> to vector<1xf32>
    %1173 = vector.shape_cast %1172 : vector<1xf32> to vector<1x1xf32>
    %1174 = vector.broadcast %1173 : vector<1x1xf32> to vector<1x3xf32>
    %1175 = arith.mulf %1174, %1170 : vector<1x3xf32>
    %1176 = arith.subf %1162, %1175 : vector<1x3xf32>
    %1177 = arith.mulf %1176, %1176 : vector<1x3xf32>
    %cst_379 = arith.constant dense<0.000000e+00> : vector<1xf32>
    %1178 = vector.multi_reduction <add>, %1177, %cst_379 [1] : vector<1x3xf32> to vector<1xf32>
    %1179 = vector.shape_cast %1178 : vector<1xf32> to vector<1x1xf32>
    %cst_380 = arith.constant 9.99999993E-9 : f32
    %1180 = vector.broadcast %cst_380 : f32 to vector<1x1xf32>
    %1181 = arith.addf %1179, %1180 : vector<1x1xf32>
    %1182 = math.rsqrt %1181 : vector<1x1xf32>
    %1183 = vector.broadcast %1182 : vector<1x1xf32> to vector<1x3xf32>
    %1184 = arith.mulf %1176, %1183 : vector<1x3xf32>
    %1185 = vector.extract_strided_slice %1170 {offsets = [0, 0], sizes = [1, 1], strides = [1, 1]} : vector<1x3xf32> to vector<1x1xf32>
    %1186 = vector.extract_strided_slice %1170 {offsets = [0, 1], sizes = [1, 1], strides = [1, 1]} : vector<1x3xf32> to vector<1x1xf32>
    %1187 = vector.extract_strided_slice %1170 {offsets = [0, 2], sizes = [1, 1], strides = [1, 1]} : vector<1x3xf32> to vector<1x1xf32>
    %1188 = vector.extract_strided_slice %1184 {offsets = [0, 0], sizes = [1, 1], strides = [1, 1]} : vector<1x3xf32> to vector<1x1xf32>
    %1189 = vector.extract_strided_slice %1184 {offsets = [0, 1], sizes = [1, 1], strides = [1, 1]} : vector<1x3xf32> to vector<1x1xf32>
    %1190 = vector.extract_strided_slice %1184 {offsets = [0, 2], sizes = [1, 1], strides = [1, 1]} : vector<1x3xf32> to vector<1x1xf32>
    %1191 = arith.mulf %1186, %1190 : vector<1x1xf32>
    %1192 = arith.mulf %1187, %1189 : vector<1x1xf32>
    %1193 = arith.subf %1191, %1192 : vector<1x1xf32>
    %1194 = arith.mulf %1187, %1188 : vector<1x1xf32>
    %1195 = arith.mulf %1185, %1190 : vector<1x1xf32>
    %1196 = arith.subf %1194, %1195 : vector<1x1xf32>
    %1197 = arith.mulf %1185, %1189 : vector<1x1xf32>
    %1198 = arith.mulf %1186, %1188 : vector<1x1xf32>
    %1199 = arith.subf %1197, %1198 : vector<1x1xf32>
    %1200 = arith.addf %1185, %1189 : vector<1x1xf32>
    %1201 = arith.addf %1200, %1199 : vector<1x1xf32>
    %cst_381 = arith.constant 1.000000e+00 : f32
    %1202 = vector.broadcast %cst_381 : f32 to vector<1x1xf32>
    %1203 = arith.subf %1201, %1202 : vector<1x1xf32>
    %cst_382 = arith.constant 5.000000e-01 : f32
    %1204 = vector.broadcast %cst_382 : f32 to vector<1x1xf32>
    %1205 = arith.mulf %1203, %1204 : vector<1x1xf32>
    %cst_383 = arith.constant -0.999998986 : f32
    %cst_384 = arith.constant 0.999998986 : f32
    %1206 = vector.broadcast %cst_383 : f32 to vector<1x1xf32>
    %1207 = arith.maximumf %1206, %1205 : vector<1x1xf32>
    %1208 = vector.broadcast %cst_384 : f32 to vector<1x1xf32>
    %1209 = arith.minimumf %1208, %1207 : vector<1x1xf32>
    %1210 = math.absf %1209 : vector<1x1xf32>
    %cst_385 = arith.constant 5.000000e-01 : f32
    %1211 = vector.broadcast %cst_385 : f32 to vector<1x1xf32>
    %1212 = arith.cmpf ogt, %1210, %1211 : vector<1x1xf32>
    %cst_386 = arith.constant 1.000000e+00 : f32
    %1213 = vector.broadcast %cst_386 : f32 to vector<1x1xf32>
    %1214 = arith.subf %1213, %1210 : vector<1x1xf32>
    %cst_387 = arith.constant 5.000000e-01 : f32
    %1215 = vector.broadcast %cst_387 : f32 to vector<1x1xf32>
    %1216 = arith.mulf %1215, %1214 : vector<1x1xf32>
    %1217 = arith.mulf %1210, %1210 : vector<1x1xf32>
    %1218 = arith.select %1212, %1216, %1217 : vector<1x1xi1>, vector<1x1xf32>
    %cst_388 = arith.constant 1.000000e+00 : f32
    %1219 = vector.broadcast %cst_388 : f32 to vector<1x1xf32>
    %1220 = arith.subf %1219, %1210 : vector<1x1xf32>
    %cst_389 = arith.constant 5.000000e-01 : f32
    %1221 = vector.broadcast %cst_389 : f32 to vector<1x1xf32>
    %1222 = arith.mulf %1221, %1220 : vector<1x1xf32>
    %cst_390 = arith.constant 0.000000e+00 : f32
    %1223 = vector.broadcast %cst_390 : f32 to vector<1x1xf32>
    %1224 = arith.maximumf %1222, %1223 : vector<1x1xf32>
    %1225 = math.sqrt %1224 : vector<1x1xf32>
    %1226 = arith.select %1212, %1225, %1210 : vector<1x1xi1>, vector<1x1xf32>
    %cst_391 = arith.constant 4.216320e-02 : f32
    %1227 = vector.broadcast %cst_391 : f32 to vector<1x1xf32>
    %1228 = arith.mulf %1227, %1218 : vector<1x1xf32>
    %cst_392 = arith.constant 0.024181312 : f32
    %1229 = vector.broadcast %cst_392 : f32 to vector<1x1xf32>
    %1230 = arith.addf %1228, %1229 : vector<1x1xf32>
    %1231 = arith.mulf %1230, %1218 : vector<1x1xf32>
    %cst_393 = arith.constant 0.0454700254 : f32
    %1232 = vector.broadcast %cst_393 : f32 to vector<1x1xf32>
    %1233 = arith.addf %1231, %1232 : vector<1x1xf32>
    %1234 = arith.mulf %1233, %1218 : vector<1x1xf32>
    %cst_394 = arith.constant 0.0749530047 : f32
    %1235 = vector.broadcast %cst_394 : f32 to vector<1x1xf32>
    %1236 = arith.addf %1234, %1235 : vector<1x1xf32>
    %1237 = arith.mulf %1236, %1218 : vector<1x1xf32>
    %cst_395 = arith.constant 0.166667521 : f32
    %1238 = vector.broadcast %cst_395 : f32 to vector<1x1xf32>
    %1239 = arith.addf %1237, %1238 : vector<1x1xf32>
    %1240 = arith.mulf %1226, %1218 : vector<1x1xf32>
    %1241 = arith.mulf %1240, %1239 : vector<1x1xf32>
    %1242 = arith.addf %1226, %1241 : vector<1x1xf32>
    %cst_396 = arith.constant 2.000000e+00 : f32
    %1243 = vector.broadcast %cst_396 : f32 to vector<1x1xf32>
    %1244 = arith.mulf %1243, %1242 : vector<1x1xf32>
    %cst_397 = arith.constant 1.57079637 : f32
    %1245 = vector.broadcast %cst_397 : f32 to vector<1x1xf32>
    %1246 = arith.subf %1245, %1244 : vector<1x1xf32>
    %1247 = arith.select %1212, %1246, %1242 : vector<1x1xi1>, vector<1x1xf32>
    %cst_398 = arith.constant 0.000000e+00 : f32
    %1248 = vector.broadcast %cst_398 : f32 to vector<1x1xf32>
    %1249 = arith.cmpf olt, %1209, %1248 : vector<1x1xf32>
    %cst_399 = arith.constant 0.000000e+00 : f32
    %1250 = vector.broadcast %cst_399 : f32 to vector<1x1xf32>
    %1251 = arith.subf %1250, %1247 : vector<1x1xf32>
    %1252 = arith.select %1249, %1251, %1247 : vector<1x1xi1>, vector<1x1xf32>
    %cst_400 = arith.constant 1.57079637 : f32
    %1253 = vector.broadcast %cst_400 : f32 to vector<1x1xf32>
    %1254 = arith.subf %1253, %1252 : vector<1x1xf32>
    %1255 = arith.mulf %1209, %1209 : vector<1x1xf32>
    %cst_401 = arith.constant 1.000000e+00 : f32
    %1256 = vector.broadcast %cst_401 : f32 to vector<1x1xf32>
    %1257 = arith.subf %1256, %1255 : vector<1x1xf32>
    %cst_402 = arith.constant 9.99999996E-13 : f32
    %1258 = vector.broadcast %cst_402 : f32 to vector<1x1xf32>
    %1259 = arith.maximumf %1257, %1258 : vector<1x1xf32>
    %1260 = math.sqrt %1259 : vector<1x1xf32>
    %cst_403 = arith.constant 9.99999997E-7 : f32
    %1261 = vector.broadcast %cst_403 : f32 to vector<1x1xf32>
    %1262 = arith.maximumf %1260, %1261 : vector<1x1xf32>
    %cst_404 = arith.constant 2.000000e+00 : f32
    %1263 = vector.broadcast %cst_404 : f32 to vector<1x1xf32>
    %1264 = arith.mulf %1263, %1262 : vector<1x1xf32>
    %1265 = arith.divf %1254, %1264 : vector<1x1xf32>
    %1266 = arith.subf %1190, %1196 : vector<1x1xf32>
    %1267 = arith.subf %1193, %1187 : vector<1x1xf32>
    %1268 = arith.subf %1186, %1188 : vector<1x1xf32>
    %1269 = tpu.concatenate %1266, %1267, %1268 in 1 : vector<1x1xf32>, vector<1x1xf32>, vector<1x1xf32> -> vector<1x3xf32>
    %1270 = vector.broadcast %1265 : vector<1x1xf32> to vector<1x3xf32>
    %1271 = arith.mulf %1269, %1270 : vector<1x3xf32>
    %1272 = vector.extract_strided_slice %1159 {offsets = [0, 6], sizes = [1, 6], strides = [1, 1]} : vector<1x18xf32> to vector<1x6xf32>
    %1273 = vector.extract_strided_slice %1272 {offsets = [0, 0], sizes = [1, 3], strides = [1, 1]} : vector<1x6xf32> to vector<1x3xf32>
    %1274 = vector.extract_strided_slice %1272 {offsets = [0, 3], sizes = [1, 3], strides = [1, 1]} : vector<1x6xf32> to vector<1x3xf32>
    %1275 = arith.mulf %1273, %1273 : vector<1x3xf32>
    %cst_405 = arith.constant dense<0.000000e+00> : vector<1xf32>
    %1276 = vector.multi_reduction <add>, %1275, %cst_405 [1] : vector<1x3xf32> to vector<1xf32>
    %1277 = vector.shape_cast %1276 : vector<1xf32> to vector<1x1xf32>
    %cst_406 = arith.constant 9.99999993E-9 : f32
    %1278 = vector.broadcast %cst_406 : f32 to vector<1x1xf32>
    %1279 = arith.addf %1277, %1278 : vector<1x1xf32>
    %1280 = math.rsqrt %1279 : vector<1x1xf32>
    %1281 = vector.broadcast %1280 : vector<1x1xf32> to vector<1x3xf32>
    %1282 = arith.mulf %1273, %1281 : vector<1x3xf32>
    %1283 = arith.mulf %1282, %1274 : vector<1x3xf32>
    %cst_407 = arith.constant dense<0.000000e+00> : vector<1xf32>
    %1284 = vector.multi_reduction <add>, %1283, %cst_407 [1] : vector<1x3xf32> to vector<1xf32>
    %1285 = vector.shape_cast %1284 : vector<1xf32> to vector<1x1xf32>
    %1286 = vector.broadcast %1285 : vector<1x1xf32> to vector<1x3xf32>
    %1287 = arith.mulf %1286, %1282 : vector<1x3xf32>
    %1288 = arith.subf %1274, %1287 : vector<1x3xf32>
    %1289 = arith.mulf %1288, %1288 : vector<1x3xf32>
    %cst_408 = arith.constant dense<0.000000e+00> : vector<1xf32>
    %1290 = vector.multi_reduction <add>, %1289, %cst_408 [1] : vector<1x3xf32> to vector<1xf32>
    %1291 = vector.shape_cast %1290 : vector<1xf32> to vector<1x1xf32>
    %cst_409 = arith.constant 9.99999993E-9 : f32
    %1292 = vector.broadcast %cst_409 : f32 to vector<1x1xf32>
    %1293 = arith.addf %1291, %1292 : vector<1x1xf32>
    %1294 = math.rsqrt %1293 : vector<1x1xf32>
    %1295 = vector.broadcast %1294 : vector<1x1xf32> to vector<1x3xf32>
    %1296 = arith.mulf %1288, %1295 : vector<1x3xf32>
    %1297 = vector.extract_strided_slice %1282 {offsets = [0, 0], sizes = [1, 1], strides = [1, 1]} : vector<1x3xf32> to vector<1x1xf32>
    %1298 = vector.extract_strided_slice %1282 {offsets = [0, 1], sizes = [1, 1], strides = [1, 1]} : vector<1x3xf32> to vector<1x1xf32>
    %1299 = vector.extract_strided_slice %1282 {offsets = [0, 2], sizes = [1, 1], strides = [1, 1]} : vector<1x3xf32> to vector<1x1xf32>
    %1300 = vector.extract_strided_slice %1296 {offsets = [0, 0], sizes = [1, 1], strides = [1, 1]} : vector<1x3xf32> to vector<1x1xf32>
    %1301 = vector.extract_strided_slice %1296 {offsets = [0, 1], sizes = [1, 1], strides = [1, 1]} : vector<1x3xf32> to vector<1x1xf32>
    %1302 = vector.extract_strided_slice %1296 {offsets = [0, 2], sizes = [1, 1], strides = [1, 1]} : vector<1x3xf32> to vector<1x1xf32>
    %1303 = arith.mulf %1298, %1302 : vector<1x1xf32>
    %1304 = arith.mulf %1299, %1301 : vector<1x1xf32>
    %1305 = arith.subf %1303, %1304 : vector<1x1xf32>
    %1306 = arith.mulf %1299, %1300 : vector<1x1xf32>
    %1307 = arith.mulf %1297, %1302 : vector<1x1xf32>
    %1308 = arith.subf %1306, %1307 : vector<1x1xf32>
    %1309 = arith.mulf %1297, %1301 : vector<1x1xf32>
    %1310 = arith.mulf %1298, %1300 : vector<1x1xf32>
    %1311 = arith.subf %1309, %1310 : vector<1x1xf32>
    %1312 = arith.addf %1297, %1301 : vector<1x1xf32>
    %1313 = arith.addf %1312, %1311 : vector<1x1xf32>
    %cst_410 = arith.constant 1.000000e+00 : f32
    %1314 = vector.broadcast %cst_410 : f32 to vector<1x1xf32>
    %1315 = arith.subf %1313, %1314 : vector<1x1xf32>
    %cst_411 = arith.constant 5.000000e-01 : f32
    %1316 = vector.broadcast %cst_411 : f32 to vector<1x1xf32>
    %1317 = arith.mulf %1315, %1316 : vector<1x1xf32>
    %cst_412 = arith.constant -0.999998986 : f32
    %cst_413 = arith.constant 0.999998986 : f32
    %1318 = vector.broadcast %cst_412 : f32 to vector<1x1xf32>
    %1319 = arith.maximumf %1318, %1317 : vector<1x1xf32>
    %1320 = vector.broadcast %cst_413 : f32 to vector<1x1xf32>
    %1321 = arith.minimumf %1320, %1319 : vector<1x1xf32>
    %1322 = math.absf %1321 : vector<1x1xf32>
    %cst_414 = arith.constant 5.000000e-01 : f32
    %1323 = vector.broadcast %cst_414 : f32 to vector<1x1xf32>
    %1324 = arith.cmpf ogt, %1322, %1323 : vector<1x1xf32>
    %cst_415 = arith.constant 1.000000e+00 : f32
    %1325 = vector.broadcast %cst_415 : f32 to vector<1x1xf32>
    %1326 = arith.subf %1325, %1322 : vector<1x1xf32>
    %cst_416 = arith.constant 5.000000e-01 : f32
    %1327 = vector.broadcast %cst_416 : f32 to vector<1x1xf32>
    %1328 = arith.mulf %1327, %1326 : vector<1x1xf32>
    %1329 = arith.mulf %1322, %1322 : vector<1x1xf32>
    %1330 = arith.select %1324, %1328, %1329 : vector<1x1xi1>, vector<1x1xf32>
    %cst_417 = arith.constant 1.000000e+00 : f32
    %1331 = vector.broadcast %cst_417 : f32 to vector<1x1xf32>
    %1332 = arith.subf %1331, %1322 : vector<1x1xf32>
    %cst_418 = arith.constant 5.000000e-01 : f32
    %1333 = vector.broadcast %cst_418 : f32 to vector<1x1xf32>
    %1334 = arith.mulf %1333, %1332 : vector<1x1xf32>
    %cst_419 = arith.constant 0.000000e+00 : f32
    %1335 = vector.broadcast %cst_419 : f32 to vector<1x1xf32>
    %1336 = arith.maximumf %1334, %1335 : vector<1x1xf32>
    %1337 = math.sqrt %1336 : vector<1x1xf32>
    %1338 = arith.select %1324, %1337, %1322 : vector<1x1xi1>, vector<1x1xf32>
    %cst_420 = arith.constant 4.216320e-02 : f32
    %1339 = vector.broadcast %cst_420 : f32 to vector<1x1xf32>
    %1340 = arith.mulf %1339, %1330 : vector<1x1xf32>
    %cst_421 = arith.constant 0.024181312 : f32
    %1341 = vector.broadcast %cst_421 : f32 to vector<1x1xf32>
    %1342 = arith.addf %1340, %1341 : vector<1x1xf32>
    %1343 = arith.mulf %1342, %1330 : vector<1x1xf32>
    %cst_422 = arith.constant 0.0454700254 : f32
    %1344 = vector.broadcast %cst_422 : f32 to vector<1x1xf32>
    %1345 = arith.addf %1343, %1344 : vector<1x1xf32>
    %1346 = arith.mulf %1345, %1330 : vector<1x1xf32>
    %cst_423 = arith.constant 0.0749530047 : f32
    %1347 = vector.broadcast %cst_423 : f32 to vector<1x1xf32>
    %1348 = arith.addf %1346, %1347 : vector<1x1xf32>
    %1349 = arith.mulf %1348, %1330 : vector<1x1xf32>
    %cst_424 = arith.constant 0.166667521 : f32
    %1350 = vector.broadcast %cst_424 : f32 to vector<1x1xf32>
    %1351 = arith.addf %1349, %1350 : vector<1x1xf32>
    %1352 = arith.mulf %1338, %1330 : vector<1x1xf32>
    %1353 = arith.mulf %1352, %1351 : vector<1x1xf32>
    %1354 = arith.addf %1338, %1353 : vector<1x1xf32>
    %cst_425 = arith.constant 2.000000e+00 : f32
    %1355 = vector.broadcast %cst_425 : f32 to vector<1x1xf32>
    %1356 = arith.mulf %1355, %1354 : vector<1x1xf32>
    %cst_426 = arith.constant 1.57079637 : f32
    %1357 = vector.broadcast %cst_426 : f32 to vector<1x1xf32>
    %1358 = arith.subf %1357, %1356 : vector<1x1xf32>
    %1359 = arith.select %1324, %1358, %1354 : vector<1x1xi1>, vector<1x1xf32>
    %cst_427 = arith.constant 0.000000e+00 : f32
    %1360 = vector.broadcast %cst_427 : f32 to vector<1x1xf32>
    %1361 = arith.cmpf olt, %1321, %1360 : vector<1x1xf32>
    %cst_428 = arith.constant 0.000000e+00 : f32
    %1362 = vector.broadcast %cst_428 : f32 to vector<1x1xf32>
    %1363 = arith.subf %1362, %1359 : vector<1x1xf32>
    %1364 = arith.select %1361, %1363, %1359 : vector<1x1xi1>, vector<1x1xf32>
    %cst_429 = arith.constant 1.57079637 : f32
    %1365 = vector.broadcast %cst_429 : f32 to vector<1x1xf32>
    %1366 = arith.subf %1365, %1364 : vector<1x1xf32>
    %1367 = arith.mulf %1321, %1321 : vector<1x1xf32>
    %cst_430 = arith.constant 1.000000e+00 : f32
    %1368 = vector.broadcast %cst_430 : f32 to vector<1x1xf32>
    %1369 = arith.subf %1368, %1367 : vector<1x1xf32>
    %cst_431 = arith.constant 9.99999996E-13 : f32
    %1370 = vector.broadcast %cst_431 : f32 to vector<1x1xf32>
    %1371 = arith.maximumf %1369, %1370 : vector<1x1xf32>
    %1372 = math.sqrt %1371 : vector<1x1xf32>
    %cst_432 = arith.constant 9.99999997E-7 : f32
    %1373 = vector.broadcast %cst_432 : f32 to vector<1x1xf32>
    %1374 = arith.maximumf %1372, %1373 : vector<1x1xf32>
    %cst_433 = arith.constant 2.000000e+00 : f32
    %1375 = vector.broadcast %cst_433 : f32 to vector<1x1xf32>
    %1376 = arith.mulf %1375, %1374 : vector<1x1xf32>
    %1377 = arith.divf %1366, %1376 : vector<1x1xf32>
    %1378 = arith.subf %1302, %1308 : vector<1x1xf32>
    %1379 = arith.subf %1305, %1299 : vector<1x1xf32>
    %1380 = arith.subf %1298, %1300 : vector<1x1xf32>
    %1381 = tpu.concatenate %1378, %1379, %1380 in 1 : vector<1x1xf32>, vector<1x1xf32>, vector<1x1xf32> -> vector<1x3xf32>
    %1382 = vector.broadcast %1377 : vector<1x1xf32> to vector<1x3xf32>
    %1383 = arith.mulf %1381, %1382 : vector<1x3xf32>
    %1384 = vector.extract_strided_slice %1159 {offsets = [0, 12], sizes = [1, 6], strides = [1, 1]} : vector<1x18xf32> to vector<1x6xf32>
    %1385 = vector.extract_strided_slice %1384 {offsets = [0, 0], sizes = [1, 3], strides = [1, 1]} : vector<1x6xf32> to vector<1x3xf32>
    %1386 = vector.extract_strided_slice %1384 {offsets = [0, 3], sizes = [1, 3], strides = [1, 1]} : vector<1x6xf32> to vector<1x3xf32>
    %1387 = arith.mulf %1385, %1385 : vector<1x3xf32>
    %cst_434 = arith.constant dense<0.000000e+00> : vector<1xf32>
    %1388 = vector.multi_reduction <add>, %1387, %cst_434 [1] : vector<1x3xf32> to vector<1xf32>
    %1389 = vector.shape_cast %1388 : vector<1xf32> to vector<1x1xf32>
    %cst_435 = arith.constant 9.99999993E-9 : f32
    %1390 = vector.broadcast %cst_435 : f32 to vector<1x1xf32>
    %1391 = arith.addf %1389, %1390 : vector<1x1xf32>
    %1392 = math.rsqrt %1391 : vector<1x1xf32>
    %1393 = vector.broadcast %1392 : vector<1x1xf32> to vector<1x3xf32>
    %1394 = arith.mulf %1385, %1393 : vector<1x3xf32>
    %1395 = arith.mulf %1394, %1386 : vector<1x3xf32>
    %cst_436 = arith.constant dense<0.000000e+00> : vector<1xf32>
    %1396 = vector.multi_reduction <add>, %1395, %cst_436 [1] : vector<1x3xf32> to vector<1xf32>
    %1397 = vector.shape_cast %1396 : vector<1xf32> to vector<1x1xf32>
    %1398 = vector.broadcast %1397 : vector<1x1xf32> to vector<1x3xf32>
    %1399 = arith.mulf %1398, %1394 : vector<1x3xf32>
    %1400 = arith.subf %1386, %1399 : vector<1x3xf32>
    %1401 = arith.mulf %1400, %1400 : vector<1x3xf32>
    %cst_437 = arith.constant dense<0.000000e+00> : vector<1xf32>
    %1402 = vector.multi_reduction <add>, %1401, %cst_437 [1] : vector<1x3xf32> to vector<1xf32>
    %1403 = vector.shape_cast %1402 : vector<1xf32> to vector<1x1xf32>
    %cst_438 = arith.constant 9.99999993E-9 : f32
    %1404 = vector.broadcast %cst_438 : f32 to vector<1x1xf32>
    %1405 = arith.addf %1403, %1404 : vector<1x1xf32>
    %1406 = math.rsqrt %1405 : vector<1x1xf32>
    %1407 = vector.broadcast %1406 : vector<1x1xf32> to vector<1x3xf32>
    %1408 = arith.mulf %1400, %1407 : vector<1x3xf32>
    %1409 = vector.extract_strided_slice %1394 {offsets = [0, 0], sizes = [1, 1], strides = [1, 1]} : vector<1x3xf32> to vector<1x1xf32>
    %1410 = vector.extract_strided_slice %1394 {offsets = [0, 1], sizes = [1, 1], strides = [1, 1]} : vector<1x3xf32> to vector<1x1xf32>
    %1411 = vector.extract_strided_slice %1394 {offsets = [0, 2], sizes = [1, 1], strides = [1, 1]} : vector<1x3xf32> to vector<1x1xf32>
    %1412 = vector.extract_strided_slice %1408 {offsets = [0, 0], sizes = [1, 1], strides = [1, 1]} : vector<1x3xf32> to vector<1x1xf32>
    %1413 = vector.extract_strided_slice %1408 {offsets = [0, 1], sizes = [1, 1], strides = [1, 1]} : vector<1x3xf32> to vector<1x1xf32>
    %1414 = vector.extract_strided_slice %1408 {offsets = [0, 2], sizes = [1, 1], strides = [1, 1]} : vector<1x3xf32> to vector<1x1xf32>
    %1415 = arith.mulf %1410, %1414 : vector<1x1xf32>
    %1416 = arith.mulf %1411, %1413 : vector<1x1xf32>
    %1417 = arith.subf %1415, %1416 : vector<1x1xf32>
    %1418 = arith.mulf %1411, %1412 : vector<1x1xf32>
    %1419 = arith.mulf %1409, %1414 : vector<1x1xf32>
    %1420 = arith.subf %1418, %1419 : vector<1x1xf32>
    %1421 = arith.mulf %1409, %1413 : vector<1x1xf32>
    %1422 = arith.mulf %1410, %1412 : vector<1x1xf32>
    %1423 = arith.subf %1421, %1422 : vector<1x1xf32>
    %1424 = arith.addf %1409, %1413 : vector<1x1xf32>
    %1425 = arith.addf %1424, %1423 : vector<1x1xf32>
    %cst_439 = arith.constant 1.000000e+00 : f32
    %1426 = vector.broadcast %cst_439 : f32 to vector<1x1xf32>
    %1427 = arith.subf %1425, %1426 : vector<1x1xf32>
    %cst_440 = arith.constant 5.000000e-01 : f32
    %1428 = vector.broadcast %cst_440 : f32 to vector<1x1xf32>
    %1429 = arith.mulf %1427, %1428 : vector<1x1xf32>
    %cst_441 = arith.constant -0.999998986 : f32
    %cst_442 = arith.constant 0.999998986 : f32
    %1430 = vector.broadcast %cst_441 : f32 to vector<1x1xf32>
    %1431 = arith.maximumf %1430, %1429 : vector<1x1xf32>
    %1432 = vector.broadcast %cst_442 : f32 to vector<1x1xf32>
    %1433 = arith.minimumf %1432, %1431 : vector<1x1xf32>
    %1434 = math.absf %1433 : vector<1x1xf32>
    %cst_443 = arith.constant 5.000000e-01 : f32
    %1435 = vector.broadcast %cst_443 : f32 to vector<1x1xf32>
    %1436 = arith.cmpf ogt, %1434, %1435 : vector<1x1xf32>
    %cst_444 = arith.constant 1.000000e+00 : f32
    %1437 = vector.broadcast %cst_444 : f32 to vector<1x1xf32>
    %1438 = arith.subf %1437, %1434 : vector<1x1xf32>
    %cst_445 = arith.constant 5.000000e-01 : f32
    %1439 = vector.broadcast %cst_445 : f32 to vector<1x1xf32>
    %1440 = arith.mulf %1439, %1438 : vector<1x1xf32>
    %1441 = arith.mulf %1434, %1434 : vector<1x1xf32>
    %1442 = arith.select %1436, %1440, %1441 : vector<1x1xi1>, vector<1x1xf32>
    %cst_446 = arith.constant 1.000000e+00 : f32
    %1443 = vector.broadcast %cst_446 : f32 to vector<1x1xf32>
    %1444 = arith.subf %1443, %1434 : vector<1x1xf32>
    %cst_447 = arith.constant 5.000000e-01 : f32
    %1445 = vector.broadcast %cst_447 : f32 to vector<1x1xf32>
    %1446 = arith.mulf %1445, %1444 : vector<1x1xf32>
    %cst_448 = arith.constant 0.000000e+00 : f32
    %1447 = vector.broadcast %cst_448 : f32 to vector<1x1xf32>
    %1448 = arith.maximumf %1446, %1447 : vector<1x1xf32>
    %1449 = math.sqrt %1448 : vector<1x1xf32>
    %1450 = arith.select %1436, %1449, %1434 : vector<1x1xi1>, vector<1x1xf32>
    %cst_449 = arith.constant 4.216320e-02 : f32
    %1451 = vector.broadcast %cst_449 : f32 to vector<1x1xf32>
    %1452 = arith.mulf %1451, %1442 : vector<1x1xf32>
    %cst_450 = arith.constant 0.024181312 : f32
    %1453 = vector.broadcast %cst_450 : f32 to vector<1x1xf32>
    %1454 = arith.addf %1452, %1453 : vector<1x1xf32>
    %1455 = arith.mulf %1454, %1442 : vector<1x1xf32>
    %cst_451 = arith.constant 0.0454700254 : f32
    %1456 = vector.broadcast %cst_451 : f32 to vector<1x1xf32>
    %1457 = arith.addf %1455, %1456 : vector<1x1xf32>
    %1458 = arith.mulf %1457, %1442 : vector<1x1xf32>
    %cst_452 = arith.constant 0.0749530047 : f32
    %1459 = vector.broadcast %cst_452 : f32 to vector<1x1xf32>
    %1460 = arith.addf %1458, %1459 : vector<1x1xf32>
    %1461 = arith.mulf %1460, %1442 : vector<1x1xf32>
    %cst_453 = arith.constant 0.166667521 : f32
    %1462 = vector.broadcast %cst_453 : f32 to vector<1x1xf32>
    %1463 = arith.addf %1461, %1462 : vector<1x1xf32>
    %1464 = arith.mulf %1450, %1442 : vector<1x1xf32>
    %1465 = arith.mulf %1464, %1463 : vector<1x1xf32>
    %1466 = arith.addf %1450, %1465 : vector<1x1xf32>
    %cst_454 = arith.constant 2.000000e+00 : f32
    %1467 = vector.broadcast %cst_454 : f32 to vector<1x1xf32>
    %1468 = arith.mulf %1467, %1466 : vector<1x1xf32>
    %cst_455 = arith.constant 1.57079637 : f32
    %1469 = vector.broadcast %cst_455 : f32 to vector<1x1xf32>
    %1470 = arith.subf %1469, %1468 : vector<1x1xf32>
    %1471 = arith.select %1436, %1470, %1466 : vector<1x1xi1>, vector<1x1xf32>
    %cst_456 = arith.constant 0.000000e+00 : f32
    %1472 = vector.broadcast %cst_456 : f32 to vector<1x1xf32>
    %1473 = arith.cmpf olt, %1433, %1472 : vector<1x1xf32>
    %cst_457 = arith.constant 0.000000e+00 : f32
    %1474 = vector.broadcast %cst_457 : f32 to vector<1x1xf32>
    %1475 = arith.subf %1474, %1471 : vector<1x1xf32>
    %1476 = arith.select %1473, %1475, %1471 : vector<1x1xi1>, vector<1x1xf32>
    %cst_458 = arith.constant 1.57079637 : f32
    %1477 = vector.broadcast %cst_458 : f32 to vector<1x1xf32>
    %1478 = arith.subf %1477, %1476 : vector<1x1xf32>
    %1479 = arith.mulf %1433, %1433 : vector<1x1xf32>
    %cst_459 = arith.constant 1.000000e+00 : f32
    %1480 = vector.broadcast %cst_459 : f32 to vector<1x1xf32>
    %1481 = arith.subf %1480, %1479 : vector<1x1xf32>
    %cst_460 = arith.constant 9.99999996E-13 : f32
    %1482 = vector.broadcast %cst_460 : f32 to vector<1x1xf32>
    %1483 = arith.maximumf %1481, %1482 : vector<1x1xf32>
    %1484 = math.sqrt %1483 : vector<1x1xf32>
    %cst_461 = arith.constant 9.99999997E-7 : f32
    %1485 = vector.broadcast %cst_461 : f32 to vector<1x1xf32>
    %1486 = arith.maximumf %1484, %1485 : vector<1x1xf32>
    %cst_462 = arith.constant 2.000000e+00 : f32
    %1487 = vector.broadcast %cst_462 : f32 to vector<1x1xf32>
    %1488 = arith.mulf %1487, %1486 : vector<1x1xf32>
    %1489 = arith.divf %1478, %1488 : vector<1x1xf32>
    %1490 = arith.subf %1414, %1420 : vector<1x1xf32>
    %1491 = arith.subf %1417, %1411 : vector<1x1xf32>
    %1492 = arith.subf %1410, %1412 : vector<1x1xf32>
    %1493 = tpu.concatenate %1490, %1491, %1492 in 1 : vector<1x1xf32>, vector<1x1xf32>, vector<1x1xf32> -> vector<1x3xf32>
    %1494 = vector.broadcast %1489 : vector<1x1xf32> to vector<1x3xf32>
    %1495 = arith.mulf %1493, %1494 : vector<1x3xf32>
    %1496 = vector.extract_strided_slice %851 {offsets = [0, 0], sizes = [1, 1], strides = [1, 1]} : vector<1x3xf32> to vector<1x1xf32>
    %1497 = vector.extract_strided_slice %851 {offsets = [0, 1], sizes = [1, 2], strides = [1, 1]} : vector<1x3xf32> to vector<1x2xf32>
    %cst_463 = arith.constant 0.000000e+00 : f32
    %1498 = vector.broadcast %cst_463 : f32 to vector<1x2xf32>
    %1499 = arith.subf %1498, %1497 : vector<1x2xf32>
    %1500 = tpu.concatenate %1496, %1499 in 1 : vector<1x1xf32>, vector<1x2xf32> -> vector<1x3xf32>
    %1501 = vector.extract_strided_slice %963 {offsets = [0, 0], sizes = [1, 1], strides = [1, 1]} : vector<1x3xf32> to vector<1x1xf32>
    %1502 = vector.extract_strided_slice %963 {offsets = [0, 1], sizes = [1, 2], strides = [1, 1]} : vector<1x3xf32> to vector<1x2xf32>
    %cst_464 = arith.constant 0.000000e+00 : f32
    %1503 = vector.broadcast %cst_464 : f32 to vector<1x2xf32>
    %1504 = arith.subf %1503, %1502 : vector<1x2xf32>
    %1505 = tpu.concatenate %1501, %1504 in 1 : vector<1x1xf32>, vector<1x2xf32> -> vector<1x3xf32>
    %1506 = vector.extract_strided_slice %1075 {offsets = [0, 0], sizes = [1, 1], strides = [1, 1]} : vector<1x3xf32> to vector<1x1xf32>
    %1507 = vector.extract_strided_slice %1075 {offsets = [0, 1], sizes = [1, 2], strides = [1, 1]} : vector<1x3xf32> to vector<1x2xf32>
    %cst_465 = arith.constant 0.000000e+00 : f32
    %1508 = vector.broadcast %cst_465 : f32 to vector<1x2xf32>
    %1509 = arith.subf %1508, %1507 : vector<1x2xf32>
    %1510 = tpu.concatenate %1506, %1509 in 1 : vector<1x1xf32>, vector<1x2xf32> -> vector<1x3xf32>
    %c0_466 = arith.constant 0 : index
    %c0_467 = arith.constant 0 : index
    %1511 = vector.load %arg26[%c0_466, %c0_467] : memref<32x16xf32, #tpu.memory_space<vmem>>, vector<32x16xf32>
    %cst_468 = arith.constant dense<0.000000e+00> : vector<1x16xf32>
    %1512 = tpu.matmul %18, %1511, %cst_468 {dimension_numbers = #tpu.dot_dimension_numbers<[1], [0], [0], [1], [0, 0, 1, 1], [], []>} : vector<1x32xf32>, vector<32x16xf32>, vector<1x16xf32> -> vector<1x16xf32>
    %c0_469 = arith.constant 0 : index
    %c0_470 = arith.constant 0 : index
    %1513 = vector.load %arg27[%c0_469, %c0_470] : memref<32x16xf32, #tpu.memory_space<vmem>>, vector<32x16xf32>
    %cst_471 = arith.constant dense<0.000000e+00> : vector<1x16xf32>
    %1514 = tpu.matmul %19, %1513, %cst_471 {dimension_numbers = #tpu.dot_dimension_numbers<[1], [0], [0], [1], [0, 0, 1, 1], [], []>} : vector<1x32xf32>, vector<32x16xf32>, vector<1x16xf32> -> vector<1x16xf32>
    %1515 = arith.addf %1512, %1514 : vector<1x16xf32>
    %c0_472 = arith.constant 0 : index
    %c0_473 = arith.constant 0 : index
    %1516 = vector.load %arg28[%c0_472, %c0_473] : memref<1x16xf32, #tpu.memory_space<vmem>>, vector<1x16xf32>
    %1517 = arith.addf %1515, %1516 : vector<1x16xf32>
    %1518 = vector.extract_strided_slice %1517 {offsets = [0, 0], sizes = [1, 10], strides = [1, 1]} : vector<1x16xf32> to vector<1x10xf32>
    %1519 = vector.extract_strided_slice %1517 {offsets = [0, 10], sizes = [1, 6], strides = [1, 1]} : vector<1x16xf32> to vector<1x6xf32>
    %1520 = vector.extract_strided_slice %1519 {offsets = [0, 0], sizes = [1, 3], strides = [1, 1]} : vector<1x6xf32> to vector<1x3xf32>
    %1521 = vector.extract_strided_slice %1519 {offsets = [0, 3], sizes = [1, 3], strides = [1, 1]} : vector<1x6xf32> to vector<1x3xf32>
    %1522 = arith.mulf %1520, %1520 : vector<1x3xf32>
    %cst_474 = arith.constant dense<0.000000e+00> : vector<1xf32>
    %1523 = vector.multi_reduction <add>, %1522, %cst_474 [1] : vector<1x3xf32> to vector<1xf32>
    %1524 = vector.shape_cast %1523 : vector<1xf32> to vector<1x1xf32>
    %cst_475 = arith.constant 9.99999993E-9 : f32
    %1525 = vector.broadcast %cst_475 : f32 to vector<1x1xf32>
    %1526 = arith.addf %1524, %1525 : vector<1x1xf32>
    %1527 = math.rsqrt %1526 : vector<1x1xf32>
    %1528 = vector.broadcast %1527 : vector<1x1xf32> to vector<1x3xf32>
    %1529 = arith.mulf %1520, %1528 : vector<1x3xf32>
    %1530 = arith.mulf %1529, %1521 : vector<1x3xf32>
    %cst_476 = arith.constant dense<0.000000e+00> : vector<1xf32>
    %1531 = vector.multi_reduction <add>, %1530, %cst_476 [1] : vector<1x3xf32> to vector<1xf32>
    %1532 = vector.shape_cast %1531 : vector<1xf32> to vector<1x1xf32>
    %1533 = vector.broadcast %1532 : vector<1x1xf32> to vector<1x3xf32>
    %1534 = arith.mulf %1533, %1529 : vector<1x3xf32>
    %1535 = arith.subf %1521, %1534 : vector<1x3xf32>
    %1536 = arith.mulf %1535, %1535 : vector<1x3xf32>
    %cst_477 = arith.constant dense<0.000000e+00> : vector<1xf32>
    %1537 = vector.multi_reduction <add>, %1536, %cst_477 [1] : vector<1x3xf32> to vector<1xf32>
    %1538 = vector.shape_cast %1537 : vector<1xf32> to vector<1x1xf32>
    %cst_478 = arith.constant 9.99999993E-9 : f32
    %1539 = vector.broadcast %cst_478 : f32 to vector<1x1xf32>
    %1540 = arith.addf %1538, %1539 : vector<1x1xf32>
    %1541 = math.rsqrt %1540 : vector<1x1xf32>
    %1542 = vector.broadcast %1541 : vector<1x1xf32> to vector<1x3xf32>
    %1543 = arith.mulf %1535, %1542 : vector<1x3xf32>
    %1544 = vector.extract_strided_slice %1529 {offsets = [0, 0], sizes = [1, 1], strides = [1, 1]} : vector<1x3xf32> to vector<1x1xf32>
    %1545 = vector.extract_strided_slice %1529 {offsets = [0, 1], sizes = [1, 1], strides = [1, 1]} : vector<1x3xf32> to vector<1x1xf32>
    %1546 = vector.extract_strided_slice %1529 {offsets = [0, 2], sizes = [1, 1], strides = [1, 1]} : vector<1x3xf32> to vector<1x1xf32>
    %1547 = vector.extract_strided_slice %1543 {offsets = [0, 0], sizes = [1, 1], strides = [1, 1]} : vector<1x3xf32> to vector<1x1xf32>
    %1548 = vector.extract_strided_slice %1543 {offsets = [0, 1], sizes = [1, 1], strides = [1, 1]} : vector<1x3xf32> to vector<1x1xf32>
    %1549 = vector.extract_strided_slice %1543 {offsets = [0, 2], sizes = [1, 1], strides = [1, 1]} : vector<1x3xf32> to vector<1x1xf32>
    %1550 = arith.mulf %1545, %1549 : vector<1x1xf32>
    %1551 = arith.mulf %1546, %1548 : vector<1x1xf32>
    %1552 = arith.subf %1550, %1551 : vector<1x1xf32>
    %1553 = arith.mulf %1546, %1547 : vector<1x1xf32>
    %1554 = arith.mulf %1544, %1549 : vector<1x1xf32>
    %1555 = arith.subf %1553, %1554 : vector<1x1xf32>
    %1556 = arith.mulf %1544, %1548 : vector<1x1xf32>
    %1557 = arith.mulf %1545, %1547 : vector<1x1xf32>
    %1558 = arith.subf %1556, %1557 : vector<1x1xf32>
    %1559 = arith.addf %1544, %1548 : vector<1x1xf32>
    %1560 = arith.addf %1559, %1558 : vector<1x1xf32>
    %cst_479 = arith.constant 1.000000e+00 : f32
    %1561 = vector.broadcast %cst_479 : f32 to vector<1x1xf32>
    %1562 = arith.subf %1560, %1561 : vector<1x1xf32>
    %cst_480 = arith.constant 5.000000e-01 : f32
    %1563 = vector.broadcast %cst_480 : f32 to vector<1x1xf32>
    %1564 = arith.mulf %1562, %1563 : vector<1x1xf32>
    %cst_481 = arith.constant -0.999998986 : f32
    %cst_482 = arith.constant 0.999998986 : f32
    %1565 = vector.broadcast %cst_481 : f32 to vector<1x1xf32>
    %1566 = arith.maximumf %1565, %1564 : vector<1x1xf32>
    %1567 = vector.broadcast %cst_482 : f32 to vector<1x1xf32>
    %1568 = arith.minimumf %1567, %1566 : vector<1x1xf32>
    %1569 = math.absf %1568 : vector<1x1xf32>
    %cst_483 = arith.constant 5.000000e-01 : f32
    %1570 = vector.broadcast %cst_483 : f32 to vector<1x1xf32>
    %1571 = arith.cmpf ogt, %1569, %1570 : vector<1x1xf32>
    %cst_484 = arith.constant 1.000000e+00 : f32
    %1572 = vector.broadcast %cst_484 : f32 to vector<1x1xf32>
    %1573 = arith.subf %1572, %1569 : vector<1x1xf32>
    %cst_485 = arith.constant 5.000000e-01 : f32
    %1574 = vector.broadcast %cst_485 : f32 to vector<1x1xf32>
    %1575 = arith.mulf %1574, %1573 : vector<1x1xf32>
    %1576 = arith.mulf %1569, %1569 : vector<1x1xf32>
    %1577 = arith.select %1571, %1575, %1576 : vector<1x1xi1>, vector<1x1xf32>
    %cst_486 = arith.constant 1.000000e+00 : f32
    %1578 = vector.broadcast %cst_486 : f32 to vector<1x1xf32>
    %1579 = arith.subf %1578, %1569 : vector<1x1xf32>
    %cst_487 = arith.constant 5.000000e-01 : f32
    %1580 = vector.broadcast %cst_487 : f32 to vector<1x1xf32>
    %1581 = arith.mulf %1580, %1579 : vector<1x1xf32>
    %cst_488 = arith.constant 0.000000e+00 : f32
    %1582 = vector.broadcast %cst_488 : f32 to vector<1x1xf32>
    %1583 = arith.maximumf %1581, %1582 : vector<1x1xf32>
    %1584 = math.sqrt %1583 : vector<1x1xf32>
    %1585 = arith.select %1571, %1584, %1569 : vector<1x1xi1>, vector<1x1xf32>
    %cst_489 = arith.constant 4.216320e-02 : f32
    %1586 = vector.broadcast %cst_489 : f32 to vector<1x1xf32>
    %1587 = arith.mulf %1586, %1577 : vector<1x1xf32>
    %cst_490 = arith.constant 0.024181312 : f32
    %1588 = vector.broadcast %cst_490 : f32 to vector<1x1xf32>
    %1589 = arith.addf %1587, %1588 : vector<1x1xf32>
    %1590 = arith.mulf %1589, %1577 : vector<1x1xf32>
    %cst_491 = arith.constant 0.0454700254 : f32
    %1591 = vector.broadcast %cst_491 : f32 to vector<1x1xf32>
    %1592 = arith.addf %1590, %1591 : vector<1x1xf32>
    %1593 = arith.mulf %1592, %1577 : vector<1x1xf32>
    %cst_492 = arith.constant 0.0749530047 : f32
    %1594 = vector.broadcast %cst_492 : f32 to vector<1x1xf32>
    %1595 = arith.addf %1593, %1594 : vector<1x1xf32>
    %1596 = arith.mulf %1595, %1577 : vector<1x1xf32>
    %cst_493 = arith.constant 0.166667521 : f32
    %1597 = vector.broadcast %cst_493 : f32 to vector<1x1xf32>
    %1598 = arith.addf %1596, %1597 : vector<1x1xf32>
    %1599 = arith.mulf %1585, %1577 : vector<1x1xf32>
    %1600 = arith.mulf %1599, %1598 : vector<1x1xf32>
    %1601 = arith.addf %1585, %1600 : vector<1x1xf32>
    %cst_494 = arith.constant 2.000000e+00 : f32
    %1602 = vector.broadcast %cst_494 : f32 to vector<1x1xf32>
    %1603 = arith.mulf %1602, %1601 : vector<1x1xf32>
    %cst_495 = arith.constant 1.57079637 : f32
    %1604 = vector.broadcast %cst_495 : f32 to vector<1x1xf32>
    %1605 = arith.subf %1604, %1603 : vector<1x1xf32>
    %1606 = arith.select %1571, %1605, %1601 : vector<1x1xi1>, vector<1x1xf32>
    %cst_496 = arith.constant 0.000000e+00 : f32
    %1607 = vector.broadcast %cst_496 : f32 to vector<1x1xf32>
    %1608 = arith.cmpf olt, %1568, %1607 : vector<1x1xf32>
    %cst_497 = arith.constant 0.000000e+00 : f32
    %1609 = vector.broadcast %cst_497 : f32 to vector<1x1xf32>
    %1610 = arith.subf %1609, %1606 : vector<1x1xf32>
    %1611 = arith.select %1608, %1610, %1606 : vector<1x1xi1>, vector<1x1xf32>
    %cst_498 = arith.constant 1.57079637 : f32
    %1612 = vector.broadcast %cst_498 : f32 to vector<1x1xf32>
    %1613 = arith.subf %1612, %1611 : vector<1x1xf32>
    %1614 = arith.mulf %1568, %1568 : vector<1x1xf32>
    %cst_499 = arith.constant 1.000000e+00 : f32
    %1615 = vector.broadcast %cst_499 : f32 to vector<1x1xf32>
    %1616 = arith.subf %1615, %1614 : vector<1x1xf32>
    %cst_500 = arith.constant 9.99999996E-13 : f32
    %1617 = vector.broadcast %cst_500 : f32 to vector<1x1xf32>
    %1618 = arith.maximumf %1616, %1617 : vector<1x1xf32>
    %1619 = math.sqrt %1618 : vector<1x1xf32>
    %cst_501 = arith.constant 9.99999997E-7 : f32
    %1620 = vector.broadcast %cst_501 : f32 to vector<1x1xf32>
    %1621 = arith.maximumf %1619, %1620 : vector<1x1xf32>
    %cst_502 = arith.constant 2.000000e+00 : f32
    %1622 = vector.broadcast %cst_502 : f32 to vector<1x1xf32>
    %1623 = arith.mulf %1622, %1621 : vector<1x1xf32>
    %1624 = arith.divf %1613, %1623 : vector<1x1xf32>
    %1625 = arith.subf %1549, %1555 : vector<1x1xf32>
    %1626 = arith.subf %1552, %1546 : vector<1x1xf32>
    %1627 = arith.subf %1545, %1547 : vector<1x1xf32>
    %1628 = tpu.concatenate %1625, %1626, %1627 in 1 : vector<1x1xf32>, vector<1x1xf32>, vector<1x1xf32> -> vector<1x3xf32>
    %1629 = vector.broadcast %1624 : vector<1x1xf32> to vector<1x3xf32>
    %1630 = arith.mulf %1628, %1629 : vector<1x3xf32>
    %1631 = tpu.concatenate %179, %291, %403, %515, %627, %1500, %1505, %1510, %1271, %1383, %1495, %1630, %628, %1518 in 1 : vector<1x3xf32>, vector<1x3xf32>, vector<1x3xf32>, vector<1x3xf32>, vector<1x3xf32>, vector<1x3xf32>, vector<1x3xf32>, vector<1x3xf32>, vector<1x3xf32>, vector<1x3xf32>, vector<1x3xf32>, vector<1x3xf32>, vector<1x10xf32>, vector<1x10xf32> -> vector<1x56xf32>
    %c0_503 = arith.constant 0 : index
    %c0_504 = arith.constant 0 : index
    %1632 = vector.load %arg29[%c0_503, %c0_504] : memref<56x96xf32, #tpu.memory_space<vmem>>, vector<56x96xf32>
    %cst_505 = arith.constant dense<0.000000e+00> : vector<1x96xf32>
    %1633 = tpu.matmul %1631, %1632, %cst_505 {dimension_numbers = #tpu.dot_dimension_numbers<[1], [0], [0], [1], [0, 0, 1, 1], [], []>} : vector<1x56xf32>, vector<56x96xf32>, vector<1x96xf32> -> vector<1x96xf32>
    %c0_506 = arith.constant 0 : index
    %c0_507 = arith.constant 0 : index
    %1634 = vector.load %arg30[%c0_506, %c0_507] : memref<1x96xf32, #tpu.memory_space<vmem>>, vector<1x96xf32>
    %1635 = arith.addf %1633, %1634 : vector<1x96xf32>
    %c0_508 = arith.constant 0 : index
    %c0_509 = arith.constant 0 : index
    %1636 = vector.load %arg3[%c0_508, %c0_509] : memref<3x96xf32, #tpu.memory_space<vmem>>, vector<3x96xf32>
    %cst_510 = arith.constant dense<0.000000e+00> : vector<1x96xf32>
    %1637 = tpu.matmul %641, %1636, %cst_510 {dimension_numbers = #tpu.dot_dimension_numbers<[1], [0], [0], [1], [0, 0, 1, 1], [], []>} : vector<1x3xf32>, vector<3x96xf32>, vector<1x96xf32> -> vector<1x96xf32>
    %1638 = arith.addf %1635, %1637 : vector<1x96xf32>
    %c0_511 = arith.constant 0 : index
    %c0_512 = arith.constant 0 : index
    %c0_513 = arith.constant 0 : index
    %1639 = vector.load %arg31[%c0_511, %c0_512, %c0_513] : memref<1x1x96xf32, #tpu.memory_space<vmem>>, vector<1x1x96xf32>
    %1640 = vector.shape_cast %1639 : vector<1x1x96xf32> to vector<1x96xf32>
    %1641 = vector.shape_cast %1638 : vector<1x96xf32> to vector<1x1x96xf32>
    tpu.vector_store %arg31[%c0_511, %c0_512, %c0_513], %1641 {strides = array<i32>} : memref<1x1x96xf32, #tpu.memory_space<vmem>>, vector<1x1x96xf32>,
    return
  }
  func.func @transform_0(%arg0: i32) -> (i32, i32, i32) {
    %c0_i32 = arith.constant 0 : i32
    %c0_i32_0 = arith.constant 0 : i32
    %c0_i32_1 = arith.constant 0 : i32
    return %arg0, %c0_i32, %c0_i32_0 : i32, i32, i32
  }
  func.func @transform_1(%arg0: i32) -> (i32, i32) {
    %c0_i32 = arith.constant 0 : i32
    %c0_i32_0 = arith.constant 0 : i32
    %c0_i32_1 = arith.constant 0 : i32
    return %c0_i32, %c0_i32_0 : i32, i32
  }
  func.func @transform_2(%arg0: i32) -> (i32, i32) {
    %c0_i32 = arith.constant 0 : i32
    %c0_i32_0 = arith.constant 0 : i32
    %c0_i32_1 = arith.constant 0 : i32
    return %c0_i32, %c0_i32_0 : i32, i32
  }
  func.func @transform_3(%arg0: i32) -> (i32, i32) {
    %c0_i32 = arith.constant 0 : i32
    %c0_i32_0 = arith.constant 0 : i32
    %c0_i32_1 = arith.constant 0 : i32
    return %c0_i32, %c0_i32_0 : i32, i32
  }
  func.func @transform_4(%arg0: i32) -> (i32, i32) {
    %c0_i32 = arith.constant 0 : i32
    %c0_i32_0 = arith.constant 0 : i32
    %c0_i32_1 = arith.constant 0 : i32
    return %c0_i32, %c0_i32_0 : i32, i32
  }
  func.func @transform_5(%arg0: i32) -> (i32, i32) {
    %c0_i32 = arith.constant 0 : i32
    %c0_i32_0 = arith.constant 0 : i32
    %c0_i32_1 = arith.constant 0 : i32
    return %c0_i32, %c0_i32_0 : i32, i32
  }
  func.func @transform_6(%arg0: i32) -> (i32, i32) {
    %c0_i32 = arith.constant 0 : i32
    %c0_i32_0 = arith.constant 0 : i32
    %c0_i32_1 = arith.constant 0 : i32
    return %c0_i32, %c0_i32_0 : i32, i32
  }
  func.func @transform_7(%arg0: i32) -> (i32, i32) {
    %c0_i32 = arith.constant 0 : i32
    %c0_i32_0 = arith.constant 0 : i32
    %c0_i32_1 = arith.constant 0 : i32
    return %c0_i32, %c0_i32_0 : i32, i32
  }
  func.func @transform_8(%arg0: i32) -> (i32, i32) {
    %c0_i32 = arith.constant 0 : i32
    %c0_i32_0 = arith.constant 0 : i32
    %c0_i32_1 = arith.constant 0 : i32
    return %c0_i32, %c0_i32_0 : i32, i32
  }
  func.func @transform_9(%arg0: i32) -> (i32, i32) {
    %c0_i32 = arith.constant 0 : i32
    %c0_i32_0 = arith.constant 0 : i32
    %c0_i32_1 = arith.constant 0 : i32
    return %c0_i32, %c0_i32_0 : i32, i32
  }
  func.func @transform_10(%arg0: i32) -> (i32, i32) {
    %c0_i32 = arith.constant 0 : i32
    %c0_i32_0 = arith.constant 0 : i32
    %c0_i32_1 = arith.constant 0 : i32
    return %c0_i32, %c0_i32_0 : i32, i32
  }
  func.func @transform_11(%arg0: i32) -> (i32, i32) {
    %c0_i32 = arith.constant 0 : i32
    %c0_i32_0 = arith.constant 0 : i32
    %c0_i32_1 = arith.constant 0 : i32
    return %c0_i32, %c0_i32_0 : i32, i32
  }
  func.func @transform_12(%arg0: i32) -> (i32, i32) {
    %c0_i32 = arith.constant 0 : i32
    %c0_i32_0 = arith.constant 0 : i32
    %c0_i32_1 = arith.constant 0 : i32
    return %c0_i32, %c0_i32_0 : i32, i32
  }
  func.func @transform_13(%arg0: i32) -> (i32, i32) {
    %c0_i32 = arith.constant 0 : i32
    %c0_i32_0 = arith.constant 0 : i32
    %c0_i32_1 = arith.constant 0 : i32
    return %c0_i32, %c0_i32_0 : i32, i32
  }
  func.func @transform_14(%arg0: i32) -> (i32, i32) {
    %c0_i32 = arith.constant 0 : i32
    %c0_i32_0 = arith.constant 0 : i32
    %c0_i32_1 = arith.constant 0 : i32
    return %c0_i32, %c0_i32_0 : i32, i32
  }
  func.func @transform_15(%arg0: i32) -> (i32, i32) {
    %c0_i32 = arith.constant 0 : i32
    %c0_i32_0 = arith.constant 0 : i32
    %c0_i32_1 = arith.constant 0 : i32
    return %c0_i32, %c0_i32_0 : i32, i32
  }
  func.func @transform_16(%arg0: i32) -> (i32, i32) {
    %c0_i32 = arith.constant 0 : i32
    %c0_i32_0 = arith.constant 0 : i32
    %c0_i32_1 = arith.constant 0 : i32
    return %c0_i32, %c0_i32_0 : i32, i32
  }
  func.func @transform_17(%arg0: i32) -> (i32, i32) {
    %c0_i32 = arith.constant 0 : i32
    %c0_i32_0 = arith.constant 0 : i32
    %c0_i32_1 = arith.constant 0 : i32
    return %c0_i32, %c0_i32_0 : i32, i32
  }
  func.func @transform_18(%arg0: i32) -> (i32, i32) {
    %c0_i32 = arith.constant 0 : i32
    %c0_i32_0 = arith.constant 0 : i32
    %c0_i32_1 = arith.constant 0 : i32
    return %c0_i32, %c0_i32_0 : i32, i32
  }
  func.func @transform_19(%arg0: i32) -> (i32, i32) {
    %c0_i32 = arith.constant 0 : i32
    %c0_i32_0 = arith.constant 0 : i32
    %c0_i32_1 = arith.constant 0 : i32
    return %c0_i32, %c0_i32_0 : i32, i32
  }
  func.func @transform_20(%arg0: i32) -> (i32, i32) {
    %c0_i32 = arith.constant 0 : i32
    %c0_i32_0 = arith.constant 0 : i32
    %c0_i32_1 = arith.constant 0 : i32
    return %c0_i32, %c0_i32_0 : i32, i32
  }
  func.func @transform_21(%arg0: i32) -> (i32, i32) {
    %c0_i32 = arith.constant 0 : i32
    %c0_i32_0 = arith.constant 0 : i32
    %c0_i32_1 = arith.constant 0 : i32
    return %c0_i32, %c0_i32_0 : i32, i32
  }
  func.func @transform_22(%arg0: i32) -> (i32, i32) {
    %c0_i32 = arith.constant 0 : i32
    %c0_i32_0 = arith.constant 0 : i32
    %c0_i32_1 = arith.constant 0 : i32
    return %c0_i32, %c0_i32_0 : i32, i32
  }
  func.func @transform_23(%arg0: i32) -> (i32, i32) {
    %c0_i32 = arith.constant 0 : i32
    %c0_i32_0 = arith.constant 0 : i32
    %c0_i32_1 = arith.constant 0 : i32
    return %c0_i32, %c0_i32_0 : i32, i32
  }
  func.func @transform_24(%arg0: i32) -> (i32, i32) {
    %c0_i32 = arith.constant 0 : i32
    %c0_i32_0 = arith.constant 0 : i32
    %c0_i32_1 = arith.constant 0 : i32
    return %c0_i32, %c0_i32_0 : i32, i32
  }
  func.func @transform_25(%arg0: i32) -> (i32, i32) {
    %c0_i32 = arith.constant 0 : i32
    %c0_i32_0 = arith.constant 0 : i32
    %c0_i32_1 = arith.constant 0 : i32
    return %c0_i32, %c0_i32_0 : i32, i32
  }
  func.func @transform_26(%arg0: i32) -> (i32, i32) {
    %c0_i32 = arith.constant 0 : i32
    %c0_i32_0 = arith.constant 0 : i32
    %c0_i32_1 = arith.constant 0 : i32
    return %c0_i32, %c0_i32_0 : i32, i32
  }
  func.func @transform_27(%arg0: i32) -> (i32, i32) {
    %c0_i32 = arith.constant 0 : i32
    %c0_i32_0 = arith.constant 0 : i32
    %c0_i32_1 = arith.constant 0 : i32
    return %c0_i32, %c0_i32_0 : i32, i32
  }
  func.func @transform_28(%arg0: i32) -> (i32, i32) {
    %c0_i32 = arith.constant 0 : i32
    %c0_i32_0 = arith.constant 0 : i32
    %c0_i32_1 = arith.constant 0 : i32
    return %c0_i32, %c0_i32_0 : i32, i32
  }
  func.func @transform_29(%arg0: i32) -> (i32, i32) {
    %c0_i32 = arith.constant 0 : i32
    %c0_i32_0 = arith.constant 0 : i32
    %c0_i32_1 = arith.constant 0 : i32
    return %c0_i32, %c0_i32_0 : i32, i32
  }
  func.func @transform_30(%arg0: i32) -> (i32, i32, i32) {
    %c0_i32 = arith.constant 0 : i32
    %c0_i32_0 = arith.constant 0 : i32
    %c0_i32_1 = arith.constant 0 : i32
    return %arg0, %c0_i32, %c0_i32_0 : i32, i32, i32
  }
}

</mosaic_0001>

<llo_original>
// kernel: tpu_custom_call.1
$region0: #{tpu_custom_call.1}
  #allocation0 [shape = 'u32[]', space=smem, size = 0x4, offset = 0x4, fixed_abs, tag = 'smem constant byte address 0x4 - core index']
  #allocation1 [shape = 'u32[72,128]{1,0:T(1,128)}', space=vmem, size = 0x9000, scoped, tag = 'internal scratch']
  %s0 = inlined_call_operand.smem [shape: u32[31], index: -1, kind: input, shape index: {}]
  %s1 = sld [smem:[%s0]]
  %s2 = scalar_lea.smem %s0, 1
  %s3 = sld [smem:[%s2]]
  %s4 = scalar_lea.smem %s0, 2
  %s5 = sld [smem:[%s4]]
  %s6 = scalar_lea.smem %s0, 3
  %s7 = sld [smem:[%s6]]
  %s8 = scalar_lea.smem %s0, 4
  %s9 = sld [smem:[%s8]]
  %s10 = scalar_lea.smem %s0, 5
  %s11 = sld [smem:[%s10]]
  %s12 = scalar_lea.smem %s0, 6
  %s13 = sld [smem:[%s12]]
  %s14 = scalar_lea.smem %s0, 7
  %s15 = sld [smem:[%s14]]
  %s16 = scalar_lea.smem %s0, 8
  %s17 = sld [smem:[%s16]]
  %s18 = scalar_lea.smem %s0, 9
  %s19 = sld [smem:[%s18]]
  %s20 = scalar_lea.smem %s0, 10
  %s21 = sld [smem:[%s20]]
  %s22 = scalar_lea.smem %s0, 11
  %s23 = sld [smem:[%s22]]
  %s24 = scalar_lea.smem %s0, 12
  %s25 = sld [smem:[%s24]]
  %s26 = scalar_lea.smem %s0, 13
  %s27 = sld [smem:[%s26]]
  %s28 = scalar_lea.smem %s0, 14
  %s29 = sld [smem:[%s28]]
  %s30 = scalar_lea.smem %s0, 15
  %s31 = sld [smem:[%s30]]
  %s32 = scalar_lea.smem %s0, 16
  %s33 = sld [smem:[%s32]]
  %s34 = scalar_lea.smem %s0, 17
  %s35 = sld [smem:[%s34]]
  %s36 = scalar_lea.smem %s0, 18
  %s37 = sld [smem:[%s36]]
  %s38 = scalar_lea.smem %s0, 19
  %s39 = sld [smem:[%s38]]
  %s40 = scalar_lea.smem %s0, 20
  %s41 = sld [smem:[%s40]]
  %s42 = scalar_lea.smem %s0, 21
  %s43 = sld [smem:[%s42]]
  %s44 = scalar_lea.smem %s0, 22
  %s45 = sld [smem:[%s44]]
  %s46 = scalar_lea.smem %s0, 23
  %s47 = sld [smem:[%s46]]
  %s48 = scalar_lea.smem %s0, 24
  %s49 = sld [smem:[%s48]]
  %s50 = scalar_lea.smem %s0, 25
  %s51 = sld [smem:[%s50]]
  %s52 = scalar_lea.smem %s0, 26
  %s53 = sld [smem:[%s52]]
  %s54 = scalar_lea.smem %s0, 27
  %s55 = sld [smem:[%s54]]
  %s56 = scalar_lea.smem %s0, 28
  %s57 = sld [smem:[%s56]]
  %s58 = scalar_lea.smem %s0, 29
  %s59 = sld [smem:[%s58]]
  %s60 = scalar_lea.smem %s0, 30
  %s61 = sld [smem:[%s60]]
  %s62 = sld [smem:[#allocation0]]
  $region153: #{tpu_custom_call.1} parent=0
    _
  %s64 = ssub.s32 1, %s62
  %s65 = scalar_select 0, %s64, %s62
  $region1: #{tpu_custom_call.1} parent=0
    #allocation2 [shape = 'u8[1024]{0}', space=vmem, size = 0x400, scoped, tag = 'output window, operand 0']
    #allocation3 [shape = 's32[2]{0}', space=sflag, size = 0x8, scoped, tag = 'scoped memory for tpu_custom_call.1']
    %66 = vsyncpa [#allocation3], 0
    %s67 = scalar_lea.sflag [#allocation3], 1
    %68 = vsyncpa %s67, 0
    loop: start=0, step=1, limit=4
    $region2: #{tpu_custom_call.1} parent=1 // loop_pre_header
      _
    $region3: #{tpu_custom_call.1} parent=1 // loop_header
      %s70 = sphi 0, %s74
      %p71 = scmp.ge.s32.totalorder %s70, 4
      %s80 = sphi 0, %s82
      %s83 = sphi 0, %s80
      %s84 = sphi 0, %s83
      %s100 = sphi 0, %s84
      %s104 = sphi 0, %s104
      %s106 = sphi 0, %s104
      %s107 = sphi 0, %s106
      %s121 = sphi 0, %s107
      %s125 = sphi 0, %s125
      %s127 = sphi 0, %s125
      %s128 = sphi 0, %s127
      %s142 = sphi 0, %s128
      %s146 = sphi 0, %s146
      %s148 = sphi 0, %s146
      %s149 = sphi 0, %s148
      %s163 = sphi 0, %s149
      %s167 = sphi 0, %s167
      %s169 = sphi 0, %s167
      %s170 = sphi 0, %s169
      %s184 = sphi 0, %s170
      %s188 = sphi 0, %s188
      %s190 = sphi 0, %s188
      %s191 = sphi 0, %s190
      %s205 = sphi 0, %s191
      %s209 = sphi 0, %s209
      %s211 = sphi 0, %s209
      %s212 = sphi 0, %s211
      %s226 = sphi 0, %s212
      %s230 = sphi 0, %s230
      %s232 = sphi 0, %s230
      %s233 = sphi 0, %s232
      %s247 = sphi 0, %s233
      %s251 = sphi 0, %s251
      %s253 = sphi 0, %s251
      %s254 = sphi 0, %s253
      %s268 = sphi 0, %s254
      %s272 = sphi 0, %s272
      %s274 = sphi 0, %s272
      %s275 = sphi 0, %s274
      %s289 = sphi 0, %s275
      %s293 = sphi 0, %s293
      %s295 = sphi 0, %s293
      %s296 = sphi 0, %s295
      %s310 = sphi 0, %s296
      %s314 = sphi 0, %s314
      %s316 = sphi 0, %s314
      %s317 = sphi 0, %s316
      %s331 = sphi 0, %s317
      %s335 = sphi 0, %s335
      %s337 = sphi 0, %s335
      %s338 = sphi 0, %s337
      %s352 = sphi 0, %s338
      %s356 = sphi 0, %s356
      %s358 = sphi 0, %s356
      %s359 = sphi 0, %s358
      %s373 = sphi 0, %s359
      %s377 = sphi 0, %s377
      %s379 = sphi 0, %s377
      %s380 = sphi 0, %s379
      %s394 = sphi 0, %s380
      %s398 = sphi 0, %s398
      %s400 = sphi 0, %s398
      %s401 = sphi 0, %s400
      %s415 = sphi 0, %s401
      %s419 = sphi 0, %s419
      %s421 = sphi 0, %s419
      %s422 = sphi 0, %s421
      %s436 = sphi 0, %s422
      %s440 = sphi 0, %s440
      %s442 = sphi 0, %s440
      %s443 = sphi 0, %s442
      %s457 = sphi 0, %s443
      %s461 = sphi 0, %s461
      %s463 = sphi 0, %s461
      %s464 = sphi 0, %s463
      %s478 = sphi 0, %s464
      %s482 = sphi 0, %s482
      %s484 = sphi 0, %s482
      %s485 = sphi 0, %s484
      %s499 = sphi 0, %s485
      %s503 = sphi 0, %s503
      %s505 = sphi 0, %s503
      %s506 = sphi 0, %s505
      %s520 = sphi 0, %s506
      %s524 = sphi 0, %s524
      %s526 = sphi 0, %s524
      %s527 = sphi 0, %s526
      %s541 = sphi 0, %s527
      %s545 = sphi 0, %s545
      %s547 = sphi 0, %s545
      %s548 = sphi 0, %s547
      %s562 = sphi 0, %s548
      %s566 = sphi 0, %s566
      %s568 = sphi 0, %s566
      %s569 = sphi 0, %s568
      %s583 = sphi 0, %s569
      %s587 = sphi 0, %s587
      %s589 = sphi 0, %s587
      %s590 = sphi 0, %s589
      %s604 = sphi 0, %s590
      %s608 = sphi 0, %s608
      %s610 = sphi 0, %s608
      %s611 = sphi 0, %s610
      %s625 = sphi 0, %s611
      %s629 = sphi 0, %s629
      %s631 = sphi 0, %s629
      %s632 = sphi 0, %s631
      %s646 = sphi 0, %s632
      %s650 = sphi 0, %s650
      %s652 = sphi 0, %s650
      %s653 = sphi 0, %s652
      %s667 = sphi 0, %s653
      %s671 = sphi 0, %s671
      %s673 = sphi 0, %s671
      %s674 = sphi 0, %s673
      %s688 = sphi 0, %s674
      %s692 = sphi 0, %s692
      %s694 = sphi 0, %s692
      %s695 = sphi 0, %s694
      %s709 = sphi 0, %s695
      %s715 = sphi 0, %s717
      %s718 = sphi 0, %s715
      %s719 = sphi 0, %s718
      %s735 = sphi 0, %s719
    $region4: #{tpu_custom_call.1} parent=1 // loop_header_branch
      %73 = sbr.rel (%p71) target = $region8
    $region5: #{tpu_custom_call.1} parent=1 // loop_body
      %s75 = ssub.s32 %s70, 1
      %s76 = ssub.s32 %s70, 2
      %s77 = sadd.s32 %s70, 1
      %s78 = ssub.s32 %s70, %s77
      %p79 = scmp.eq.s32.totalorder %s78, 0
      %s81 = sadd.s32 %s80, 1
      %s82 = scalar_select %p79, %s80, %s81
      %p85 = pneg %p79
      %p86 = scmp.eq.s32.totalorder %s70, 1
      %p87 = por %p85, %p86
      %p88 = scmp.ne.s32.totalorder %s80, %s83
      %p89 = scmp.eq.s32.totalorder %s70, 0
      %p90 = por %p88, %p89
      %p91 = scmp.ne.s32.totalorder %s80, %s83
      %p92 = scmp.eq.s32.totalorder %s75, 1
      %p93 = por %p91, %p92
      %p94 = scmp.ne.s32.totalorder %s83, %s84
      %p95 = scmp.eq.s32.totalorder %s75, 0
      %p96 = por %p94, %p95
      %p97 = scmp.ne.s32.totalorder %s83, %s84
      %p98 = scmp.eq.s32.totalorder %s76, 1
      %p99 = por %p97, %p98
      %p101 = scmp.ne.s32.totalorder %s84, %s100
      %p102 = scmp.eq.s32.totalorder %s76, 0
      %p103 = por %p101, %p102
      %s105 = sadd.s32 %s104, 1
      %p108 = scmp.eq.s32.totalorder %s70, 1
      %p109 = scmp.ne.s32.totalorder %s104, %s106
      %p110 = scmp.eq.s32.totalorder %s70, 0
      %p111 = por %p109, %p110
      %p112 = scmp.ne.s32.totalorder %s104, %s106
      %p113 = scmp.eq.s32.totalorder %s75, 1
      %p114 = por %p112, %p113
      %p115 = scmp.ne.s32.totalorder %s106, %s107
      %p116 = scmp.eq.s32.totalorder %s75, 0
      %p117 = por %p115, %p116
      %p118 = scmp.ne.s32.totalorder %s106, %s107
      %p119 = scmp.eq.s32.totalorder %s76, 1
      %p120 = por %p118, %p119
      %p122 = scmp.ne.s32.totalorder %s107, %s121
      %p123 = scmp.eq.s32.totalorder %s76, 0
      %p124 = por %p122, %p123
      %s126 = sadd.s32 %s125, 1
      %p129 = scmp.eq.s32.totalorder %s70, 1
      %p130 = scmp.ne.s32.totalorder %s125, %s127
      %p131 = scmp.eq.s32.totalorder %s70, 0
      %p132 = por %p130, %p131
      %p133 = scmp.ne.s32.totalorder %s125, %s127
      %p134 = scmp.eq.s32.totalorder %s75, 1
      %p135 = por %p133, %p134
      %p136 = scmp.ne.s32.totalorder %s127, %s128
      %p137 = scmp.eq.s32.totalorder %s75, 0
      %p138 = por %p136, %p137
      %p139 = scmp.ne.s32.totalorder %s127, %s128
      %p140 = scmp.eq.s32.totalorder %s76, 1
      %p141 = por %p139, %p140
      %p143 = scmp.ne.s32.totalorder %s128, %s142
      %p144 = scmp.eq.s32.totalorder %s76, 0
      %p145 = por %p143, %p144
      %s147 = sadd.s32 %s146, 1
      %p150 = scmp.eq.s32.totalorder %s70, 1
      %p151 = scmp.ne.s32.totalorder %s146, %s148
      %p152 = scmp.eq.s32.totalorder %s70, 0
      %p153 = por %p151, %p152
      %p154 = scmp.ne.s32.totalorder %s146, %s148
      %p155 = scmp.eq.s32.totalorder %s75, 1
      %p156 = por %p154, %p155
      %p157 = scmp.ne.s32.totalorder %s148, %s149
      %p158 = scmp.eq.s32.totalorder %s75, 0
      %p159 = por %p157, %p158
      %p160 = scmp.ne.s32.totalorder %s148, %s149
      %p161 = scmp.eq.s32.totalorder %s76, 1
      %p162 = por %p160, %p161
      %p164 = scmp.ne.s32.totalorder %s149, %s163
      %p165 = scmp.eq.s32.totalorder %s76, 0
      %p166 = por %p164, %p165
      %s168 = sadd.s32 %s167, 1
      %p171 = scmp.eq.s32.totalorder %s70, 1
      %p172 = scmp.ne.s32.totalorder %s167, %s169
      %p173 = scmp.eq.s32.totalorder %s70, 0
      %p174 = por %p172, %p173
      %p175 = scmp.ne.s32.totalorder %s167, %s169
      %p176 = scmp.eq.s32.totalorder %s75, 1
      %p177 = por %p175, %p176
      %p178 = scmp.ne.s32.totalorder %s169, %s170
      %p179 = scmp.eq.s32.totalorder %s75, 0
      %p180 = por %p178, %p179
      %p181 = scmp.ne.s32.totalorder %s169, %s170
      %p182 = scmp.eq.s32.totalorder %s76, 1
      %p183 = por %p181, %p182
      %p185 = scmp.ne.s32.totalorder %s170, %s184
      %p186 = scmp.eq.s32.totalorder %s76, 0
      %p187 = por %p185, %p186
      %s189 = sadd.s32 %s188, 1
      %p192 = scmp.eq.s32.totalorder %s70, 1
      %p193 = scmp.ne.s32.totalorder %s188, %s190
      %p194 = scmp.eq.s32.totalorder %s70, 0
      %p195 = por %p193, %p194
      %p196 = scmp.ne.s32.totalorder %s188, %s190
      %p197 = scmp.eq.s32.totalorder %s75, 1
      %p198 = por %p196, %p197
      %p199 = scmp.ne.s32.totalorder %s190, %s191
      %p200 = scmp.eq.s32.totalorder %s75, 0
      %p201 = por %p199, %p200
      %p202 = scmp.ne.s32.totalorder %s190, %s191
      %p203 = scmp.eq.s32.totalorder %s76, 1
      %p204 = por %p202, %p203
      %p206 = scmp.ne.s32.totalorder %s191, %s205
      %p207 = scmp.eq.s32.totalorder %s76, 0
      %p208 = por %p206, %p207
      %s210 = sadd.s32 %s209, 1
      %p213 = scmp.eq.s32.totalorder %s70, 1
      %p214 = scmp.ne.s32.totalorder %s209, %s211
      %p215 = scmp.eq.s32.totalorder %s70, 0
      %p216 = por %p214, %p215
      %p217 = scmp.ne.s32.totalorder %s209, %s211
      %p218 = scmp.eq.s32.totalorder %s75, 1
      %p219 = por %p217, %p218
      %p220 = scmp.ne.s32.totalorder %s211, %s212
      %p221 = scmp.eq.s32.totalorder %s75, 0
      %p222 = por %p220, %p221
      %p223 = scmp.ne.s32.totalorder %s211, %s212
      %p224 = scmp.eq.s32.totalorder %s76, 1
      %p225 = por %p223, %p224
      %p227 = scmp.ne.s32.totalorder %s212, %s226
      %p228 = scmp.eq.s32.totalorder %s76, 0
      %p229 = por %p227, %p228
      %s231 = sadd.s32 %s230, 1
      %p234 = scmp.eq.s32.totalorder %s70, 1
      %p235 = scmp.ne.s32.totalorder %s230, %s232
      %p236 = scmp.eq.s32.totalorder %s70, 0
      %p237 = por %p235, %p236
      %p238 = scmp.ne.s32.totalorder %s230, %s232
      %p239 = scmp.eq.s32.totalorder %s75, 1
      %p240 = por %p238, %p239
      %p241 = scmp.ne.s32.totalorder %s232, %s233
      %p242 = scmp.eq.s32.totalorder %s75, 0
      %p243 = por %p241, %p242
      %p244 = scmp.ne.s32.totalorder %s232, %s233
      %p245 = scmp.eq.s32.totalorder %s76, 1
      %p246 = por %p244, %p245
      %p248 = scmp.ne.s32.totalorder %s233, %s247
      %p249 = scmp.eq.s32.totalorder %s76, 0
      %p250 = por %p248, %p249
      %s252 = sadd.s32 %s251, 1
      %p255 = scmp.eq.s32.totalorder %s70, 1
      %p256 = scmp.ne.s32.totalorder %s251, %s253
      %p257 = scmp.eq.s32.totalorder %s70, 0
      %p258 = por %p256, %p257
      %p259 = scmp.ne.s32.totalorder %s251, %s253
      %p260 = scmp.eq.s32.totalorder %s75, 1
      %p261 = por %p259, %p260
      %p262 = scmp.ne.s32.totalorder %s253, %s254
      %p263 = scmp.eq.s32.totalorder %s75, 0
      %p264 = por %p262, %p263
      %p265 = scmp.ne.s32.totalorder %s253, %s254
      %p266 = scmp.eq.s32.totalorder %s76, 1
      %p267 = por %p265, %p266
      %p269 = scmp.ne.s32.totalorder %s254, %s268
      %p270 = scmp.eq.s32.totalorder %s76, 0
      %p271 = por %p269, %p270
      %s273 = sadd.s32 %s272, 1
      %p276 = scmp.eq.s32.totalorder %s70, 1
      %p277 = scmp.ne.s32.totalorder %s272, %s274
      %p278 = scmp.eq.s32.totalorder %s70, 0
      %p279 = por %p277, %p278
      %p280 = scmp.ne.s32.totalorder %s272, %s274
      %p281 = scmp.eq.s32.totalorder %s75, 1
      %p282 = por %p280, %p281
      %p283 = scmp.ne.s32.totalorder %s274, %s275
      %p284 = scmp.eq.s32.totalorder %s75, 0
      %p285 = por %p283, %p284
      %p286 = scmp.ne.s32.totalorder %s274, %s275
      %p287 = scmp.eq.s32.totalorder %s76, 1
      %p288 = por %p286, %p287
      %p290 = scmp.ne.s32.totalorder %s275, %s289
      %p291 = scmp.eq.s32.totalorder %s76, 0
      %p292 = por %p290, %p291
      %s294 = sadd.s32 %s293, 1
      %p297 = scmp.eq.s32.totalorder %s70, 1
      %p298 = scmp.ne.s32.totalorder %s293, %s295
      %p299 = scmp.eq.s32.totalorder %s70, 0
      %p300 = por %p298, %p299
      %p301 = scmp.ne.s32.totalorder %s293, %s295
      %p302 = scmp.eq.s32.totalorder %s75, 1
      %p303 = por %p301, %p302
      %p304 = scmp.ne.s32.totalorder %s295, %s296
      %p305 = scmp.eq.s32.totalorder %s75, 0
      %p306 = por %p304, %p305
      %p307 = scmp.ne.s32.totalorder %s295, %s296
      %p308 = scmp.eq.s32.totalorder %s76, 1
      %p309 = por %p307, %p308
      %p311 = scmp.ne.s32.totalorder %s296, %s310
      %p312 = scmp.eq.s32.totalorder %s76, 0
      %p313 = por %p311, %p312
      %s315 = sadd.s32 %s314, 1
      %p318 = scmp.eq.s32.totalorder %s70, 1
      %p319 = scmp.ne.s32.totalorder %s314, %s316
      %p320 = scmp.eq.s32.totalorder %s70, 0
      %p321 = por %p319, %p320
      %p322 = scmp.ne.s32.totalorder %s314, %s316
      %p323 = scmp.eq.s32.totalorder %s75, 1
      %p324 = por %p322, %p323
      %p325 = scmp.ne.s32.totalorder %s316, %s317
      %p326 = scmp.eq.s32.totalorder %s75, 0
      %p327 = por %p325, %p326
      %p328 = scmp.ne.s32.totalorder %s316, %s317
      %p329 = scmp.eq.s32.totalorder %s76, 1
      %p330 = por %p328, %p329
      %p332 = scmp.ne.s32.totalorder %s317, %s331
      %p333 = scmp.eq.s32.totalorder %s76, 0
      %p334 = por %p332, %p333
      %s336 = sadd.s32 %s335, 1
      %p339 = scmp.eq.s32.totalorder %s70, 1
      %p340 = scmp.ne.s32.totalorder %s335, %s337
      %p341 = scmp.eq.s32.totalorder %s70, 0
      %p342 = por %p340, %p341
      %p343 = scmp.ne.s32.totalorder %s335, %s337
      %p344 = scmp.eq.s32.totalorder %s75, 1
      %p345 = por %p343, %p344
      %p346 = scmp.ne.s32.totalorder %s337, %s338
      %p347 = scmp.eq.s32.totalorder %s75, 0
      %p348 = por %p346, %p347
      %p349 = scmp.ne.s32.totalorder %s337, %s338
      %p350 = scmp.eq.s32.totalorder %s76, 1
      %p351 = por %p349, %p350
      %p353 = scmp.ne.s32.totalorder %s338, %s352
      %p354 = scmp.eq.s32.totalorder %s76, 0
      %p355 = por %p353, %p354
      %s357 = sadd.s32 %s356, 1
      %p360 = scmp.eq.s32.totalorder %s70, 1
      %p361 = scmp.ne.s32.totalorder %s356, %s358
      %p362 = scmp.eq.s32.totalorder %s70, 0
      %p363 = por %p361, %p362
      %p364 = scmp.ne.s32.totalorder %s356, %s358
      %p365 = scmp.eq.s32.totalorder %s75, 1
      %p366 = por %p364, %p365
      %p367 = scmp.ne.s32.totalorder %s358, %s359
      %p368 = scmp.eq.s32.totalorder %s75, 0
      %p369 = por %p367, %p368
      %p370 = scmp.ne.s32.totalorder %s358, %s359
      %p371 = scmp.eq.s32.totalorder %s76, 1
      %p372 = por %p370, %p371
      %p374 = scmp.ne.s32.totalorder %s359, %s373
      %p375 = scmp.eq.s32.totalorder %s76, 0
      %p376 = por %p374, %p375
      %s378 = sadd.s32 %s377, 1
      %p381 = scmp.eq.s32.totalorder %s70, 1
      %p382 = scmp.ne.s32.totalorder %s377, %s379
      %p383 = scmp.eq.s32.totalorder %s70, 0
      %p384 = por %p382, %p383
      %p385 = scmp.ne.s32.totalorder %s377, %s379
      %p386 = scmp.eq.s32.totalorder %s75, 1
      %p387 = por %p385, %p386
      %p388 = scmp.ne.s32.totalorder %s379, %s380
      %p389 = scmp.eq.s32.totalorder %s75, 0
      %p390 = por %p388, %p389
      %p391 = scmp.ne.s32.totalorder %s379, %s380
      %p392 = scmp.eq.s32.totalorder %s76, 1
      %p393 = por %p391, %p392
      %p395 = scmp.ne.s32.totalorder %s380, %s394
      %p396 = scmp.eq.s32.totalorder %s76, 0
      %p397 = por %p395, %p396
      %s399 = sadd.s32 %s398, 1
      %p402 = scmp.eq.s32.totalorder %s70, 1
      %p403 = scmp.ne.s32.totalorder %s398, %s400
      %p404 = scmp.eq.s32.totalorder %s70, 0
      %p405 = por %p403, %p404
      %p406 = scmp.ne.s32.totalorder %s398, %s400
      %p407 = scmp.eq.s32.totalorder %s75, 1
      %p408 = por %p406, %p407
      %p409 = scmp.ne.s32.totalorder %s400, %s401
      %p410 = scmp.eq.s32.totalorder %s75, 0
      %p411 = por %p409, %p410
      %p412 = scmp.ne.s32.totalorder %s400, %s401
      %p413 = scmp.eq.s32.totalorder %s76, 1
      %p414 = por %p412, %p413
      %p416 = scmp.ne.s32.totalorder %s401, %s415
      %p417 = scmp.eq.s32.totalorder %s76, 0
      %p418 = por %p416, %p417
      %s420 = sadd.s32 %s419, 1
      %p423 = scmp.eq.s32.totalorder %s70, 1
      %p424 = scmp.ne.s32.totalorder %s419, %s421
      %p425 = scmp.eq.s32.totalorder %s70, 0
      %p426 = por %p424, %p425
      %p427 = scmp.ne.s32.totalorder %s419, %s421
      %p428 = scmp.eq.s32.totalorder %s75, 1
      %p429 = por %p427, %p428
      %p430 = scmp.ne.s32.totalorder %s421, %s422
      %p431 = scmp.eq.s32.totalorder %s75, 0
      %p432 = por %p430, %p431
      %p433 = scmp.ne.s32.totalorder %s421, %s422
      %p434 = scmp.eq.s32.totalorder %s76, 1
      %p435 = por %p433, %p434
      %p437 = scmp.ne.s32.totalorder %s422, %s436
      %p438 = scmp.eq.s32.totalorder %s76, 0
      %p439 = por %p437, %p438
      %s441 = sadd.s32 %s440, 1
      %p444 = scmp.eq.s32.totalorder %s70, 1
      %p445 = scmp.ne.s32.totalorder %s440, %s442
      %p446 = scmp.eq.s32.totalorder %s70, 0
      %p447 = por %p445, %p446
      %p448 = scmp.ne.s32.totalorder %s440, %s442
      %p449 = scmp.eq.s32.totalorder %s75, 1
      %p450 = por %p448, %p449
      %p451 = scmp.ne.s32.totalorder %s442, %s443
      %p452 = scmp.eq.s32.totalorder %s75, 0
      %p453 = por %p451, %p452
      %p454 = scmp.ne.s32.totalorder %s442, %s443
      %p455 = scmp.eq.s32.totalorder %s76, 1
      %p456 = por %p454, %p455
      %p458 = scmp.ne.s32.totalorder %s443, %s457
      %p459 = scmp.eq.s32.totalorder %s76, 0
      %p460 = por %p458, %p459
      %s462 = sadd.s32 %s461, 1
      %p465 = scmp.eq.s32.totalorder %s70, 1
      %p466 = scmp.ne.s32.totalorder %s461, %s463
      %p467 = scmp.eq.s32.totalorder %s70, 0
      %p468 = por %p466, %p467
      %p469 = scmp.ne.s32.totalorder %s461, %s463
      %p470 = scmp.eq.s32.totalorder %s75, 1
      %p471 = por %p469, %p470
      %p472 = scmp.ne.s32.totalorder %s463, %s464
      %p473 = scmp.eq.s32.totalorder %s75, 0
      %p474 = por %p472, %p473
      %p475 = scmp.ne.s32.totalorder %s463, %s464
      %p476 = scmp.eq.s32.totalorder %s76, 1
      %p477 = por %p475, %p476
      %p479 = scmp.ne.s32.totalorder %s464, %s478
      %p480 = scmp.eq.s32.totalorder %s76, 0
      %p481 = por %p479, %p480
      %s483 = sadd.s32 %s482, 1
      %p486 = scmp.eq.s32.totalorder %s70, 1
      %p487 = scmp.ne.s32.totalorder %s482, %s484
      %p488 = scmp.eq.s32.totalorder %s70, 0
      %p489 = por %p487, %p488
      %p490 = scmp.ne.s32.totalorder %s482, %s484
      %p491 = scmp.eq.s32.totalorder %s75, 1
      %p492 = por %p490, %p491
      %p493 = scmp.ne.s32.totalorder %s484, %s485
      %p494 = scmp.eq.s32.totalorder %s75, 0
      %p495 = por %p493, %p494
      %p496 = scmp.ne.s32.totalorder %s484, %s485
      %p497 = scmp.eq.s32.totalorder %s76, 1
      %p498 = por %p496, %p497
      %p500 = scmp.ne.s32.totalorder %s485, %s499
      %p501 = scmp.eq.s32.totalorder %s76, 0
      %p502 = por %p500, %p501
      %s504 = sadd.s32 %s503, 1
      %p507 = scmp.eq.s32.totalorder %s70, 1
      %p508 = scmp.ne.s32.totalorder %s503, %s505
      %p509 = scmp.eq.s32.totalorder %s70, 0
      %p510 = por %p508, %p509
      %p511 = scmp.ne.s32.totalorder %s503, %s505
      %p512 = scmp.eq.s32.totalorder %s75, 1
      %p513 = por %p511, %p512
      %p514 = scmp.ne.s32.totalorder %s505, %s506
      %p515 = scmp.eq.s32.totalorder %s75, 0
      %p516 = por %p514, %p515
      %p517 = scmp.ne.s32.totalorder %s505, %s506
      %p518 = scmp.eq.s32.totalorder %s76, 1
      %p519 = por %p517, %p518
      %p521 = scmp.ne.s32.totalorder %s506, %s520
      %p522 = scmp.eq.s32.totalorder %s76, 0
      %p523 = por %p521, %p522
      %s525 = sadd.s32 %s524, 1
      %p528 = scmp.eq.s32.totalorder %s70, 1
      %p529 = scmp.ne.s32.totalorder %s524, %s526
      %p530 = scmp.eq.s32.totalorder %s70, 0
      %p531 = por %p529, %p530
      %p532 = scmp.ne.s32.totalorder %s524, %s526
      %p533 = scmp.eq.s32.totalorder %s75, 1
      %p534 = por %p532, %p533
      %p535 = scmp.ne.s32.totalorder %s526, %s527
      %p536 = scmp.eq.s32.totalorder %s75, 0
      %p537 = por %p535, %p536
      %p538 = scmp.ne.s32.totalorder %s526, %s527
      %p539 = scmp.eq.s32.totalorder %s76, 1
      %p540 = por %p538, %p539
      %p542 = scmp.ne.s32.totalorder %s527, %s541
      %p543 = scmp.eq.s32.totalorder %s76, 0
      %p544 = por %p542, %p543
      %s546 = sadd.s32 %s545, 1
      %p549 = scmp.eq.s32.totalorder %s70, 1
      %p550 = scmp.ne.s32.totalorder %s545, %s547
      %p551 = scmp.eq.s32.totalorder %s70, 0
      %p552 = por %p550, %p551
      %p553 = scmp.ne.s32.totalorder %s545, %s547
      %p554 = scmp.eq.s32.totalorder %s75, 1
      %p555 = por %p553, %p554
      %p556 = scmp.ne.s32.totalorder %s547, %s548
      %p557 = scmp.eq.s32.totalorder %s75, 0
      %p558 = por %p556, %p557
      %p559 = scmp.ne.s32.totalorder %s547, %s548
      %p560 = scmp.eq.s32.totalorder %s76, 1
      %p561 = por %p559, %p560
      %p563 = scmp.ne.s32.totalorder %s548, %s562
      %p564 = scmp.eq.s32.totalorder %s76, 0
      %p565 = por %p563, %p564
      %s567 = sadd.s32 %s566, 1
      %p570 = scmp.eq.s32.totalorder %s70, 1
      %p571 = scmp.ne.s32.totalorder %s566, %s568
      %p572 = scmp.eq.s32.totalorder %s70, 0
      %p573 = por %p571, %p572
      %p574 = scmp.ne.s32.totalorder %s566, %s568
      %p575 = scmp.eq.s32.totalorder %s75, 1
      %p576 = por %p574, %p575
      %p577 = scmp.ne.s32.totalorder %s568, %s569
      %p578 = scmp.eq.s32.totalorder %s75, 0
      %p579 = por %p577, %p578
      %p580 = scmp.ne.s32.totalorder %s568, %s569
      %p581 = scmp.eq.s32.totalorder %s76, 1
      %p582 = por %p580, %p581
      %p584 = scmp.ne.s32.totalorder %s569, %s583
      %p585 = scmp.eq.s32.totalorder %s76, 0
      %p586 = por %p584, %p585
      %s588 = sadd.s32 %s587, 1
      %p591 = scmp.eq.s32.totalorder %s70, 1
      %p592 = scmp.ne.s32.totalorder %s587, %s589
      %p593 = scmp.eq.s32.totalorder %s70, 0
      %p594 = por %p592, %p593
      %p595 = scmp.ne.s32.totalorder %s587, %s589
      %p596 = scmp.eq.s32.totalorder %s75, 1
      %p597 = por %p595, %p596
      %p598 = scmp.ne.s32.totalorder %s589, %s590
      %p599 = scmp.eq.s32.totalorder %s75, 0
      %p600 = por %p598, %p599
      %p601 = scmp.ne.s32.totalorder %s589, %s590
      %p602 = scmp.eq.s32.totalorder %s76, 1
      %p603 = por %p601, %p602
      %p605 = scmp.ne.s32.totalorder %s590, %s604
      %p606 = scmp.eq.s32.totalorder %s76, 0
      %p607 = por %p605, %p606
      %s609 = sadd.s32 %s608, 1
      %p612 = scmp.eq.s32.totalorder %s70, 1
      %p613 = scmp.ne.s32.totalorder %s608, %s610
      %p614 = scmp.eq.s32.totalorder %s70, 0
      %p615 = por %p613, %p614
      %p616 = scmp.ne.s32.totalorder %s608, %s610
      %p617 = scmp.eq.s32.totalorder %s75, 1
      %p618 = por %p616, %p617
      %p619 = scmp.ne.s32.totalorder %s610, %s611
      %p620 = scmp.eq.s32.totalorder %s75, 0
      %p621 = por %p619, %p620
      %p622 = scmp.ne.s32.totalorder %s610, %s611
      %p623 = scmp.eq.s32.totalorder %s76, 1
      %p624 = por %p622, %p623
      %p626 = scmp.ne.s32.totalorder %s611, %s625
      %p627 = scmp.eq.s32.totalorder %s76, 0
      %p628 = por %p626, %p627
      %s630 = sadd.s32 %s629, 1
      %p633 = scmp.eq.s32.totalorder %s70, 1
      %p634 = scmp.ne.s32.totalorder %s629, %s631
      %p635 = scmp.eq.s32.totalorder %s70, 0
      %p636 = por %p634, %p635
      %p637 = scmp.ne.s32.totalorder %s629, %s631
      %p638 = scmp.eq.s32.totalorder %s75, 1
      %p639 = por %p637, %p638
      %p640 = scmp.ne.s32.totalorder %s631, %s632
      %p641 = scmp.eq.s32.totalorder %s75, 0
      %p642 = por %p640, %p641
      %p643 = scmp.ne.s32.totalorder %s631, %s632
      %p644 = scmp.eq.s32.totalorder %s76, 1
      %p645 = por %p643, %p644
      %p647 = scmp.ne.s32.totalorder %s632, %s646
      %p648 = scmp.eq.s32.totalorder %s76, 0
      %p649 = por %p647, %p648
      %s651 = sadd.s32 %s650, 1
      %p654 = scmp.eq.s32.totalorder %s70, 1
      %p655 = scmp.ne.s32.totalorder %s650, %s652
      %p656 = scmp.eq.s32.totalorder %s70, 0
      %p657 = por %p655, %p656
      %p658 = scmp.ne.s32.totalorder %s650, %s652
      %p659 = scmp.eq.s32.totalorder %s75, 1
      %p660 = por %p658, %p659
      %p661 = scmp.ne.s32.totalorder %s652, %s653
      %p662 = scmp.eq.s32.totalorder %s75, 0
      %p663 = por %p661, %p662
      %p664 = scmp.ne.s32.totalorder %s652, %s653
      %p665 = scmp.eq.s32.totalorder %s76, 1
      %p666 = por %p664, %p665
      %p668 = scmp.ne.s32.totalorder %s653, %s667
      %p669 = scmp.eq.s32.totalorder %s76, 0
      %p670 = por %p668, %p669
      %s672 = sadd.s32 %s671, 1
      %p675 = scmp.eq.s32.totalorder %s70, 1
      %p676 = scmp.ne.s32.totalorder %s671, %s673
      %p677 = scmp.eq.s32.totalorder %s70, 0
      %p678 = por %p676, %p677
      %p679 = scmp.ne.s32.totalorder %s671, %s673
      %p680 = scmp.eq.s32.totalorder %s75, 1
      %p681 = por %p679, %p680
      %p682 = scmp.ne.s32.totalorder %s673, %s674
      %p683 = scmp.eq.s32.totalorder %s75, 0
      %p684 = por %p682, %p683
      %p685 = scmp.ne.s32.totalorder %s673, %s674
      %p686 = scmp.eq.s32.totalorder %s76, 1
      %p687 = por %p685, %p686
      %p689 = scmp.ne.s32.totalorder %s674, %s688
      %p690 = scmp.eq.s32.totalorder %s76, 0
      %p691 = por %p689, %p690
      %s693 = sadd.s32 %s692, 1
      %p696 = scmp.eq.s32.totalorder %s70, 1
      %p697 = scmp.ne.s32.totalorder %s692, %s694
      %p698 = scmp.eq.s32.totalorder %s70, 0
      %p699 = por %p697, %p698
      %p700 = scmp.ne.s32.totalorder %s692, %s694
      %p701 = scmp.eq.s32.totalorder %s75, 1
      %p702 = por %p700, %p701
      %p703 = scmp.ne.s32.totalorder %s694, %s695
      %p704 = scmp.eq.s32.totalorder %s75, 0
      %p705 = por %p703, %p704
      %p706 = scmp.ne.s32.totalorder %s694, %s695
      %p707 = scmp.eq.s32.totalorder %s76, 1
      %p708 = por %p706, %p707
      %p710 = scmp.ne.s32.totalorder %s695, %s709
      %p711 = scmp.eq.s32.totalorder %s76, 0
      %p712 = por %p710, %p711
      %s713 = ssub.s32 %s70, %s77
      %p714 = scmp.eq.s32.totalorder %s713, 0
      %s716 = sadd.s32 %s715, 1
      %s717 = scalar_select %p714, %s715, %s716
      %p720 = pneg %p714
      %p721 = scmp.eq.s32.totalorder %s70, 1
      %p722 = por %p720, %p721
      %p723 = scmp.ne.s32.totalorder %s715, %s718
      %p724 = scmp.eq.s32.totalorder %s70, 0
      %p725 = por %p723, %p724
      %p726 = scmp.ne.s32.totalorder %s715, %s718
      %p727 = scmp.eq.s32.totalorder %s75, 1
      %p728 = por %p726, %p727
      %p729 = scmp.ne.s32.totalorder %s718, %s719
      %p730 = scmp.eq.s32.totalorder %s75, 0
      %p731 = por %p729, %p730
      %p732 = scmp.ne.s32.totalorder %s718, %s719
      %p733 = scmp.eq.s32.totalorder %s76, 1
      %p734 = por %p732, %p733
      %p736 = scmp.ne.s32.totalorder %s719, %s735
      %p737 = scmp.eq.s32.totalorder %s76, 0
      %p738 = por %p736, %p737
      %p739 = scmp.le.s32.totalorder 1, %s70
      %p740 = scmp.lt.s32.totalorder %s70, 3
      %p741 = pnand %p739, %p740
      %p742 = pneg %p741
      // Predicated region
      $region9: #{tpu_custom_call.1} parent=5 // pred_check
        _
      $region10: #{tpu_custom_call.1} parent=5 // pred_check_branch
        %744 = sbr.rel (%p741) target = $region12
      $region11: #{tpu_custom_call.1} parent=5 // pred_region
        %s745 = ssub.s32 %s70, 1
        // Predicated region
        $region13: #{tpu_custom_call.1} parent=11 // pred_check
          %p746 = pneg %p117
        $region14: #{tpu_custom_call.1} parent=11 // pred_check_branch
          %748 = sbr.rel (%p746) target = $region16
        $region15: #{tpu_custom_call.1} parent=11 // pred_region
          _
        $region16: #{tpu_custom_call.1} parent=11 // pred_fallthru
          _
        // Predicated region
        $region17: #{tpu_custom_call.1} parent=11 // pred_check
          %p749 = pneg %p138
        $region18: #{tpu_custom_call.1} parent=11 // pred_check_branch
          %751 = sbr.rel (%p749) target = $region20
        $region19: #{tpu_custom_call.1} parent=11 // pred_region
          _
        $region20: #{tpu_custom_call.1} parent=11 // pred_fallthru
          _
        // Predicated region
        $region21: #{tpu_custom_call.1} parent=11 // pred_check
          %p752 = pneg %p159
        $region22: #{tpu_custom_call.1} parent=11 // pred_check_branch
          %754 = sbr.rel (%p752) target = $region24
        $region23: #{tpu_custom_call.1} parent=11 // pred_region
          _
        $region24: #{tpu_custom_call.1} parent=11 // pred_fallthru
          _
        // Predicated region
        $region25: #{tpu_custom_call.1} parent=11 // pred_check
          %p755 = pneg %p180
        $region26: #{tpu_custom_call.1} parent=11 // pred_check_branch
          %757 = sbr.rel (%p755) target = $region28
        $region27: #{tpu_custom_call.1} parent=11 // pred_region
          _
        $region28: #{tpu_custom_call.1} parent=11 // pred_fallthru
          _
        // Predicated region
        $region29: #{tpu_custom_call.1} parent=11 // pred_check
          %p758 = pneg %p201
        $region30: #{tpu_custom_call.1} parent=11 // pred_check_branch
          %760 = sbr.rel (%p758) target = $region32
        $region31: #{tpu_custom_call.1} parent=11 // pred_region
          _
        $region32: #{tpu_custom_call.1} parent=11 // pred_fallthru
          _
        // Predicated region
        $region33: #{tpu_custom_call.1} parent=11 // pred_check
          %p761 = pneg %p222
        $region34: #{tpu_custom_call.1} parent=11 // pred_check_branch
          %763 = sbr.rel (%p761) target = $region36
        $region35: #{tpu_custom_call.1} parent=11 // pred_region
          _
        $region36: #{tpu_custom_call.1} parent=11 // pred_fallthru
          _
        // Predicated region
        $region37: #{tpu_custom_call.1} parent=11 // pred_check
          %p764 = pneg %p243
        $region38: #{tpu_custom_call.1} parent=11 // pred_check_branch
          %766 = sbr.rel (%p764) target = $region40
        $region39: #{tpu_custom_call.1} parent=11 // pred_region
          _
        $region40: #{tpu_custom_call.1} parent=11 // pred_fallthru
          _
        // Predicated region
        $region41: #{tpu_custom_call.1} parent=11 // pred_check
          %p767 = pneg %p264
        $region42: #{tpu_custom_call.1} parent=11 // pred_check_branch
          %769 = sbr.rel (%p767) target = $region44
        $region43: #{tpu_custom_call.1} parent=11 // pred_region
          _
        $region44: #{tpu_custom_call.1} parent=11 // pred_fallthru
          _
        // Predicated region
        $region45: #{tpu_custom_call.1} parent=11 // pred_check
          %p770 = pneg %p285
        $region46: #{tpu_custom_call.1} parent=11 // pred_check_branch
          %772 = sbr.rel (%p770) target = $region48
        $region47: #{tpu_custom_call.1} parent=11 // pred_region
          _
        $region48: #{tpu_custom_call.1} parent=11 // pred_fallthru
          _
        // Predicated region
        $region49: #{tpu_custom_call.1} parent=11 // pred_check
          %p773 = pneg %p306
        $region50: #{tpu_custom_call.1} parent=11 // pred_check_branch
          %775 = sbr.rel (%p773) target = $region52
        $region51: #{tpu_custom_call.1} parent=11 // pred_region
          _
        $region52: #{tpu_custom_call.1} parent=11 // pred_fallthru
          _
        // Predicated region
        $region53: #{tpu_custom_call.1} parent=11 // pred_check
          %p776 = pneg %p327
        $region54: #{tpu_custom_call.1} parent=11 // pred_check_branch
          %778 = sbr.rel (%p776) target = $region56
        $region55: #{tpu_custom_call.1} parent=11 // pred_region
          _
        $region56: #{tpu_custom_call.1} parent=11 // pred_fallthru
          _
        // Predicated region
        $region57: #{tpu_custom_call.1} parent=11 // pred_check
          %p779 = pneg %p348
        $region58: #{tpu_custom_call.1} parent=11 // pred_check_branch
          %781 = sbr.rel (%p779) target = $region60
        $region59: #{tpu_custom_call.1} parent=11 // pred_region
          _
        $region60: #{tpu_custom_call.1} parent=11 // pred_fallthru
          _
        // Predicated region
        $region61: #{tpu_custom_call.1} parent=11 // pred_check
          %p782 = pneg %p369
        $region62: #{tpu_custom_call.1} parent=11 // pred_check_branch
          %784 = sbr.rel (%p782) target = $region64
        $region63: #{tpu_custom_call.1} parent=11 // pred_region
          _
        $region64: #{tpu_custom_call.1} parent=11 // pred_fallthru
          _
        // Predicated region
        $region65: #{tpu_custom_call.1} parent=11 // pred_check
          %p785 = pneg %p390
        $region66: #{tpu_custom_call.1} parent=11 // pred_check_branch
          %787 = sbr.rel (%p785) target = $region68
        $region67: #{tpu_custom_call.1} parent=11 // pred_region
          _
        $region68: #{tpu_custom_call.1} parent=11 // pred_fallthru
          _
        // Predicated region
        $region69: #{tpu_custom_call.1} parent=11 // pred_check
          %p788 = pneg %p411
        $region70: #{tpu_custom_call.1} parent=11 // pred_check_branch
          %790 = sbr.rel (%p788) target = $region72
        $region71: #{tpu_custom_call.1} parent=11 // pred_region
          _
        $region72: #{tpu_custom_call.1} parent=11 // pred_fallthru
          _
        // Predicated region
        $region73: #{tpu_custom_call.1} parent=11 // pred_check
          %p791 = pneg %p432
        $region74: #{tpu_custom_call.1} parent=11 // pred_check_branch
          %793 = sbr.rel (%p791) target = $region76
        $region75: #{tpu_custom_call.1} parent=11 // pred_region
          _
        $region76: #{tpu_custom_call.1} parent=11 // pred_fallthru
          _
        // Predicated region
        $region77: #{tpu_custom_call.1} parent=11 // pred_check
          %p794 = pneg %p453
        $region78: #{tpu_custom_call.1} parent=11 // pred_check_branch
          %796 = sbr.rel (%p794) target = $region80
        $region79: #{tpu_custom_call.1} parent=11 // pred_region
          _
        $region80: #{tpu_custom_call.1} parent=11 // pred_fallthru
          _
        // Predicated region
        $region81: #{tpu_custom_call.1} parent=11 // pred_check
          %p797 = pneg %p474
        $region82: #{tpu_custom_call.1} parent=11 // pred_check_branch
          %799 = sbr.rel (%p797) target = $region84
        $region83: #{tpu_custom_call.1} parent=11 // pred_region
          _
        $region84: #{tpu_custom_call.1} parent=11 // pred_fallthru
          _
        // Predicated region
        $region85: #{tpu_custom_call.1} parent=11 // pred_check
          %p800 = pneg %p495
        $region86: #{tpu_custom_call.1} parent=11 // pred_check_branch
          %802 = sbr.rel (%p800) target = $region88
        $region87: #{tpu_custom_call.1} parent=11 // pred_region
          _
        $region88: #{tpu_custom_call.1} parent=11 // pred_fallthru
          _
        // Predicated region
        $region89: #{tpu_custom_call.1} parent=11 // pred_check
          %p803 = pneg %p516
        $region90: #{tpu_custom_call.1} parent=11 // pred_check_branch
          %805 = sbr.rel (%p803) target = $region92
        $region91: #{tpu_custom_call.1} parent=11 // pred_region
          _
        $region92: #{tpu_custom_call.1} parent=11 // pred_fallthru
          _
        // Predicated region
        $region93: #{tpu_custom_call.1} parent=11 // pred_check
          %p806 = pneg %p537
        $region94: #{tpu_custom_call.1} parent=11 // pred_check_branch
          %808 = sbr.rel (%p806) target = $region96
        $region95: #{tpu_custom_call.1} parent=11 // pred_region
          _
        $region96: #{tpu_custom_call.1} parent=11 // pred_fallthru
          _
        // Predicated region
        $region97: #{tpu_custom_call.1} parent=11 // pred_check
          %p809 = pneg %p558
        $region98: #{tpu_custom_call.1} parent=11 // pred_check_branch
          %811 = sbr.rel (%p809) target = $region100
        $region99: #{tpu_custom_call.1} parent=11 // pred_region
          _
        $region100: #{tpu_custom_call.1} parent=11 // pred_fallthru
          _
        // Predicated region
        $region101: #{tpu_custom_call.1} parent=11 // pred_check
          %p812 = pneg %p579
        $region102: #{tpu_custom_call.1} parent=11 // pred_check_branch
          %814 = sbr.rel (%p812) target = $region104
        $region103: #{tpu_custom_call.1} parent=11 // pred_region
          _
        $region104: #{tpu_custom_call.1} parent=11 // pred_fallthru
          _
        // Predicated region
        $region105: #{tpu_custom_call.1} parent=11 // pred_check
          %p815 = pneg %p600
        $region106: #{tpu_custom_call.1} parent=11 // pred_check_branch
          %817 = sbr.rel (%p815) target = $region108
        $region107: #{tpu_custom_call.1} parent=11 // pred_region
          _
        $region108: #{tpu_custom_call.1} parent=11 // pred_fallthru
          _
        // Predicated region
        $region109: #{tpu_custom_call.1} parent=11 // pred_check
          %p818 = pneg %p621
        $region110: #{tpu_custom_call.1} parent=11 // pred_check_branch
          %820 = sbr.rel (%p818) target = $region112
        $region111: #{tpu_custom_call.1} parent=11 // pred_region
          _
        $region112: #{tpu_custom_call.1} parent=11 // pred_fallthru
          _
        // Predicated region
        $region113: #{tpu_custom_call.1} parent=11 // pred_check
          %p821 = pneg %p642
        $region114: #{tpu_custom_call.1} parent=11 // pred_check_branch
          %823 = sbr.rel (%p821) target = $region116
        $region115: #{tpu_custom_call.1} parent=11 // pred_region
          _
        $region116: #{tpu_custom_call.1} parent=11 // pred_fallthru
          _
        // Predicated region
        $region117: #{tpu_custom_call.1} parent=11 // pred_check
          %p824 = pneg %p663
        $region118: #{tpu_custom_call.1} parent=11 // pred_check_branch
          %826 = sbr.rel (%p824) target = $region120
        $region119: #{tpu_custom_call.1} parent=11 // pred_region
          _
        $region120: #{tpu_custom_call.1} parent=11 // pred_fallthru
          _
        // Predicated region
        $region121: #{tpu_custom_call.1} parent=11 // pred_check
          %p827 = pneg %p684
        $region122: #{tpu_custom_call.1} parent=11 // pred_check_branch
          %829 = sbr.rel (%p827) target = $region124
        $region123: #{tpu_custom_call.1} parent=11 // pred_region
          _
        $region124: #{tpu_custom_call.1} parent=11 // pred_fallthru
          _
        // Predicated region
        $region125: #{tpu_custom_call.1} parent=11 // pred_check
          %p830 = pneg %p705
        $region126: #{tpu_custom_call.1} parent=11 // pred_check_branch
          %832 = sbr.rel (%p830) target = $region128
        $region127: #{tpu_custom_call.1} parent=11 // pred_region
          _
        $region128: #{tpu_custom_call.1} parent=11 // pred_fallthru
          _
      $region12: #{tpu_custom_call.1} parent=5 // pred_fallthru
        _
      %p833 = scmp.lt.s32.totalorder %s70, 2
      // Predicated region
      $region129: #{tpu_custom_call.1} parent=5 // pred_check
        %p834 = pneg %p833
      $region130: #{tpu_custom_call.1} parent=5 // pred_check_branch
        %836 = sbr.rel (%p834) target = $region132
      $region131: #{tpu_custom_call.1} parent=5 // pred_region
        // Predicated region
        $region133: #{tpu_custom_call.1} parent=131 // pred_check
          %p837 = pneg %p90
        $region134: #{tpu_custom_call.1} parent=131 // pred_check_branch
          %839 = sbr.rel (%p837) target = $region136
        $region135: #{tpu_custom_call.1} parent=131 // pred_region
          %p840 = scmp.lt.s32.totalorder %s70, 1
          %s841 = scalar_select %p840, %s70, 1
          %s842 = smul.addr %s841, 2
          %s843 = smul.addr %s842, 8
          %s844 = scalar_lea.vmem %s1, %s843
        $region136: #{tpu_custom_call.1} parent=131 // pred_fallthru
          _
      $region132: #{tpu_custom_call.1} parent=5 // pred_fallthru
        _
      %p845 = scmp.le.s32.totalorder 1, %s70
      %p846 = scmp.lt.s32.totalorder %s70, 3
      %p847 = pnand %p845, %p846
      %p848 = pneg %p847
      // Predicated region
      $region137: #{tpu_custom_call.1} parent=5 // pred_check
        _
      $region138: #{tpu_custom_call.1} parent=5 // pred_check_branch
        %850 = sbr.rel (%p847) target = $region140
      $region139: #{tpu_custom_call.1} parent=5 // pred_region
        %s851 = ssub.s32 %s70, 1
        %p852 = scmp.lt.s32.totalorder %s75, 1
        %s853 = scalar_select %p852, %s75, 1
        %s854 = smul.addr %s853, 2
        %s855 = smul.addr %s854, 8
        %s856 = scalar_lea.vmem %s1, %s855
        %p857 = pneg %p96
        %p858 = pneg %p93
        %p859 = pneg %p117
        %p860 = pneg %p114
        %p861 = pneg %p138
        %p862 = pneg %p135
        %p863 = pneg %p159
        %p864 = pneg %p156
        %p865 = pneg %p180
        %p866 = pneg %p177
        %p867 = pneg %p201
        %p868 = pneg %p198
        %p869 = pneg %p222
        %p870 = pneg %p219
        %p871 = pneg %p243
        %p872 = pneg %p240
        %p873 = pneg %p264
        %p874 = pneg %p261
        %p875 = pneg %p285
        %p876 = pneg %p282
        %p877 = pneg %p306
        %p878 = pneg %p303
        %p879 = pneg %p327
        %p880 = pneg %p324
        %p881 = pneg %p348
        %p882 = pneg %p345
        %p883 = pneg %p369
        %p884 = pneg %p366
        %p885 = pneg %p390
        %p886 = pneg %p387
        %p887 = pneg %p411
        %p888 = pneg %p408
        %p889 = pneg %p432
        %p890 = pneg %p429
        %p891 = pneg %p453
        %p892 = pneg %p450
        %p893 = pneg %p474
        %p894 = pneg %p471
        %p895 = pneg %p495
        %p896 = pneg %p492
        %p897 = pneg %p516
        %p898 = pneg %p513
        %p899 = pneg %p537
        %p900 = pneg %p534
        %p901 = pneg %p558
        %p902 = pneg %p555
        %p903 = pneg %p579
        %p904 = pneg %p576
        %p905 = pneg %p600
        %p906 = pneg %p597
        %p907 = pneg %p621
        %p908 = pneg %p618
        %p909 = pneg %p642
        %p910 = pneg %p639
        %p911 = pneg %p663
        %p912 = pneg %p660
        %p913 = pneg %p684
        %p914 = pneg %p681
        %p915 = pneg %p705
        %p916 = pneg %p702
        %p917 = pneg %p731
        %p918 = pneg %p728
        %s919 = sand.u32 %s718, 1
        %s920 = scalar_lea.sflag [#allocation3], %s919
        %s921 = sand.u32 %s718, 1
        %s922 = scalar_lea.vmem [#allocation2], %s921
        %p923 = scmp.lt.s32.totalorder %s75, 1
        %s924 = scalar_select %p923, %s75, 1
        %s925 = smul.addr %s924, 2
        %s926 = smul.addr %s925, 8
        %s927 = scalar_lea.vmem %s1, %s926
        %v928 = vld [vmem:[%s927] sm:$0xff]
        %v929 = vld [vmem:[%s927 + $0x8] sm:$0xff]
        %v930 = vld [vmem:[%s7] sm:$0xff]
        %v931 = vld [vmem:[%s7 + $0x8] sm:$0xff]
        %v932 = vld [vmem:[%s7 + $0x10] sm:$0xff]
        %v933 = vld [vmem:[%s7 + $0x18] sm:$0xff]
        %v934 = vld [vmem:[%s7 + $0x20] sm:$0xff]
        %v935 = vld [vmem:[%s7 + $0x28] sm:$0xff]
        %v936 = vld [vmem:[%s9] sm:$0x1]
        %v938 = vperm.slane %v936, 0
        %vm940 = vcmask 392192
        %v942 = vsel %vm940, %v928, 0
        %v945 = vsel %vm940, %v929, 0
        %947 = vmatpush.msra.mxu0 0.0
        %948 = vmatpush.msra.mxu0 0.0
        %949 = vmatpush.msra.mxu0 0.0
        %950 = vmatpush.msra.mxu0 0.0
        %951 = vmatpush.msra.mxu0 0.0
        %952 = vmatpush.msra.mxu0 0.0
        %953 = vmatpush.msra.mxu0 0.0
        %954 = vmatpush.msra.mxu0 0.0
        %955 = vmatpush.msra.mxu0 0.0
        %956 = vmatpush.msra.mxu0 0.0
        %957 = vmatpush.msra.mxu0 %v935
        %958 = vmatpush.msra.mxu0 %v934
        %959 = vmatpush.msra.mxu0 %v933
        %960 = vmatpush.msra.mxu0 %v932
        %961 = vmatpush.msra.mxu0 %v931
        %962 = vmatpush.msra.mxu0 %v930
        %963 = vmatmul.f32.gmra.mxu0 %v942
        %v964 = vpop.f32.mrf.mxu0
        %v965 = vadd.f32 %v938, %v964
        %966 = vmatmul.f32.gmra.mxu0 %v945
        %v967 = vpop.f32.mrf.mxu0
        %v968 = vadd.f32 %v938, %v967
        %969 = vdwg.mxu0
        %v970 = vtanh.pop %v965
        %v971 = vtanh.pop %v968
        %vm972 = vcmask 261120
        %v973 = vsel %vm972, %v970, 0.0
        %v974 = vsel %vm972, %v971, 0.0
        %v975 = vadd.f32 %v973, %v974
        %v976 = vrot.slane %v975, 4
        %v977 = vadd.f32 %v975, %v976
        %v978 = vrot.slane %v977, 2
        %v979 = vadd.f32 %v977, %v978
        %v980 = vrot.slane %v979, 1
        %v981 = vadd.f32 %v979, %v980
        %v982 = vrcp.pop 16.0
        %v983 = vmul.f32 16.0, %v982
        %v984 = vsub.f32 1.0, %v983
        %v985 = vmul.f32 %v982, %v984
        %v986 = vadd.f32 %v982, %v985
        %vm987 = vweird.f32 %v982
        %v988 = vsel %vm987, %v982, %v986
        %v989 = vmul.f32 %v981, %v988
        %v990 = vld [vmem:[%s11] sm:$0xff]
        %v991 = vld [vmem:[%s11 + $0x8] sm:$0xff]
        %v992 = vld [vmem:[%s11 + $0x10] sm:$0xff]
        %v993 = vld [vmem:[%s11 + $0x18] sm:$0xff]
        %v994 = vld [vmem:[%s11 + $0x20] sm:$0xff]
        %v995 = vld [vmem:[%s11 + $0x28] sm:$0xff]
        %v996 = vld [vmem:[%s11 + $0x30] sm:$0xff]
        %v997 = vld [vmem:[%s11 + $0x38] sm:$0xff]
        %v998 = vld [vmem:[%s11 + $0x40] sm:$0xff]
        %v999 = vld [vmem:[%s11 + $0x48] sm:$0xff]
        %v1000 = vld [vmem:[%s11 + $0x50] sm:$0xff]
        %v1001 = vld [vmem:[%s11 + $0x58] sm:$0xff]
        %v1002 = vld [vmem:[%s13] sm:$0x7]
        %v1004 = vperm.slane %v1002, 0
        %v1005 = vperm.slane %v1002, 1
        %v1006 = vperm.slane %v1002, 2
        %v1011 = vsel %vm972, %v989, 0
        %1013 = vmatpush.msra.mxu0 0.0
        %1014 = vmatpush.msra.mxu0 0.0
        %1015 = vmatpush.msra.mxu0 0.0
        %1016 = vmatpush.msra.mxu0 0.0
        %1017 = vmatpush.msra.mxu0 0.0
        %1018 = vmatpush.msra.mxu0 0.0
        %1019 = vmatpush.msra.mxu0 0.0
        %1020 = vmatpush.msra.mxu0 0.0
        %1021 = vmatpush.msra.mxu0 0.0
        %1022 = vmatpush.msra.mxu0 0.0
        %1023 = vmatpush.msra.mxu0 0.0
        %1024 = vmatpush.msra.mxu0 0.0
        %1025 = vmatpush.msra.mxu0 %v999
        %1026 = vmatpush.msra.mxu0 %v996
        %1027 = vmatpush.msra.mxu0 %v993
        %1028 = vmatpush.msra.mxu0 %v990
        %1029 = vmatmul.f32.gmra.mxu0 %v1011
        %v1030 = vpop.f32.mrf.mxu0
        %v1031 = vadd.f32 %v1004, %v1030
        %1032 = vdwg.mxu0
        %1033 = vmatpush.msra.mxu0 0.0
        %1034 = vmatpush.msra.mxu0 0.0
        %1035 = vmatpush.msra.mxu0 0.0
        %1036 = vmatpush.msra.mxu0 0.0
        %1037 = vmatpush.msra.mxu0 0.0
        %1038 = vmatpush.msra.mxu0 0.0
        %1039 = vmatpush.msra.mxu0 0.0
        %1040 = vmatpush.msra.mxu0 0.0
        %1041 = vmatpush.msra.mxu0 0.0
        %1042 = vmatpush.msra.mxu0 0.0
        %1043 = vmatpush.msra.mxu0 0.0
        %1044 = vmatpush.msra.mxu0 0.0
        %1045 = vmatpush.msra.mxu0 %v1000
        %1046 = vmatpush.msra.mxu0 %v997
        %1047 = vmatpush.msra.mxu0 %v994
        %1048 = vmatpush.msra.mxu0 %v991
        %1049 = vmatmul.f32.gmra.mxu0 %v1011
        %v1050 = vpop.f32.mrf.mxu0
        %v1051 = vadd.f32 %v1005, %v1050
        %1052 = vdwg.mxu0
        %1053 = vmatpush.msra.mxu0 0.0
        %1054 = vmatpush.msra.mxu0 0.0
        %1055 = vmatpush.msra.mxu0 0.0
        %1056 = vmatpush.msra.mxu0 0.0
        %1057 = vmatpush.msra.mxu0 0.0
        %1058 = vmatpush.msra.mxu0 0.0
        %1059 = vmatpush.msra.mxu0 0.0
        %1060 = vmatpush.msra.mxu0 0.0
        %1061 = vmatpush.msra.mxu0 0.0
        %1062 = vmatpush.msra.mxu0 0.0
        %1063 = vmatpush.msra.mxu0 0.0
        %1064 = vmatpush.msra.mxu0 0.0
        %1065 = vmatpush.msra.mxu0 %v1001
        %1066 = vmatpush.msra.mxu0 %v998
        %1067 = vmatpush.msra.mxu0 %v995
        %1068 = vmatpush.msra.mxu0 %v992
        %1069 = vmatmul.f32.gmra.mxu0 %v1011
        %v1070 = vpop.f32.mrf.mxu0
        %v1071 = vadd.f32 %v1006, %v1070
        %1072 = vdwg.mxu0
        %v1073 = vld [vmem:[%s15] sm:$0xff]
        %v1074 = vld [vmem:[%s15 + $0x8] sm:$0xff]
        %v1075 = vld [vmem:[%s15 + $0x10] sm:$0xff]
        %v1076 = vld [vmem:[%s15 + $0x18] sm:$0xff]
        %v1077 = vld [vmem:[%s17] sm:$0x1]
        %v1079 = vperm.slane %v1077, 0
        %v1082 = vsel %vm972, %v970, 0
        %v1085 = vsel %vm972, %v971, 0
        %1087 = vmatpush.msra.mxu0 0.0
        %1088 = vmatpush.msra.mxu0 0.0
        %1089 = vmatpush.msra.mxu0 0.0
        %1090 = vmatpush.msra.mxu0 0.0
        %1091 = vmatpush.msra.mxu0 0.0
        %1092 = vmatpush.msra.mxu0 0.0
        %1093 = vmatpush.msra.mxu0 0.0
        %1094 = vmatpush.msra.mxu0 0.0
        %1095 = vmatpush.msra.mxu0 0.0
        %1096 = vmatpush.msra.mxu0 0.0
        %1097 = vmatpush.msra.mxu0 0.0
        %1098 = vmatpush.msra.mxu0 0.0
        %1099 = vmatpush.msra.mxu0 %v1076
        %1100 = vmatpush.msra.mxu0 %v1075
        %1101 = vmatpush.msra.mxu0 %v1074
        %1102 = vmatpush.msra.mxu0 %v1073
        %1103 = vmatmul.f32.gmra.mxu0 %v1082
        %v1104 = vpop.f32.mrf.mxu0
        %v1105 = vadd.f32 %v1079, %v1104
        %1106 = vmatmul.f32.gmra.mxu0 %v1085
        %v1107 = vpop.f32.mrf.mxu0
        %v1108 = vadd.f32 %v1079, %v1107
        %1109 = vdwg.mxu0
        %vm1110 = vcmask 31744
        %v1111 = vsel %vm1110, %v1105, -inf
        %v1112 = vsel %vm1110, %v1108, -inf
        %v1113 = vmax.f32 %v1111, %v1112
        %v1114 = vrot.slane %v1113, 4
        %v1115 = vmax.f32 %v1113, %v1114
        %v1116 = vrot.slane %v1115, 2
        %v1117 = vmax.f32 %v1115, %v1116
        %v1118 = vrot.slane %v1117, 1
        %v1119 = vmax.f32 %v1117, %v1118
        %v1120 = vsub.f32 %v1105, %v1119
        %v1121 = vsub.f32 %v1108, %v1119
        %v1122 = vmul.f32 %v1120, 1.442695
        %v1123 = vpow.pop %v1122
        %v1124 = vmul.f32 %v1121, 1.442695
        %v1125 = vpow.pop %v1124
        %v1126 = vsel %vm1110, %v1123, 0.0
        %v1127 = vsel %vm1110, %v1125, 0.0
        %v1128 = vadd.f32 %v1126, %v1127
        %v1129 = vrot.slane %v1128, 4
        %v1130 = vadd.f32 %v1128, %v1129
        %v1131 = vrot.slane %v1130, 2
        %v1132 = vadd.f32 %v1130, %v1131
        %v1133 = vrot.slane %v1132, 1
        %v1134 = vadd.f32 %v1132, %v1133
        %v1135 = vrcp.pop %v1134
        %v1136 = vmul.f32 %v1123, %v1135
        %v1137 = vmul.f32 %v1125, %v1135
        %v1138 = vld [vmem:[%s3] sm:$0xff]
        %v1139 = vld [vmem:[%s3 + $0x8] sm:$0xff]
        %1141 = vset.pattern.permute.xlu0 0
        %1142 = vperm.xlu0 %1141, %v1138
        %v1143 = vpop.permute.xlu0 %1142
        %1146 = vset.pattern.permute.xlu0 0
        %1147 = vperm.xlu0 %1146, %v1139
        %v1148 = vpop.permute.xlu0 %1147
        %v1150 = vmul.f32 %v1136, %v1143
        %v1151 = vmul.f32 %v1137, %v1148
        %v1152 = vsel %vm1110, %v1150, 0.0
        %v1153 = vsel %vm1110, %v1151, 0.0
        %v1154 = vadd.f32 %v1152, %v1153
        %v1155 = vrot.slane %v1154, 4
        %v1156 = vadd.f32 %v1154, %v1155
        %v1157 = vrot.slane %v1156, 2
        %v1158 = vadd.f32 %v1156, %v1157
        %v1159 = vrot.slane %v1158, 1
        %v1160 = vadd.f32 %v1158, %v1159
        %1161 = vset.pattern.permute.xlu0 1
        %1162 = vperm.xlu0 %1161, %v1138
        %v1163 = vpop.permute.xlu0 %1162
        %1165 = vset.pattern.permute.xlu0 1
        %1166 = vperm.xlu0 %1165, %v1139
        %v1167 = vpop.permute.xlu0 %1166
        %v1169 = vmul.f32 %v1136, %v1163
        %v1170 = vmul.f32 %v1137, %v1167
        %v1171 = vsel %vm1110, %v1169, 0.0
        %v1172 = vsel %vm1110, %v1170, 0.0
        %v1173 = vadd.f32 %v1171, %v1172
        %v1174 = vrot.slane %v1173, 4
        %v1175 = vadd.f32 %v1173, %v1174
        %v1176 = vrot.slane %v1175, 2
        %v1177 = vadd.f32 %v1175, %v1176
        %v1178 = vrot.slane %v1177, 1
        %v1179 = vadd.f32 %v1177, %v1178
        %v1180 = vsel %vm1110, %v1105, 0.0
        %v1181 = vsel %vm1110, %v1108, 0.0
        %v1182 = vadd.f32 %v1180, %v1181
        %v1183 = vrot.slane %v1182, 4
        %v1184 = vadd.f32 %v1182, %v1183
        %v1185 = vrot.slane %v1184, 2
        %v1186 = vadd.f32 %v1184, %v1185
        %v1187 = vrot.slane %v1186, 1
        %v1188 = vadd.f32 %v1186, %v1187
        %v1189 = vmul.f32 %v1188, %v988
        %v1190 = vmul.f32 %v1160, 2.0
        %v1191 = vmul.f32 %v1179, 2.0
        %1193 = vrot.lane.b32.xlu0 %v1191, 4
        %v1194 = vpop.permute.xlu0 %1193
        %1197 = vrot.lane.b32.xlu0 %v1189, 8
        %v1198 = vpop.permute.xlu0 %1197
        %v1200 = vsel %vm1110, %v1190, %v1194
        %vm1201 = vcmask 64512
        %v1202 = vsel %vm1201, %v1200, %v1198
        %v1203 = vld [vmem:[%s19] sm:$0xff]
        %v1204 = vld [vmem:[%s19 + $0x8] sm:$0xff]
        %v1205 = vld [vmem:[%s19 + $0x10] sm:$0xff]
        %v1206 = vld [vmem:[%s19 + $0x18] sm:$0xff]
        %v1207 = vld [vmem:[%s19 + $0x20] sm:$0xff]
        %v1208 = vld [vmem:[%s19 + $0x28] sm:$0xff]
        %v1209 = vld [vmem:[%s19 + $0x30] sm:$0xff]
        %v1210 = vld [vmem:[%s19 + $0x38] sm:$0xff]
        %v1211 = vld [vmem:[%s19 + $0x40] sm:$0xff]
        %v1212 = vld [vmem:[%s19 + $0x48] sm:$0xff]
        %v1213 = vld [vmem:[%s19 + $0x50] sm:$0xff]
        %v1214 = vld [vmem:[%s19 + $0x58] sm:$0xff]
        %v1215 = vld [vmem:[%s19 + $0x60] sm:$0xff]
        %v1216 = vld [vmem:[%s19 + $0x68] sm:$0xff]
        %v1217 = vld [vmem:[%s19 + $0x70] sm:$0xff]
        %v1218 = vld [vmem:[%s19 + $0x78] sm:$0xff]
        %v1219 = vld [vmem:[%s21] sm:$0xff]
        %v1220 = vld [vmem:[%s21 + $0x8] sm:$0xff]
        %v1221 = vld [vmem:[%s21 + $0x10] sm:$0xff]
        %v1222 = vld [vmem:[%s21 + $0x18] sm:$0xff]
        %v1224 = vsel %vm972, %v1031, 0
        %1226 = vmatpush.msra.mxu0 0.0
        %1227 = vmatpush.msra.mxu0 0.0
        %1228 = vmatpush.msra.mxu0 0.0
        %1229 = vmatpush.msra.mxu0 0.0
        %1230 = vmatpush.msra.mxu0 0.0
        %1231 = vmatpush.msra.mxu0 0.0
        %1232 = vmatpush.msra.mxu0 0.0
        %1233 = vmatpush.msra.mxu0 0.0
        %1234 = vmatpush.msra.mxu0 0.0
        %1235 = vmatpush.msra.mxu0 0.0
        %1236 = vmatpush.msra.mxu0 0.0
        %1237 = vmatpush.msra.mxu0 0.0
        %1238 = vmatpush.msra.mxu0 %v1222
        %1239 = vmatpush.msra.mxu0 %v1221
        %1240 = vmatpush.msra.mxu0 %v1220
        %1241 = vmatpush.msra.mxu0 %v1219
        %1242 = vmatmul.f32.gmra.mxu0 %v1224
        %v1243 = vpop.f32.mrf.mxu0
        %v1244 = vadd.f32 0.0, %v1243
        %1245 = vdwg.mxu0
        %1248 = vrot.lane.b32.xlu0 %v1051, 64
        %v1249 = vpop.permute.xlu0 %1248
        %1250 = vrot.lane.b32.xlu0 %v1071, 64
        %v1251 = vpop.permute.xlu0 %1250
        %vm1252 = vcmask 523264
        %v1253 = vsel %vm1252, %v1249, %v1251
        %1255 = vmatpush.msra.mxu0 %v1218
        %1256 = vmatpush.msra.mxu0 %v1217
        %1257 = vmatpush.msra.mxu0 %v1216
        %1258 = vmatpush.msra.mxu0 %v1215
        %1259 = vmatpush.msra.mxu0 %v1214
        %1260 = vmatpush.msra.mxu0 %v1213
        %1261 = vmatpush.msra.mxu0 %v1212
        %1262 = vmatpush.msra.mxu0 %v1211
        %1263 = vmatpush.msra.mxu0 %v1210
        %1264 = vmatpush.msra.mxu0 %v1209
        %1265 = vmatpush.msra.mxu0 %v1208
        %1266 = vmatpush.msra.mxu0 %v1207
        %1267 = vmatpush.msra.mxu0 %v1206
        %1268 = vmatpush.msra.mxu0 %v1205
        %1269 = vmatpush.msra.mxu0 %v1204
        %1270 = vmatpush.msra.mxu0 %v1203
        %1271 = vmatmul.f32.gmra.mxu0 %v1253
        %v1272 = vpop.f32.mrf.mxu0
        %v1273 = vadd.f32 %v1244, %v1272
        %1274 = vdwg.mxu0
        %v1275 = vld [vmem:[%s23] sm:$0xff]
        %v1276 = vld [vmem:[%s23 + $0x8] sm:$0xff]
        %v1277 = vld [vmem:[%s23 + $0x10] sm:$0xff]
        %v1278 = vld [vmem:[%s23 + $0x18] sm:$0xff]
        %1279 = vrot.lane.b32.xlu0 %v1031, 96
        %v1280 = vpop.permute.xlu0 %1279
        %v1281 = vsel %vm972, %v1280, 0
        %1283 = vmatpush.msra.mxu0 0.0
        %1284 = vmatpush.msra.mxu0 0.0
        %1285 = vmatpush.msra.mxu0 0.0
        %1286 = vmatpush.msra.mxu0 0.0
        %1287 = vmatpush.msra.mxu0 0.0
        %1288 = vmatpush.msra.mxu0 0.0
        %1289 = vmatpush.msra.mxu0 0.0
        %1290 = vmatpush.msra.mxu0 0.0
        %1291 = vmatpush.msra.mxu0 0.0
        %1292 = vmatpush.msra.mxu0 0.0
        %1293 = vmatpush.msra.mxu0 0.0
        %1294 = vmatpush.msra.mxu0 0.0
        %1295 = vmatpush.msra.mxu0 %v1278
        %1296 = vmatpush.msra.mxu0 %v1277
        %1297 = vmatpush.msra.mxu0 %v1276
        %1298 = vmatpush.msra.mxu0 %v1275
        %1299 = vmatmul.f32.gmra.mxu0 %v1281
        %v1300 = vpop.f32.mrf.mxu0
        %v1301 = vadd.f32 0.0, %v1300
        %1302 = vdwg.mxu0
        %v1303 = vadd.f32 %v1273, %v1301
        %v1304 = vld [vmem:[%s25] sm:$0xff]
        %v1305 = vld [vmem:[%s25 + $0x8] sm:$0xf]
        %vm1306 = vcmask 97280
        %v1308 = vsel %vm1306, %v1202, 0
        %vm1310 = vcmask 1043456
        %v1312 = vsel %vm1310, %v1305, 0
        %1314 = vmatpush.msra.mxu0 0.0
        %1315 = vmatpush.msra.mxu0 0.0
        %1316 = vmatpush.msra.mxu0 0.0
        %1317 = vmatpush.msra.mxu0 0.0
        %1318 = vmatpush.msra.mxu0 0.0
        %1319 = vmatpush.msra.mxu0 0.0
        %1320 = vmatpush.msra.mxu0 0.0
        %1321 = vmatpush.msra.mxu0 0.0
        %1322 = vmatpush.msra.mxu0 0.0
        %1323 = vmatpush.msra.mxu0 0.0
        %1324 = vmatpush.msra.mxu0 0.0
        %1325 = vmatpush.msra.mxu0 0.0
        %1326 = vmatpush.msra.mxu0 0.0
        %1327 = vmatpush.msra.mxu0 0.0
        %1328 = vmatpush.msra.mxu0 %v1312
        %1329 = vmatpush.msra.mxu0 %v1304
        %1330 = vmatmul.f32.gmra.mxu0 %v1308
        %v1331 = vpop.f32.mrf.mxu0
        %v1332 = vadd.f32 0.0, %v1331
        %1333 = vdwg.mxu0
        %v1334 = vadd.f32 %v1303, %v1332
        %v1335 = vld [vmem:[%s27] sm:$0x1]
        %v1336 = vadd.f32 %v1334, %v1335
        %v1337 = vmul.f32 %v1336, %v1336
        %vm1338 = vcmask 16384
        %v1339 = vsel %vm1338, %v1337, 0.0
        %1340 = vadd.xlane.f32.xlu0 %v1339
        %v1341 = vpop.xlane.xlu0 %1340
        %v1342 = vadd.f32 %v1341, 1e-08
        %v1343 = vrsqrt.pop %v1342
        %v1344 = vmul.f32 %v1343, %v1342
        %v1345 = vmul.f32 %v1344, %v1343
        %v1346 = vmul.f32 0.5, %v1345
        %v1347 = vsub.f32 1.5, %v1346
        %v1348 = vmul.f32 %v1343, %v1347
        %vm1349 = vweird.f32 %v1342
        %vm1350 = vweird.f32 %v1343
        %vm1351 = vmor %vm1349, %vm1350
        %v1352 = vsel %vm1351, %v1343, %v1348
        %v1353 = vmul.f32 %v1336, %v1352
        %1355 = vrot.lane.b32.xlu0 %v1336, 125
        %v1356 = vpop.permute.xlu0 %1355
        %v1358 = vmul.f32 %v1353, %v1356
        %v1359 = vsel %vm1338, %v1358, 0.0
        %1360 = vadd.xlane.f32.xlu0 %v1359
        %v1361 = vpop.xlane.xlu0 %1360
        %v1362 = vmul.f32 %v1361, %v1353
        %1364 = vrot.lane.b32.xlu0 %v1362, 3
        %v1365 = vpop.permute.xlu0 %1364
        %v1367 = vsub.f32 %v1336, %v1365
        %v1368 = vmul.f32 %v1367, %v1367
        %1370 = vrot.lane.b32.xlu0 %v1368, 125
        %v1371 = vpop.permute.xlu0 %1370
        %v1373 = vsel %vm1338, %v1371, 0.0
        %1374 = vadd.xlane.f32.xlu0 %v1373
        %v1375 = vpop.xlane.xlu0 %1374
        %v1376 = vadd.f32 %v1375, 1e-08
        %v1377 = vrsqrt.pop %v1376
        %v1378 = vmul.f32 %v1377, %v1376
        %v1379 = vmul.f32 %v1378, %v1377
        %v1380 = vmul.f32 0.5, %v1379
        %v1381 = vsub.f32 1.5, %v1380
        %v1382 = vmul.f32 %v1377, %v1381
        %vm1383 = vweird.f32 %v1376
        %vm1384 = vweird.f32 %v1377
        %vm1385 = vmor %vm1383, %vm1384
        %v1386 = vsel %vm1385, %v1377, %v1382
        %v1387 = vmul.f32 %v1367, %v1386
        %1389 = vrot.lane.b32.xlu0 %v1387, 124
        %v1390 = vpop.permute.xlu0 %1389
        %v1392 = vmul.f32 %v1353, %v1390
        %1393 = vrot.lane.b32.xlu0 %v1387, 126
        %v1394 = vpop.permute.xlu0 %1393
        %v1396 = vmul.f32 %v1353, %v1394
        %1398 = vrot.lane.b32.xlu0 %v1396, 127
        %v1399 = vpop.permute.xlu0 %1398
        %v1401 = vsub.f32 %v1392, %v1399
        %1402 = vrot.lane.b32.xlu0 %v1387, 127
        %v1403 = vpop.permute.xlu0 %1402
        %v1405 = vmul.f32 %v1353, %v1403
        %1406 = vrot.lane.b32.xlu0 %v1387, 123
        %v1407 = vpop.permute.xlu0 %1406
        %v1409 = vmul.f32 %v1353, %v1407
        %1411 = vrot.lane.b32.xlu0 %v1409, 2
        %v1412 = vpop.permute.xlu0 %1411
        %v1414 = vsub.f32 %v1405, %v1412
        %v1415 = vadd.f32 %v1353, %v1390
        %v1416 = vadd.f32 %v1415, %v1401
        %v1417 = vsub.f32 %v1416, 1.0
        %v1418 = vmul.f32 %v1417, 0.5
        %v1419 = vmax.f32 %v1418, -0.999999
        %v1420 = vmin.f32 %v1419, 0.999999
        %v1421 = vand.u32 2147483647, %v1420
        %vm1422 = vcmp.gt.f32.partialorder %v1421, 0.5
        %v1423 = vsub.f32 1.0, %v1421
        %v1424 = vmul.f32 %v1423, 0.5
        %v1425 = vmul.f32 %v1421, %v1421
        %v1426 = vsel %vm1422, %v1424, %v1425
        %v1427 = vmax.f32 %v1424, 0.0
        %v1428 = vrsqrt.pop %v1427
        %v1429 = vmul.f32 %v1428, %v1427
        %v1430 = vmul.f32 %v1429, %v1428
        %v1431 = vmul.f32 0.5, %v1430
        %v1432 = vsub.f32 1.5, %v1431
        %v1433 = vmul.f32 %v1428, %v1432
        %v1434 = vmul.f32 %v1427, %v1433
        %vm1435 = vcmp.eq.f32.partialorder %v1427, inf
        %v1436 = vsel %vm1435, %v1427, %v1434
        %vm1437 = vcmp.eq.f32.partialorder %v1427, 0.0
        %v1438 = vand.u32 %v1427, 2147483648
        %v1439 = vsel %vm1437, %v1438, %v1436
        %v1440 = vsel %vm1422, %v1439, %v1421
        %v1441 = vmul.f32 %v1426, 0.0421632
        %v1442 = vadd.f32 %v1441, 0.024181312
        %v1443 = vmul.f32 %v1442, %v1426
        %v1444 = vadd.f32 %v1443, 0.045470025
        %v1445 = vmul.f32 %v1444, %v1426
        %v1446 = vadd.f32 %v1445, 0.074953005
        %v1447 = vmul.f32 %v1446, %v1426
        %v1448 = vadd.f32 %v1447, 0.16666752
        %v1449 = vmul.f32 %v1440, %v1426
        %v1450 = vmul.f32 %v1449, %v1448
        %v1451 = vadd.f32 %v1440, %v1450
        %v1452 = vmul.f32 %v1451, 2.0
        %v1453 = vsub.f32 1.5707964, %v1452
        %v1454 = vsel %vm1422, %v1453, %v1451
        %vm1455 = vcmp.lt.f32.partialorder %v1420, 0.0
        %v1456 = vsub.f32 0.0, %v1454
        %v1457 = vsel %vm1455, %v1456, %v1454
        %v1458 = vsub.f32 1.5707964, %v1457
        %v1459 = vmul.f32 %v1420, %v1420
        %v1460 = vsub.f32 1.0, %v1459
        %v1461 = vmax.f32 %v1460, 1e-12
        %v1462 = vrsqrt.pop %v1461
        %v1463 = vmul.f32 %v1462, %v1461
        %v1464 = vmul.f32 %v1463, %v1462
        %v1465 = vmul.f32 0.5, %v1464
        %v1466 = vsub.f32 1.5, %v1465
        %v1467 = vmul.f32 %v1462, %v1466
        %v1468 = vmul.f32 %v1461, %v1467
        %vm1469 = vcmp.eq.f32.partialorder %v1461, inf
        %v1470 = vsel %vm1469, %v1461, %v1468
        %vm1471 = vcmp.eq.f32.partialorder %v1461, 0.0
        %v1472 = vand.u32 %v1461, 2147483648
        %v1473 = vsel %vm1471, %v1472, %v1470
        %v1474 = vmax.f32 %v1473, 1e-06
        %v1475 = vmul.f32 %v1474, 2.0
        %v1476 = vrcp.pop %v1475
        %v1477 = vmul.f32 %v1475, %v1476
        %v1478 = vsub.f32 1.0, %v1477
        %v1479 = vmul.f32 %v1476, %v1478
        %v1480 = vadd.f32 %v1476, %v1479
        %vm1481 = vweird.f32 %v1475
        %vm1482 = vweird.f32 %v1476
        %vm1483 = vmor %vm1481, %vm1482
        %v1484 = vsel %vm1483, %v1476, %v1480
        %v1485 = vand.u32 2147483647, %v1475
        %vm1486 = vcmp.eq.f32.partialorder %v1485, 8.507059e+37
        %v1487 = vand.u32 %v1475, 2147483648
        %v1488 = vor.u32 1.1754944e-38, %v1487
        %v1489 = vsel %vm1486, %v1488, %v1484
        %v1490 = vmul.f32 %v1458, %v1489
        %1492 = vrot.lane.b32.xlu0 %v1414, 3
        %v1493 = vpop.permute.xlu0 %1492
        %v1495 = vsub.f32 %v1387, %v1493
        %1497 = vrot.lane.b32.xlu0 %v1353, 127
        %v1498 = vpop.permute.xlu0 %1497
        %v1500 = vsub.f32 %v1401, %v1498
        %v1501 = vsub.f32 %v1353, %v1394
        %1503 = vrot.lane.b32.xlu0 %v1495, 123
        %v1504 = vpop.permute.xlu0 %1503
        %1507 = vrot.lane.b32.xlu0 %v1501, 1
        %v1508 = vpop.permute.xlu0 %1507
        %vm1510 = vcmask 7168
        %v1511 = vsel %vm1510, %v1504, %v1500
        %vm1512 = vcmask 15360
        %v1513 = vsel %vm1512, %v1511, %v1508
        %1515 = vset.pattern.permute.xlu0 0
        %1516 = vperm.xlu0 %1515, %v1490
        %v1517 = vpop.permute.xlu0 %1516
        %v1519 = vmul.f32 %v1513, %v1517
        %1521 = vrot.lane.b32.xlu0 %v1337, 122
        %v1522 = vpop.permute.xlu0 %1521
        %v1524 = vsel %vm1338, %v1522, 0.0
        %1525 = vadd.xlane.f32.xlu0 %v1524
        %v1526 = vpop.xlane.xlu0 %1525
        %v1527 = vadd.f32 %v1526, 1e-08
        %v1528 = vrsqrt.pop %v1527
        %v1529 = vmul.f32 %v1528, %v1527
        %v1530 = vmul.f32 %v1529, %v1528
        %v1531 = vmul.f32 0.5, %v1530
        %v1532 = vsub.f32 1.5, %v1531
        %v1533 = vmul.f32 %v1528, %v1532
        %vm1534 = vweird.f32 %v1527
        %vm1535 = vweird.f32 %v1528
        %vm1536 = vmor %vm1534, %vm1535
        %v1537 = vsel %vm1536, %v1528, %v1533
        %v1538 = vmul.f32 %v1336, %v1537
        %v1539 = vmul.f32 %v1538, %v1356
        %1541 = vrot.lane.b32.xlu0 %v1539, 122
        %v1542 = vpop.permute.xlu0 %1541
        %v1544 = vsel %vm1338, %v1542, 0.0
        %1545 = vadd.xlane.f32.xlu0 %v1544
        %v1546 = vpop.xlane.xlu0 %1545
        %v1547 = vmul.f32 %v1546, %v1538
        %1549 = vrot.lane.b32.xlu0 %v1547, 3
        %v1550 = vpop.permute.xlu0 %1549
        %v1552 = vsub.f32 %v1336, %v1550
        %v1553 = vmul.f32 %v1552, %v1552
        %1555 = vrot.lane.b32.xlu0 %v1553, 119
        %v1556 = vpop.permute.xlu0 %1555
        %v1558 = vsel %vm1338, %v1556, 0.0
        %1559 = vadd.xlane.f32.xlu0 %v1558
        %v1560 = vpop.xlane.xlu0 %1559
        %v1561 = vadd.f32 %v1560, 1e-08
        %v1562 = vrsqrt.pop %v1561
        %v1563 = vmul.f32 %v1562, %v1561
        %v1564 = vmul.f32 %v1563, %v1562
        %v1565 = vmul.f32 0.5, %v1564
        %v1566 = vsub.f32 1.5, %v1565
        %v1567 = vmul.f32 %v1562, %v1566
        %vm1568 = vweird.f32 %v1561
        %vm1569 = vweird.f32 %v1562
        %vm1570 = vmor %vm1568, %vm1569
        %v1571 = vsel %vm1570, %v1562, %v1567
        %v1572 = vmul.f32 %v1552, %v1571
        %1574 = vrot.lane.b32.xlu0 %v1572, 124
        %v1575 = vpop.permute.xlu0 %1574
        %v1577 = vmul.f32 %v1538, %v1575
        %1578 = vrot.lane.b32.xlu0 %v1572, 126
        %v1579 = vpop.permute.xlu0 %1578
        %v1581 = vmul.f32 %v1538, %v1579
        %1583 = vrot.lane.b32.xlu0 %v1581, 127
        %v1584 = vpop.permute.xlu0 %1583
        %v1586 = vsub.f32 %v1577, %v1584
        %1587 = vrot.lane.b32.xlu0 %v1572, 127
        %v1588 = vpop.permute.xlu0 %1587
        %v1590 = vmul.f32 %v1538, %v1588
        %1591 = vrot.lane.b32.xlu0 %v1572, 123
        %v1592 = vpop.permute.xlu0 %1591
        %v1594 = vmul.f32 %v1538, %v1592
        %1596 = vrot.lane.b32.xlu0 %v1594, 2
        %v1597 = vpop.permute.xlu0 %1596
        %v1599 = vsub.f32 %v1590, %v1597
        %v1600 = vadd.f32 %v1538, %v1575
        %v1601 = vadd.f32 %v1600, %v1586
        %v1602 = vsub.f32 %v1601, 1.0
        %v1603 = vmul.f32 %v1602, 0.5
        %v1604 = vmax.f32 %v1603, -0.999999
        %v1605 = vmin.f32 %v1604, 0.999999
        %v1606 = vand.u32 2147483647, %v1605
        %vm1607 = vcmp.gt.f32.partialorder %v1606, 0.5
        %v1608 = vsub.f32 1.0, %v1606
        %v1609 = vmul.f32 %v1608, 0.5
        %v1610 = vmul.f32 %v1606, %v1606
        %v1611 = vsel %vm1607, %v1609, %v1610
        %v1612 = vmax.f32 %v1609, 0.0
        %v1613 = vrsqrt.pop %v1612
        %v1614 = vmul.f32 %v1613, %v1612
        %v1615 = vmul.f32 %v1614, %v1613
        %v1616 = vmul.f32 0.5, %v1615
        %v1617 = vsub.f32 1.5, %v1616
        %v1618 = vmul.f32 %v1613, %v1617
        %v1619 = vmul.f32 %v1612, %v1618
        %vm1620 = vcmp.eq.f32.partialorder %v1612, inf
        %v1621 = vsel %vm1620, %v1612, %v1619
        %vm1622 = vcmp.eq.f32.partialorder %v1612, 0.0
        %v1623 = vand.u32 %v1612, 2147483648
        %v1624 = vsel %vm1622, %v1623, %v1621
        %v1625 = vsel %vm1607, %v1624, %v1606
        %v1626 = vmul.f32 %v1611, 0.0421632
        %v1627 = vadd.f32 %v1626, 0.024181312
        %v1628 = vmul.f32 %v1627, %v1611
        %v1629 = vadd.f32 %v1628, 0.045470025
        %v1630 = vmul.f32 %v1629, %v1611
        %v1631 = vadd.f32 %v1630, 0.074953005
        %v1632 = vmul.f32 %v1631, %v1611
        %v1633 = vadd.f32 %v1632, 0.16666752
        %v1634 = vmul.f32 %v1625, %v1611
        %v1635 = vmul.f32 %v1634, %v1633
        %v1636 = vadd.f32 %v1625, %v1635
        %v1637 = vmul.f32 %v1636, 2.0
        %v1638 = vsub.f32 1.5707964, %v1637
        %v1639 = vsel %vm1607, %v1638, %v1636
        %vm1640 = vcmp.lt.f32.partialorder %v1605, 0.0
        %v1641 = vsub.f32 0.0, %v1639
        %v1642 = vsel %vm1640, %v1641, %v1639
        %v1643 = vsub.f32 1.5707964, %v1642
        %v1644 = vmul.f32 %v1605, %v1605
        %v1645 = vsub.f32 1.0, %v1644
        %v1646 = vmax.f32 %v1645, 1e-12
        %v1647 = vrsqrt.pop %v1646
        %v1648 = vmul.f32 %v1647, %v1646
        %v1649 = vmul.f32 %v1648, %v1647
        %v1650 = vmul.f32 0.5, %v1649
        %v1651 = vsub.f32 1.5, %v1650
        %v1652 = vmul.f32 %v1647, %v1651
        %v1653 = vmul.f32 %v1646, %v1652
        %vm1654 = vcmp.eq.f32.partialorder %v1646, inf
        %v1655 = vsel %vm1654, %v1646, %v1653
        %vm1656 = vcmp.eq.f32.partialorder %v1646, 0.0
        %v1657 = vand.u32 %v1646, 2147483648
        %v1658 = vsel %vm1656, %v1657, %v1655
        %v1659 = vmax.f32 %v1658, 1e-06
        %v1660 = vmul.f32 %v1659, 2.0
        %v1661 = vrcp.pop %v1660
        %v1662 = vmul.f32 %v1660, %v1661
        %v1663 = vsub.f32 1.0, %v1662
        %v1664 = vmul.f32 %v1661, %v1663
        %v1665 = vadd.f32 %v1661, %v1664
        %vm1666 = vweird.f32 %v1660
        %vm1667 = vweird.f32 %v1661
        %vm1668 = vmor %vm1666, %vm1667
        %v1669 = vsel %vm1668, %v1661, %v1665
        %v1670 = vand.u32 2147483647, %v1660
        %vm1671 = vcmp.eq.f32.partialorder %v1670, 8.507059e+37
        %v1672 = vand.u32 %v1660, 2147483648
        %v1673 = vor.u32 1.1754944e-38, %v1672
        %v1674 = vsel %vm1671, %v1673, %v1669
        %v1675 = vmul.f32 %v1643, %v1674
        %1677 = vrot.lane.b32.xlu0 %v1599, 3
        %v1678 = vpop.permute.xlu0 %1677
        %v1680 = vsub.f32 %v1572, %v1678
        %1682 = vrot.lane.b32.xlu0 %v1538, 127
        %v1683 = vpop.permute.xlu0 %1682
        %v1685 = vsub.f32 %v1586, %v1683
        %v1686 = vsub.f32 %v1538, %v1579
        %1688 = vrot.lane.b32.xlu0 %v1680, 117
        %v1689 = vpop.permute.xlu0 %1688
        %1692 = vrot.lane.b32.xlu0 %v1685, 122
        %v1693 = vpop.permute.xlu0 %1692
        %1696 = vrot.lane.b32.xlu0 %v1686, 123
        %v1697 = vpop.permute.xlu0 %1696
        %v1699 = vsel %vm1510, %v1689, %v1693
        %v1700 = vsel %vm1512, %v1699, %v1697
        %1702 = vset.pattern.permute.xlu0 6
        %1703 = vperm.xlu0 %1702, %v1675
        %v1704 = vpop.permute.xlu0 %1703
        %v1706 = vmul.f32 %v1700, %v1704
        %1707 = vrot.lane.b32.xlu0 %v1337, 116
        %v1708 = vpop.permute.xlu0 %1707
        %v1710 = vsel %vm1338, %v1708, 0.0
        %1711 = vadd.xlane.f32.xlu0 %v1710
        %v1712 = vpop.xlane.xlu0 %1711
        %v1713 = vadd.f32 %v1712, 1e-08
        %v1714 = vrsqrt.pop %v1713
        %v1715 = vmul.f32 %v1714, %v1713
        %v1716 = vmul.f32 %v1715, %v1714
        %v1717 = vmul.f32 0.5, %v1716
        %v1718 = vsub.f32 1.5, %v1717
        %v1719 = vmul.f32 %v1714, %v1718
        %vm1720 = vweird.f32 %v1713
        %vm1721 = vweird.f32 %v1714
        %vm1722 = vmor %vm1720, %vm1721
        %v1723 = vsel %vm1722, %v1714, %v1719
        %v1724 = vmul.f32 %v1336, %v1723
        %v1725 = vmul.f32 %v1724, %v1356
        %1727 = vrot.lane.b32.xlu0 %v1725, 116
        %v1728 = vpop.permute.xlu0 %1727
        %v1730 = vsel %vm1338, %v1728, 0.0
        %1731 = vadd.xlane.f32.xlu0 %v1730
        %v1732 = vpop.xlane.xlu0 %1731
        %v1733 = vmul.f32 %v1732, %v1724
        %1735 = vrot.lane.b32.xlu0 %v1733, 3
        %v1736 = vpop.permute.xlu0 %1735
        %v1738 = vsub.f32 %v1336, %v1736
        %v1739 = vmul.f32 %v1738, %v1738
        %1741 = vrot.lane.b32.xlu0 %v1739, 113
        %v1742 = vpop.permute.xlu0 %1741
        %v1744 = vsel %vm1338, %v1742, 0.0
        %1745 = vadd.xlane.f32.xlu0 %v1744
        %v1746 = vpop.xlane.xlu0 %1745
        %v1747 = vadd.f32 %v1746, 1e-08
        %v1748 = vrsqrt.pop %v1747
        %v1749 = vmul.f32 %v1748, %v1747
        %v1750 = vmul.f32 %v1749, %v1748
        %v1751 = vmul.f32 0.5, %v1750
        %v1752 = vsub.f32 1.5, %v1751
        %v1753 = vmul.f32 %v1748, %v1752
        %vm1754 = vweird.f32 %v1747
        %vm1755 = vweird.f32 %v1748
        %vm1756 = vmor %vm1754, %vm1755
        %v1757 = vsel %vm1756, %v1748, %v1753
        %v1758 = vmul.f32 %v1738, %v1757
        %1760 = vrot.lane.b32.xlu0 %v1758, 124
        %v1761 = vpop.permute.xlu0 %1760
        %v1763 = vmul.f32 %v1724, %v1761
        %1764 = vrot.lane.b32.xlu0 %v1758, 126
        %v1765 = vpop.permute.xlu0 %1764
        %v1767 = vmul.f32 %v1724, %v1765
        %1769 = vrot.lane.b32.xlu0 %v1767, 127
        %v1770 = vpop.permute.xlu0 %1769
        %v1772 = vsub.f32 %v1763, %v1770
        %1773 = vrot.lane.b32.xlu0 %v1758, 127
        %v1774 = vpop.permute.xlu0 %1773
        %v1776 = vmul.f32 %v1724, %v1774
        %1777 = vrot.lane.b32.xlu0 %v1758, 123
        %v1778 = vpop.permute.xlu0 %1777
        %v1780 = vmul.f32 %v1724, %v1778
        %1782 = vrot.lane.b32.xlu0 %v1780, 2
        %v1783 = vpop.permute.xlu0 %1782
        %v1785 = vsub.f32 %v1776, %v1783
        %v1786 = vadd.f32 %v1724, %v1761
        %v1787 = vadd.f32 %v1786, %v1772
        %v1788 = vsub.f32 %v1787, 1.0
        %v1789 = vmul.f32 %v1788, 0.5
        %v1790 = vmax.f32 %v1789, -0.999999
        %v1791 = vmin.f32 %v1790, 0.999999
        %v1792 = vand.u32 2147483647, %v1791
        %vm1793 = vcmp.gt.f32.partialorder %v1792, 0.5
        %v1794 = vsub.f32 1.0, %v1792
        %v1795 = vmul.f32 %v1794, 0.5
        %v1796 = vmul.f32 %v1792, %v1792
        %v1797 = vsel %vm1793, %v1795, %v1796
        %v1798 = vmax.f32 %v1795, 0.0
        %v1799 = vrsqrt.pop %v1798
        %v1800 = vmul.f32 %v1799, %v1798
        %v1801 = vmul.f32 %v1800, %v1799
        %v1802 = vmul.f32 0.5, %v1801
        %v1803 = vsub.f32 1.5, %v1802
        %v1804 = vmul.f32 %v1799, %v1803
        %v1805 = vmul.f32 %v1798, %v1804
        %vm1806 = vcmp.eq.f32.partialorder %v1798, inf
        %v1807 = vsel %vm1806, %v1798, %v1805
        %vm1808 = vcmp.eq.f32.partialorder %v1798, 0.0
        %v1809 = vand.u32 %v1798, 2147483648
        %v1810 = vsel %vm1808, %v1809, %v1807
        %v1811 = vsel %vm1793, %v1810, %v1792
        %v1812 = vmul.f32 %v1797, 0.0421632
        %v1813 = vadd.f32 %v1812, 0.024181312
        %v1814 = vmul.f32 %v1813, %v1797
        %v1815 = vadd.f32 %v1814, 0.045470025
        %v1816 = vmul.f32 %v1815, %v1797
        %v1817 = vadd.f32 %v1816, 0.074953005
        %v1818 = vmul.f32 %v1817, %v1797
        %v1819 = vadd.f32 %v1818, 0.16666752
        %v1820 = vmul.f32 %v1811, %v1797
        %v1821 = vmul.f32 %v1820, %v1819
        %v1822 = vadd.f32 %v1811, %v1821
        %v1823 = vmul.f32 %v1822, 2.0
        %v1824 = vsub.f32 1.5707964, %v1823
        %v1825 = vsel %vm1793, %v1824, %v1822
        %vm1826 = vcmp.lt.f32.partialorder %v1791, 0.0
        %v1827 = vsub.f32 0.0, %v1825
        %v1828 = vsel %vm1826, %v1827, %v1825
        %v1829 = vsub.f32 1.5707964, %v1828
        %v1830 = vmul.f32 %v1791, %v1791
        %v1831 = vsub.f32 1.0, %v1830
        %v1832 = vmax.f32 %v1831, 1e-12
        %v1833 = vrsqrt.pop %v1832
        %v1834 = vmul.f32 %v1833, %v1832
        %v1835 = vmul.f32 %v1834, %v1833
        %v1836 = vmul.f32 0.5, %v1835
        %v1837 = vsub.f32 1.5, %v1836
        %v1838 = vmul.f32 %v1833, %v1837
        %v1839 = vmul.f32 %v1832, %v1838
        %vm1840 = vcmp.eq.f32.partialorder %v1832, inf
        %v1841 = vsel %vm1840, %v1832, %v1839
        %vm1842 = vcmp.eq.f32.partialorder %v1832, 0.0
        %v1843 = vand.u32 %v1832, 2147483648
        %v1844 = vsel %vm1842, %v1843, %v1841
        %v1845 = vmax.f32 %v1844, 1e-06
        %v1846 = vmul.f32 %v1845, 2.0
        %v1847 = vrcp.pop %v1846
        %v1848 = vmul.f32 %v1846, %v1847
        %v1849 = vsub.f32 1.0, %v1848
        %v1850 = vmul.f32 %v1847, %v1849
        %v1851 = vadd.f32 %v1847, %v1850
        %vm1852 = vweird.f32 %v1846
        %vm1853 = vweird.f32 %v1847
        %vm1854 = vmor %vm1852, %vm1853
        %v1855 = vsel %vm1854, %v1847, %v1851
        %v1856 = vand.u32 2147483647, %v1846
        %vm1857 = vcmp.eq.f32.partialorder %v1856, 8.507059e+37
        %v1858 = vand.u32 %v1846, 2147483648
        %v1859 = vor.u32 1.1754944e-38, %v1858
        %v1860 = vsel %vm1857, %v1859, %v1855
        %v1861 = vmul.f32 %v1829, %v1860
        %1863 = vrot.lane.b32.xlu0 %v1785, 3
        %v1864 = vpop.permute.xlu0 %1863
        %v1866 = vsub.f32 %v1758, %v1864
        %1868 = vrot.lane.b32.xlu0 %v1724, 127
        %v1869 = vpop.permute.xlu0 %1868
        %v1871 = vsub.f32 %v1772, %v1869
        %v1872 = vsub.f32 %v1724, %v1765
        %1874 = vrot.lane.b32.xlu0 %v1866, 111
        %v1875 = vpop.permute.xlu0 %1874
        %1878 = vrot.lane.b32.xlu0 %v1871, 116
        %v1879 = vpop.permute.xlu0 %1878
        %1882 = vrot.lane.b32.xlu0 %v1872, 117
        %v1883 = vpop.permute.xlu0 %1882
        %v1885 = vsel %vm1510, %v1875, %v1879
        %v1886 = vsel %vm1512, %v1885, %v1883
        %1888 = vset.pattern.permute.xlu0 12
        %1889 = vperm.xlu0 %1888, %v1861
        %v1890 = vpop.permute.xlu0 %1889
        %v1892 = vmul.f32 %v1886, %v1890
        %1893 = vrot.lane.b32.xlu0 %v1337, 110
        %v1894 = vpop.permute.xlu0 %1893
        %v1896 = vsel %vm1338, %v1894, 0.0
        %1897 = vadd.xlane.f32.xlu0 %v1896
        %v1898 = vpop.xlane.xlu0 %1897
        %v1899 = vadd.f32 %v1898, 1e-08
        %v1900 = vrsqrt.pop %v1899
        %v1901 = vmul.f32 %v1900, %v1899
        %v1902 = vmul.f32 %v1901, %v1900
        %v1903 = vmul.f32 0.5, %v1902
        %v1904 = vsub.f32 1.5, %v1903
        %v1905 = vmul.f32 %v1900, %v1904
        %vm1906 = vweird.f32 %v1899
        %vm1907 = vweird.f32 %v1900
        %vm1908 = vmor %vm1906, %vm1907
        %v1909 = vsel %vm1908, %v1900, %v1905
        %v1910 = vmul.f32 %v1336, %v1909
        %v1911 = vmul.f32 %v1910, %v1356
        %1913 = vrot.lane.b32.xlu0 %v1911, 110
        %v1914 = vpop.permute.xlu0 %1913
        %v1916 = vsel %vm1338, %v1914, 0.0
        %1917 = vadd.xlane.f32.xlu0 %v1916
        %v1918 = vpop.xlane.xlu0 %1917
        %v1919 = vmul.f32 %v1918, %v1910
        %1921 = vrot.lane.b32.xlu0 %v1919, 3
        %v1922 = vpop.permute.xlu0 %1921
        %v1924 = vsub.f32 %v1336, %v1922
        %v1925 = vmul.f32 %v1924, %v1924
        %1927 = vrot.lane.b32.xlu0 %v1925, 107
        %v1928 = vpop.permute.xlu0 %1927
        %v1930 = vsel %vm1338, %v1928, 0.0
        %1931 = vadd.xlane.f32.xlu0 %v1930
        %v1932 = vpop.xlane.xlu0 %1931
        %v1933 = vadd.f32 %v1932, 1e-08
        %v1934 = vrsqrt.pop %v1933
        %v1935 = vmul.f32 %v1934, %v1933
        %v1936 = vmul.f32 %v1935, %v1934
        %v1937 = vmul.f32 0.5, %v1936
        %v1938 = vsub.f32 1.5, %v1937
        %v1939 = vmul.f32 %v1934, %v1938
        %vm1940 = vweird.f32 %v1933
        %vm1941 = vweird.f32 %v1934
        %vm1942 = vmor %vm1940, %vm1941
        %v1943 = vsel %vm1942, %v1934, %v1939
        %v1944 = vmul.f32 %v1924, %v1943
        %1946 = vrot.lane.b32.xlu0 %v1944, 124
        %v1947 = vpop.permute.xlu0 %1946
        %v1949 = vmul.f32 %v1910, %v1947
        %1950 = vrot.lane.b32.xlu0 %v1944, 126
        %v1951 = vpop.permute.xlu0 %1950
        %v1953 = vmul.f32 %v1910, %v1951
        %1955 = vrot.lane.b32.xlu0 %v1953, 127
        %v1956 = vpop.permute.xlu0 %1955
        %v1958 = vsub.f32 %v1949, %v1956
        %1959 = vrot.lane.b32.xlu0 %v1944, 127
        %v1960 = vpop.permute.xlu0 %1959
        %v1962 = vmul.f32 %v1910, %v1960
        %1963 = vrot.lane.b32.xlu0 %v1944, 123
        %v1964 = vpop.permute.xlu0 %1963
        %v1966 = vmul.f32 %v1910, %v1964
        %1968 = vrot.lane.b32.xlu0 %v1966, 2
        %v1969 = vpop.permute.xlu0 %1968
        %v1971 = vsub.f32 %v1962, %v1969
        %v1972 = vadd.f32 %v1910, %v1947
        %v1973 = vadd.f32 %v1972, %v1958
        %v1974 = vsub.f32 %v1973, 1.0
        %v1975 = vmul.f32 %v1974, 0.5
        %v1976 = vmax.f32 %v1975, -0.999999
        %v1977 = vmin.f32 %v1976, 0.999999
        %v1978 = vand.u32 2147483647, %v1977
        %vm1979 = vcmp.gt.f32.partialorder %v1978, 0.5
        %v1980 = vsub.f32 1.0, %v1978
        %v1981 = vmul.f32 %v1980, 0.5
        %v1982 = vmul.f32 %v1978, %v1978
        %v1983 = vsel %vm1979, %v1981, %v1982
        %v1984 = vmax.f32 %v1981, 0.0
        %v1985 = vrsqrt.pop %v1984
        %v1986 = vmul.f32 %v1985, %v1984
        %v1987 = vmul.f32 %v1986, %v1985
        %v1988 = vmul.f32 0.5, %v1987
        %v1989 = vsub.f32 1.5, %v1988
        %v1990 = vmul.f32 %v1985, %v1989
        %v1991 = vmul.f32 %v1984, %v1990
        %vm1992 = vcmp.eq.f32.partialorder %v1984, inf
        %v1993 = vsel %vm1992, %v1984, %v1991
        %vm1994 = vcmp.eq.f32.partialorder %v1984, 0.0
        %v1995 = vand.u32 %v1984, 2147483648
        %v1996 = vsel %vm1994, %v1995, %v1993
        %v1997 = vsel %vm1979, %v1996, %v1978
        %v1998 = vmul.f32 %v1983, 0.0421632
        %v1999 = vadd.f32 %v1998, 0.024181312
        %v2000 = vmul.f32 %v1999, %v1983
        %v2001 = vadd.f32 %v2000, 0.045470025
        %v2002 = vmul.f32 %v2001, %v1983
        %v2003 = vadd.f32 %v2002, 0.074953005
        %v2004 = vmul.f32 %v2003, %v1983
        %v2005 = vadd.f32 %v2004, 0.16666752
        %v2006 = vmul.f32 %v1997, %v1983
        %v2007 = vmul.f32 %v2006, %v2005
        %v2008 = vadd.f32 %v1997, %v2007
        %v2009 = vmul.f32 %v2008, 2.0
        %v2010 = vsub.f32 1.5707964, %v2009
        %v2011 = vsel %vm1979, %v2010, %v2008
        %vm2012 = vcmp.lt.f32.partialorder %v1977, 0.0
        %v2013 = vsub.f32 0.0, %v2011
        %v2014 = vsel %vm2012, %v2013, %v2011
        %v2015 = vsub.f32 1.5707964, %v2014
        %v2016 = vmul.f32 %v1977, %v1977
        %v2017 = vsub.f32 1.0, %v2016
        %v2018 = vmax.f32 %v2017, 1e-12
        %v2019 = vrsqrt.pop %v2018
        %v2020 = vmul.f32 %v2019, %v2018
        %v2021 = vmul.f32 %v2020, %v2019
        %v2022 = vmul.f32 0.5, %v2021
        %v2023 = vsub.f32 1.5, %v2022
        %v2024 = vmul.f32 %v2019, %v2023
        %v2025 = vmul.f32 %v2018, %v2024
        %vm2026 = vcmp.eq.f32.partialorder %v2018, inf
        %v2027 = vsel %vm2026, %v2018, %v2025
        %vm2028 = vcmp.eq.f32.partialorder %v2018, 0.0
        %v2029 = vand.u32 %v2018, 2147483648
        %v2030 = vsel %vm2028, %v2029, %v2027
        %v2031 = vmax.f32 %v2030, 1e-06
        %v2032 = vmul.f32 %v2031, 2.0
        %v2033 = vrcp.pop %v2032
        %v2034 = vmul.f32 %v2032, %v2033
        %v2035 = vsub.f32 1.0, %v2034
        %v2036 = vmul.f32 %v2033, %v2035
        %v2037 = vadd.f32 %v2033, %v2036
        %vm2038 = vweird.f32 %v2032
        %vm2039 = vweird.f32 %v2033
        %vm2040 = vmor %vm2038, %vm2039
        %v2041 = vsel %vm2040, %v2033, %v2037
        %v2042 = vand.u32 2147483647, %v2032
        %vm2043 = vcmp.eq.f32.partialorder %v2042, 8.507059e+37
        %v2044 = vand.u32 %v2032, 2147483648
        %v2045 = vor.u32 1.1754944e-38, %v2044
        %v2046 = vsel %vm2043, %v2045, %v2041
        %v2047 = vmul.f32 %v2015, %v2046
        %2049 = vrot.lane.b32.xlu0 %v1971, 3
        %v2050 = vpop.permute.xlu0 %2049
        %v2052 = vsub.f32 %v1944, %v2050
        %2054 = vrot.lane.b32.xlu0 %v1910, 127
        %v2055 = vpop.permute.xlu0 %2054
        %v2057 = vsub.f32 %v1958, %v2055
        %v2058 = vsub.f32 %v1910, %v1951
        %2060 = vrot.lane.b32.xlu0 %v2052, 105
        %v2061 = vpop.permute.xlu0 %2060
        %2064 = vrot.lane.b32.xlu0 %v2057, 110
        %v2065 = vpop.permute.xlu0 %2064
        %2068 = vrot.lane.b32.xlu0 %v2058, 111
        %v2069 = vpop.permute.xlu0 %2068
        %v2071 = vsel %vm1510, %v2061, %v2065
        %v2072 = vsel %vm1512, %v2071, %v2069
        %2074 = vset.pattern.permute.xlu0 18
        %2075 = vperm.xlu0 %2074, %v2047
        %v2076 = vpop.permute.xlu0 %2075
        %v2078 = vmul.f32 %v2072, %v2076
        %2079 = vrot.lane.b32.xlu0 %v1337, 104
        %v2080 = vpop.permute.xlu0 %2079
        %v2082 = vsel %vm1338, %v2080, 0.0
        %2083 = vadd.xlane.f32.xlu0 %v2082
        %v2084 = vpop.xlane.xlu0 %2083
        %v2085 = vadd.f32 %v2084, 1e-08
        %v2086 = vrsqrt.pop %v2085
        %v2087 = vmul.f32 %v2086, %v2085
        %v2088 = vmul.f32 %v2087, %v2086
        %v2089 = vmul.f32 0.5, %v2088
        %v2090 = vsub.f32 1.5, %v2089
        %v2091 = vmul.f32 %v2086, %v2090
        %vm2092 = vweird.f32 %v2085
        %vm2093 = vweird.f32 %v2086
        %vm2094 = vmor %vm2092, %vm2093
        %v2095 = vsel %vm2094, %v2086, %v2091
        %v2096 = vmul.f32 %v1336, %v2095
        %v2097 = vmul.f32 %v2096, %v1356
        %2099 = vrot.lane.b32.xlu0 %v2097, 104
        %v2100 = vpop.permute.xlu0 %2099
        %v2102 = vsel %vm1338, %v2100, 0.0
        %2103 = vadd.xlane.f32.xlu0 %v2102
        %v2104 = vpop.xlane.xlu0 %2103
        %v2105 = vmul.f32 %v2104, %v2096
        %2107 = vrot.lane.b32.xlu0 %v2105, 3
        %v2108 = vpop.permute.xlu0 %2107
        %v2110 = vsub.f32 %v1336, %v2108
        %v2111 = vmul.f32 %v2110, %v2110
        %2113 = vrot.lane.b32.xlu0 %v2111, 101
        %v2114 = vpop.permute.xlu0 %2113
        %v2116 = vsel %vm1338, %v2114, 0.0
        %2117 = vadd.xlane.f32.xlu0 %v2116
        %v2118 = vpop.xlane.xlu0 %2117
        %v2119 = vadd.f32 %v2118, 1e-08
        %v2120 = vrsqrt.pop %v2119
        %v2121 = vmul.f32 %v2120, %v2119
        %v2122 = vmul.f32 %v2121, %v2120
        %v2123 = vmul.f32 0.5, %v2122
        %v2124 = vsub.f32 1.5, %v2123
        %v2125 = vmul.f32 %v2120, %v2124
        %vm2126 = vweird.f32 %v2119
        %vm2127 = vweird.f32 %v2120
        %vm2128 = vmor %vm2126, %vm2127
        %v2129 = vsel %vm2128, %v2120, %v2125
        %v2130 = vmul.f32 %v2110, %v2129
        %2132 = vrot.lane.b32.xlu0 %v2130, 124
        %v2133 = vpop.permute.xlu0 %2132
        %v2135 = vmul.f32 %v2096, %v2133
        %2136 = vrot.lane.b32.xlu0 %v2130, 126
        %v2137 = vpop.permute.xlu0 %2136
        %v2139 = vmul.f32 %v2096, %v2137
        %2141 = vrot.lane.b32.xlu0 %v2139, 127
        %v2142 = vpop.permute.xlu0 %2141
        %v2144 = vsub.f32 %v2135, %v2142
        %2145 = vrot.lane.b32.xlu0 %v2130, 127
        %v2146 = vpop.permute.xlu0 %2145
        %v2148 = vmul.f32 %v2096, %v2146
        %2149 = vrot.lane.b32.xlu0 %v2130, 123
        %v2150 = vpop.permute.xlu0 %2149
        %v2152 = vmul.f32 %v2096, %v2150
        %2154 = vrot.lane.b32.xlu0 %v2152, 2
        %v2155 = vpop.permute.xlu0 %2154
        %v2157 = vsub.f32 %v2148, %v2155
        %v2158 = vadd.f32 %v2096, %v2133
        %v2159 = vadd.f32 %v2158, %v2144
        %v2160 = vsub.f32 %v2159, 1.0
        %v2161 = vmul.f32 %v2160, 0.5
        %v2162 = vmax.f32 %v2161, -0.999999
        %v2163 = vmin.f32 %v2162, 0.999999
        %v2164 = vand.u32 2147483647, %v2163
        %vm2165 = vcmp.gt.f32.partialorder %v2164, 0.5
        %v2166 = vsub.f32 1.0, %v2164
        %v2167 = vmul.f32 %v2166, 0.5
        %v2168 = vmul.f32 %v2164, %v2164
        %v2169 = vsel %vm2165, %v2167, %v2168
        %v2170 = vmax.f32 %v2167, 0.0
        %v2171 = vrsqrt.pop %v2170
        %v2172 = vmul.f32 %v2171, %v2170
        %v2173 = vmul.f32 %v2172, %v2171
        %v2174 = vmul.f32 0.5, %v2173
        %v2175 = vsub.f32 1.5, %v2174
        %v2176 = vmul.f32 %v2171, %v2175
        %v2177 = vmul.f32 %v2170, %v2176
        %vm2178 = vcmp.eq.f32.partialorder %v2170, inf
        %v2179 = vsel %vm2178, %v2170, %v2177
        %vm2180 = vcmp.eq.f32.partialorder %v2170, 0.0
        %v2181 = vand.u32 %v2170, 2147483648
        %v2182 = vsel %vm2180, %v2181, %v2179
        %v2183 = vsel %vm2165, %v2182, %v2164
        %v2184 = vmul.f32 %v2169, 0.0421632
        %v2185 = vadd.f32 %v2184, 0.024181312
        %v2186 = vmul.f32 %v2185, %v2169
        %v2187 = vadd.f32 %v2186, 0.045470025
        %v2188 = vmul.f32 %v2187, %v2169
        %v2189 = vadd.f32 %v2188, 0.074953005
        %v2190 = vmul.f32 %v2189, %v2169
        %v2191 = vadd.f32 %v2190, 0.16666752
        %v2192 = vmul.f32 %v2183, %v2169
        %v2193 = vmul.f32 %v2192, %v2191
        %v2194 = vadd.f32 %v2183, %v2193
        %v2195 = vmul.f32 %v2194, 2.0
        %v2196 = vsub.f32 1.5707964, %v2195
        %v2197 = vsel %vm2165, %v2196, %v2194
        %vm2198 = vcmp.lt.f32.partialorder %v2163, 0.0
        %v2199 = vsub.f32 0.0, %v2197
        %v2200 = vsel %vm2198, %v2199, %v2197
        %v2201 = vsub.f32 1.5707964, %v2200
        %v2202 = vmul.f32 %v2163, %v2163
        %v2203 = vsub.f32 1.0, %v2202
        %v2204 = vmax.f32 %v2203, 1e-12
        %v2205 = vrsqrt.pop %v2204
        %v2206 = vmul.f32 %v2205, %v2204
        %v2207 = vmul.f32 %v2206, %v2205
        %v2208 = vmul.f32 0.5, %v2207
        %v2209 = vsub.f32 1.5, %v2208
        %v2210 = vmul.f32 %v2205, %v2209
        %v2211 = vmul.f32 %v2204, %v2210
        %vm2212 = vcmp.eq.f32.partialorder %v2204, inf
        %v2213 = vsel %vm2212, %v2204, %v2211
        %vm2214 = vcmp.eq.f32.partialorder %v2204, 0.0
        %v2215 = vand.u32 %v2204, 2147483648
        %v2216 = vsel %vm2214, %v2215, %v2213
        %v2217 = vmax.f32 %v2216, 1e-06
        %v2218 = vmul.f32 %v2217, 2.0
        %v2219 = vrcp.pop %v2218
        %v2220 = vmul.f32 %v2218, %v2219
        %v2221 = vsub.f32 1.0, %v2220
        %v2222 = vmul.f32 %v2219, %v2221
        %v2223 = vadd.f32 %v2219, %v2222
        %vm2224 = vweird.f32 %v2218
        %vm2225 = vweird.f32 %v2219
        %vm2226 = vmor %vm2224, %vm2225
        %v2227 = vsel %vm2226, %v2219, %v2223
        %v2228 = vand.u32 2147483647, %v2218
        %vm2229 = vcmp.eq.f32.partialorder %v2228, 8.507059e+37
        %v2230 = vand.u32 %v2218, 2147483648
        %v2231 = vor.u32 1.1754944e-38, %v2230
        %v2232 = vsel %vm2229, %v2231, %v2227
        %v2233 = vmul.f32 %v2201, %v2232
        %2235 = vrot.lane.b32.xlu0 %v2157, 3
        %v2236 = vpop.permute.xlu0 %2235
        %v2238 = vsub.f32 %v2130, %v2236
        %2240 = vrot.lane.b32.xlu0 %v2096, 127
        %v2241 = vpop.permute.xlu0 %2240
        %v2243 = vsub.f32 %v2144, %v2241
        %v2244 = vsub.f32 %v2096, %v2137
        %2246 = vrot.lane.b32.xlu0 %v2238, 99
        %v2247 = vpop.permute.xlu0 %2246
        %2250 = vrot.lane.b32.xlu0 %v2243, 104
        %v2251 = vpop.permute.xlu0 %2250
        %2254 = vrot.lane.b32.xlu0 %v2244, 105
        %v2255 = vpop.permute.xlu0 %2254
        %v2257 = vsel %vm1510, %v2247, %v2251
        %v2258 = vsel %vm1512, %v2257, %v2255
        %2260 = vset.pattern.permute.xlu0 24
        %2261 = vperm.xlu0 %2260, %v2233
        %v2262 = vpop.permute.xlu0 %2261
        %v2264 = vmul.f32 %v2258, %v2262
        %v2265 = vmul.f32 %v1336, 0.5
        %v2266 = vtanh.pop %v2265
        %v2267 = vadd.f32 %v2266, 1.0
        %v2268 = vmul.f32 %v2267, 0.5
        %v2269 = vmul.f32 %v2268, 781.25
        %2270 = vrot.lane.b32.xlu0 %v1336, 88
        %v2271 = vpop.permute.xlu0 %2270
        %2274 = vrot.lane.b32.xlu0 %v2269, 88
        %v2275 = vpop.permute.xlu0 %2274
        %v2277 = vsel %vm1512, %v2271, %v2275
        %v2278 = vld [vmem:[%s29] sm:$0xff]
        %v2279 = vld [vmem:[%s29 + $0x8] sm:$0xff]
        %v2280 = vld [vmem:[%s29 + $0x10] sm:$0xff]
        %v2281 = vld [vmem:[%s29 + $0x18] sm:$0xff]
        %v2282 = vld [vmem:[%s31] sm:$0xff]
        %v2283 = vld [vmem:[%s31 + $0x8] sm:$0xf]
        %v2285 = vsel %vm1310, %v2283, 0
        %2287 = vmatpush.msra.mxu0 0.0
        %2288 = vmatpush.msra.mxu0 0.0
        %2289 = vmatpush.msra.mxu0 0.0
        %2290 = vmatpush.msra.mxu0 0.0
        %2291 = vmatpush.msra.mxu0 0.0
        %2292 = vmatpush.msra.mxu0 0.0
        %2293 = vmatpush.msra.mxu0 0.0
        %2294 = vmatpush.msra.mxu0 0.0
        %2295 = vmatpush.msra.mxu0 0.0
        %2296 = vmatpush.msra.mxu0 0.0
        %2297 = vmatpush.msra.mxu0 0.0
        %2298 = vmatpush.msra.mxu0 0.0
        %2299 = vmatpush.msra.mxu0 0.0
        %2300 = vmatpush.msra.mxu0 0.0
        %2301 = vmatpush.msra.mxu0 %v2285
        %2302 = vmatpush.msra.mxu0 %v2282
        %2303 = vmatmul.f32.gmra.mxu0 %v1308
        %v2304 = vpop.f32.mrf.mxu0
        %v2305 = vadd.f32 0.0, %v2304
        %2306 = vdwg.mxu0
        %2307 = vmatpush.msra.mxu0 0.0
        %2308 = vmatpush.msra.mxu0 0.0
        %2309 = vmatpush.msra.mxu0 0.0
        %2310 = vmatpush.msra.mxu0 0.0
        %2311 = vmatpush.msra.mxu0 0.0
        %2312 = vmatpush.msra.mxu0 0.0
        %2313 = vmatpush.msra.mxu0 0.0
        %2314 = vmatpush.msra.mxu0 0.0
        %2315 = vmatpush.msra.mxu0 0.0
        %2316 = vmatpush.msra.mxu0 0.0
        %2317 = vmatpush.msra.mxu0 0.0
        %2318 = vmatpush.msra.mxu0 0.0
        %2319 = vmatpush.msra.mxu0 %v2281
        %2320 = vmatpush.msra.mxu0 %v2280
        %2321 = vmatpush.msra.mxu0 %v2279
        %2322 = vmatpush.msra.mxu0 %v2278
        %2323 = vmatmul.f32.gmra.mxu0 %v1011
        %v2324 = vpop.f32.mrf.mxu0
        %v2325 = vadd.f32 %v2305, %v2324
        %2326 = vdwg.mxu0
        %v2327 = vld [vmem:[%s33] sm:$0x1]
        %v2328 = vadd.f32 %v2325, %v2327
        %v2329 = vmul.f32 %v2328, 0.5
        %v2330 = vtanh.pop %v2329
        %v2331 = vadd.f32 %v2330, 1.0
        %v2332 = vmul.f32 %v2331, 0.5
        %v2333 = vmul.f32 %v2332, 8.0
        %v2334 = vmul.f32 %v2333, 0.5
        %2336 = vrot.lane.b32.xlu0 %v2334, 126
        %v2337 = vpop.permute.xlu0 %2336
        %v2339 = vsub.f32 %v2333, %v2337
        %v2340 = vmul.f32 %v2339, 2.0
        %v2341 = vadd.f32 %v2333, %v2337
        %v2342 = vmul.f32 %v2341, 2.0
        %v2343 = vsub.f32 %v2342, %v2340
        %v2344 = vmul.f32 %v2343, 0.5
        %v2345 = vadd.f32 %v2340, %v2344
        %2347 = vrot.lane.b32.xlu0 %v2343, 127
        %v2348 = vpop.permute.xlu0 %2347
        %vm2350 = vcmp.gt.f32.partialorder %v2343, %v2348
        %v2351 = vsel %vm2350, %v2343, %v2348
        %vm2352 = vcmp.lt.f32.partialorder %v2343, %v2348
        %v2353 = vsel %vm2352, %v2348, %v2343
        %v2354 = vmul.f32 %v2353, 2.0
        %v2355 = vmul.f32 %v2351, 2.0
        %v2356 = vmul.f32 %v2354, 0.5
        %v2357 = vsub.f32 %v2345, %v2356
        %v2358 = vmul.f32 %v2355, 0.5
        %2360 = vrot.lane.b32.xlu0 %v2358, 1
        %v2361 = vpop.permute.xlu0 %2360
        %v2363 = vsub.f32 %v2345, %v2361
        %v2364 = vadd.f32 %v2357, %v2354
        %2366 = vrot.lane.b32.xlu0 %v2355, 1
        %v2367 = vpop.permute.xlu0 %2366
        %v2369 = vadd.f32 %v2363, %v2367
        %2371 = vrot.lane.b32.xlu0 %v2364, 2
        %v2372 = vpop.permute.xlu0 %2371
        %2375 = vrot.lane.b32.xlu0 %v2369, 2
        %v2376 = vpop.permute.xlu0 %2375
        %v2378 = vsel %vm1510, %v2357, %v2363
        %v2379 = vsel %vm1512, %v2378, %v2372
        %vm2380 = vcmask 23552
        %v2381 = vsel %vm2380, %v2379, %v2376
        %v2382 = vld [vmem:[%s35] sm:$0xff]
        %v2383 = vld [vmem:[%s35 + $0x8] sm:$0xff]
        %v2384 = vld [vmem:[%s35 + $0x10] sm:$0xff]
        %v2385 = vld [vmem:[%s35 + $0x18] sm:$0xff]
        %v2386 = vld [vmem:[%s37] sm:$0xf]
        %v2388 = vsel %vm1110, %v2381, 0
        %v2391 = vsel %vm1310, %v2386, 0
        %2393 = vmatpush.msra.mxu0 0.0
        %2394 = vmatpush.msra.mxu0 0.0
        %2395 = vmatpush.msra.mxu0 0.0
        %2396 = vmatpush.msra.mxu0 0.0
        %2397 = vmatpush.msra.mxu0 0.0
        %2398 = vmatpush.msra.mxu0 0.0
        %2399 = vmatpush.msra.mxu0 0.0
        %2400 = vmatpush.msra.mxu0 0.0
        %2401 = vmatpush.msra.mxu0 0.0
        %2402 = vmatpush.msra.mxu0 0.0
        %2403 = vmatpush.msra.mxu0 0.0
        %2404 = vmatpush.msra.mxu0 0.0
        %2405 = vmatpush.msra.mxu0 0.0
        %2406 = vmatpush.msra.mxu0 0.0
        %2407 = vmatpush.msra.mxu0 0.0
        %2408 = vmatpush.msra.mxu0 %v2391
        %2409 = vmatmul.f32.gmra.mxu0 %v2388
        %v2410 = vpop.f32.mrf.mxu0
        %v2411 = vadd.f32 0.0, %v2410
        %2412 = vdwg.mxu0
        %2413 = vmatpush.msra.mxu0 0.0
        %2414 = vmatpush.msra.mxu0 0.0
        %2415 = vmatpush.msra.mxu0 0.0
        %2416 = vmatpush.msra.mxu0 0.0
        %2417 = vmatpush.msra.mxu0 0.0
        %2418 = vmatpush.msra.mxu0 0.0
        %2419 = vmatpush.msra.mxu0 0.0
        %2420 = vmatpush.msra.mxu0 0.0
        %2421 = vmatpush.msra.mxu0 0.0
        %2422 = vmatpush.msra.mxu0 0.0
        %2423 = vmatpush.msra.mxu0 0.0
        %2424 = vmatpush.msra.mxu0 0.0
        %2425 = vmatpush.msra.mxu0 %v2385
        %2426 = vmatpush.msra.mxu0 %v2384
        %2427 = vmatpush.msra.mxu0 %v2383
        %2428 = vmatpush.msra.mxu0 %v2382
        %2429 = vmatmul.f32.gmra.mxu0 %v1011
        %v2430 = vpop.f32.mrf.mxu0
        %v2431 = vadd.f32 %v2411, %v2430
        %2432 = vdwg.mxu0
        %v2433 = vld [vmem:[%s39] sm:$0x1]
        %v2434 = vadd.f32 %v2431, %v2433
        %v2435 = vtanh.pop %v2434
        %v2436 = vld [vmem:[%s41] sm:$0xff]
        %v2437 = vld [vmem:[%s41 + $0x8] sm:$0xff]
        %v2438 = vld [vmem:[%s41 + $0x10] sm:$0xff]
        %v2439 = vld [vmem:[%s41 + $0x18] sm:$0xff]
        %v2440 = vld [vmem:[%s43] sm:$0x1]
        %v2442 = vsel %vm972, %v2435, 0
        %2444 = vmatpush.msra.mxu0 0.0
        %2445 = vmatpush.msra.mxu0 0.0
        %2446 = vmatpush.msra.mxu0 0.0
        %2447 = vmatpush.msra.mxu0 0.0
        %2448 = vmatpush.msra.mxu0 0.0
        %2449 = vmatpush.msra.mxu0 0.0
        %2450 = vmatpush.msra.mxu0 0.0
        %2451 = vmatpush.msra.mxu0 0.0
        %2452 = vmatpush.msra.mxu0 0.0
        %2453 = vmatpush.msra.mxu0 0.0
        %2454 = vmatpush.msra.mxu0 0.0
        %2455 = vmatpush.msra.mxu0 0.0
        %2456 = vmatpush.msra.mxu0 %v2439
        %2457 = vmatpush.msra.mxu0 %v2438
        %2458 = vmatpush.msra.mxu0 %v2437
        %2459 = vmatpush.msra.mxu0 %v2436
        %2460 = vmatmul.f32.gmra.mxu0 %v2442
        %v2461 = vpop.f32.mrf.mxu0
        %v2462 = vadd.f32 %v2440, %v2461
        %2463 = vdwg.mxu0
        %v2464 = vld [vmem:[%s45] sm:$0xff]
        %v2465 = vld [vmem:[%s45 + $0x8] sm:$0xff]
        %v2466 = vld [vmem:[%s45 + $0x10] sm:$0xff]
        %v2467 = vld [vmem:[%s45 + $0x18] sm:$0xff]
        %v2468 = vld [vmem:[%s47] sm:$0xff]
        %v2469 = vld [vmem:[%s47 + $0x8] sm:$0x1]
        %vm2470 = vcmask 72704
        %v2472 = vsel %vm2470, %v2462, 0
        %vm2474 = vcmask 1040384
        %v2476 = vsel %vm2474, %v2469, 0
        %2478 = vmatpush.msra.mxu0 0.0
        %2479 = vmatpush.msra.mxu0 0.0
        %2480 = vmatpush.msra.mxu0 0.0
        %2481 = vmatpush.msra.mxu0 0.0
        %2482 = vmatpush.msra.mxu0 0.0
        %2483 = vmatpush.msra.mxu0 0.0
        %2484 = vmatpush.msra.mxu0 0.0
        %2485 = vmatpush.msra.mxu0 0.0
        %2486 = vmatpush.msra.mxu0 0.0
        %2487 = vmatpush.msra.mxu0 0.0
        %2488 = vmatpush.msra.mxu0 0.0
        %2489 = vmatpush.msra.mxu0 0.0
        %2490 = vmatpush.msra.mxu0 0.0
        %2491 = vmatpush.msra.mxu0 0.0
        %2492 = vmatpush.msra.mxu0 %v2476
        %2493 = vmatpush.msra.mxu0 %v2468
        %2494 = vmatmul.f32.gmra.mxu0 %v2472
        %v2495 = vpop.f32.mrf.mxu0
        %v2496 = vadd.f32 0.0, %v2495
        %2497 = vdwg.mxu0
        %2498 = vmatpush.msra.mxu0 0.0
        %2499 = vmatpush.msra.mxu0 0.0
        %2500 = vmatpush.msra.mxu0 0.0
        %2501 = vmatpush.msra.mxu0 0.0
        %2502 = vmatpush.msra.mxu0 0.0
        %2503 = vmatpush.msra.mxu0 0.0
        %2504 = vmatpush.msra.mxu0 0.0
        %2505 = vmatpush.msra.mxu0 0.0
        %2506 = vmatpush.msra.mxu0 0.0
        %2507 = vmatpush.msra.mxu0 0.0
        %2508 = vmatpush.msra.mxu0 0.0
        %2509 = vmatpush.msra.mxu0 0.0
        %2510 = vmatpush.msra.mxu0 %v2467
        %2511 = vmatpush.msra.mxu0 %v2466
        %2512 = vmatpush.msra.mxu0 %v2465
        %2513 = vmatpush.msra.mxu0 %v2464
        %2514 = vmatmul.f32.gmra.mxu0 %v2442
        %v2515 = vpop.f32.mrf.mxu0
        %v2516 = vadd.f32 %v2496, %v2515
        %2517 = vdwg.mxu0
        %v2518 = vld [vmem:[%s49] sm:$0x1]
        %v2519 = vadd.f32 %v2516, %v2518
        %v2520 = vmul.f32 %v2519, %v2519
        %v2521 = vsel %vm1338, %v2520, 0.0
        %2522 = vadd.xlane.f32.xlu0 %v2521
        %v2523 = vpop.xlane.xlu0 %2522
        %v2524 = vadd.f32 %v2523, 1e-08
        %v2525 = vrsqrt.pop %v2524
        %v2526 = vmul.f32 %v2525, %v2524
        %v2527 = vmul.f32 %v2526, %v2525
        %v2528 = vmul.f32 0.5, %v2527
        %v2529 = vsub.f32 1.5, %v2528
        %v2530 = vmul.f32 %v2525, %v2529
        %vm2531 = vweird.f32 %v2524
        %vm2532 = vweird.f32 %v2525
        %vm2533 = vmor %vm2531, %vm2532
        %v2534 = vsel %vm2533, %v2525, %v2530
        %v2535 = vmul.f32 %v2519, %v2534
        %2537 = vrot.lane.b32.xlu0 %v2519, 125
        %v2538 = vpop.permute.xlu0 %2537
        %v2540 = vmul.f32 %v2535, %v2538
        %v2541 = vsel %vm1338, %v2540, 0.0
        %2542 = vadd.xlane.f32.xlu0 %v2541
        %v2543 = vpop.xlane.xlu0 %2542
        %v2544 = vmul.f32 %v2543, %v2535
        %2546 = vrot.lane.b32.xlu0 %v2544, 3
        %v2547 = vpop.permute.xlu0 %2546
        %v2549 = vsub.f32 %v2519, %v2547
        %v2550 = vmul.f32 %v2549, %v2549
        %2552 = vrot.lane.b32.xlu0 %v2550, 125
        %v2553 = vpop.permute.xlu0 %2552
        %v2555 = vsel %vm1338, %v2553, 0.0
        %2556 = vadd.xlane.f32.xlu0 %v2555
        %v2557 = vpop.xlane.xlu0 %2556
        %v2558 = vadd.f32 %v2557, 1e-08
        %v2559 = vrsqrt.pop %v2558
        %v2560 = vmul.f32 %v2559, %v2558
        %v2561 = vmul.f32 %v2560, %v2559
        %v2562 = vmul.f32 0.5, %v2561
        %v2563 = vsub.f32 1.5, %v2562
        %v2564 = vmul.f32 %v2559, %v2563
        %vm2565 = vweird.f32 %v2558
        %vm2566 = vweird.f32 %v2559
        %vm2567 = vmor %vm2565, %vm2566
        %v2568 = vsel %vm2567, %v2559, %v2564
        %v2569 = vmul.f32 %v2549, %v2568
        %2571 = vrot.lane.b32.xlu0 %v2569, 124
        %v2572 = vpop.permute.xlu0 %2571
        %v2574 = vmul.f32 %v2535, %v2572
        %2575 = vrot.lane.b32.xlu0 %v2569, 126
        %v2576 = vpop.permute.xlu0 %2575
        %v2578 = vmul.f32 %v2535, %v2576
        %2580 = vrot.lane.b32.xlu0 %v2578, 127
        %v2581 = vpop.permute.xlu0 %2580
        %v2583 = vsub.f32 %v2574, %v2581
        %2584 = vrot.lane.b32.xlu0 %v2569, 127
        %v2585 = vpop.permute.xlu0 %2584
        %v2587 = vmul.f32 %v2535, %v2585
        %2588 = vrot.lane.b32.xlu0 %v2569, 123
        %v2589 = vpop.permute.xlu0 %2588
        %v2591 = vmul.f32 %v2535, %v2589
        %2593 = vrot.lane.b32.xlu0 %v2591, 2
        %v2594 = vpop.permute.xlu0 %2593
        %v2596 = vsub.f32 %v2587, %v2594
        %v2597 = vadd.f32 %v2535, %v2572
        %v2598 = vadd.f32 %v2597, %v2583
        %v2599 = vsub.f32 %v2598, 1.0
        %v2600 = vmul.f32 %v2599, 0.5
        %v2601 = vmax.f32 %v2600, -0.999999
        %v2602 = vmin.f32 %v2601, 0.999999
        %v2603 = vand.u32 2147483647, %v2602
        %vm2604 = vcmp.gt.f32.partialorder %v2603, 0.5
        %v2605 = vsub.f32 1.0, %v2603
        %v2606 = vmul.f32 %v2605, 0.5
        %v2607 = vmul.f32 %v2603, %v2603
        %v2608 = vsel %vm2604, %v2606, %v2607
        %v2609 = vmax.f32 %v2606, 0.0
        %v2610 = vrsqrt.pop %v2609
        %v2611 = vmul.f32 %v2610, %v2609
        %v2612 = vmul.f32 %v2611, %v2610
        %v2613 = vmul.f32 0.5, %v2612
        %v2614 = vsub.f32 1.5, %v2613
        %v2615 = vmul.f32 %v2610, %v2614
        %v2616 = vmul.f32 %v2609, %v2615
        %vm2617 = vcmp.eq.f32.partialorder %v2609, inf
        %v2618 = vsel %vm2617, %v2609, %v2616
        %vm2619 = vcmp.eq.f32.partialorder %v2609, 0.0
        %v2620 = vand.u32 %v2609, 2147483648
        %v2621 = vsel %vm2619, %v2620, %v2618
        %v2622 = vsel %vm2604, %v2621, %v2603
        %v2623 = vmul.f32 %v2608, 0.0421632
        %v2624 = vadd.f32 %v2623, 0.024181312
        %v2625 = vmul.f32 %v2624, %v2608
        %v2626 = vadd.f32 %v2625, 0.045470025
        %v2627 = vmul.f32 %v2626, %v2608
        %v2628 = vadd.f32 %v2627, 0.074953005
        %v2629 = vmul.f32 %v2628, %v2608
        %v2630 = vadd.f32 %v2629, 0.16666752
        %v2631 = vmul.f32 %v2622, %v2608
        %v2632 = vmul.f32 %v2631, %v2630
        %v2633 = vadd.f32 %v2622, %v2632
        %v2634 = vmul.f32 %v2633, 2.0
        %v2635 = vsub.f32 1.5707964, %v2634
        %v2636 = vsel %vm2604, %v2635, %v2633
        %vm2637 = vcmp.lt.f32.partialorder %v2602, 0.0
        %v2638 = vsub.f32 0.0, %v2636
        %v2639 = vsel %vm2637, %v2638, %v2636
        %v2640 = vsub.f32 1.5707964, %v2639
        %v2641 = vmul.f32 %v2602, %v2602
        %v2642 = vsub.f32 1.0, %v2641
        %v2643 = vmax.f32 %v2642, 1e-12
        %v2644 = vrsqrt.pop %v2643
        %v2645 = vmul.f32 %v2644, %v2643
        %v2646 = vmul.f32 %v2645, %v2644
        %v2647 = vmul.f32 0.5, %v2646
        %v2648 = vsub.f32 1.5, %v2647
        %v2649 = vmul.f32 %v2644, %v2648
        %v2650 = vmul.f32 %v2643, %v2649
        %vm2651 = vcmp.eq.f32.partialorder %v2643, inf
        %v2652 = vsel %vm2651, %v2643, %v2650
        %vm2653 = vcmp.eq.f32.partialorder %v2643, 0.0
        %v2654 = vand.u32 %v2643, 2147483648
        %v2655 = vsel %vm2653, %v2654, %v2652
        %v2656 = vmax.f32 %v2655, 1e-06
        %v2657 = vmul.f32 %v2656, 2.0
        %v2658 = vrcp.pop %v2657
        %v2659 = vmul.f32 %v2657, %v2658
        %v2660 = vsub.f32 1.0, %v2659
        %v2661 = vmul.f32 %v2658, %v2660
        %v2662 = vadd.f32 %v2658, %v2661
        %vm2663 = vweird.f32 %v2657
        %vm2664 = vweird.f32 %v2658
        %vm2665 = vmor %vm2663, %vm2664
        %v2666 = vsel %vm2665, %v2658, %v2662
        %v2667 = vand.u32 2147483647, %v2657
        %vm2668 = vcmp.eq.f32.partialorder %v2667, 8.507059e+37
        %v2669 = vand.u32 %v2657, 2147483648
        %v2670 = vor.u32 1.1754944e-38, %v2669
        %v2671 = vsel %vm2668, %v2670, %v2666
        %v2672 = vmul.f32 %v2640, %v2671
        %2674 = vrot.lane.b32.xlu0 %v2596, 3
        %v2675 = vpop.permute.xlu0 %2674
        %v2677 = vsub.f32 %v2569, %v2675
        %2679 = vrot.lane.b32.xlu0 %v2535, 127
        %v2680 = vpop.permute.xlu0 %2679
        %v2682 = vsub.f32 %v2583, %v2680
        %v2683 = vsub.f32 %v2535, %v2576
        %2685 = vrot.lane.b32.xlu0 %v2677, 123
        %v2686 = vpop.permute.xlu0 %2685
        %2689 = vrot.lane.b32.xlu0 %v2683, 1
        %v2690 = vpop.permute.xlu0 %2689
        %v2692 = vsel %vm1510, %v2686, %v2682
        %v2693 = vsel %vm1512, %v2692, %v2690
        %2695 = vset.pattern.permute.xlu0 0
        %2696 = vperm.xlu0 %2695, %v2672
        %v2697 = vpop.permute.xlu0 %2696
        %v2699 = vmul.f32 %v2693, %v2697
        %2701 = vrot.lane.b32.xlu0 %v2520, 122
        %v2702 = vpop.permute.xlu0 %2701
        %v2704 = vsel %vm1338, %v2702, 0.0
        %2705 = vadd.xlane.f32.xlu0 %v2704
        %v2706 = vpop.xlane.xlu0 %2705
        %v2707 = vadd.f32 %v2706, 1e-08
        %v2708 = vrsqrt.pop %v2707
        %v2709 = vmul.f32 %v2708, %v2707
        %v2710 = vmul.f32 %v2709, %v2708
        %v2711 = vmul.f32 0.5, %v2710
        %v2712 = vsub.f32 1.5, %v2711
        %v2713 = vmul.f32 %v2708, %v2712
        %vm2714 = vweird.f32 %v2707
        %vm2715 = vweird.f32 %v2708
        %vm2716 = vmor %vm2714, %vm2715
        %v2717 = vsel %vm2716, %v2708, %v2713
        %v2718 = vmul.f32 %v2519, %v2717
        %v2719 = vmul.f32 %v2718, %v2538
        %2721 = vrot.lane.b32.xlu0 %v2719, 122
        %v2722 = vpop.permute.xlu0 %2721
        %v2724 = vsel %vm1338, %v2722, 0.0
        %2725 = vadd.xlane.f32.xlu0 %v2724
        %v2726 = vpop.xlane.xlu0 %2725
        %v2727 = vmul.f32 %v2726, %v2718
        %2729 = vrot.lane.b32.xlu0 %v2727, 3
        %v2730 = vpop.permute.xlu0 %2729
        %v2732 = vsub.f32 %v2519, %v2730
        %v2733 = vmul.f32 %v2732, %v2732
        %2735 = vrot.lane.b32.xlu0 %v2733, 119
        %v2736 = vpop.permute.xlu0 %2735
        %v2738 = vsel %vm1338, %v2736, 0.0
        %2739 = vadd.xlane.f32.xlu0 %v2738
        %v2740 = vpop.xlane.xlu0 %2739
        %v2741 = vadd.f32 %v2740, 1e-08
        %v2742 = vrsqrt.pop %v2741
        %v2743 = vmul.f32 %v2742, %v2741
        %v2744 = vmul.f32 %v2743, %v2742
        %v2745 = vmul.f32 0.5, %v2744
        %v2746 = vsub.f32 1.5, %v2745
        %v2747 = vmul.f32 %v2742, %v2746
        %vm2748 = vweird.f32 %v2741
        %vm2749 = vweird.f32 %v2742
        %vm2750 = vmor %vm2748, %vm2749
        %v2751 = vsel %vm2750, %v2742, %v2747
        %v2752 = vmul.f32 %v2732, %v2751
        %2754 = vrot.lane.b32.xlu0 %v2752, 124
        %v2755 = vpop.permute.xlu0 %2754
        %v2757 = vmul.f32 %v2718, %v2755
        %2758 = vrot.lane.b32.xlu0 %v2752, 126
        %v2759 = vpop.permute.xlu0 %2758
        %v2761 = vmul.f32 %v2718, %v2759
        %2763 = vrot.lane.b32.xlu0 %v2761, 127
        %v2764 = vpop.permute.xlu0 %2763
        %v2766 = vsub.f32 %v2757, %v2764
        %2767 = vrot.lane.b32.xlu0 %v2752, 127
        %v2768 = vpop.permute.xlu0 %2767
        %v2770 = vmul.f32 %v2718, %v2768
        %2771 = vrot.lane.b32.xlu0 %v2752, 123
        %v2772 = vpop.permute.xlu0 %2771
        %v2774 = vmul.f32 %v2718, %v2772
        %2776 = vrot.lane.b32.xlu0 %v2774, 2
        %v2777 = vpop.permute.xlu0 %2776
        %v2779 = vsub.f32 %v2770, %v2777
        %v2780 = vadd.f32 %v2718, %v2755
        %v2781 = vadd.f32 %v2780, %v2766
        %v2782 = vsub.f32 %v2781, 1.0
        %v2783 = vmul.f32 %v2782, 0.5
        %v2784 = vmax.f32 %v2783, -0.999999
        %v2785 = vmin.f32 %v2784, 0.999999
        %v2786 = vand.u32 2147483647, %v2785
        %vm2787 = vcmp.gt.f32.partialorder %v2786, 0.5
        %v2788 = vsub.f32 1.0, %v2786
        %v2789 = vmul.f32 %v2788, 0.5
        %v2790 = vmul.f32 %v2786, %v2786
        %v2791 = vsel %vm2787, %v2789, %v2790
        %v2792 = vmax.f32 %v2789, 0.0
        %v2793 = vrsqrt.pop %v2792
        %v2794 = vmul.f32 %v2793, %v2792
        %v2795 = vmul.f32 %v2794, %v2793
        %v2796 = vmul.f32 0.5, %v2795
        %v2797 = vsub.f32 1.5, %v2796
        %v2798 = vmul.f32 %v2793, %v2797
        %v2799 = vmul.f32 %v2792, %v2798
        %vm2800 = vcmp.eq.f32.partialorder %v2792, inf
        %v2801 = vsel %vm2800, %v2792, %v2799
        %vm2802 = vcmp.eq.f32.partialorder %v2792, 0.0
        %v2803 = vand.u32 %v2792, 2147483648
        %v2804 = vsel %vm2802, %v2803, %v2801
        %v2805 = vsel %vm2787, %v2804, %v2786
        %v2806 = vmul.f32 %v2791, 0.0421632
        %v2807 = vadd.f32 %v2806, 0.024181312
        %v2808 = vmul.f32 %v2807, %v2791
        %v2809 = vadd.f32 %v2808, 0.045470025
        %v2810 = vmul.f32 %v2809, %v2791
        %v2811 = vadd.f32 %v2810, 0.074953005
        %v2812 = vmul.f32 %v2811, %v2791
        %v2813 = vadd.f32 %v2812, 0.16666752
        %v2814 = vmul.f32 %v2805, %v2791
        %v2815 = vmul.f32 %v2814, %v2813
        %v2816 = vadd.f32 %v2805, %v2815
        %v2817 = vmul.f32 %v2816, 2.0
        %v2818 = vsub.f32 1.5707964, %v2817
        %v2819 = vsel %vm2787, %v2818, %v2816
        %vm2820 = vcmp.lt.f32.partialorder %v2785, 0.0
        %v2821 = vsub.f32 0.0, %v2819
        %v2822 = vsel %vm2820, %v2821, %v2819
        %v2823 = vsub.f32 1.5707964, %v2822
        %v2824 = vmul.f32 %v2785, %v2785
        %v2825 = vsub.f32 1.0, %v2824
        %v2826 = vmax.f32 %v2825, 1e-12
        %v2827 = vrsqrt.pop %v2826
        %v2828 = vmul.f32 %v2827, %v2826
        %v2829 = vmul.f32 %v2828, %v2827
        %v2830 = vmul.f32 0.5, %v2829
        %v2831 = vsub.f32 1.5, %v2830
        %v2832 = vmul.f32 %v2827, %v2831
        %v2833 = vmul.f32 %v2826, %v2832
        %vm2834 = vcmp.eq.f32.partialorder %v2826, inf
        %v2835 = vsel %vm2834, %v2826, %v2833
        %vm2836 = vcmp.eq.f32.partialorder %v2826, 0.0
        %v2837 = vand.u32 %v2826, 2147483648
        %v2838 = vsel %vm2836, %v2837, %v2835
        %v2839 = vmax.f32 %v2838, 1e-06
        %v2840 = vmul.f32 %v2839, 2.0
        %v2841 = vrcp.pop %v2840
        %v2842 = vmul.f32 %v2840, %v2841
        %v2843 = vsub.f32 1.0, %v2842
        %v2844 = vmul.f32 %v2841, %v2843
        %v2845 = vadd.f32 %v2841, %v2844
        %vm2846 = vweird.f32 %v2840
        %vm2847 = vweird.f32 %v2841
        %vm2848 = vmor %vm2846, %vm2847
        %v2849 = vsel %vm2848, %v2841, %v2845
        %v2850 = vand.u32 2147483647, %v2840
        %vm2851 = vcmp.eq.f32.partialorder %v2850, 8.507059e+37
        %v2852 = vand.u32 %v2840, 2147483648
        %v2853 = vor.u32 1.1754944e-38, %v2852
        %v2854 = vsel %vm2851, %v2853, %v2849
        %v2855 = vmul.f32 %v2823, %v2854
        %2857 = vrot.lane.b32.xlu0 %v2779, 3
        %v2858 = vpop.permute.xlu0 %2857
        %v2860 = vsub.f32 %v2752, %v2858
        %2862 = vrot.lane.b32.xlu0 %v2718, 127
        %v2863 = vpop.permute.xlu0 %2862
        %v2865 = vsub.f32 %v2766, %v2863
        %v2866 = vsub.f32 %v2718, %v2759
        %2868 = vrot.lane.b32.xlu0 %v2860, 117
        %v2869 = vpop.permute.xlu0 %2868
        %2872 = vrot.lane.b32.xlu0 %v2865, 122
        %v2873 = vpop.permute.xlu0 %2872
        %2876 = vrot.lane.b32.xlu0 %v2866, 123
        %v2877 = vpop.permute.xlu0 %2876
        %v2879 = vsel %vm1510, %v2869, %v2873
        %v2880 = vsel %vm1512, %v2879, %v2877
        %2882 = vset.pattern.permute.xlu0 6
        %2883 = vperm.xlu0 %2882, %v2855
        %v2884 = vpop.permute.xlu0 %2883
        %v2886 = vmul.f32 %v2880, %v2884
        %2887 = vrot.lane.b32.xlu0 %v2520, 116
        %v2888 = vpop.permute.xlu0 %2887
        %v2890 = vsel %vm1338, %v2888, 0.0
        %2891 = vadd.xlane.f32.xlu0 %v2890
        %v2892 = vpop.xlane.xlu0 %2891
        %v2893 = vadd.f32 %v2892, 1e-08
        %v2894 = vrsqrt.pop %v2893
        %v2895 = vmul.f32 %v2894, %v2893
        %v2896 = vmul.f32 %v2895, %v2894
        %v2897 = vmul.f32 0.5, %v2896
        %v2898 = vsub.f32 1.5, %v2897
        %v2899 = vmul.f32 %v2894, %v2898
        %vm2900 = vweird.f32 %v2893
        %vm2901 = vweird.f32 %v2894
        %vm2902 = vmor %vm2900, %vm2901
        %v2903 = vsel %vm2902, %v2894, %v2899
        %v2904 = vmul.f32 %v2519, %v2903
        %v2905 = vmul.f32 %v2904, %v2538
        %2907 = vrot.lane.b32.xlu0 %v2905, 116
        %v2908 = vpop.permute.xlu0 %2907
        %v2910 = vsel %vm1338, %v2908, 0.0
        %2911 = vadd.xlane.f32.xlu0 %v2910
        %v2912 = vpop.xlane.xlu0 %2911
        %v2913 = vmul.f32 %v2912, %v2904
        %2915 = vrot.lane.b32.xlu0 %v2913, 3
        %v2916 = vpop.permute.xlu0 %2915
        %v2918 = vsub.f32 %v2519, %v2916
        %v2919 = vmul.f32 %v2918, %v2918
        %2921 = vrot.lane.b32.xlu0 %v2919, 113
        %v2922 = vpop.permute.xlu0 %2921
        %v2924 = vsel %vm1338, %v2922, 0.0
        %2925 = vadd.xlane.f32.xlu0 %v2924
        %v2926 = vpop.xlane.xlu0 %2925
        %v2927 = vadd.f32 %v2926, 1e-08
        %v2928 = vrsqrt.pop %v2927
        %v2929 = vmul.f32 %v2928, %v2927
        %v2930 = vmul.f32 %v2929, %v2928
        %v2931 = vmul.f32 0.5, %v2930
        %v2932 = vsub.f32 1.5, %v2931
        %v2933 = vmul.f32 %v2928, %v2932
        %vm2934 = vweird.f32 %v2927
        %vm2935 = vweird.f32 %v2928
        %vm2936 = vmor %vm2934, %vm2935
        %v2937 = vsel %vm2936, %v2928, %v2933
        %v2938 = vmul.f32 %v2918, %v2937
        %2940 = vrot.lane.b32.xlu0 %v2938, 124
        %v2941 = vpop.permute.xlu0 %2940
        %v2943 = vmul.f32 %v2904, %v2941
        %2944 = vrot.lane.b32.xlu0 %v2938, 126
        %v2945 = vpop.permute.xlu0 %2944
        %v2947 = vmul.f32 %v2904, %v2945
        %2949 = vrot.lane.b32.xlu0 %v2947, 127
        %v2950 = vpop.permute.xlu0 %2949
        %v2952 = vsub.f32 %v2943, %v2950
        %2953 = vrot.lane.b32.xlu0 %v2938, 127
        %v2954 = vpop.permute.xlu0 %2953
        %v2956 = vmul.f32 %v2904, %v2954
        %2957 = vrot.lane.b32.xlu0 %v2938, 123
        %v2958 = vpop.permute.xlu0 %2957
        %v2960 = vmul.f32 %v2904, %v2958
        %2962 = vrot.lane.b32.xlu0 %v2960, 2
        %v2963 = vpop.permute.xlu0 %2962
        %v2965 = vsub.f32 %v2956, %v2963
        %v2966 = vadd.f32 %v2904, %v2941
        %v2967 = vadd.f32 %v2966, %v2952
        %v2968 = vsub.f32 %v2967, 1.0
        %v2969 = vmul.f32 %v2968, 0.5
        %v2970 = vmax.f32 %v2969, -0.999999
        %v2971 = vmin.f32 %v2970, 0.999999
        %v2972 = vand.u32 2147483647, %v2971
        %vm2973 = vcmp.gt.f32.partialorder %v2972, 0.5
        %v2974 = vsub.f32 1.0, %v2972
        %v2975 = vmul.f32 %v2974, 0.5
        %v2976 = vmul.f32 %v2972, %v2972
        %v2977 = vsel %vm2973, %v2975, %v2976
        %v2978 = vmax.f32 %v2975, 0.0
        %v2979 = vrsqrt.pop %v2978
        %v2980 = vmul.f32 %v2979, %v2978
        %v2981 = vmul.f32 %v2980, %v2979
        %v2982 = vmul.f32 0.5, %v2981
        %v2983 = vsub.f32 1.5, %v2982
        %v2984 = vmul.f32 %v2979, %v2983
        %v2985 = vmul.f32 %v2978, %v2984
        %vm2986 = vcmp.eq.f32.partialorder %v2978, inf
        %v2987 = vsel %vm2986, %v2978, %v2985
        %vm2988 = vcmp.eq.f32.partialorder %v2978, 0.0
        %v2989 = vand.u32 %v2978, 2147483648
        %v2990 = vsel %vm2988, %v2989, %v2987
        %v2991 = vsel %vm2973, %v2990, %v2972
        %v2992 = vmul.f32 %v2977, 0.0421632
        %v2993 = vadd.f32 %v2992, 0.024181312
        %v2994 = vmul.f32 %v2993, %v2977
        %v2995 = vadd.f32 %v2994, 0.045470025
        %v2996 = vmul.f32 %v2995, %v2977
        %v2997 = vadd.f32 %v2996, 0.074953005
        %v2998 = vmul.f32 %v2997, %v2977
        %v2999 = vadd.f32 %v2998, 0.16666752
        %v3000 = vmul.f32 %v2991, %v2977
        %v3001 = vmul.f32 %v3000, %v2999
        %v3002 = vadd.f32 %v2991, %v3001
        %v3003 = vmul.f32 %v3002, 2.0
        %v3004 = vsub.f32 1.5707964, %v3003
        %v3005 = vsel %vm2973, %v3004, %v3002
        %vm3006 = vcmp.lt.f32.partialorder %v2971, 0.0
        %v3007 = vsub.f32 0.0, %v3005
        %v3008 = vsel %vm3006, %v3007, %v3005
        %v3009 = vsub.f32 1.5707964, %v3008
        %v3010 = vmul.f32 %v2971, %v2971
        %v3011 = vsub.f32 1.0, %v3010
        %v3012 = vmax.f32 %v3011, 1e-12
        %v3013 = vrsqrt.pop %v3012
        %v3014 = vmul.f32 %v3013, %v3012
        %v3015 = vmul.f32 %v3014, %v3013
        %v3016 = vmul.f32 0.5, %v3015
        %v3017 = vsub.f32 1.5, %v3016
        %v3018 = vmul.f32 %v3013, %v3017
        %v3019 = vmul.f32 %v3012, %v3018
        %vm3020 = vcmp.eq.f32.partialorder %v3012, inf
        %v3021 = vsel %vm3020, %v3012, %v3019
        %vm3022 = vcmp.eq.f32.partialorder %v3012, 0.0
        %v3023 = vand.u32 %v3012, 2147483648
        %v3024 = vsel %vm3022, %v3023, %v3021
        %v3025 = vmax.f32 %v3024, 1e-06
        %v3026 = vmul.f32 %v3025, 2.0
        %v3027 = vrcp.pop %v3026
        %v3028 = vmul.f32 %v3026, %v3027
        %v3029 = vsub.f32 1.0, %v3028
        %v3030 = vmul.f32 %v3027, %v3029
        %v3031 = vadd.f32 %v3027, %v3030
        %vm3032 = vweird.f32 %v3026
        %vm3033 = vweird.f32 %v3027
        %vm3034 = vmor %vm3032, %vm3033
        %v3035 = vsel %vm3034, %v3027, %v3031
        %v3036 = vand.u32 2147483647, %v3026
        %vm3037 = vcmp.eq.f32.partialorder %v3036, 8.507059e+37
        %v3038 = vand.u32 %v3026, 2147483648
        %v3039 = vor.u32 1.1754944e-38, %v3038
        %v3040 = vsel %vm3037, %v3039, %v3035
        %v3041 = vmul.f32 %v3009, %v3040
        %3043 = vrot.lane.b32.xlu0 %v2965, 3
        %v3044 = vpop.permute.xlu0 %3043
        %v3046 = vsub.f32 %v2938, %v3044
        %3048 = vrot.lane.b32.xlu0 %v2904, 127
        %v3049 = vpop.permute.xlu0 %3048
        %v3051 = vsub.f32 %v2952, %v3049
        %v3052 = vsub.f32 %v2904, %v2945
        %3054 = vrot.lane.b32.xlu0 %v3046, 111
        %v3055 = vpop.permute.xlu0 %3054
        %3058 = vrot.lane.b32.xlu0 %v3051, 116
        %v3059 = vpop.permute.xlu0 %3058
        %3062 = vrot.lane.b32.xlu0 %v3052, 117
        %v3063 = vpop.permute.xlu0 %3062
        %v3065 = vsel %vm1510, %v3055, %v3059
        %v3066 = vsel %vm1512, %v3065, %v3063
        %3068 = vset.pattern.permute.xlu0 12
        %3069 = vperm.xlu0 %3068, %v3041
        %v3070 = vpop.permute.xlu0 %3069
        %v3072 = vmul.f32 %v3066, %v3070
        %3074 = vrot.lane.b32.xlu0 %v2357, 124
        %v3075 = vpop.permute.xlu0 %3074
        %3078 = vrot.lane.b32.xlu0 %v2363, 124
        %v3079 = vpop.permute.xlu0 %3078
        %3081 = vrot.lane.b32.xlu0 %v2364, 126
        %v3082 = vpop.permute.xlu0 %3081
        %3084 = vrot.lane.b32.xlu0 %v2369, 126
        %v3085 = vpop.permute.xlu0 %3084
        %v3087 = vsel %vm1510, %v3075, %v3079
        %v3088 = vsel %vm1512, %v3087, %v3082
        %v3089 = vsel %vm2380, %v3088, %v3085
        %v3091 = vsel %vm1110, %v3089, 0
        %3093 = vmatpush.msra.mxu0 0.0
        %3094 = vmatpush.msra.mxu0 0.0
        %3095 = vmatpush.msra.mxu0 0.0
        %3096 = vmatpush.msra.mxu0 0.0
        %3097 = vmatpush.msra.mxu0 0.0
        %3098 = vmatpush.msra.mxu0 0.0
        %3099 = vmatpush.msra.mxu0 0.0
        %3100 = vmatpush.msra.mxu0 0.0
        %3101 = vmatpush.msra.mxu0 0.0
        %3102 = vmatpush.msra.mxu0 0.0
        %3103 = vmatpush.msra.mxu0 0.0
        %3104 = vmatpush.msra.mxu0 0.0
        %3105 = vmatpush.msra.mxu0 0.0
        %3106 = vmatpush.msra.mxu0 0.0
        %3107 = vmatpush.msra.mxu0 0.0
        %3108 = vmatpush.msra.mxu0 %v2391
        %3109 = vmatmul.f32.gmra.mxu0 %v3091
        %v3110 = vpop.f32.mrf.mxu0
        %v3111 = vadd.f32 0.0, %v3110
        %3112 = vdwg.mxu0
        %3113 = vmatpush.msra.mxu0 0.0
        %3114 = vmatpush.msra.mxu0 0.0
        %3115 = vmatpush.msra.mxu0 0.0
        %3116 = vmatpush.msra.mxu0 0.0
        %3117 = vmatpush.msra.mxu0 0.0
        %3118 = vmatpush.msra.mxu0 0.0
        %3119 = vmatpush.msra.mxu0 0.0
        %3120 = vmatpush.msra.mxu0 0.0
        %3121 = vmatpush.msra.mxu0 0.0
        %3122 = vmatpush.msra.mxu0 0.0
        %3123 = vmatpush.msra.mxu0 0.0
        %3124 = vmatpush.msra.mxu0 0.0
        %3125 = vmatpush.msra.mxu0 %v2385
        %3126 = vmatpush.msra.mxu0 %v2384
        %3127 = vmatpush.msra.mxu0 %v2383
        %3128 = vmatpush.msra.mxu0 %v2382
        %3129 = vmatmul.f32.gmra.mxu0 %v1011
        %v3130 = vpop.f32.mrf.mxu0
        %v3131 = vadd.f32 %v3111, %v3130
        %3132 = vdwg.mxu0
        %v3133 = vadd.f32 %v3131, %v2433
        %v3134 = vtanh.pop %v3133
        %v3136 = vsel %vm972, %v3134, 0
        %3138 = vmatpush.msra.mxu0 0.0
        %3139 = vmatpush.msra.mxu0 0.0
        %3140 = vmatpush.msra.mxu0 0.0
        %3141 = vmatpush.msra.mxu0 0.0
        %3142 = vmatpush.msra.mxu0 0.0
        %3143 = vmatpush.msra.mxu0 0.0
        %3144 = vmatpush.msra.mxu0 0.0
        %3145 = vmatpush.msra.mxu0 0.0
        %3146 = vmatpush.msra.mxu0 0.0
        %3147 = vmatpush.msra.mxu0 0.0
        %3148 = vmatpush.msra.mxu0 0.0
        %3149 = vmatpush.msra.mxu0 0.0
        %3150 = vmatpush.msra.mxu0 %v2439
        %3151 = vmatpush.msra.mxu0 %v2438
        %3152 = vmatpush.msra.mxu0 %v2437
        %3153 = vmatpush.msra.mxu0 %v2436
        %3154 = vmatmul.f32.gmra.mxu0 %v3136
        %v3155 = vpop.f32.mrf.mxu0
        %v3156 = vadd.f32 %v2440, %v3155
        %3157 = vdwg.mxu0
        %v3159 = vsel %vm2470, %v3156, 0
        %3161 = vmatpush.msra.mxu0 0.0
        %3162 = vmatpush.msra.mxu0 0.0
        %3163 = vmatpush.msra.mxu0 0.0
        %3164 = vmatpush.msra.mxu0 0.0
        %3165 = vmatpush.msra.mxu0 0.0
        %3166 = vmatpush.msra.mxu0 0.0
        %3167 = vmatpush.msra.mxu0 0.0
        %3168 = vmatpush.msra.mxu0 0.0
        %3169 = vmatpush.msra.mxu0 0.0
        %3170 = vmatpush.msra.mxu0 0.0
        %3171 = vmatpush.msra.mxu0 0.0
        %3172 = vmatpush.msra.mxu0 0.0
        %3173 = vmatpush.msra.mxu0 0.0
        %3174 = vmatpush.msra.mxu0 0.0
        %3175 = vmatpush.msra.mxu0 %v2476
        %3176 = vmatpush.msra.mxu0 %v2468
        %3177 = vmatmul.f32.gmra.mxu0 %v3159
        %v3178 = vpop.f32.mrf.mxu0
        %v3179 = vadd.f32 0.0, %v3178
        %3180 = vdwg.mxu0
        %3181 = vmatpush.msra.mxu0 0.0
        %3182 = vmatpush.msra.mxu0 0.0
        %3183 = vmatpush.msra.mxu0 0.0
        %3184 = vmatpush.msra.mxu0 0.0
        %3185 = vmatpush.msra.mxu0 0.0
        %3186 = vmatpush.msra.mxu0 0.0
        %3187 = vmatpush.msra.mxu0 0.0
        %3188 = vmatpush.msra.mxu0 0.0
        %3189 = vmatpush.msra.mxu0 0.0
        %3190 = vmatpush.msra.mxu0 0.0
        %3191 = vmatpush.msra.mxu0 0.0
        %3192 = vmatpush.msra.mxu0 0.0
        %3193 = vmatpush.msra.mxu0 %v2467
        %3194 = vmatpush.msra.mxu0 %v2466
        %3195 = vmatpush.msra.mxu0 %v2465
        %3196 = vmatpush.msra.mxu0 %v2464
        %3197 = vmatmul.f32.gmra.mxu0 %v3136
        %v3198 = vpop.f32.mrf.mxu0
        %v3199 = vadd.f32 %v3179, %v3198
        %3200 = vdwg.mxu0
        %v3201 = vadd.f32 %v3199, %v2518
        %v3202 = vmul.f32 %v3201, %v3201
        %v3203 = vsel %vm1338, %v3202, 0.0
        %3204 = vadd.xlane.f32.xlu0 %v3203
        %v3205 = vpop.xlane.xlu0 %3204
        %v3206 = vadd.f32 %v3205, 1e-08
        %v3207 = vrsqrt.pop %v3206
        %v3208 = vmul.f32 %v3207, %v3206
        %v3209 = vmul.f32 %v3208, %v3207
        %v3210 = vmul.f32 0.5, %v3209
        %v3211 = vsub.f32 1.5, %v3210
        %v3212 = vmul.f32 %v3207, %v3211
        %vm3213 = vweird.f32 %v3206
        %vm3214 = vweird.f32 %v3207
        %vm3215 = vmor %vm3213, %vm3214
        %v3216 = vsel %vm3215, %v3207, %v3212
        %v3217 = vmul.f32 %v3201, %v3216
        %3219 = vrot.lane.b32.xlu0 %v3201, 125
        %v3220 = vpop.permute.xlu0 %3219
        %v3222 = vmul.f32 %v3217, %v3220
        %v3223 = vsel %vm1338, %v3222, 0.0
        %3224 = vadd.xlane.f32.xlu0 %v3223
        %v3225 = vpop.xlane.xlu0 %3224
        %v3226 = vmul.f32 %v3225, %v3217
        %3228 = vrot.lane.b32.xlu0 %v3226, 3
        %v3229 = vpop.permute.xlu0 %3228
        %v3231 = vsub.f32 %v3201, %v3229
        %v3232 = vmul.f32 %v3231, %v3231
        %3234 = vrot.lane.b32.xlu0 %v3232, 125
        %v3235 = vpop.permute.xlu0 %3234
        %v3237 = vsel %vm1338, %v3235, 0.0
        %3238 = vadd.xlane.f32.xlu0 %v3237
        %v3239 = vpop.xlane.xlu0 %3238
        %v3240 = vadd.f32 %v3239, 1e-08
        %v3241 = vrsqrt.pop %v3240
        %v3242 = vmul.f32 %v3241, %v3240
        %v3243 = vmul.f32 %v3242, %v3241
        %v3244 = vmul.f32 0.5, %v3243
        %v3245 = vsub.f32 1.5, %v3244
        %v3246 = vmul.f32 %v3241, %v3245
        %vm3247 = vweird.f32 %v3240
        %vm3248 = vweird.f32 %v3241
        %vm3249 = vmor %vm3247, %vm3248
        %v3250 = vsel %vm3249, %v3241, %v3246
        %v3251 = vmul.f32 %v3231, %v3250
        %3253 = vrot.lane.b32.xlu0 %v3251, 124
        %v3254 = vpop.permute.xlu0 %3253
        %v3256 = vmul.f32 %v3217, %v3254
        %3257 = vrot.lane.b32.xlu0 %v3251, 126
        %v3258 = vpop.permute.xlu0 %3257
        %v3260 = vmul.f32 %v3217, %v3258
        %3262 = vrot.lane.b32.xlu0 %v3260, 127
        %v3263 = vpop.permute.xlu0 %3262
        %v3265 = vsub.f32 %v3256, %v3263
        %3266 = vrot.lane.b32.xlu0 %v3251, 127
        %v3267 = vpop.permute.xlu0 %3266
        %v3269 = vmul.f32 %v3217, %v3267
        %3270 = vrot.lane.b32.xlu0 %v3251, 123
        %v3271 = vpop.permute.xlu0 %3270
        %v3273 = vmul.f32 %v3217, %v3271
        %3275 = vrot.lane.b32.xlu0 %v3273, 2
        %v3276 = vpop.permute.xlu0 %3275
        %v3278 = vsub.f32 %v3269, %v3276
        %v3279 = vadd.f32 %v3217, %v3254
        %v3280 = vadd.f32 %v3279, %v3265
        %v3281 = vsub.f32 %v3280, 1.0
        %v3282 = vmul.f32 %v3281, 0.5
        %v3283 = vmax.f32 %v3282, -0.999999
        %v3284 = vmin.f32 %v3283, 0.999999
        %v3285 = vand.u32 2147483647, %v3284
        %vm3286 = vcmp.gt.f32.partialorder %v3285, 0.5
        %v3287 = vsub.f32 1.0, %v3285
        %v3288 = vmul.f32 %v3287, 0.5
        %v3289 = vmul.f32 %v3285, %v3285
        %v3290 = vsel %vm3286, %v3288, %v3289
        %v3291 = vmax.f32 %v3288, 0.0
        %v3292 = vrsqrt.pop %v3291
        %v3293 = vmul.f32 %v3292, %v3291
        %v3294 = vmul.f32 %v3293, %v3292
        %v3295 = vmul.f32 0.5, %v3294
        %v3296 = vsub.f32 1.5, %v3295
        %v3297 = vmul.f32 %v3292, %v3296
        %v3298 = vmul.f32 %v3291, %v3297
        %vm3299 = vcmp.eq.f32.partialorder %v3291, inf
        %v3300 = vsel %vm3299, %v3291, %v3298
        %vm3301 = vcmp.eq.f32.partialorder %v3291, 0.0
        %v3302 = vand.u32 %v3291, 2147483648
        %v3303 = vsel %vm3301, %v3302, %v3300
        %v3304 = vsel %vm3286, %v3303, %v3285
        %v3305 = vmul.f32 %v3290, 0.0421632
        %v3306 = vadd.f32 %v3305, 0.024181312
        %v3307 = vmul.f32 %v3306, %v3290
        %v3308 = vadd.f32 %v3307, 0.045470025
        %v3309 = vmul.f32 %v3308, %v3290
        %v3310 = vadd.f32 %v3309, 0.074953005
        %v3311 = vmul.f32 %v3310, %v3290
        %v3312 = vadd.f32 %v3311, 0.16666752
        %v3313 = vmul.f32 %v3304, %v3290
        %v3314 = vmul.f32 %v3313, %v3312
        %v3315 = vadd.f32 %v3304, %v3314
        %v3316 = vmul.f32 %v3315, 2.0
        %v3317 = vsub.f32 1.5707964, %v3316
        %v3318 = vsel %vm3286, %v3317, %v3315
        %vm3319 = vcmp.lt.f32.partialorder %v3284, 0.0
        %v3320 = vsub.f32 0.0, %v3318
        %v3321 = vsel %vm3319, %v3320, %v3318
        %v3322 = vsub.f32 1.5707964, %v3321
        %v3323 = vmul.f32 %v3284, %v3284
        %v3324 = vsub.f32 1.0, %v3323
        %v3325 = vmax.f32 %v3324, 1e-12
        %v3326 = vrsqrt.pop %v3325
        %v3327 = vmul.f32 %v3326, %v3325
        %v3328 = vmul.f32 %v3327, %v3326
        %v3329 = vmul.f32 0.5, %v3328
        %v3330 = vsub.f32 1.5, %v3329
        %v3331 = vmul.f32 %v3326, %v3330
        %v3332 = vmul.f32 %v3325, %v3331
        %vm3333 = vcmp.eq.f32.partialorder %v3325, inf
        %v3334 = vsel %vm3333, %v3325, %v3332
        %vm3335 = vcmp.eq.f32.partialorder %v3325, 0.0
        %v3336 = vand.u32 %v3325, 2147483648
        %v3337 = vsel %vm3335, %v3336, %v3334
        %v3338 = vmax.f32 %v3337, 1e-06
        %v3339 = vmul.f32 %v3338, 2.0
        %v3340 = vrcp.pop %v3339
        %v3341 = vmul.f32 %v3339, %v3340
        %v3342 = vsub.f32 1.0, %v3341
        %v3343 = vmul.f32 %v3340, %v3342
        %v3344 = vadd.f32 %v3340, %v3343
        %vm3345 = vweird.f32 %v3339
        %vm3346 = vweird.f32 %v3340
        %vm3347 = vmor %vm3345, %vm3346
        %v3348 = vsel %vm3347, %v3340, %v3344
        %v3349 = vand.u32 2147483647, %v3339
        %vm3350 = vcmp.eq.f32.partialorder %v3349, 8.507059e+37
        %v3351 = vand.u32 %v3339, 2147483648
        %v3352 = vor.u32 1.1754944e-38, %v3351
        %v3353 = vsel %vm3350, %v3352, %v3348
        %v3354 = vmul.f32 %v3322, %v3353
        %3356 = vrot.lane.b32.xlu0 %v3278, 3
        %v3357 = vpop.permute.xlu0 %3356
        %v3359 = vsub.f32 %v3251, %v3357
        %3361 = vrot.lane.b32.xlu0 %v3217, 127
        %v3362 = vpop.permute.xlu0 %3361
        %v3364 = vsub.f32 %v3265, %v3362
        %v3365 = vsub.f32 %v3217, %v3258
        %3367 = vrot.lane.b32.xlu0 %v3359, 123
        %v3368 = vpop.permute.xlu0 %3367
        %3371 = vrot.lane.b32.xlu0 %v3365, 1
        %v3372 = vpop.permute.xlu0 %3371
        %v3374 = vsel %vm1510, %v3368, %v3364
        %v3375 = vsel %vm1512, %v3374, %v3372
        %3377 = vset.pattern.permute.xlu0 0
        %3378 = vperm.xlu0 %3377, %v3354
        %v3379 = vpop.permute.xlu0 %3378
        %v3381 = vmul.f32 %v3375, %v3379
        %3383 = vrot.lane.b32.xlu0 %v3202, 122
        %v3384 = vpop.permute.xlu0 %3383
        %v3386 = vsel %vm1338, %v3384, 0.0
        %3387 = vadd.xlane.f32.xlu0 %v3386
        %v3388 = vpop.xlane.xlu0 %3387
        %v3389 = vadd.f32 %v3388, 1e-08
        %v3390 = vrsqrt.pop %v3389
        %v3391 = vmul.f32 %v3390, %v3389
        %v3392 = vmul.f32 %v3391, %v3390
        %v3393 = vmul.f32 0.5, %v3392
        %v3394 = vsub.f32 1.5, %v3393
        %v3395 = vmul.f32 %v3390, %v3394
        %vm3396 = vweird.f32 %v3389
        %vm3397 = vweird.f32 %v3390
        %vm3398 = vmor %vm3396, %vm3397
        %v3399 = vsel %vm3398, %v3390, %v3395
        %v3400 = vmul.f32 %v3201, %v3399
        %v3401 = vmul.f32 %v3400, %v3220
        %3403 = vrot.lane.b32.xlu0 %v3401, 122
        %v3404 = vpop.permute.xlu0 %3403
        %v3406 = vsel %vm1338, %v3404, 0.0
        %3407 = vadd.xlane.f32.xlu0 %v3406
        %v3408 = vpop.xlane.xlu0 %3407
        %v3409 = vmul.f32 %v3408, %v3400
        %3411 = vrot.lane.b32.xlu0 %v3409, 3
        %v3412 = vpop.permute.xlu0 %3411
        %v3414 = vsub.f32 %v3201, %v3412
        %v3415 = vmul.f32 %v3414, %v3414
        %3417 = vrot.lane.b32.xlu0 %v3415, 119
        %v3418 = vpop.permute.xlu0 %3417
        %v3420 = vsel %vm1338, %v3418, 0.0
        %3421 = vadd.xlane.f32.xlu0 %v3420
        %v3422 = vpop.xlane.xlu0 %3421
        %v3423 = vadd.f32 %v3422, 1e-08
        %v3424 = vrsqrt.pop %v3423
        %v3425 = vmul.f32 %v3424, %v3423
        %v3426 = vmul.f32 %v3425, %v3424
        %v3427 = vmul.f32 0.5, %v3426
        %v3428 = vsub.f32 1.5, %v3427
        %v3429 = vmul.f32 %v3424, %v3428
        %vm3430 = vweird.f32 %v3423
        %vm3431 = vweird.f32 %v3424
        %vm3432 = vmor %vm3430, %vm3431
        %v3433 = vsel %vm3432, %v3424, %v3429
        %v3434 = vmul.f32 %v3414, %v3433
        %3436 = vrot.lane.b32.xlu0 %v3434, 124
        %v3437 = vpop.permute.xlu0 %3436
        %v3439 = vmul.f32 %v3400, %v3437
        %3440 = vrot.lane.b32.xlu0 %v3434, 126
        %v3441 = vpop.permute.xlu0 %3440
        %v3443 = vmul.f32 %v3400, %v3441
        %3445 = vrot.lane.b32.xlu0 %v3443, 127
        %v3446 = vpop.permute.xlu0 %3445
        %v3448 = vsub.f32 %v3439, %v3446
        %3449 = vrot.lane.b32.xlu0 %v3434, 127
        %v3450 = vpop.permute.xlu0 %3449
        %v3452 = vmul.f32 %v3400, %v3450
        %3453 = vrot.lane.b32.xlu0 %v3434, 123
        %v3454 = vpop.permute.xlu0 %3453
        %v3456 = vmul.f32 %v3400, %v3454
        %3458 = vrot.lane.b32.xlu0 %v3456, 2
        %v3459 = vpop.permute.xlu0 %3458
        %v3461 = vsub.f32 %v3452, %v3459
        %v3462 = vadd.f32 %v3400, %v3437
        %v3463 = vadd.f32 %v3462, %v3448
        %v3464 = vsub.f32 %v3463, 1.0
        %v3465 = vmul.f32 %v3464, 0.5
        %v3466 = vmax.f32 %v3465, -0.999999
        %v3467 = vmin.f32 %v3466, 0.999999
        %v3468 = vand.u32 2147483647, %v3467
        %vm3469 = vcmp.gt.f32.partialorder %v3468, 0.5
        %v3470 = vsub.f32 1.0, %v3468
        %v3471 = vmul.f32 %v3470, 0.5
        %v3472 = vmul.f32 %v3468, %v3468
        %v3473 = vsel %vm3469, %v3471, %v3472
        %v3474 = vmax.f32 %v3471, 0.0
        %v3475 = vrsqrt.pop %v3474
        %v3476 = vmul.f32 %v3475, %v3474
        %v3477 = vmul.f32 %v3476, %v3475
        %v3478 = vmul.f32 0.5, %v3477
        %v3479 = vsub.f32 1.5, %v3478
        %v3480 = vmul.f32 %v3475, %v3479
        %v3481 = vmul.f32 %v3474, %v3480
        %vm3482 = vcmp.eq.f32.partialorder %v3474, inf
        %v3483 = vsel %vm3482, %v3474, %v3481
        %vm3484 = vcmp.eq.f32.partialorder %v3474, 0.0
        %v3485 = vand.u32 %v3474, 2147483648
        %v3486 = vsel %vm3484, %v3485, %v3483
        %v3487 = vsel %vm3469, %v3486, %v3468
        %v3488 = vmul.f32 %v3473, 0.0421632
        %v3489 = vadd.f32 %v3488, 0.024181312
        %v3490 = vmul.f32 %v3489, %v3473
        %v3491 = vadd.f32 %v3490, 0.045470025
        %v3492 = vmul.f32 %v3491, %v3473
        %v3493 = vadd.f32 %v3492, 0.074953005
        %v3494 = vmul.f32 %v3493, %v3473
        %v3495 = vadd.f32 %v3494, 0.16666752
        %v3496 = vmul.f32 %v3487, %v3473
        %v3497 = vmul.f32 %v3496, %v3495
        %v3498 = vadd.f32 %v3487, %v3497
        %v3499 = vmul.f32 %v3498, 2.0
        %v3500 = vsub.f32 1.5707964, %v3499
        %v3501 = vsel %vm3469, %v3500, %v3498
        %vm3502 = vcmp.lt.f32.partialorder %v3467, 0.0
        %v3503 = vsub.f32 0.0, %v3501
        %v3504 = vsel %vm3502, %v3503, %v3501
        %v3505 = vsub.f32 1.5707964, %v3504
        %v3506 = vmul.f32 %v3467, %v3467
        %v3507 = vsub.f32 1.0, %v3506
        %v3508 = vmax.f32 %v3507, 1e-12
        %v3509 = vrsqrt.pop %v3508
        %v3510 = vmul.f32 %v3509, %v3508
        %v3511 = vmul.f32 %v3510, %v3509
        %v3512 = vmul.f32 0.5, %v3511
        %v3513 = vsub.f32 1.5, %v3512
        %v3514 = vmul.f32 %v3509, %v3513
        %v3515 = vmul.f32 %v3508, %v3514
        %vm3516 = vcmp.eq.f32.partialorder %v3508, inf
        %v3517 = vsel %vm3516, %v3508, %v3515
        %vm3518 = vcmp.eq.f32.partialorder %v3508, 0.0
        %v3519 = vand.u32 %v3508, 2147483648
        %v3520 = vsel %vm3518, %v3519, %v3517
        %v3521 = vmax.f32 %v3520, 1e-06
        %v3522 = vmul.f32 %v3521, 2.0
        %v3523 = vrcp.pop %v3522
        %v3524 = vmul.f32 %v3522, %v3523
        %v3525 = vsub.f32 1.0, %v3524
        %v3526 = vmul.f32 %v3523, %v3525
        %v3527 = vadd.f32 %v3523, %v3526
        %vm3528 = vweird.f32 %v3522
        %vm3529 = vweird.f32 %v3523
        %vm3530 = vmor %vm3528, %vm3529
        %v3531 = vsel %vm3530, %v3523, %v3527
        %v3532 = vand.u32 2147483647, %v3522
        %vm3533 = vcmp.eq.f32.partialorder %v3532, 8.507059e+37
        %v3534 = vand.u32 %v3522, 2147483648
        %v3535 = vor.u32 1.1754944e-38, %v3534
        %v3536 = vsel %vm3533, %v3535, %v3531
        %v3537 = vmul.f32 %v3505, %v3536
        %3539 = vrot.lane.b32.xlu0 %v3461, 3
        %v3540 = vpop.permute.xlu0 %3539
        %v3542 = vsub.f32 %v3434, %v3540
        %3544 = vrot.lane.b32.xlu0 %v3400, 127
        %v3545 = vpop.permute.xlu0 %3544
        %v3547 = vsub.f32 %v3448, %v3545
        %v3548 = vsub.f32 %v3400, %v3441
        %3550 = vrot.lane.b32.xlu0 %v3542, 117
        %v3551 = vpop.permute.xlu0 %3550
        %3554 = vrot.lane.b32.xlu0 %v3547, 122
        %v3555 = vpop.permute.xlu0 %3554
        %3558 = vrot.lane.b32.xlu0 %v3548, 123
        %v3559 = vpop.permute.xlu0 %3558
        %v3561 = vsel %vm1510, %v3551, %v3555
        %v3562 = vsel %vm1512, %v3561, %v3559
        %3564 = vset.pattern.permute.xlu0 6
        %3565 = vperm.xlu0 %3564, %v3537
        %v3566 = vpop.permute.xlu0 %3565
        %v3568 = vmul.f32 %v3562, %v3566
        %3569 = vrot.lane.b32.xlu0 %v3202, 116
        %v3570 = vpop.permute.xlu0 %3569
        %v3572 = vsel %vm1338, %v3570, 0.0
        %3573 = vadd.xlane.f32.xlu0 %v3572
        %v3574 = vpop.xlane.xlu0 %3573
        %v3575 = vadd.f32 %v3574, 1e-08
        %v3576 = vrsqrt.pop %v3575
        %v3577 = vmul.f32 %v3576, %v3575
        %v3578 = vmul.f32 %v3577, %v3576
        %v3579 = vmul.f32 0.5, %v3578
        %v3580 = vsub.f32 1.5, %v3579
        %v3581 = vmul.f32 %v3576, %v3580
        %vm3582 = vweird.f32 %v3575
        %vm3583 = vweird.f32 %v3576
        %vm3584 = vmor %vm3582, %vm3583
        %v3585 = vsel %vm3584, %v3576, %v3581
        %v3586 = vmul.f32 %v3201, %v3585
        %v3587 = vmul.f32 %v3586, %v3220
        %3589 = vrot.lane.b32.xlu0 %v3587, 116
        %v3590 = vpop.permute.xlu0 %3589
        %v3592 = vsel %vm1338, %v3590, 0.0
        %3593 = vadd.xlane.f32.xlu0 %v3592
        %v3594 = vpop.xlane.xlu0 %3593
        %v3595 = vmul.f32 %v3594, %v3586
        %3597 = vrot.lane.b32.xlu0 %v3595, 3
        %v3598 = vpop.permute.xlu0 %3597
        %v3600 = vsub.f32 %v3201, %v3598
        %v3601 = vmul.f32 %v3600, %v3600
        %3603 = vrot.lane.b32.xlu0 %v3601, 113
        %v3604 = vpop.permute.xlu0 %3603
        %v3606 = vsel %vm1338, %v3604, 0.0
        %3607 = vadd.xlane.f32.xlu0 %v3606
        %v3608 = vpop.xlane.xlu0 %3607
        %v3609 = vadd.f32 %v3608, 1e-08
        %v3610 = vrsqrt.pop %v3609
        %v3611 = vmul.f32 %v3610, %v3609
        %v3612 = vmul.f32 %v3611, %v3610
        %v3613 = vmul.f32 0.5, %v3612
        %v3614 = vsub.f32 1.5, %v3613
        %v3615 = vmul.f32 %v3610, %v3614
        %vm3616 = vweird.f32 %v3609
        %vm3617 = vweird.f32 %v3610
        %vm3618 = vmor %vm3616, %vm3617
        %v3619 = vsel %vm3618, %v3610, %v3615
        %v3620 = vmul.f32 %v3600, %v3619
        %3622 = vrot.lane.b32.xlu0 %v3620, 124
        %v3623 = vpop.permute.xlu0 %3622
        %v3625 = vmul.f32 %v3586, %v3623
        %3626 = vrot.lane.b32.xlu0 %v3620, 126
        %v3627 = vpop.permute.xlu0 %3626
        %v3629 = vmul.f32 %v3586, %v3627
        %3631 = vrot.lane.b32.xlu0 %v3629, 127
        %v3632 = vpop.permute.xlu0 %3631
        %v3634 = vsub.f32 %v3625, %v3632
        %3635 = vrot.lane.b32.xlu0 %v3620, 127
        %v3636 = vpop.permute.xlu0 %3635
        %v3638 = vmul.f32 %v3586, %v3636
        %3639 = vrot.lane.b32.xlu0 %v3620, 123
        %v3640 = vpop.permute.xlu0 %3639
        %v3642 = vmul.f32 %v3586, %v3640
        %3644 = vrot.lane.b32.xlu0 %v3642, 2
        %v3645 = vpop.permute.xlu0 %3644
        %v3647 = vsub.f32 %v3638, %v3645
        %v3648 = vadd.f32 %v3586, %v3623
        %v3649 = vadd.f32 %v3648, %v3634
        %v3650 = vsub.f32 %v3649, 1.0
        %v3651 = vmul.f32 %v3650, 0.5
        %v3652 = vmax.f32 %v3651, -0.999999
        %v3653 = vmin.f32 %v3652, 0.999999
        %v3654 = vand.u32 2147483647, %v3653
        %vm3655 = vcmp.gt.f32.partialorder %v3654, 0.5
        %v3656 = vsub.f32 1.0, %v3654
        %v3657 = vmul.f32 %v3656, 0.5
        %v3658 = vmul.f32 %v3654, %v3654
        %v3659 = vsel %vm3655, %v3657, %v3658
        %v3660 = vmax.f32 %v3657, 0.0
        %v3661 = vrsqrt.pop %v3660
        %v3662 = vmul.f32 %v3661, %v3660
        %v3663 = vmul.f32 %v3662, %v3661
        %v3664 = vmul.f32 0.5, %v3663
        %v3665 = vsub.f32 1.5, %v3664
        %v3666 = vmul.f32 %v3661, %v3665
        %v3667 = vmul.f32 %v3660, %v3666
        %vm3668 = vcmp.eq.f32.partialorder %v3660, inf
        %v3669 = vsel %vm3668, %v3660, %v3667
        %vm3670 = vcmp.eq.f32.partialorder %v3660, 0.0
        %v3671 = vand.u32 %v3660, 2147483648
        %v3672 = vsel %vm3670, %v3671, %v3669
        %v3673 = vsel %vm3655, %v3672, %v3654
        %v3674 = vmul.f32 %v3659, 0.0421632
        %v3675 = vadd.f32 %v3674, 0.024181312
        %v3676 = vmul.f32 %v3675, %v3659
        %v3677 = vadd.f32 %v3676, 0.045470025
        %v3678 = vmul.f32 %v3677, %v3659
        %v3679 = vadd.f32 %v3678, 0.074953005
        %v3680 = vmul.f32 %v3679, %v3659
        %v3681 = vadd.f32 %v3680, 0.16666752
        %v3682 = vmul.f32 %v3673, %v3659
        %v3683 = vmul.f32 %v3682, %v3681
        %v3684 = vadd.f32 %v3673, %v3683
        %v3685 = vmul.f32 %v3684, 2.0
        %v3686 = vsub.f32 1.5707964, %v3685
        %v3687 = vsel %vm3655, %v3686, %v3684
        %vm3688 = vcmp.lt.f32.partialorder %v3653, 0.0
        %v3689 = vsub.f32 0.0, %v3687
        %v3690 = vsel %vm3688, %v3689, %v3687
        %v3691 = vsub.f32 1.5707964, %v3690
        %v3692 = vmul.f32 %v3653, %v3653
        %v3693 = vsub.f32 1.0, %v3692
        %v3694 = vmax.f32 %v3693, 1e-12
        %v3695 = vrsqrt.pop %v3694
        %v3696 = vmul.f32 %v3695, %v3694
        %v3697 = vmul.f32 %v3696, %v3695
        %v3698 = vmul.f32 0.5, %v3697
        %v3699 = vsub.f32 1.5, %v3698
        %v3700 = vmul.f32 %v3695, %v3699
        %v3701 = vmul.f32 %v3694, %v3700
        %vm3702 = vcmp.eq.f32.partialorder %v3694, inf
        %v3703 = vsel %vm3702, %v3694, %v3701
        %vm3704 = vcmp.eq.f32.partialorder %v3694, 0.0
        %v3705 = vand.u32 %v3694, 2147483648
        %v3706 = vsel %vm3704, %v3705, %v3703
        %v3707 = vmax.f32 %v3706, 1e-06
        %v3708 = vmul.f32 %v3707, 2.0
        %v3709 = vrcp.pop %v3708
        %v3710 = vmul.f32 %v3708, %v3709
        %v3711 = vsub.f32 1.0, %v3710
        %v3712 = vmul.f32 %v3709, %v3711
        %v3713 = vadd.f32 %v3709, %v3712
        %vm3714 = vweird.f32 %v3708
        %vm3715 = vweird.f32 %v3709
        %vm3716 = vmor %vm3714, %vm3715
        %v3717 = vsel %vm3716, %v3709, %v3713
        %v3718 = vand.u32 2147483647, %v3708
        %vm3719 = vcmp.eq.f32.partialorder %v3718, 8.507059e+37
        %v3720 = vand.u32 %v3708, 2147483648
        %v3721 = vor.u32 1.1754944e-38, %v3720
        %v3722 = vsel %vm3719, %v3721, %v3717
        %v3723 = vmul.f32 %v3691, %v3722
        %3725 = vrot.lane.b32.xlu0 %v3647, 3
        %v3726 = vpop.permute.xlu0 %3725
        %v3728 = vsub.f32 %v3620, %v3726
        %3730 = vrot.lane.b32.xlu0 %v3586, 127
        %v3731 = vpop.permute.xlu0 %3730
        %v3733 = vsub.f32 %v3634, %v3731
        %v3734 = vsub.f32 %v3586, %v3627
        %3736 = vrot.lane.b32.xlu0 %v3728, 111
        %v3737 = vpop.permute.xlu0 %3736
        %3740 = vrot.lane.b32.xlu0 %v3733, 116
        %v3741 = vpop.permute.xlu0 %3740
        %3744 = vrot.lane.b32.xlu0 %v3734, 117
        %v3745 = vpop.permute.xlu0 %3744
        %v3747 = vsel %vm1510, %v3737, %v3741
        %v3748 = vsel %vm1512, %v3747, %v3745
        %3750 = vset.pattern.permute.xlu0 12
        %3751 = vperm.xlu0 %3750, %v3723
        %v3752 = vpop.permute.xlu0 %3751
        %v3754 = vmul.f32 %v3748, %v3752
        %v3755 = vsub.f32 0.0, %v2699
        %v3756 = vsel %vm1510, %v2699, %v3755
        %v3757 = vsub.f32 0.0, %v2886
        %v3758 = vsel %vm1510, %v2886, %v3757
        %v3759 = vsub.f32 0.0, %v3072
        %v3760 = vsel %vm1510, %v3072, %v3759
        %v3761 = vld [vmem:[%s51] sm:$0xff]
        %v3762 = vld [vmem:[%s51 + $0x8] sm:$0xff]
        %v3763 = vld [vmem:[%s51 + $0x10] sm:$0xff]
        %v3764 = vld [vmem:[%s51 + $0x18] sm:$0xff]
        %v3765 = vld [vmem:[%s53] sm:$0xff]
        %v3766 = vld [vmem:[%s53 + $0x8] sm:$0xff]
        %v3767 = vld [vmem:[%s53 + $0x10] sm:$0xff]
        %v3768 = vld [vmem:[%s53 + $0x18] sm:$0xff]
        %3769 = vrot.lane.b32.xlu0 %v1031, 32
        %v3770 = vpop.permute.xlu0 %3769
        %v3771 = vsel %vm972, %v3770, 0
        %3773 = vmatpush.msra.mxu0 0.0
        %3774 = vmatpush.msra.mxu0 0.0
        %3775 = vmatpush.msra.mxu0 0.0
        %3776 = vmatpush.msra.mxu0 0.0
        %3777 = vmatpush.msra.mxu0 0.0
        %3778 = vmatpush.msra.mxu0 0.0
        %3779 = vmatpush.msra.mxu0 0.0
        %3780 = vmatpush.msra.mxu0 0.0
        %3781 = vmatpush.msra.mxu0 0.0
        %3782 = vmatpush.msra.mxu0 0.0
        %3783 = vmatpush.msra.mxu0 0.0
        %3784 = vmatpush.msra.mxu0 0.0
        %3785 = vmatpush.msra.mxu0 %v3768
        %3786 = vmatpush.msra.mxu0 %v3767
        %3787 = vmatpush.msra.mxu0 %v3766
        %3788 = vmatpush.msra.mxu0 %v3765
        %3789 = vmatmul.f32.gmra.mxu0 %v3771
        %v3790 = vpop.f32.mrf.mxu0
        %v3791 = vadd.f32 0.0, %v3790
        %3792 = vdwg.mxu0
        %3793 = vrot.lane.b32.xlu0 %v1031, 64
        %v3794 = vpop.permute.xlu0 %3793
        %v3795 = vsel %vm972, %v3794, 0
        %3797 = vmatpush.msra.mxu0 0.0
        %3798 = vmatpush.msra.mxu0 0.0
        %3799 = vmatpush.msra.mxu0 0.0
        %3800 = vmatpush.msra.mxu0 0.0
        %3801 = vmatpush.msra.mxu0 0.0
        %3802 = vmatpush.msra.mxu0 0.0
        %3803 = vmatpush.msra.mxu0 0.0
        %3804 = vmatpush.msra.mxu0 0.0
        %3805 = vmatpush.msra.mxu0 0.0
        %3806 = vmatpush.msra.mxu0 0.0
        %3807 = vmatpush.msra.mxu0 0.0
        %3808 = vmatpush.msra.mxu0 0.0
        %3809 = vmatpush.msra.mxu0 %v3764
        %3810 = vmatpush.msra.mxu0 %v3763
        %3811 = vmatpush.msra.mxu0 %v3762
        %3812 = vmatpush.msra.mxu0 %v3761
        %3813 = vmatmul.f32.gmra.mxu0 %v3795
        %v3814 = vpop.f32.mrf.mxu0
        %v3815 = vadd.f32 %v3791, %v3814
        %3816 = vdwg.mxu0
        %v3817 = vld [vmem:[%s55] sm:$0x1]
        %v3818 = vadd.f32 %v3815, %v3817
        %v3819 = vmul.f32 %v3818, %v3818
        %3821 = vrot.lane.b32.xlu0 %v3819, 118
        %v3822 = vpop.permute.xlu0 %3821
        %v3824 = vsel %vm1338, %v3822, 0.0
        %3825 = vadd.xlane.f32.xlu0 %v3824
        %v3826 = vpop.xlane.xlu0 %3825
        %v3827 = vadd.f32 %v3826, 1e-08
        %v3828 = vrsqrt.pop %v3827
        %v3829 = vmul.f32 %v3828, %v3827
        %v3830 = vmul.f32 %v3829, %v3828
        %v3831 = vmul.f32 0.5, %v3830
        %v3832 = vsub.f32 1.5, %v3831
        %v3833 = vmul.f32 %v3828, %v3832
        %vm3834 = vweird.f32 %v3827
        %vm3835 = vweird.f32 %v3828
        %vm3836 = vmor %vm3834, %vm3835
        %v3837 = vsel %vm3836, %v3828, %v3833
        %v3838 = vmul.f32 %v3818, %v3837
        %3840 = vrot.lane.b32.xlu0 %v3818, 125
        %v3841 = vpop.permute.xlu0 %3840
        %v3843 = vmul.f32 %v3838, %v3841
        %3845 = vrot.lane.b32.xlu0 %v3843, 118
        %v3846 = vpop.permute.xlu0 %3845
        %v3848 = vsel %vm1338, %v3846, 0.0
        %3849 = vadd.xlane.f32.xlu0 %v3848
        %v3850 = vpop.xlane.xlu0 %3849
        %v3851 = vmul.f32 %v3850, %v3838
        %3853 = vrot.lane.b32.xlu0 %v3851, 3
        %v3854 = vpop.permute.xlu0 %3853
        %v3856 = vsub.f32 %v3818, %v3854
        %v3857 = vmul.f32 %v3856, %v3856
        %3859 = vrot.lane.b32.xlu0 %v3857, 115
        %v3860 = vpop.permute.xlu0 %3859
        %v3862 = vsel %vm1338, %v3860, 0.0
        %3863 = vadd.xlane.f32.xlu0 %v3862
        %v3864 = vpop.xlane.xlu0 %3863
        %v3865 = vadd.f32 %v3864, 1e-08
        %v3866 = vrsqrt.pop %v3865
        %v3867 = vmul.f32 %v3866, %v3865
        %v3868 = vmul.f32 %v3867, %v3866
        %v3869 = vmul.f32 0.5, %v3868
        %v3870 = vsub.f32 1.5, %v3869
        %v3871 = vmul.f32 %v3866, %v3870
        %vm3872 = vweird.f32 %v3865
        %vm3873 = vweird.f32 %v3866
        %vm3874 = vmor %vm3872, %vm3873
        %v3875 = vsel %vm3874, %v3866, %v3871
        %v3876 = vmul.f32 %v3856, %v3875
        %3878 = vrot.lane.b32.xlu0 %v3876, 124
        %v3879 = vpop.permute.xlu0 %3878
        %v3881 = vmul.f32 %v3838, %v3879
        %3882 = vrot.lane.b32.xlu0 %v3876, 126
        %v3883 = vpop.permute.xlu0 %3882
        %v3885 = vmul.f32 %v3838, %v3883
        %3887 = vrot.lane.b32.xlu0 %v3885, 127
        %v3888 = vpop.permute.xlu0 %3887
        %v3890 = vsub.f32 %v3881, %v3888
        %3891 = vrot.lane.b32.xlu0 %v3876, 127
        %v3892 = vpop.permute.xlu0 %3891
        %v3894 = vmul.f32 %v3838, %v3892
        %3895 = vrot.lane.b32.xlu0 %v3876, 123
        %v3896 = vpop.permute.xlu0 %3895
        %v3898 = vmul.f32 %v3838, %v3896
        %3900 = vrot.lane.b32.xlu0 %v3898, 2
        %v3901 = vpop.permute.xlu0 %3900
        %v3903 = vsub.f32 %v3894, %v3901
        %v3904 = vadd.f32 %v3838, %v3879
        %v3905 = vadd.f32 %v3904, %v3890
        %v3906 = vsub.f32 %v3905, 1.0
        %v3907 = vmul.f32 %v3906, 0.5
        %v3908 = vmax.f32 %v3907, -0.999999
        %v3909 = vmin.f32 %v3908, 0.999999
        %v3910 = vand.u32 2147483647, %v3909
        %vm3911 = vcmp.gt.f32.partialorder %v3910, 0.5
        %v3912 = vsub.f32 1.0, %v3910
        %v3913 = vmul.f32 %v3912, 0.5
        %v3914 = vmul.f32 %v3910, %v3910
        %v3915 = vsel %vm3911, %v3913, %v3914
        %v3916 = vmax.f32 %v3913, 0.0
        %v3917 = vrsqrt.pop %v3916
        %v3918 = vmul.f32 %v3917, %v3916
        %v3919 = vmul.f32 %v3918, %v3917
        %v3920 = vmul.f32 0.5, %v3919
        %v3921 = vsub.f32 1.5, %v3920
        %v3922 = vmul.f32 %v3917, %v3921
        %v3923 = vmul.f32 %v3916, %v3922
        %vm3924 = vcmp.eq.f32.partialorder %v3916, inf
        %v3925 = vsel %vm3924, %v3916, %v3923
        %vm3926 = vcmp.eq.f32.partialorder %v3916, 0.0
        %v3927 = vand.u32 %v3916, 2147483648
        %v3928 = vsel %vm3926, %v3927, %v3925
        %v3929 = vsel %vm3911, %v3928, %v3910
        %v3930 = vmul.f32 %v3915, 0.0421632
        %v3931 = vadd.f32 %v3930, 0.024181312
        %v3932 = vmul.f32 %v3931, %v3915
        %v3933 = vadd.f32 %v3932, 0.045470025
        %v3934 = vmul.f32 %v3933, %v3915
        %v3935 = vadd.f32 %v3934, 0.074953005
        %v3936 = vmul.f32 %v3935, %v3915
        %v3937 = vadd.f32 %v3936, 0.16666752
        %v3938 = vmul.f32 %v3929, %v3915
        %v3939 = vmul.f32 %v3938, %v3937
        %v3940 = vadd.f32 %v3929, %v3939
        %v3941 = vmul.f32 %v3940, 2.0
        %v3942 = vsub.f32 1.5707964, %v3941
        %v3943 = vsel %vm3911, %v3942, %v3940
        %vm3944 = vcmp.lt.f32.partialorder %v3909, 0.0
        %v3945 = vsub.f32 0.0, %v3943
        %v3946 = vsel %vm3944, %v3945, %v3943
        %v3947 = vsub.f32 1.5707964, %v3946
        %v3948 = vmul.f32 %v3909, %v3909
        %v3949 = vsub.f32 1.0, %v3948
        %v3950 = vmax.f32 %v3949, 1e-12
        %v3951 = vrsqrt.pop %v3950
        %v3952 = vmul.f32 %v3951, %v3950
        %v3953 = vmul.f32 %v3952, %v3951
        %v3954 = vmul.f32 0.5, %v3953
        %v3955 = vsub.f32 1.5, %v3954
        %v3956 = vmul.f32 %v3951, %v3955
        %v3957 = vmul.f32 %v3950, %v3956
        %vm3958 = vcmp.eq.f32.partialorder %v3950, inf
        %v3959 = vsel %vm3958, %v3950, %v3957
        %vm3960 = vcmp.eq.f32.partialorder %v3950, 0.0
        %v3961 = vand.u32 %v3950, 2147483648
        %v3962 = vsel %vm3960, %v3961, %v3959
        %v3963 = vmax.f32 %v3962, 1e-06
        %v3964 = vmul.f32 %v3963, 2.0
        %v3965 = vrcp.pop %v3964
        %v3966 = vmul.f32 %v3964, %v3965
        %v3967 = vsub.f32 1.0, %v3966
        %v3968 = vmul.f32 %v3965, %v3967
        %v3969 = vadd.f32 %v3965, %v3968
        %vm3970 = vweird.f32 %v3964
        %vm3971 = vweird.f32 %v3965
        %vm3972 = vmor %vm3970, %vm3971
        %v3973 = vsel %vm3972, %v3965, %v3969
        %v3974 = vand.u32 2147483647, %v3964
        %vm3975 = vcmp.eq.f32.partialorder %v3974, 8.507059e+37
        %v3976 = vand.u32 %v3964, 2147483648
        %v3977 = vor.u32 1.1754944e-38, %v3976
        %v3978 = vsel %vm3975, %v3977, %v3973
        %v3979 = vmul.f32 %v3947, %v3978
        %3981 = vrot.lane.b32.xlu0 %v3903, 3
        %v3982 = vpop.permute.xlu0 %3981
        %v3984 = vsub.f32 %v3876, %v3982
        %3986 = vrot.lane.b32.xlu0 %v3838, 127
        %v3987 = vpop.permute.xlu0 %3986
        %v3989 = vsub.f32 %v3890, %v3987
        %v3990 = vsub.f32 %v3838, %v3883
        %3992 = vrot.lane.b32.xlu0 %v3984, 113
        %v3993 = vpop.permute.xlu0 %3992
        %3996 = vrot.lane.b32.xlu0 %v3989, 118
        %v3997 = vpop.permute.xlu0 %3996
        %4000 = vrot.lane.b32.xlu0 %v3990, 119
        %v4001 = vpop.permute.xlu0 %4000
        %v4003 = vsel %vm1510, %v3993, %v3997
        %v4004 = vsel %vm1512, %v4003, %v4001
        %4006 = vset.pattern.permute.xlu0 10
        %4007 = vperm.xlu0 %4006, %v3979
        %v4008 = vpop.permute.xlu0 %4007
        %v4010 = vmul.f32 %v4004, %v4008
        %4012 = vrot.lane.b32.xlu0 %v1706, 3
        %v4013 = vpop.permute.xlu0 %4012
        %4016 = vrot.lane.b32.xlu0 %v1892, 6
        %v4017 = vpop.permute.xlu0 %4016
        %4020 = vrot.lane.b32.xlu0 %v2078, 9
        %v4021 = vpop.permute.xlu0 %4020
        %4024 = vrot.lane.b32.xlu0 %v2264, 12
        %v4025 = vpop.permute.xlu0 %4024
        %4028 = vrot.lane.b32.xlu0 %v3756, 15
        %v4029 = vpop.permute.xlu0 %4028
        %4032 = vrot.lane.b32.xlu0 %v3758, 18
        %v4033 = vpop.permute.xlu0 %4032
        %4036 = vrot.lane.b32.xlu0 %v3760, 21
        %v4037 = vpop.permute.xlu0 %4036
        %4040 = vrot.lane.b32.xlu0 %v3381, 24
        %v4041 = vpop.permute.xlu0 %4040
        %4044 = vrot.lane.b32.xlu0 %v3568, 27
        %v4045 = vpop.permute.xlu0 %4044
        %4048 = vrot.lane.b32.xlu0 %v3754, 30
        %v4049 = vpop.permute.xlu0 %4048
        %4052 = vrot.lane.b32.xlu0 %v4010, 33
        %v4053 = vpop.permute.xlu0 %4052
        %4055 = vrot.lane.b32.xlu0 %v1336, 6
        %v4056 = vpop.permute.xlu0 %4055
        %4058 = vrot.lane.b32.xlu0 %v3818, 46
        %v4059 = vpop.permute.xlu0 %4058
        %v4061 = vsel %vm2380, %v1519, %v4013
        %vm4062 = vcmask 48128
        %v4063 = vsel %vm4062, %v4061, %v4017
        %v4064 = vsel %vm2470, %v4063, %v4021
        %v4065 = vsel %vm1306, %v4064, %v4025
        %vm4066 = vcmask 121856
        %v4067 = vsel %vm4066, %v4065, %v4029
        %vm4068 = vcmask 146432
        %v4069 = vsel %vm4068, %v4067, %v4033
        %vm4070 = vcmask 171008
        %v4071 = vsel %vm4070, %v4069, %v4037
        %vm4072 = vcmask 195584
        %v4073 = vsel %vm4072, %v4071, %v4041
        %vm4074 = vcmask 220160
        %v4075 = vsel %vm4074, %v4073, %v4045
        %vm4076 = vcmask 244736
        %v4077 = vsel %vm4076, %v4075, %v4049
        %vm4078 = vcmask 269312
        %v4079 = vsel %vm4078, %v4077, %v4053
        %vm4080 = vcmask 293888
        %v4081 = vsel %vm4080, %v4079, %v4056
        %vm4082 = vcmask 375808
        %v4083 = vsel %vm4082, %v4081, %v4059
        %v4084 = vld [vmem:[%s57] sm:$0xff]
        %v4085 = vld [vmem:[%s57 + $0x8] sm:$0xff]
        %v4086 = vld [vmem:[%s57 + $0x10] sm:$0xff]
        %v4087 = vld [vmem:[%s57 + $0x18] sm:$0xff]
        %v4088 = vld [vmem:[%s57 + $0x20] sm:$0xff]
        %v4089 = vld [vmem:[%s57 + $0x28] sm:$0xff]
        %v4090 = vld [vmem:[%s57 + $0x30] sm:$0xff]
        %v4091 = vld [vmem:[%s59] sm:$0x1]
        %vm4092 = vcmask 457728
        %v4094 = vsel %vm4092, %v4083, 0
        %4096 = vmatpush.msra.mxu0 0.0
        %4097 = vmatpush.msra.mxu0 0.0
        %4098 = vmatpush.msra.mxu0 0.0
        %4099 = vmatpush.msra.mxu0 0.0
        %4100 = vmatpush.msra.mxu0 0.0
        %4101 = vmatpush.msra.mxu0 0.0
        %4102 = vmatpush.msra.mxu0 0.0
        %4103 = vmatpush.msra.mxu0 0.0
        %4104 = vmatpush.msra.mxu0 0.0
        %4105 = vmatpush.msra.mxu0 %v4090
        %4106 = vmatpush.msra.mxu0 %v4089
        %4107 = vmatpush.msra.mxu0 %v4088
        %4108 = vmatpush.msra.mxu0 %v4087
        %4109 = vmatpush.msra.mxu0 %v4086
        %4110 = vmatpush.msra.mxu0 %v4085
        %4111 = vmatpush.msra.mxu0 %v4084
        %4112 = vmatmul.f32.gmra.mxu0 %v4094
        %v4113 = vpop.f32.mrf.mxu0
        %v4114 = vadd.f32 %v4091, %v4113
        %4115 = vdwg.mxu0
        %v4116 = vld [vmem:[%s5] sm:$0x7]
        %v4118 = vsel %vm2380, %v2277, 0
        %vm4120 = vcmask 1042432
        %v4122 = vsel %vm4120, %v4116, 0
        %4124 = vmatpush.msra.mxu0 0.0
        %4125 = vmatpush.msra.mxu0 0.0
        %4126 = vmatpush.msra.mxu0 0.0
        %4127 = vmatpush.msra.mxu0 0.0
        %4128 = vmatpush.msra.mxu0 0.0
        %4129 = vmatpush.msra.mxu0 0.0
        %4130 = vmatpush.msra.mxu0 0.0
        %4131 = vmatpush.msra.mxu0 0.0
        %4132 = vmatpush.msra.mxu0 0.0
        %4133 = vmatpush.msra.mxu0 0.0
        %4134 = vmatpush.msra.mxu0 0.0
        %4135 = vmatpush.msra.mxu0 0.0
        %4136 = vmatpush.msra.mxu0 0.0
        %4137 = vmatpush.msra.mxu0 0.0
        %4138 = vmatpush.msra.mxu0 0.0
        %4139 = vmatpush.msra.mxu0 %v4122
        %4140 = vmatmul.f32.gmra.mxu0 %v4118
        %v4141 = vpop.f32.mrf.mxu0
        %v4142 = vadd.f32 0.0, %v4141
        %4143 = vdwg.mxu0
        %v4144 = vadd.f32 %v4114, %v4142
        %vm4145 = vcmask 778240
        %4146 = vst.msk [vmem:[%s922] sm:$0x1] %vm4145, %v4144
        %s4147 = sand.u32 %s718, 1
        %s4148 = scalar_lea.sflag [#allocation3], %s4147
        %s4149 = sand.u32 %s718, 1
        %s4150 = scalar_lea.vmem [#allocation2], %s4149
        // Predicated region
        $region141: #{tpu_custom_call.1} parent=139 // pred_check
          %p4151 = pneg %p728
        $region142: #{tpu_custom_call.1} parent=139 // pred_check_branch
          %4153 = sbr.rel (%p4151) target = $region144
        $region143: #{tpu_custom_call.1} parent=139 // pred_region
          %4155 = vsyncadd %s4148, 0
          %s4156 = scalar_lea.hbm %s61, %s75
          %s4158 = sshll.u32 %s4150, 4
          %s4159 = int_to_ptr.vmem [resolvable:$true] %s4158
          %s4160 = sshll.u32 %s4156, 4
          %s4161 = int_to_ptr.hbm [resolvable:$true] %s4160
          %4163 = dma.vmem_to_hbm [thread:$0]  %s4159, 16, %s4161, %s4148
        $region144: #{tpu_custom_call.1} parent=139 // pred_fallthru
          _
      $region140: #{tpu_custom_call.1} parent=5 // pred_fallthru
        _
      %p4164 = scmp.le.s32.totalorder 2, %s70
      // Predicated region
      $region145: #{tpu_custom_call.1} parent=5 // pred_check
        %p4165 = pneg %p4164
      $region146: #{tpu_custom_call.1} parent=5 // pred_check_branch
        %4167 = sbr.rel (%p4165) target = $region148
      $region147: #{tpu_custom_call.1} parent=5 // pred_region
        %s4168 = ssub.s32 %s70, 2
        // Predicated region
        $region149: #{tpu_custom_call.1} parent=147 // pred_check
          %p4169 = pneg %p734
        $region150: #{tpu_custom_call.1} parent=147 // pred_check_branch
          %4171 = sbr.rel (%p4169) target = $region152
        $region151: #{tpu_custom_call.1} parent=147 // pred_region
          %s4172 = sand.u32 %s719, 1
          %s4173 = scalar_lea.sflag [#allocation3], %s4172
          %s4174 = sand.u32 %s719, 1
          %s4175 = scalar_lea.vmem [#allocation2], %s4174
          %4177 = dma.done %s4173, 16
        $region152: #{tpu_custom_call.1} parent=147 // pred_fallthru
          _
      $region148: #{tpu_custom_call.1} parent=5 // pred_fallthru
        _
    $region6: #{tpu_custom_call.1} parent=1 // loop_footer
      %s74 = sadd.s32 1, %s70
    $region7: #{tpu_custom_call.1} parent=1 // loop_footer_branch
      %69 = sbr.rel target = $region3
    $region8: #{tpu_custom_call.1} parent=1 // loop_exit
      _
    %4178 = vsyncpa [#allocation3], 1
    %s4179 = scalar_lea.sflag [#allocation3], 1
    %4180 = vsyncpa %s4179, 1

</llo_original>
